<compile_context>
chip_gen: v7x
topology: tpu7x:2x2x1
jax: 0.10.0
libtpu: 0.0.40
codegen_flags: <defaults>
</compile_context>

<pallas_src>
import functools
import math

import numpy as np
import jax
import jax.numpy as jnp
from jax.experimental import pallas as pl
from jax.experimental.pallas import tpu as pltpu

F32 = jnp.float32
EPS = 1e-5


# ----------------------------- in-kernel helpers -----------------------------
def _gelu(x):
    # tanh-approximate GELU: the transcendental (tanh) runs on the EUP slot.
    c = 0.7978845608028654  # sqrt(2/pi)
    return 0.5 * x * (1.0 + jnp.tanh(c * (x + 0.044715 * x * x * x)))


def _layer_norm(v, g, b):
    mu = jnp.mean(v, axis=-1, keepdims=True)
    var = jnp.mean((v - mu) ** 2, axis=-1, keepdims=True)
    return (v - mu) * jax.lax.rsqrt(var + EPS) * g + b


def _conv3x3_gn_cf(x_cf, w_ref, gn_ref, *, cmask_ref, W, apply_gelu):
    # Channels-first 3x3 conv (padding=1, bias=False) + GroupNorm(1, Cout) [+ GELU].
    #   x_cf:  [Cin, HW]                   (HW = H*W, lane-dense)
    #   w_ref: (9, Cout, Cin)              w_ref[k] == torch_w[:, :, k//3, k%3]
    #   gn_ref:(2, Cout, 1)                [gamma; beta]
    # Each tap k = (dy, dx): shifted activation = static lane slice of a zero-padded copy,
    # horizontal wrap killed by a per-dx column mask; then a tiny MXU matmul.
    cin, HW = x_cf.shape
    cout = w_ref.shape[1]
    pad = jnp.zeros((cin, W + 1), F32)
    xpad = jnp.concatenate([pad, x_cf, pad], axis=1)        # [Cin, HW + 2W + 2]

    acc = jnp.zeros((cout, HW), F32)
    for k in range(9):
        dy, dx = k // 3 - 1, k % 3 - 1
        if dy == 0 and dx == 0:
            xs = x_cf                                        # center tap: no shift needed
        else:
            off = dy * W + dx
            xs = xpad[:, W + 1 + off: W + 1 + off + HW]      # xs[:, p] = x[:, p+off] or 0
            if dx != 0:
                xs = xs * cmask_ref[dx + 1]                  # kill horizontal wraparound
        acc = acc + jnp.dot(w_ref[k], xs, preferred_element_type=F32)

    # GroupNorm(num_groups=1): normalize over all (C, H, W) elements of the sample.
    mu = jnp.mean(acc)
    var = jnp.mean((acc - mu) ** 2)
    y = (acc - mu) * jax.lax.rsqrt(var + EPS)
    y = y * gn_ref[0] + gn_ref[1]                            # per-channel affine [Cout,1]
    return _gelu(y) if apply_gelu else y


# ------------------------------ fused DownBlock kernel ------------------------------
def _down_block_kernel(x_ref, t_ref, cmask_ref, psel_ref,
                       w1_ref, gn1_ref, w2_ref, gn2_ref,
                       w3_ref, gn3_ref, w4_ref, gn4_ref,
                       tw_ref, tb_ref,
                       ln1_ref, wqkv_ref, bqkv_ref, wo_ref, bo_ref,
                       ln2_ref, ffw_ref, ffb_ref,
                       y_ref, skip_ref,
                       *, H, W, num_heads):
    HW = H * W
    x = x_ref[0].astype(F32)                                 # [Cin, HW] channels-first

    conv = functools.partial(_conv3x3_gn_cf, cmask_ref=cmask_ref, W=W)

    # ---- DoubleConv(in, in, residual=True) ----
    h1 = conv(x, w1_ref, gn1_ref, apply_gelu=True)
    h2 = conv(h1, w2_ref, gn2_ref, apply_gelu=False)
    r = _gelu(x + h2)                                        # F.gelu(x + dc(x))

    # ---- DoubleConv(in, out) ----
    h3 = conv(r, w3_ref, gn3_ref, apply_gelu=True)
    x_skip = conv(h3, w4_ref, gn4_ref, apply_gelu=False)     # [Cout, HW]
    skip_ref[0] = x_skip.astype(skip_ref.dtype)              # lane-dense (Cout, HW) store

    # ---- MaxPool2d(2): max over {p, p+1, p+W, p+W+1}; select 2x2-window corners ----
    Cout = x_skip.shape[0]
    zpad = jnp.zeros((Cout, W + 1), F32)
    xsp = jnp.concatenate([x_skip, zpad], axis=1)            # [Cout, HW + W + 1]
    m = jnp.maximum(
        jnp.maximum(x_skip, xsp[:, 1:1 + HW]),
        jnp.maximum(xsp[:, W:W + HW], xsp[:, W + 1:W + 1 + HW]))
    # token-major pooled activations [N, Cout] via the corner-select matmul
    xd = jax.lax.dot_general(psel_ref[...], m, (((1,), (1,)), ((), ())),
                             preferred_element_type=F32)

    # ---- time embedding: Linear(SiLU(t)) ----
    tt = t_ref[0].astype(F32)                                # [1, T]
    tt = tt * jax.nn.sigmoid(tt)
    temb = jnp.dot(tt, tw_ref[...], preferred_element_type=F32) + tb_ref[...]   # [1, Cout]

    # ---- MultiHeadSelfAttention(embed_dim=Cout) on (pooled + t_emb) ----
    C = xd.shape[1]
    hd = C // num_heads
    x_in = xd + temb                                         # [N, C]
    x_ln = _layer_norm(x_in, ln1_ref[0], ln1_ref[1])

    q = jnp.dot(x_ln, wqkv_ref[0], preferred_element_type=F32) + bqkv_ref[0]
    k = jnp.dot(x_ln, wqkv_ref[1], preferred_element_type=F32) + bqkv_ref[1]
    v = jnp.dot(x_ln, wqkv_ref[2], preferred_element_type=F32) + bqkv_ref[2]
    q = q * (1.0 / math.sqrt(hd))            # fold softmax scale into q (N*hd, not N*N)

    lane = jax.lax.broadcasted_iota(jnp.int32, (1, C), 1)
    ctx = jnp.zeros_like(x_ln)
    for h in range(num_heads):
        # heads occupy disjoint lane ranges -> mask instead of slicing head_dim=2 blocks
        hmask = jnp.where((lane >= h * hd) & (lane < (h + 1) * hd), 1.0, 0.0)
        s = jax.lax.dot_general(q * hmask, k, (((1,), (1,)), ((), ())),
                                preferred_element_type=F32)   # [N, N]
        s = s - jnp.max(s, axis=-1, keepdims=True)
        pexp = jnp.exp(s)
        pexp = pexp * pl.reciprocal(jnp.sum(pexp, axis=-1, keepdims=True), approx=True)
        ctx = ctx + jnp.dot(pexp, v * hmask, preferred_element_type=F32)  # disjoint lanes
    attn = jnp.dot(ctx, wo_ref[...], preferred_element_type=F32) + bo_ref[...]

    x_attn = attn + x_in                                     # residual 1
    g = _layer_norm(x_attn, ln2_ref[0], ln2_ref[1])
    g = _gelu(jnp.dot(g, ffw_ref[0], preferred_element_type=F32) + ffb_ref[0])
    ff = jnp.dot(g, ffw_ref[1], preferred_element_type=F32) + ffb_ref[1]
    y = ff + x_attn                                          # residual 2

    y_ref[0] = jnp.transpose(y).astype(y_ref.dtype)          # (Cout, N) channels-first


# ------------------------------ wrapper ------------------------------
def down_block_forward(x_nchw, t, p, *, num_heads=4):
    # x_nchw: [B, Cin, H, W] (PyTorch NCHW), t: [B, t_emb_dim]
    B, Cin, H, W = x_nchw.shape
    Cout = p['dc2_w1'].shape[1]
    T = t.shape[1]
    assert H % 2 == 0 and W % 2 == 0
    HW, N = H * W, (H // 2) * (W // 2)

    # natural NCHW layout -> no wrapper-side transpose, only free reshapes
    x3 = x_nchw.reshape(B, Cin, HW).astype(F32)
    t3 = t.reshape(B, 1, T).astype(F32)

    # tiny host-built geometry constants (constant index_map => single DMA, never recopied)
    col = np.arange(HW) % W
    cmask = np.stack([(col >= 1), np.ones(HW, dtype=bool), (col < W - 1)], axis=0)
    cmask = jnp.asarray(cmask.astype(np.float32).reshape(3, 1, HW))
    ridx = np.arange(N)
    corner = 2 * (ridx // (W // 2)) * W + 2 * (ridx % (W // 2))
    psel_np = np.zeros((N, HW), np.float32)
    psel_np[ridx, corner] = 1.0
    psel = jnp.asarray(psel_np)

    weights = [
        p['dc1_w1'], p['dc1_n1'], p['dc1_w2'], p['dc1_n2'],
        p['dc2_w1'], p['dc2_n1'], p['dc2_w2'], p['dc2_n2'],
        p['t_w'], p['t_b'],
        p['ln1'], p['w_qkv'], p['b_qkv'], p['w_o'], p['b_o'],
        p['ln2'], p['ff_w'], p['ff_b'],
    ]

    def per_b(shape):
        r = len(shape)
        return pl.BlockSpec((1,) + tuple(shape[1:]), lambda b, _r=r: (b,) + (0,) * (_r - 1))

    def full(arr):
        r = arr.ndim
        return pl.BlockSpec(arr.shape, lambda b, _r=r: (0,) * _r)

    in_specs = ([per_b(x3.shape), per_b(t3.shape), full(cmask), full(psel)]
                + [full(wt) for wt in weights])
    out_specs = (
        pl.BlockSpec((1, Cout, N), lambda b: (b, 0, 0)),
        pl.BlockSpec((1, Cout, HW), lambda b: (b, 0, 0)),
    )
    out_shape = (
        jax.ShapeDtypeStruct((B, Cout, N), F32),
        jax.ShapeDtypeStruct((B, Cout, HW), F32),
    )

    kernel = functools.partial(_down_block_kernel, H=H, W=W, num_heads=num_heads)
    y_cf, skip_cf = pl.pallas_call(
        kernel,
        grid=(B,),
        in_specs=in_specs,
        out_specs=out_specs,
        out_shape=out_shape,
        compiler_params=pltpu.CompilerParams(dimension_semantics=("parallel",)),
    )(x3, t3, cmask, psel, *weights)

    # outputs are already channels-first row-major -> free reshapes to PyTorch NCHW
    y = y_cf.reshape(B, Cout, H // 2, W // 2)
    x_skip = skip_cf.reshape(B, Cout, H, W)
    return y, x_skip


# ------------------------------ parameter init ------------------------------
def init_params(key, cin, cout, t_dim, num_heads=4):
    ks = jax.random.split(key, 11)

    def w(k, shape, scale=0.1):
        return jax.random.normal(k, shape, F32) * scale

    def gn_affine(c):   # (2, C, 1): [gamma; beta], channels on the sublane axis
        return jnp.concatenate([jnp.ones((1, c, 1), F32), jnp.zeros((1, c, 1), F32)], 0)

    def ln_affine(c):   # (2, 1, C): [gamma; beta]
        return jnp.concatenate([jnp.ones((1, 1, c), F32), jnp.zeros((1, 1, c), F32)], 0)

    return {
        # DoubleConv(in, in, residual=True): conv(bias=False), GN(1), GELU, conv, GN(1)
        # conv weights stored as (9, Cout, Cin) == torch_w[:, :, ky, kx] per tap
        'dc1_w1': w(ks[0], (9, cin, cin)),   'dc1_n1': gn_affine(cin),
        'dc1_w2': w(ks[1], (9, cin, cin)),   'dc1_n2': gn_affine(cin),
        # DoubleConv(in, out)
        'dc2_w1': w(ks[2], (9, cout, cin)),  'dc2_n1': gn_affine(cout),
        'dc2_w2': w(ks[3], (9, cout, cout)), 'dc2_n2': gn_affine(cout),
        # t_linear: SiLU -> Linear(t_dim, out)
        't_w': w(ks[4], (t_dim, cout)), 't_b': w(ks[5], (1, cout)),
        # MultiHeadSelfAttention(embed_dim=out), 4 heads (weights in x@W form)
        'ln1': ln_affine(cout),
        'w_qkv': w(ks[6], (3, cout, cout)), 'b_qkv': w(ks[7], (3, 1, cout)),
        'w_o': w(ks[8], (cout, cout)), 'b_o': jnp.zeros((1, cout), F32),
        'ln2': ln_affine(cout),
        'ff_w': w(ks[9], (2, cout, cout)), 'ff_b': w(ks[10], (2, 1, cout)),
    }


# ------------------------------------ main ------------------------------------
if __name__ == "__main__":
    B, Cin, Cout, H, W, T_DIM = 2, 4, 8, 16, 16, 32
    key = jax.random.PRNGKey(0)
    kx, kt, kp = jax.random.split(key, 3)

    x = jax.random.normal(kx, (B, Cin, H, W), F32)   # NCHW like PyTorch
    t = jax.random.normal(kt, (B, T_DIM), F32)
    params = init_params(kp, Cin, Cout, T_DIM)

    y, x_skip = down_block_forward(x, t, params)
    jax.block_until_ready((y, x_skip))

    assert y.shape == (B, Cout, H // 2, W // 2)
    assert x_skip.shape == (B, Cout, H, W)
    assert bool(jnp.all(jnp.isfinite(y))) and bool(jnp.all(jnp.isfinite(x_skip)))
    print("KERNEL_OK")
</pallas_src>

<mosaic_0001>
module attributes {stable_mosaic.version = 11 : i64} {
  func.func @_down_block_kernel(%arg0: i32, %arg1: memref<1x4x256xf32, #tpu.memory_space<vmem>>, %arg2: memref<1x1x32xf32, #tpu.memory_space<vmem>>, %arg3: memref<3x1x256xf32, #tpu.memory_space<vmem>>, %arg4: memref<64x256xf32, #tpu.memory_space<vmem>>, %arg5: memref<9x4x4xf32, #tpu.memory_space<vmem>>, %arg6: memref<2x4x1xf32, #tpu.memory_space<vmem>>, %arg7: memref<9x4x4xf32, #tpu.memory_space<vmem>>, %arg8: memref<2x4x1xf32, #tpu.memory_space<vmem>>, %arg9: memref<9x8x4xf32, #tpu.memory_space<vmem>>, %arg10: memref<2x8x1xf32, #tpu.memory_space<vmem>>, %arg11: memref<9x8x8xf32, #tpu.memory_space<vmem>>, %arg12: memref<2x8x1xf32, #tpu.memory_space<vmem>>, %arg13: memref<32x8xf32, #tpu.memory_space<vmem>>, %arg14: memref<1x8xf32, #tpu.memory_space<vmem>>, %arg15: memref<2x1x8xf32, #tpu.memory_space<vmem>>, %arg16: memref<3x8x8xf32, #tpu.memory_space<vmem>>, %arg17: memref<3x1x8xf32, #tpu.memory_space<vmem>>, %arg18: memref<8x8xf32, #tpu.memory_space<vmem>>, %arg19: memref<1x8xf32, #tpu.memory_space<vmem>>, %arg20: memref<2x1x8xf32, #tpu.memory_space<vmem>>, %arg21: memref<2x8x8xf32, #tpu.memory_space<vmem>>, %arg22: memref<2x1x8xf32, #tpu.memory_space<vmem>>, %arg23: memref<1x8x64xf32, #tpu.memory_space<vmem>>, %arg24: memref<1x8x256xf32, #tpu.memory_space<vmem>>) attributes {dimension_semantics = [#tpu.dimension_semantics<parallel>], iteration_bounds = array<i64: 2>, scalar_prefetch = 0 : i64, scratch_operands = 0 : i64, tpu.core_type = #tpu.core_type<tc>, window_params = [{transform_indices = @transform_0, window_bounds = array<i64: 1, 4, 256>}, {transform_indices = @transform_1, window_bounds = array<i64: 1, 1, 32>}, {pipeline_mode = #tpu.pipeline_mode<synchronous>, transform_indices = @transform_2, window_bounds = array<i64: 3, 1, 256>}, {pipeline_mode = #tpu.pipeline_mode<synchronous>, transform_indices = @transform_3, window_bounds = array<i64: 64, 256>}, {pipeline_mode = #tpu.pipeline_mode<synchronous>, transform_indices = @transform_4, window_bounds = array<i64: 9, 4, 4>}, {pipeline_mode = #tpu.pipeline_mode<synchronous>, transform_indices = @transform_5, window_bounds = array<i64: 2, 4, 1>}, {pipeline_mode = #tpu.pipeline_mode<synchronous>, transform_indices = @transform_6, window_bounds = array<i64: 9, 4, 4>}, {pipeline_mode = #tpu.pipeline_mode<synchronous>, transform_indices = @transform_7, window_bounds = array<i64: 2, 4, 1>}, {pipeline_mode = #tpu.pipeline_mode<synchronous>, transform_indices = @transform_8, window_bounds = array<i64: 9, 8, 4>}, {pipeline_mode = #tpu.pipeline_mode<synchronous>, transform_indices = @transform_9, window_bounds = array<i64: 2, 8, 1>}, {pipeline_mode = #tpu.pipeline_mode<synchronous>, transform_indices = @transform_10, window_bounds = array<i64: 9, 8, 8>}, {pipeline_mode = #tpu.pipeline_mode<synchronous>, transform_indices = @transform_11, window_bounds = array<i64: 2, 8, 1>}, {pipeline_mode = #tpu.pipeline_mode<synchronous>, transform_indices = @transform_12, window_bounds = array<i64: 32, 8>}, {pipeline_mode = #tpu.pipeline_mode<synchronous>, transform_indices = @transform_13, window_bounds = array<i64: 1, 8>}, {pipeline_mode = #tpu.pipeline_mode<synchronous>, transform_indices = @transform_14, window_bounds = array<i64: 2, 1, 8>}, {pipeline_mode = #tpu.pipeline_mode<synchronous>, transform_indices = @transform_15, window_bounds = array<i64: 3, 8, 8>}, {pipeline_mode = #tpu.pipeline_mode<synchronous>, transform_indices = @transform_16, window_bounds = array<i64: 3, 1, 8>}, {pipeline_mode = #tpu.pipeline_mode<synchronous>, transform_indices = @transform_17, window_bounds = array<i64: 8, 8>}, {pipeline_mode = #tpu.pipeline_mode<synchronous>, transform_indices = @transform_18, window_bounds = array<i64: 1, 8>}, {pipeline_mode = #tpu.pipeline_mode<synchronous>, transform_indices = @transform_19, window_bounds = array<i64: 2, 1, 8>}, {pipeline_mode = #tpu.pipeline_mode<synchronous>, transform_indices = @transform_20, window_bounds = array<i64: 2, 8, 8>}, {pipeline_mode = #tpu.pipeline_mode<synchronous>, transform_indices = @transform_21, window_bounds = array<i64: 2, 1, 8>}, {transform_indices = @transform_22, window_bounds = array<i64: 1, 8, 64>}, {transform_indices = @transform_23, window_bounds = array<i64: 1, 8, 256>}]} {
    %c0 = arith.constant 0 : index
    %c0_0 = arith.constant 0 : index
    %c0_1 = arith.constant 0 : index
    %0 = vector.load %arg1[%c0, %c0_0, %c0_1] : memref<1x4x256xf32, #tpu.memory_space<vmem>>, vector<1x4x256xf32>
    %1 = vector.shape_cast %0 : vector<1x4x256xf32> to vector<4x256xf32>
    %cst = arith.constant 0.000000e+00 : f32
    %2 = vector.broadcast %cst : f32 to vector<4x17xf32>
    %3 = tpu.concatenate %2, %1, %2 in 1 : vector<4x17xf32>, vector<4x256xf32>, vector<4x17xf32> -> vector<4x290xf32>
    %cst_2 = arith.constant 0.000000e+00 : f32
    %4 = vector.broadcast %cst_2 : f32 to vector<4x256xf32>
    %5 = vector.extract_strided_slice %3 {offsets = [0, 0], sizes = [4, 256], strides = [1, 1]} : vector<4x290xf32> to vector<4x256xf32>
    %c0_3 = arith.constant 0 : index
    %c0_4 = arith.constant 0 : index
    %c0_5 = arith.constant 0 : index
    %6 = vector.load %arg3[%c0_3, %c0_4, %c0_5] : memref<3x1x256xf32, #tpu.memory_space<vmem>>, vector<1x1x256xf32>
    %7 = vector.shape_cast %6 : vector<1x1x256xf32> to vector<1x256xf32>
    %8 = vector.broadcast %7 : vector<1x256xf32> to vector<4x256xf32>
    %9 = arith.mulf %5, %8 : vector<4x256xf32>
    %c0_6 = arith.constant 0 : index
    %c0_7 = arith.constant 0 : index
    %c0_8 = arith.constant 0 : index
    %10 = vector.load %arg5[%c0_6, %c0_7, %c0_8] : memref<9x4x4xf32, #tpu.memory_space<vmem>>, vector<1x4x4xf32>
    %11 = vector.shape_cast %10 : vector<1x4x4xf32> to vector<4x4xf32>
    %cst_9 = arith.constant dense<0.000000e+00> : vector<4x256xf32>
    %12 = tpu.matmul %11, %9, %cst_9 {dimension_numbers = #tpu.dot_dimension_numbers<[1], [0], [0], [1], [0, 0, 1, 1], [], []>} : vector<4x4xf32>, vector<4x256xf32>, vector<4x256xf32> -> vector<4x256xf32>
    %13 = arith.addf %4, %12 : vector<4x256xf32>
    %14 = vector.extract_strided_slice %3 {offsets = [0, 1], sizes = [4, 256], strides = [1, 1]} : vector<4x290xf32> to vector<4x256xf32>
    %c1 = arith.constant 1 : index
    %c0_10 = arith.constant 0 : index
    %c0_11 = arith.constant 0 : index
    %15 = vector.load %arg5[%c1, %c0_10, %c0_11] : memref<9x4x4xf32, #tpu.memory_space<vmem>>, vector<1x4x4xf32>
    %16 = vector.shape_cast %15 : vector<1x4x4xf32> to vector<4x4xf32>
    %cst_12 = arith.constant dense<0.000000e+00> : vector<4x256xf32>
    %17 = tpu.matmul %16, %14, %cst_12 {dimension_numbers = #tpu.dot_dimension_numbers<[1], [0], [0], [1], [0, 0, 1, 1], [], []>} : vector<4x4xf32>, vector<4x256xf32>, vector<4x256xf32> -> vector<4x256xf32>
    %18 = arith.addf %13, %17 : vector<4x256xf32>
    %19 = vector.extract_strided_slice %3 {offsets = [0, 2], sizes = [4, 256], strides = [1, 1]} : vector<4x290xf32> to vector<4x256xf32>
    %c2 = arith.constant 2 : index
    %c0_13 = arith.constant 0 : index
    %c0_14 = arith.constant 0 : index
    %20 = vector.load %arg3[%c2, %c0_13, %c0_14] : memref<3x1x256xf32, #tpu.memory_space<vmem>>, vector<1x1x256xf32>
    %21 = vector.shape_cast %20 : vector<1x1x256xf32> to vector<1x256xf32>
    %22 = vector.broadcast %21 : vector<1x256xf32> to vector<4x256xf32>
    %23 = arith.mulf %19, %22 : vector<4x256xf32>
    %c2_15 = arith.constant 2 : index
    %c0_16 = arith.constant 0 : index
    %c0_17 = arith.constant 0 : index
    %24 = vector.load %arg5[%c2_15, %c0_16, %c0_17] : memref<9x4x4xf32, #tpu.memory_space<vmem>>, vector<1x4x4xf32>
    %25 = vector.shape_cast %24 : vector<1x4x4xf32> to vector<4x4xf32>
    %cst_18 = arith.constant dense<0.000000e+00> : vector<4x256xf32>
    %26 = tpu.matmul %25, %23, %cst_18 {dimension_numbers = #tpu.dot_dimension_numbers<[1], [0], [0], [1], [0, 0, 1, 1], [], []>} : vector<4x4xf32>, vector<4x256xf32>, vector<4x256xf32> -> vector<4x256xf32>
    %27 = arith.addf %18, %26 : vector<4x256xf32>
    %28 = vector.extract_strided_slice %3 {offsets = [0, 16], sizes = [4, 256], strides = [1, 1]} : vector<4x290xf32> to vector<4x256xf32>
    %c0_19 = arith.constant 0 : index
    %c0_20 = arith.constant 0 : index
    %c0_21 = arith.constant 0 : index
    %29 = vector.load %arg3[%c0_19, %c0_20, %c0_21] : memref<3x1x256xf32, #tpu.memory_space<vmem>>, vector<1x1x256xf32>
    %30 = vector.shape_cast %29 : vector<1x1x256xf32> to vector<1x256xf32>
    %31 = vector.broadcast %30 : vector<1x256xf32> to vector<4x256xf32>
    %32 = arith.mulf %28, %31 : vector<4x256xf32>
    %c3 = arith.constant 3 : index
    %c0_22 = arith.constant 0 : index
    %c0_23 = arith.constant 0 : index
    %33 = vector.load %arg5[%c3, %c0_22, %c0_23] : memref<9x4x4xf32, #tpu.memory_space<vmem>>, vector<1x4x4xf32>
    %34 = vector.shape_cast %33 : vector<1x4x4xf32> to vector<4x4xf32>
    %cst_24 = arith.constant dense<0.000000e+00> : vector<4x256xf32>
    %35 = tpu.matmul %34, %32, %cst_24 {dimension_numbers = #tpu.dot_dimension_numbers<[1], [0], [0], [1], [0, 0, 1, 1], [], []>} : vector<4x4xf32>, vector<4x256xf32>, vector<4x256xf32> -> vector<4x256xf32>
    %36 = arith.addf %27, %35 : vector<4x256xf32>
    %c4 = arith.constant 4 : index
    %c0_25 = arith.constant 0 : index
    %c0_26 = arith.constant 0 : index
    %37 = vector.load %arg5[%c4, %c0_25, %c0_26] : memref<9x4x4xf32, #tpu.memory_space<vmem>>, vector<1x4x4xf32>
    %38 = vector.shape_cast %37 : vector<1x4x4xf32> to vector<4x4xf32>
    %cst_27 = arith.constant dense<0.000000e+00> : vector<4x256xf32>
    %39 = tpu.matmul %38, %1, %cst_27 {dimension_numbers = #tpu.dot_dimension_numbers<[1], [0], [0], [1], [0, 0, 1, 1], [], []>} : vector<4x4xf32>, vector<4x256xf32>, vector<4x256xf32> -> vector<4x256xf32>
    %40 = arith.addf %36, %39 : vector<4x256xf32>
    %41 = vector.extract_strided_slice %3 {offsets = [0, 18], sizes = [4, 256], strides = [1, 1]} : vector<4x290xf32> to vector<4x256xf32>
    %c2_28 = arith.constant 2 : index
    %c0_29 = arith.constant 0 : index
    %c0_30 = arith.constant 0 : index
    %42 = vector.load %arg3[%c2_28, %c0_29, %c0_30] : memref<3x1x256xf32, #tpu.memory_space<vmem>>, vector<1x1x256xf32>
    %43 = vector.shape_cast %42 : vector<1x1x256xf32> to vector<1x256xf32>
    %44 = vector.broadcast %43 : vector<1x256xf32> to vector<4x256xf32>
    %45 = arith.mulf %41, %44 : vector<4x256xf32>
    %c5 = arith.constant 5 : index
    %c0_31 = arith.constant 0 : index
    %c0_32 = arith.constant 0 : index
    %46 = vector.load %arg5[%c5, %c0_31, %c0_32] : memref<9x4x4xf32, #tpu.memory_space<vmem>>, vector<1x4x4xf32>
    %47 = vector.shape_cast %46 : vector<1x4x4xf32> to vector<4x4xf32>
    %cst_33 = arith.constant dense<0.000000e+00> : vector<4x256xf32>
    %48 = tpu.matmul %47, %45, %cst_33 {dimension_numbers = #tpu.dot_dimension_numbers<[1], [0], [0], [1], [0, 0, 1, 1], [], []>} : vector<4x4xf32>, vector<4x256xf32>, vector<4x256xf32> -> vector<4x256xf32>
    %49 = arith.addf %40, %48 : vector<4x256xf32>
    %50 = vector.extract_strided_slice %3 {offsets = [0, 32], sizes = [4, 256], strides = [1, 1]} : vector<4x290xf32> to vector<4x256xf32>
    %c0_34 = arith.constant 0 : index
    %c0_35 = arith.constant 0 : index
    %c0_36 = arith.constant 0 : index
    %51 = vector.load %arg3[%c0_34, %c0_35, %c0_36] : memref<3x1x256xf32, #tpu.memory_space<vmem>>, vector<1x1x256xf32>
    %52 = vector.shape_cast %51 : vector<1x1x256xf32> to vector<1x256xf32>
    %53 = vector.broadcast %52 : vector<1x256xf32> to vector<4x256xf32>
    %54 = arith.mulf %50, %53 : vector<4x256xf32>
    %c6 = arith.constant 6 : index
    %c0_37 = arith.constant 0 : index
    %c0_38 = arith.constant 0 : index
    %55 = vector.load %arg5[%c6, %c0_37, %c0_38] : memref<9x4x4xf32, #tpu.memory_space<vmem>>, vector<1x4x4xf32>
    %56 = vector.shape_cast %55 : vector<1x4x4xf32> to vector<4x4xf32>
    %cst_39 = arith.constant dense<0.000000e+00> : vector<4x256xf32>
    %57 = tpu.matmul %56, %54, %cst_39 {dimension_numbers = #tpu.dot_dimension_numbers<[1], [0], [0], [1], [0, 0, 1, 1], [], []>} : vector<4x4xf32>, vector<4x256xf32>, vector<4x256xf32> -> vector<4x256xf32>
    %58 = arith.addf %49, %57 : vector<4x256xf32>
    %59 = vector.extract_strided_slice %3 {offsets = [0, 33], sizes = [4, 256], strides = [1, 1]} : vector<4x290xf32> to vector<4x256xf32>
    %c7 = arith.constant 7 : index
    %c0_40 = arith.constant 0 : index
    %c0_41 = arith.constant 0 : index
    %60 = vector.load %arg5[%c7, %c0_40, %c0_41] : memref<9x4x4xf32, #tpu.memory_space<vmem>>, vector<1x4x4xf32>
    %61 = vector.shape_cast %60 : vector<1x4x4xf32> to vector<4x4xf32>
    %cst_42 = arith.constant dense<0.000000e+00> : vector<4x256xf32>
    %62 = tpu.matmul %61, %59, %cst_42 {dimension_numbers = #tpu.dot_dimension_numbers<[1], [0], [0], [1], [0, 0, 1, 1], [], []>} : vector<4x4xf32>, vector<4x256xf32>, vector<4x256xf32> -> vector<4x256xf32>
    %63 = arith.addf %58, %62 : vector<4x256xf32>
    %64 = vector.extract_strided_slice %3 {offsets = [0, 34], sizes = [4, 256], strides = [1, 1]} : vector<4x290xf32> to vector<4x256xf32>
    %c2_43 = arith.constant 2 : index
    %c0_44 = arith.constant 0 : index
    %c0_45 = arith.constant 0 : index
    %65 = vector.load %arg3[%c2_43, %c0_44, %c0_45] : memref<3x1x256xf32, #tpu.memory_space<vmem>>, vector<1x1x256xf32>
    %66 = vector.shape_cast %65 : vector<1x1x256xf32> to vector<1x256xf32>
    %67 = vector.broadcast %66 : vector<1x256xf32> to vector<4x256xf32>
    %68 = arith.mulf %64, %67 : vector<4x256xf32>
    %c8 = arith.constant 8 : index
    %c0_46 = arith.constant 0 : index
    %c0_47 = arith.constant 0 : index
    %69 = vector.load %arg5[%c8, %c0_46, %c0_47] : memref<9x4x4xf32, #tpu.memory_space<vmem>>, vector<1x4x4xf32>
    %70 = vector.shape_cast %69 : vector<1x4x4xf32> to vector<4x4xf32>
    %cst_48 = arith.constant dense<0.000000e+00> : vector<4x256xf32>
    %71 = tpu.matmul %70, %68, %cst_48 {dimension_numbers = #tpu.dot_dimension_numbers<[1], [0], [0], [1], [0, 0, 1, 1], [], []>} : vector<4x4xf32>, vector<4x256xf32>, vector<4x256xf32> -> vector<4x256xf32>
    %72 = arith.addf %63, %71 : vector<4x256xf32>
    %73 = vector.shape_cast %72 : vector<4x256xf32> to vector<1x4x256xf32>
    %cst_49 = arith.constant dense<0.000000e+00> : vector<1xf32>
    %74 = vector.multi_reduction <add>, %73, %cst_49 [1, 2] : vector<1x4x256xf32> to vector<1xf32>
    %75 = vector.shape_cast %74 : vector<1xf32> to vector<1x1x1xf32>
    %76 = vector.extract %75[0, 0, 0] : f32 from vector<1x1x1xf32>
    %cst_50 = arith.constant 1.024000e+03 : f32
    %77 = arith.divf %76, %cst_50 : f32
    %78 = vector.broadcast %77 : f32 to vector<4x256xf32>
    %79 = arith.subf %72, %78 : vector<4x256xf32>
    %80 = arith.mulf %79, %79 : vector<4x256xf32>
    %81 = vector.shape_cast %80 : vector<4x256xf32> to vector<1x4x256xf32>
    %cst_51 = arith.constant dense<0.000000e+00> : vector<1xf32>
    %82 = vector.multi_reduction <add>, %81, %cst_51 [1, 2] : vector<1x4x256xf32> to vector<1xf32>
    %83 = vector.shape_cast %82 : vector<1xf32> to vector<1x1x1xf32>
    %84 = vector.extract %83[0, 0, 0] : f32 from vector<1x1x1xf32>
    %cst_52 = arith.constant 1.024000e+03 : f32
    %85 = arith.divf %84, %cst_52 : f32
    %86 = vector.broadcast %77 : f32 to vector<4x256xf32>
    %87 = arith.subf %72, %86 : vector<4x256xf32>
    %cst_53 = arith.constant 9.99999974E-6 : f32
    %88 = arith.addf %85, %cst_53 : f32
    %89 = math.rsqrt %88 : f32
    %90 = vector.broadcast %89 : f32 to vector<4x256xf32>
    %91 = arith.mulf %87, %90 : vector<4x256xf32>
    %c0_54 = arith.constant 0 : index
    %c0_55 = arith.constant 0 : index
    %c0_56 = arith.constant 0 : index
    %92 = vector.load %arg6[%c0_54, %c0_55, %c0_56] : memref<2x4x1xf32, #tpu.memory_space<vmem>>, vector<1x4x1xf32>
    %93 = vector.shape_cast %92 : vector<1x4x1xf32> to vector<4x1xf32>
    %94 = vector.broadcast %93 : vector<4x1xf32> to vector<4x256xf32>
    %95 = arith.mulf %91, %94 : vector<4x256xf32>
    %c1_57 = arith.constant 1 : index
    %c0_58 = arith.constant 0 : index
    %c0_59 = arith.constant 0 : index
    %96 = vector.load %arg6[%c1_57, %c0_58, %c0_59] : memref<2x4x1xf32, #tpu.memory_space<vmem>>, vector<1x4x1xf32>
    %97 = vector.shape_cast %96 : vector<1x4x1xf32> to vector<4x1xf32>
    %98 = vector.broadcast %97 : vector<4x1xf32> to vector<4x256xf32>
    %99 = arith.addf %95, %98 : vector<4x256xf32>
    %cst_60 = arith.constant 5.000000e-01 : f32
    %100 = vector.broadcast %cst_60 : f32 to vector<4x256xf32>
    %101 = arith.mulf %100, %99 : vector<4x256xf32>
    %cst_61 = arith.constant 4.471500e-02 : f32
    %102 = vector.broadcast %cst_61 : f32 to vector<4x256xf32>
    %103 = arith.mulf %102, %99 : vector<4x256xf32>
    %104 = arith.mulf %103, %99 : vector<4x256xf32>
    %105 = arith.mulf %104, %99 : vector<4x256xf32>
    %106 = arith.addf %99, %105 : vector<4x256xf32>
    %cst_62 = arith.constant 0.797884583 : f32
    %107 = vector.broadcast %cst_62 : f32 to vector<4x256xf32>
    %108 = arith.mulf %107, %106 : vector<4x256xf32>
    %109 = math.tanh %108 : vector<4x256xf32>
    %cst_63 = arith.constant 1.000000e+00 : f32
    %110 = vector.broadcast %cst_63 : f32 to vector<4x256xf32>
    %111 = arith.addf %110, %109 : vector<4x256xf32>
    %112 = arith.mulf %101, %111 : vector<4x256xf32>
    %cst_64 = arith.constant 0.000000e+00 : f32
    %113 = vector.broadcast %cst_64 : f32 to vector<4x17xf32>
    %114 = tpu.concatenate %113, %112, %113 in 1 : vector<4x17xf32>, vector<4x256xf32>, vector<4x17xf32> -> vector<4x290xf32>
    %cst_65 = arith.constant 0.000000e+00 : f32
    %115 = vector.broadcast %cst_65 : f32 to vector<4x256xf32>
    %116 = vector.extract_strided_slice %114 {offsets = [0, 0], sizes = [4, 256], strides = [1, 1]} : vector<4x290xf32> to vector<4x256xf32>
    %c0_66 = arith.constant 0 : index
    %c0_67 = arith.constant 0 : index
    %c0_68 = arith.constant 0 : index
    %117 = vector.load %arg3[%c0_66, %c0_67, %c0_68] : memref<3x1x256xf32, #tpu.memory_space<vmem>>, vector<1x1x256xf32>
    %118 = vector.shape_cast %117 : vector<1x1x256xf32> to vector<1x256xf32>
    %119 = vector.broadcast %118 : vector<1x256xf32> to vector<4x256xf32>
    %120 = arith.mulf %116, %119 : vector<4x256xf32>
    %c0_69 = arith.constant 0 : index
    %c0_70 = arith.constant 0 : index
    %c0_71 = arith.constant 0 : index
    %121 = vector.load %arg7[%c0_69, %c0_70, %c0_71] : memref<9x4x4xf32, #tpu.memory_space<vmem>>, vector<1x4x4xf32>
    %122 = vector.shape_cast %121 : vector<1x4x4xf32> to vector<4x4xf32>
    %cst_72 = arith.constant dense<0.000000e+00> : vector<4x256xf32>
    %123 = tpu.matmul %122, %120, %cst_72 {dimension_numbers = #tpu.dot_dimension_numbers<[1], [0], [0], [1], [0, 0, 1, 1], [], []>} : vector<4x4xf32>, vector<4x256xf32>, vector<4x256xf32> -> vector<4x256xf32>
    %124 = arith.addf %115, %123 : vector<4x256xf32>
    %125 = vector.extract_strided_slice %114 {offsets = [0, 1], sizes = [4, 256], strides = [1, 1]} : vector<4x290xf32> to vector<4x256xf32>
    %c1_73 = arith.constant 1 : index
    %c0_74 = arith.constant 0 : index
    %c0_75 = arith.constant 0 : index
    %126 = vector.load %arg7[%c1_73, %c0_74, %c0_75] : memref<9x4x4xf32, #tpu.memory_space<vmem>>, vector<1x4x4xf32>
    %127 = vector.shape_cast %126 : vector<1x4x4xf32> to vector<4x4xf32>
    %cst_76 = arith.constant dense<0.000000e+00> : vector<4x256xf32>
    %128 = tpu.matmul %127, %125, %cst_76 {dimension_numbers = #tpu.dot_dimension_numbers<[1], [0], [0], [1], [0, 0, 1, 1], [], []>} : vector<4x4xf32>, vector<4x256xf32>, vector<4x256xf32> -> vector<4x256xf32>
    %129 = arith.addf %124, %128 : vector<4x256xf32>
    %130 = vector.extract_strided_slice %114 {offsets = [0, 2], sizes = [4, 256], strides = [1, 1]} : vector<4x290xf32> to vector<4x256xf32>
    %c2_77 = arith.constant 2 : index
    %c0_78 = arith.constant 0 : index
    %c0_79 = arith.constant 0 : index
    %131 = vector.load %arg3[%c2_77, %c0_78, %c0_79] : memref<3x1x256xf32, #tpu.memory_space<vmem>>, vector<1x1x256xf32>
    %132 = vector.shape_cast %131 : vector<1x1x256xf32> to vector<1x256xf32>
    %133 = vector.broadcast %132 : vector<1x256xf32> to vector<4x256xf32>
    %134 = arith.mulf %130, %133 : vector<4x256xf32>
    %c2_80 = arith.constant 2 : index
    %c0_81 = arith.constant 0 : index
    %c0_82 = arith.constant 0 : index
    %135 = vector.load %arg7[%c2_80, %c0_81, %c0_82] : memref<9x4x4xf32, #tpu.memory_space<vmem>>, vector<1x4x4xf32>
    %136 = vector.shape_cast %135 : vector<1x4x4xf32> to vector<4x4xf32>
    %cst_83 = arith.constant dense<0.000000e+00> : vector<4x256xf32>
    %137 = tpu.matmul %136, %134, %cst_83 {dimension_numbers = #tpu.dot_dimension_numbers<[1], [0], [0], [1], [0, 0, 1, 1], [], []>} : vector<4x4xf32>, vector<4x256xf32>, vector<4x256xf32> -> vector<4x256xf32>
    %138 = arith.addf %129, %137 : vector<4x256xf32>
    %139 = vector.extract_strided_slice %114 {offsets = [0, 16], sizes = [4, 256], strides = [1, 1]} : vector<4x290xf32> to vector<4x256xf32>
    %c0_84 = arith.constant 0 : index
    %c0_85 = arith.constant 0 : index
    %c0_86 = arith.constant 0 : index
    %140 = vector.load %arg3[%c0_84, %c0_85, %c0_86] : memref<3x1x256xf32, #tpu.memory_space<vmem>>, vector<1x1x256xf32>
    %141 = vector.shape_cast %140 : vector<1x1x256xf32> to vector<1x256xf32>
    %142 = vector.broadcast %141 : vector<1x256xf32> to vector<4x256xf32>
    %143 = arith.mulf %139, %142 : vector<4x256xf32>
    %c3_87 = arith.constant 3 : index
    %c0_88 = arith.constant 0 : index
    %c0_89 = arith.constant 0 : index
    %144 = vector.load %arg7[%c3_87, %c0_88, %c0_89] : memref<9x4x4xf32, #tpu.memory_space<vmem>>, vector<1x4x4xf32>
    %145 = vector.shape_cast %144 : vector<1x4x4xf32> to vector<4x4xf32>
    %cst_90 = arith.constant dense<0.000000e+00> : vector<4x256xf32>
    %146 = tpu.matmul %145, %143, %cst_90 {dimension_numbers = #tpu.dot_dimension_numbers<[1], [0], [0], [1], [0, 0, 1, 1], [], []>} : vector<4x4xf32>, vector<4x256xf32>, vector<4x256xf32> -> vector<4x256xf32>
    %147 = arith.addf %138, %146 : vector<4x256xf32>
    %c4_91 = arith.constant 4 : index
    %c0_92 = arith.constant 0 : index
    %c0_93 = arith.constant 0 : index
    %148 = vector.load %arg7[%c4_91, %c0_92, %c0_93] : memref<9x4x4xf32, #tpu.memory_space<vmem>>, vector<1x4x4xf32>
    %149 = vector.shape_cast %148 : vector<1x4x4xf32> to vector<4x4xf32>
    %cst_94 = arith.constant dense<0.000000e+00> : vector<4x256xf32>
    %150 = tpu.matmul %149, %112, %cst_94 {dimension_numbers = #tpu.dot_dimension_numbers<[1], [0], [0], [1], [0, 0, 1, 1], [], []>} : vector<4x4xf32>, vector<4x256xf32>, vector<4x256xf32> -> vector<4x256xf32>
    %151 = arith.addf %147, %150 : vector<4x256xf32>
    %152 = vector.extract_strided_slice %114 {offsets = [0, 18], sizes = [4, 256], strides = [1, 1]} : vector<4x290xf32> to vector<4x256xf32>
    %c2_95 = arith.constant 2 : index
    %c0_96 = arith.constant 0 : index
    %c0_97 = arith.constant 0 : index
    %153 = vector.load %arg3[%c2_95, %c0_96, %c0_97] : memref<3x1x256xf32, #tpu.memory_space<vmem>>, vector<1x1x256xf32>
    %154 = vector.shape_cast %153 : vector<1x1x256xf32> to vector<1x256xf32>
    %155 = vector.broadcast %154 : vector<1x256xf32> to vector<4x256xf32>
    %156 = arith.mulf %152, %155 : vector<4x256xf32>
    %c5_98 = arith.constant 5 : index
    %c0_99 = arith.constant 0 : index
    %c0_100 = arith.constant 0 : index
    %157 = vector.load %arg7[%c5_98, %c0_99, %c0_100] : memref<9x4x4xf32, #tpu.memory_space<vmem>>, vector<1x4x4xf32>
    %158 = vector.shape_cast %157 : vector<1x4x4xf32> to vector<4x4xf32>
    %cst_101 = arith.constant dense<0.000000e+00> : vector<4x256xf32>
    %159 = tpu.matmul %158, %156, %cst_101 {dimension_numbers = #tpu.dot_dimension_numbers<[1], [0], [0], [1], [0, 0, 1, 1], [], []>} : vector<4x4xf32>, vector<4x256xf32>, vector<4x256xf32> -> vector<4x256xf32>
    %160 = arith.addf %151, %159 : vector<4x256xf32>
    %161 = vector.extract_strided_slice %114 {offsets = [0, 32], sizes = [4, 256], strides = [1, 1]} : vector<4x290xf32> to vector<4x256xf32>
    %c0_102 = arith.constant 0 : index
    %c0_103 = arith.constant 0 : index
    %c0_104 = arith.constant 0 : index
    %162 = vector.load %arg3[%c0_102, %c0_103, %c0_104] : memref<3x1x256xf32, #tpu.memory_space<vmem>>, vector<1x1x256xf32>
    %163 = vector.shape_cast %162 : vector<1x1x256xf32> to vector<1x256xf32>
    %164 = vector.broadcast %163 : vector<1x256xf32> to vector<4x256xf32>
    %165 = arith.mulf %161, %164 : vector<4x256xf32>
    %c6_105 = arith.constant 6 : index
    %c0_106 = arith.constant 0 : index
    %c0_107 = arith.constant 0 : index
    %166 = vector.load %arg7[%c6_105, %c0_106, %c0_107] : memref<9x4x4xf32, #tpu.memory_space<vmem>>, vector<1x4x4xf32>
    %167 = vector.shape_cast %166 : vector<1x4x4xf32> to vector<4x4xf32>
    %cst_108 = arith.constant dense<0.000000e+00> : vector<4x256xf32>
    %168 = tpu.matmul %167, %165, %cst_108 {dimension_numbers = #tpu.dot_dimension_numbers<[1], [0], [0], [1], [0, 0, 1, 1], [], []>} : vector<4x4xf32>, vector<4x256xf32>, vector<4x256xf32> -> vector<4x256xf32>
    %169 = arith.addf %160, %168 : vector<4x256xf32>
    %170 = vector.extract_strided_slice %114 {offsets = [0, 33], sizes = [4, 256], strides = [1, 1]} : vector<4x290xf32> to vector<4x256xf32>
    %c7_109 = arith.constant 7 : index
    %c0_110 = arith.constant 0 : index
    %c0_111 = arith.constant 0 : index
    %171 = vector.load %arg7[%c7_109, %c0_110, %c0_111] : memref<9x4x4xf32, #tpu.memory_space<vmem>>, vector<1x4x4xf32>
    %172 = vector.shape_cast %171 : vector<1x4x4xf32> to vector<4x4xf32>
    %cst_112 = arith.constant dense<0.000000e+00> : vector<4x256xf32>
    %173 = tpu.matmul %172, %170, %cst_112 {dimension_numbers = #tpu.dot_dimension_numbers<[1], [0], [0], [1], [0, 0, 1, 1], [], []>} : vector<4x4xf32>, vector<4x256xf32>, vector<4x256xf32> -> vector<4x256xf32>
    %174 = arith.addf %169, %173 : vector<4x256xf32>
    %175 = vector.extract_strided_slice %114 {offsets = [0, 34], sizes = [4, 256], strides = [1, 1]} : vector<4x290xf32> to vector<4x256xf32>
    %c2_113 = arith.constant 2 : index
    %c0_114 = arith.constant 0 : index
    %c0_115 = arith.constant 0 : index
    %176 = vector.load %arg3[%c2_113, %c0_114, %c0_115] : memref<3x1x256xf32, #tpu.memory_space<vmem>>, vector<1x1x256xf32>
    %177 = vector.shape_cast %176 : vector<1x1x256xf32> to vector<1x256xf32>
    %178 = vector.broadcast %177 : vector<1x256xf32> to vector<4x256xf32>
    %179 = arith.mulf %175, %178 : vector<4x256xf32>
    %c8_116 = arith.constant 8 : index
    %c0_117 = arith.constant 0 : index
    %c0_118 = arith.constant 0 : index
    %180 = vector.load %arg7[%c8_116, %c0_117, %c0_118] : memref<9x4x4xf32, #tpu.memory_space<vmem>>, vector<1x4x4xf32>
    %181 = vector.shape_cast %180 : vector<1x4x4xf32> to vector<4x4xf32>
    %cst_119 = arith.constant dense<0.000000e+00> : vector<4x256xf32>
    %182 = tpu.matmul %181, %179, %cst_119 {dimension_numbers = #tpu.dot_dimension_numbers<[1], [0], [0], [1], [0, 0, 1, 1], [], []>} : vector<4x4xf32>, vector<4x256xf32>, vector<4x256xf32> -> vector<4x256xf32>
    %183 = arith.addf %174, %182 : vector<4x256xf32>
    %184 = vector.shape_cast %183 : vector<4x256xf32> to vector<1x4x256xf32>
    %cst_120 = arith.constant dense<0.000000e+00> : vector<1xf32>
    %185 = vector.multi_reduction <add>, %184, %cst_120 [1, 2] : vector<1x4x256xf32> to vector<1xf32>
    %186 = vector.shape_cast %185 : vector<1xf32> to vector<1x1x1xf32>
    %187 = vector.extract %186[0, 0, 0] : f32 from vector<1x1x1xf32>
    %cst_121 = arith.constant 1.024000e+03 : f32
    %188 = arith.divf %187, %cst_121 : f32
    %189 = vector.broadcast %188 : f32 to vector<4x256xf32>
    %190 = arith.subf %183, %189 : vector<4x256xf32>
    %191 = arith.mulf %190, %190 : vector<4x256xf32>
    %192 = vector.shape_cast %191 : vector<4x256xf32> to vector<1x4x256xf32>
    %cst_122 = arith.constant dense<0.000000e+00> : vector<1xf32>
    %193 = vector.multi_reduction <add>, %192, %cst_122 [1, 2] : vector<1x4x256xf32> to vector<1xf32>
    %194 = vector.shape_cast %193 : vector<1xf32> to vector<1x1x1xf32>
    %195 = vector.extract %194[0, 0, 0] : f32 from vector<1x1x1xf32>
    %cst_123 = arith.constant 1.024000e+03 : f32
    %196 = arith.divf %195, %cst_123 : f32
    %197 = vector.broadcast %188 : f32 to vector<4x256xf32>
    %198 = arith.subf %183, %197 : vector<4x256xf32>
    %cst_124 = arith.constant 9.99999974E-6 : f32
    %199 = arith.addf %196, %cst_124 : f32
    %200 = math.rsqrt %199 : f32
    %201 = vector.broadcast %200 : f32 to vector<4x256xf32>
    %202 = arith.mulf %198, %201 : vector<4x256xf32>
    %c0_125 = arith.constant 0 : index
    %c0_126 = arith.constant 0 : index
    %c0_127 = arith.constant 0 : index
    %203 = vector.load %arg8[%c0_125, %c0_126, %c0_127] : memref<2x4x1xf32, #tpu.memory_space<vmem>>, vector<1x4x1xf32>
    %204 = vector.shape_cast %203 : vector<1x4x1xf32> to vector<4x1xf32>
    %205 = vector.broadcast %204 : vector<4x1xf32> to vector<4x256xf32>
    %206 = arith.mulf %202, %205 : vector<4x256xf32>
    %c1_128 = arith.constant 1 : index
    %c0_129 = arith.constant 0 : index
    %c0_130 = arith.constant 0 : index
    %207 = vector.load %arg8[%c1_128, %c0_129, %c0_130] : memref<2x4x1xf32, #tpu.memory_space<vmem>>, vector<1x4x1xf32>
    %208 = vector.shape_cast %207 : vector<1x4x1xf32> to vector<4x1xf32>
    %209 = vector.broadcast %208 : vector<4x1xf32> to vector<4x256xf32>
    %210 = arith.addf %206, %209 : vector<4x256xf32>
    %211 = arith.addf %1, %210 : vector<4x256xf32>
    %cst_131 = arith.constant 5.000000e-01 : f32
    %212 = vector.broadcast %cst_131 : f32 to vector<4x256xf32>
    %213 = arith.mulf %212, %211 : vector<4x256xf32>
    %cst_132 = arith.constant 4.471500e-02 : f32
    %214 = vector.broadcast %cst_132 : f32 to vector<4x256xf32>
    %215 = arith.mulf %214, %211 : vector<4x256xf32>
    %216 = arith.mulf %215, %211 : vector<4x256xf32>
    %217 = arith.mulf %216, %211 : vector<4x256xf32>
    %218 = arith.addf %211, %217 : vector<4x256xf32>
    %cst_133 = arith.constant 0.797884583 : f32
    %219 = vector.broadcast %cst_133 : f32 to vector<4x256xf32>
    %220 = arith.mulf %219, %218 : vector<4x256xf32>
    %221 = math.tanh %220 : vector<4x256xf32>
    %cst_134 = arith.constant 1.000000e+00 : f32
    %222 = vector.broadcast %cst_134 : f32 to vector<4x256xf32>
    %223 = arith.addf %222, %221 : vector<4x256xf32>
    %224 = arith.mulf %213, %223 : vector<4x256xf32>
    %cst_135 = arith.constant 0.000000e+00 : f32
    %225 = vector.broadcast %cst_135 : f32 to vector<4x17xf32>
    %226 = tpu.concatenate %225, %224, %225 in 1 : vector<4x17xf32>, vector<4x256xf32>, vector<4x17xf32> -> vector<4x290xf32>
    %cst_136 = arith.constant 0.000000e+00 : f32
    %227 = vector.broadcast %cst_136 : f32 to vector<8x256xf32>
    %228 = vector.extract_strided_slice %226 {offsets = [0, 0], sizes = [4, 256], strides = [1, 1]} : vector<4x290xf32> to vector<4x256xf32>
    %c0_137 = arith.constant 0 : index
    %c0_138 = arith.constant 0 : index
    %c0_139 = arith.constant 0 : index
    %229 = vector.load %arg3[%c0_137, %c0_138, %c0_139] : memref<3x1x256xf32, #tpu.memory_space<vmem>>, vector<1x1x256xf32>
    %230 = vector.shape_cast %229 : vector<1x1x256xf32> to vector<1x256xf32>
    %231 = vector.broadcast %230 : vector<1x256xf32> to vector<4x256xf32>
    %232 = arith.mulf %228, %231 : vector<4x256xf32>
    %c0_140 = arith.constant 0 : index
    %c0_141 = arith.constant 0 : index
    %c0_142 = arith.constant 0 : index
    %233 = vector.load %arg9[%c0_140, %c0_141, %c0_142] : memref<9x8x4xf32, #tpu.memory_space<vmem>>, vector<1x8x4xf32>
    %234 = vector.shape_cast %233 : vector<1x8x4xf32> to vector<8x4xf32>
    %cst_143 = arith.constant dense<0.000000e+00> : vector<8x256xf32>
    %235 = tpu.matmul %234, %232, %cst_143 {dimension_numbers = #tpu.dot_dimension_numbers<[1], [0], [0], [1], [0, 0, 1, 1], [], []>} : vector<8x4xf32>, vector<4x256xf32>, vector<8x256xf32> -> vector<8x256xf32>
    %236 = arith.addf %227, %235 : vector<8x256xf32>
    %237 = vector.extract_strided_slice %226 {offsets = [0, 1], sizes = [4, 256], strides = [1, 1]} : vector<4x290xf32> to vector<4x256xf32>
    %c1_144 = arith.constant 1 : index
    %c0_145 = arith.constant 0 : index
    %c0_146 = arith.constant 0 : index
    %238 = vector.load %arg9[%c1_144, %c0_145, %c0_146] : memref<9x8x4xf32, #tpu.memory_space<vmem>>, vector<1x8x4xf32>
    %239 = vector.shape_cast %238 : vector<1x8x4xf32> to vector<8x4xf32>
    %cst_147 = arith.constant dense<0.000000e+00> : vector<8x256xf32>
    %240 = tpu.matmul %239, %237, %cst_147 {dimension_numbers = #tpu.dot_dimension_numbers<[1], [0], [0], [1], [0, 0, 1, 1], [], []>} : vector<8x4xf32>, vector<4x256xf32>, vector<8x256xf32> -> vector<8x256xf32>
    %241 = arith.addf %236, %240 : vector<8x256xf32>
    %242 = vector.extract_strided_slice %226 {offsets = [0, 2], sizes = [4, 256], strides = [1, 1]} : vector<4x290xf32> to vector<4x256xf32>
    %c2_148 = arith.constant 2 : index
    %c0_149 = arith.constant 0 : index
    %c0_150 = arith.constant 0 : index
    %243 = vector.load %arg3[%c2_148, %c0_149, %c0_150] : memref<3x1x256xf32, #tpu.memory_space<vmem>>, vector<1x1x256xf32>
    %244 = vector.shape_cast %243 : vector<1x1x256xf32> to vector<1x256xf32>
    %245 = vector.broadcast %244 : vector<1x256xf32> to vector<4x256xf32>
    %246 = arith.mulf %242, %245 : vector<4x256xf32>
    %c2_151 = arith.constant 2 : index
    %c0_152 = arith.constant 0 : index
    %c0_153 = arith.constant 0 : index
    %247 = vector.load %arg9[%c2_151, %c0_152, %c0_153] : memref<9x8x4xf32, #tpu.memory_space<vmem>>, vector<1x8x4xf32>
    %248 = vector.shape_cast %247 : vector<1x8x4xf32> to vector<8x4xf32>
    %cst_154 = arith.constant dense<0.000000e+00> : vector<8x256xf32>
    %249 = tpu.matmul %248, %246, %cst_154 {dimension_numbers = #tpu.dot_dimension_numbers<[1], [0], [0], [1], [0, 0, 1, 1], [], []>} : vector<8x4xf32>, vector<4x256xf32>, vector<8x256xf32> -> vector<8x256xf32>
    %250 = arith.addf %241, %249 : vector<8x256xf32>
    %251 = vector.extract_strided_slice %226 {offsets = [0, 16], sizes = [4, 256], strides = [1, 1]} : vector<4x290xf32> to vector<4x256xf32>
    %c0_155 = arith.constant 0 : index
    %c0_156 = arith.constant 0 : index
    %c0_157 = arith.constant 0 : index
    %252 = vector.load %arg3[%c0_155, %c0_156, %c0_157] : memref<3x1x256xf32, #tpu.memory_space<vmem>>, vector<1x1x256xf32>
    %253 = vector.shape_cast %252 : vector<1x1x256xf32> to vector<1x256xf32>
    %254 = vector.broadcast %253 : vector<1x256xf32> to vector<4x256xf32>
    %255 = arith.mulf %251, %254 : vector<4x256xf32>
    %c3_158 = arith.constant 3 : index
    %c0_159 = arith.constant 0 : index
    %c0_160 = arith.constant 0 : index
    %256 = vector.load %arg9[%c3_158, %c0_159, %c0_160] : memref<9x8x4xf32, #tpu.memory_space<vmem>>, vector<1x8x4xf32>
    %257 = vector.shape_cast %256 : vector<1x8x4xf32> to vector<8x4xf32>
    %cst_161 = arith.constant dense<0.000000e+00> : vector<8x256xf32>
    %258 = tpu.matmul %257, %255, %cst_161 {dimension_numbers = #tpu.dot_dimension_numbers<[1], [0], [0], [1], [0, 0, 1, 1], [], []>} : vector<8x4xf32>, vector<4x256xf32>, vector<8x256xf32> -> vector<8x256xf32>
    %259 = arith.addf %250, %258 : vector<8x256xf32>
    %c4_162 = arith.constant 4 : index
    %c0_163 = arith.constant 0 : index
    %c0_164 = arith.constant 0 : index
    %260 = vector.load %arg9[%c4_162, %c0_163, %c0_164] : memref<9x8x4xf32, #tpu.memory_space<vmem>>, vector<1x8x4xf32>
    %261 = vector.shape_cast %260 : vector<1x8x4xf32> to vector<8x4xf32>
    %cst_165 = arith.constant dense<0.000000e+00> : vector<8x256xf32>
    %262 = tpu.matmul %261, %224, %cst_165 {dimension_numbers = #tpu.dot_dimension_numbers<[1], [0], [0], [1], [0, 0, 1, 1], [], []>} : vector<8x4xf32>, vector<4x256xf32>, vector<8x256xf32> -> vector<8x256xf32>
    %263 = arith.addf %259, %262 : vector<8x256xf32>
    %264 = vector.extract_strided_slice %226 {offsets = [0, 18], sizes = [4, 256], strides = [1, 1]} : vector<4x290xf32> to vector<4x256xf32>
    %c2_166 = arith.constant 2 : index
    %c0_167 = arith.constant 0 : index
    %c0_168 = arith.constant 0 : index
    %265 = vector.load %arg3[%c2_166, %c0_167, %c0_168] : memref<3x1x256xf32, #tpu.memory_space<vmem>>, vector<1x1x256xf32>
    %266 = vector.shape_cast %265 : vector<1x1x256xf32> to vector<1x256xf32>
    %267 = vector.broadcast %266 : vector<1x256xf32> to vector<4x256xf32>
    %268 = arith.mulf %264, %267 : vector<4x256xf32>
    %c5_169 = arith.constant 5 : index
    %c0_170 = arith.constant 0 : index
    %c0_171 = arith.constant 0 : index
    %269 = vector.load %arg9[%c5_169, %c0_170, %c0_171] : memref<9x8x4xf32, #tpu.memory_space<vmem>>, vector<1x8x4xf32>
    %270 = vector.shape_cast %269 : vector<1x8x4xf32> to vector<8x4xf32>
    %cst_172 = arith.constant dense<0.000000e+00> : vector<8x256xf32>
    %271 = tpu.matmul %270, %268, %cst_172 {dimension_numbers = #tpu.dot_dimension_numbers<[1], [0], [0], [1], [0, 0, 1, 1], [], []>} : vector<8x4xf32>, vector<4x256xf32>, vector<8x256xf32> -> vector<8x256xf32>
    %272 = arith.addf %263, %271 : vector<8x256xf32>
    %273 = vector.extract_strided_slice %226 {offsets = [0, 32], sizes = [4, 256], strides = [1, 1]} : vector<4x290xf32> to vector<4x256xf32>
    %c0_173 = arith.constant 0 : index
    %c0_174 = arith.constant 0 : index
    %c0_175 = arith.constant 0 : index
    %274 = vector.load %arg3[%c0_173, %c0_174, %c0_175] : memref<3x1x256xf32, #tpu.memory_space<vmem>>, vector<1x1x256xf32>
    %275 = vector.shape_cast %274 : vector<1x1x256xf32> to vector<1x256xf32>
    %276 = vector.broadcast %275 : vector<1x256xf32> to vector<4x256xf32>
    %277 = arith.mulf %273, %276 : vector<4x256xf32>
    %c6_176 = arith.constant 6 : index
    %c0_177 = arith.constant 0 : index
    %c0_178 = arith.constant 0 : index
    %278 = vector.load %arg9[%c6_176, %c0_177, %c0_178] : memref<9x8x4xf32, #tpu.memory_space<vmem>>, vector<1x8x4xf32>
    %279 = vector.shape_cast %278 : vector<1x8x4xf32> to vector<8x4xf32>
    %cst_179 = arith.constant dense<0.000000e+00> : vector<8x256xf32>
    %280 = tpu.matmul %279, %277, %cst_179 {dimension_numbers = #tpu.dot_dimension_numbers<[1], [0], [0], [1], [0, 0, 1, 1], [], []>} : vector<8x4xf32>, vector<4x256xf32>, vector<8x256xf32> -> vector<8x256xf32>
    %281 = arith.addf %272, %280 : vector<8x256xf32>
    %282 = vector.extract_strided_slice %226 {offsets = [0, 33], sizes = [4, 256], strides = [1, 1]} : vector<4x290xf32> to vector<4x256xf32>
    %c7_180 = arith.constant 7 : index
    %c0_181 = arith.constant 0 : index
    %c0_182 = arith.constant 0 : index
    %283 = vector.load %arg9[%c7_180, %c0_181, %c0_182] : memref<9x8x4xf32, #tpu.memory_space<vmem>>, vector<1x8x4xf32>
    %284 = vector.shape_cast %283 : vector<1x8x4xf32> to vector<8x4xf32>
    %cst_183 = arith.constant dense<0.000000e+00> : vector<8x256xf32>
    %285 = tpu.matmul %284, %282, %cst_183 {dimension_numbers = #tpu.dot_dimension_numbers<[1], [0], [0], [1], [0, 0, 1, 1], [], []>} : vector<8x4xf32>, vector<4x256xf32>, vector<8x256xf32> -> vector<8x256xf32>
    %286 = arith.addf %281, %285 : vector<8x256xf32>
    %287 = vector.extract_strided_slice %226 {offsets = [0, 34], sizes = [4, 256], strides = [1, 1]} : vector<4x290xf32> to vector<4x256xf32>
    %c2_184 = arith.constant 2 : index
    %c0_185 = arith.constant 0 : index
    %c0_186 = arith.constant 0 : index
    %288 = vector.load %arg3[%c2_184, %c0_185, %c0_186] : memref<3x1x256xf32, #tpu.memory_space<vmem>>, vector<1x1x256xf32>
    %289 = vector.shape_cast %288 : vector<1x1x256xf32> to vector<1x256xf32>
    %290 = vector.broadcast %289 : vector<1x256xf32> to vector<4x256xf32>
    %291 = arith.mulf %287, %290 : vector<4x256xf32>
    %c8_187 = arith.constant 8 : index
    %c0_188 = arith.constant 0 : index
    %c0_189 = arith.constant 0 : index
    %292 = vector.load %arg9[%c8_187, %c0_188, %c0_189] : memref<9x8x4xf32, #tpu.memory_space<vmem>>, vector<1x8x4xf32>
    %293 = vector.shape_cast %292 : vector<1x8x4xf32> to vector<8x4xf32>
    %cst_190 = arith.constant dense<0.000000e+00> : vector<8x256xf32>
    %294 = tpu.matmul %293, %291, %cst_190 {dimension_numbers = #tpu.dot_dimension_numbers<[1], [0], [0], [1], [0, 0, 1, 1], [], []>} : vector<8x4xf32>, vector<4x256xf32>, vector<8x256xf32> -> vector<8x256xf32>
    %295 = arith.addf %286, %294 : vector<8x256xf32>
    %296 = vector.shape_cast %295 : vector<8x256xf32> to vector<1x8x256xf32>
    %cst_191 = arith.constant dense<0.000000e+00> : vector<1xf32>
    %297 = vector.multi_reduction <add>, %296, %cst_191 [1, 2] : vector<1x8x256xf32> to vector<1xf32>
    %298 = vector.shape_cast %297 : vector<1xf32> to vector<1x1x1xf32>
    %299 = vector.extract %298[0, 0, 0] : f32 from vector<1x1x1xf32>
    %cst_192 = arith.constant 2.048000e+03 : f32
    %300 = arith.divf %299, %cst_192 : f32
    %301 = vector.broadcast %300 : f32 to vector<8x256xf32>
    %302 = arith.subf %295, %301 : vector<8x256xf32>
    %303 = arith.mulf %302, %302 : vector<8x256xf32>
    %304 = vector.shape_cast %303 : vector<8x256xf32> to vector<1x8x256xf32>
    %cst_193 = arith.constant dense<0.000000e+00> : vector<1xf32>
    %305 = vector.multi_reduction <add>, %304, %cst_193 [1, 2] : vector<1x8x256xf32> to vector<1xf32>
    %306 = vector.shape_cast %305 : vector<1xf32> to vector<1x1x1xf32>
    %307 = vector.extract %306[0, 0, 0] : f32 from vector<1x1x1xf32>
    %cst_194 = arith.constant 2.048000e+03 : f32
    %308 = arith.divf %307, %cst_194 : f32
    %309 = vector.broadcast %300 : f32 to vector<8x256xf32>
    %310 = arith.subf %295, %309 : vector<8x256xf32>
    %cst_195 = arith.constant 9.99999974E-6 : f32
    %311 = arith.addf %308, %cst_195 : f32
    %312 = math.rsqrt %311 : f32
    %313 = vector.broadcast %312 : f32 to vector<8x256xf32>
    %314 = arith.mulf %310, %313 : vector<8x256xf32>
    %c0_196 = arith.constant 0 : index
    %c0_197 = arith.constant 0 : index
    %c0_198 = arith.constant 0 : index
    %315 = vector.load %arg10[%c0_196, %c0_197, %c0_198] : memref<2x8x1xf32, #tpu.memory_space<vmem>>, vector<1x8x1xf32>
    %316 = vector.shape_cast %315 : vector<1x8x1xf32> to vector<8x1xf32>
    %317 = vector.broadcast %316 : vector<8x1xf32> to vector<8x256xf32>
    %318 = arith.mulf %314, %317 : vector<8x256xf32>
    %c1_199 = arith.constant 1 : index
    %c0_200 = arith.constant 0 : index
    %c0_201 = arith.constant 0 : index
    %319 = vector.load %arg10[%c1_199, %c0_200, %c0_201] : memref<2x8x1xf32, #tpu.memory_space<vmem>>, vector<1x8x1xf32>
    %320 = vector.shape_cast %319 : vector<1x8x1xf32> to vector<8x1xf32>
    %321 = vector.broadcast %320 : vector<8x1xf32> to vector<8x256xf32>
    %322 = arith.addf %318, %321 : vector<8x256xf32>
    %cst_202 = arith.constant 5.000000e-01 : f32
    %323 = vector.broadcast %cst_202 : f32 to vector<8x256xf32>
    %324 = arith.mulf %323, %322 : vector<8x256xf32>
    %cst_203 = arith.constant 4.471500e-02 : f32
    %325 = vector.broadcast %cst_203 : f32 to vector<8x256xf32>
    %326 = arith.mulf %325, %322 : vector<8x256xf32>
    %327 = arith.mulf %326, %322 : vector<8x256xf32>
    %328 = arith.mulf %327, %322 : vector<8x256xf32>
    %329 = arith.addf %322, %328 : vector<8x256xf32>
    %cst_204 = arith.constant 0.797884583 : f32
    %330 = vector.broadcast %cst_204 : f32 to vector<8x256xf32>
    %331 = arith.mulf %330, %329 : vector<8x256xf32>
    %332 = math.tanh %331 : vector<8x256xf32>
    %cst_205 = arith.constant 1.000000e+00 : f32
    %333 = vector.broadcast %cst_205 : f32 to vector<8x256xf32>
    %334 = arith.addf %333, %332 : vector<8x256xf32>
    %335 = arith.mulf %324, %334 : vector<8x256xf32>
    %cst_206 = arith.constant 0.000000e+00 : f32
    %336 = vector.broadcast %cst_206 : f32 to vector<8x17xf32>
    %337 = tpu.concatenate %336, %335, %336 in 1 : vector<8x17xf32>, vector<8x256xf32>, vector<8x17xf32> -> vector<8x290xf32>
    %cst_207 = arith.constant 0.000000e+00 : f32
    %338 = vector.broadcast %cst_207 : f32 to vector<8x256xf32>
    %339 = vector.extract_strided_slice %337 {offsets = [0, 0], sizes = [8, 256], strides = [1, 1]} : vector<8x290xf32> to vector<8x256xf32>
    %c0_208 = arith.constant 0 : index
    %c0_209 = arith.constant 0 : index
    %c0_210 = arith.constant 0 : index
    %340 = vector.load %arg3[%c0_208, %c0_209, %c0_210] : memref<3x1x256xf32, #tpu.memory_space<vmem>>, vector<1x1x256xf32>
    %341 = vector.shape_cast %340 : vector<1x1x256xf32> to vector<1x256xf32>
    %342 = vector.broadcast %341 : vector<1x256xf32> to vector<8x256xf32>
    %343 = arith.mulf %339, %342 : vector<8x256xf32>
    %c0_211 = arith.constant 0 : index
    %c0_212 = arith.constant 0 : index
    %c0_213 = arith.constant 0 : index
    %344 = vector.load %arg11[%c0_211, %c0_212, %c0_213] : memref<9x8x8xf32, #tpu.memory_space<vmem>>, vector<1x8x8xf32>
    %345 = vector.shape_cast %344 : vector<1x8x8xf32> to vector<8x8xf32>
    %cst_214 = arith.constant dense<0.000000e+00> : vector<8x256xf32>
    %346 = tpu.matmul %345, %343, %cst_214 {dimension_numbers = #tpu.dot_dimension_numbers<[1], [0], [0], [1], [0, 0, 1, 1], [], []>} : vector<8x8xf32>, vector<8x256xf32>, vector<8x256xf32> -> vector<8x256xf32>
    %347 = arith.addf %338, %346 : vector<8x256xf32>
    %348 = vector.extract_strided_slice %337 {offsets = [0, 1], sizes = [8, 256], strides = [1, 1]} : vector<8x290xf32> to vector<8x256xf32>
    %c1_215 = arith.constant 1 : index
    %c0_216 = arith.constant 0 : index
    %c0_217 = arith.constant 0 : index
    %349 = vector.load %arg11[%c1_215, %c0_216, %c0_217] : memref<9x8x8xf32, #tpu.memory_space<vmem>>, vector<1x8x8xf32>
    %350 = vector.shape_cast %349 : vector<1x8x8xf32> to vector<8x8xf32>
    %cst_218 = arith.constant dense<0.000000e+00> : vector<8x256xf32>
    %351 = tpu.matmul %350, %348, %cst_218 {dimension_numbers = #tpu.dot_dimension_numbers<[1], [0], [0], [1], [0, 0, 1, 1], [], []>} : vector<8x8xf32>, vector<8x256xf32>, vector<8x256xf32> -> vector<8x256xf32>
    %352 = arith.addf %347, %351 : vector<8x256xf32>
    %353 = vector.extract_strided_slice %337 {offsets = [0, 2], sizes = [8, 256], strides = [1, 1]} : vector<8x290xf32> to vector<8x256xf32>
    %c2_219 = arith.constant 2 : index
    %c0_220 = arith.constant 0 : index
    %c0_221 = arith.constant 0 : index
    %354 = vector.load %arg3[%c2_219, %c0_220, %c0_221] : memref<3x1x256xf32, #tpu.memory_space<vmem>>, vector<1x1x256xf32>
    %355 = vector.shape_cast %354 : vector<1x1x256xf32> to vector<1x256xf32>
    %356 = vector.broadcast %355 : vector<1x256xf32> to vector<8x256xf32>
    %357 = arith.mulf %353, %356 : vector<8x256xf32>
    %c2_222 = arith.constant 2 : index
    %c0_223 = arith.constant 0 : index
    %c0_224 = arith.constant 0 : index
    %358 = vector.load %arg11[%c2_222, %c0_223, %c0_224] : memref<9x8x8xf32, #tpu.memory_space<vmem>>, vector<1x8x8xf32>
    %359 = vector.shape_cast %358 : vector<1x8x8xf32> to vector<8x8xf32>
    %cst_225 = arith.constant dense<0.000000e+00> : vector<8x256xf32>
    %360 = tpu.matmul %359, %357, %cst_225 {dimension_numbers = #tpu.dot_dimension_numbers<[1], [0], [0], [1], [0, 0, 1, 1], [], []>} : vector<8x8xf32>, vector<8x256xf32>, vector<8x256xf32> -> vector<8x256xf32>
    %361 = arith.addf %352, %360 : vector<8x256xf32>
    %362 = vector.extract_strided_slice %337 {offsets = [0, 16], sizes = [8, 256], strides = [1, 1]} : vector<8x290xf32> to vector<8x256xf32>
    %c0_226 = arith.constant 0 : index
    %c0_227 = arith.constant 0 : index
    %c0_228 = arith.constant 0 : index
    %363 = vector.load %arg3[%c0_226, %c0_227, %c0_228] : memref<3x1x256xf32, #tpu.memory_space<vmem>>, vector<1x1x256xf32>
    %364 = vector.shape_cast %363 : vector<1x1x256xf32> to vector<1x256xf32>
    %365 = vector.broadcast %364 : vector<1x256xf32> to vector<8x256xf32>
    %366 = arith.mulf %362, %365 : vector<8x256xf32>
    %c3_229 = arith.constant 3 : index
    %c0_230 = arith.constant 0 : index
    %c0_231 = arith.constant 0 : index
    %367 = vector.load %arg11[%c3_229, %c0_230, %c0_231] : memref<9x8x8xf32, #tpu.memory_space<vmem>>, vector<1x8x8xf32>
    %368 = vector.shape_cast %367 : vector<1x8x8xf32> to vector<8x8xf32>
    %cst_232 = arith.constant dense<0.000000e+00> : vector<8x256xf32>
    %369 = tpu.matmul %368, %366, %cst_232 {dimension_numbers = #tpu.dot_dimension_numbers<[1], [0], [0], [1], [0, 0, 1, 1], [], []>} : vector<8x8xf32>, vector<8x256xf32>, vector<8x256xf32> -> vector<8x256xf32>
    %370 = arith.addf %361, %369 : vector<8x256xf32>
    %c4_233 = arith.constant 4 : index
    %c0_234 = arith.constant 0 : index
    %c0_235 = arith.constant 0 : index
    %371 = vector.load %arg11[%c4_233, %c0_234, %c0_235] : memref<9x8x8xf32, #tpu.memory_space<vmem>>, vector<1x8x8xf32>
    %372 = vector.shape_cast %371 : vector<1x8x8xf32> to vector<8x8xf32>
    %cst_236 = arith.constant dense<0.000000e+00> : vector<8x256xf32>
    %373 = tpu.matmul %372, %335, %cst_236 {dimension_numbers = #tpu.dot_dimension_numbers<[1], [0], [0], [1], [0, 0, 1, 1], [], []>} : vector<8x8xf32>, vector<8x256xf32>, vector<8x256xf32> -> vector<8x256xf32>
    %374 = arith.addf %370, %373 : vector<8x256xf32>
    %375 = vector.extract_strided_slice %337 {offsets = [0, 18], sizes = [8, 256], strides = [1, 1]} : vector<8x290xf32> to vector<8x256xf32>
    %c2_237 = arith.constant 2 : index
    %c0_238 = arith.constant 0 : index
    %c0_239 = arith.constant 0 : index
    %376 = vector.load %arg3[%c2_237, %c0_238, %c0_239] : memref<3x1x256xf32, #tpu.memory_space<vmem>>, vector<1x1x256xf32>
    %377 = vector.shape_cast %376 : vector<1x1x256xf32> to vector<1x256xf32>
    %378 = vector.broadcast %377 : vector<1x256xf32> to vector<8x256xf32>
    %379 = arith.mulf %375, %378 : vector<8x256xf32>
    %c5_240 = arith.constant 5 : index
    %c0_241 = arith.constant 0 : index
    %c0_242 = arith.constant 0 : index
    %380 = vector.load %arg11[%c5_240, %c0_241, %c0_242] : memref<9x8x8xf32, #tpu.memory_space<vmem>>, vector<1x8x8xf32>
    %381 = vector.shape_cast %380 : vector<1x8x8xf32> to vector<8x8xf32>
    %cst_243 = arith.constant dense<0.000000e+00> : vector<8x256xf32>
    %382 = tpu.matmul %381, %379, %cst_243 {dimension_numbers = #tpu.dot_dimension_numbers<[1], [0], [0], [1], [0, 0, 1, 1], [], []>} : vector<8x8xf32>, vector<8x256xf32>, vector<8x256xf32> -> vector<8x256xf32>
    %383 = arith.addf %374, %382 : vector<8x256xf32>
    %384 = vector.extract_strided_slice %337 {offsets = [0, 32], sizes = [8, 256], strides = [1, 1]} : vector<8x290xf32> to vector<8x256xf32>
    %c0_244 = arith.constant 0 : index
    %c0_245 = arith.constant 0 : index
    %c0_246 = arith.constant 0 : index
    %385 = vector.load %arg3[%c0_244, %c0_245, %c0_246] : memref<3x1x256xf32, #tpu.memory_space<vmem>>, vector<1x1x256xf32>
    %386 = vector.shape_cast %385 : vector<1x1x256xf32> to vector<1x256xf32>
    %387 = vector.broadcast %386 : vector<1x256xf32> to vector<8x256xf32>
    %388 = arith.mulf %384, %387 : vector<8x256xf32>
    %c6_247 = arith.constant 6 : index
    %c0_248 = arith.constant 0 : index
    %c0_249 = arith.constant 0 : index
    %389 = vector.load %arg11[%c6_247, %c0_248, %c0_249] : memref<9x8x8xf32, #tpu.memory_space<vmem>>, vector<1x8x8xf32>
    %390 = vector.shape_cast %389 : vector<1x8x8xf32> to vector<8x8xf32>
    %cst_250 = arith.constant dense<0.000000e+00> : vector<8x256xf32>
    %391 = tpu.matmul %390, %388, %cst_250 {dimension_numbers = #tpu.dot_dimension_numbers<[1], [0], [0], [1], [0, 0, 1, 1], [], []>} : vector<8x8xf32>, vector<8x256xf32>, vector<8x256xf32> -> vector<8x256xf32>
    %392 = arith.addf %383, %391 : vector<8x256xf32>
    %393 = vector.extract_strided_slice %337 {offsets = [0, 33], sizes = [8, 256], strides = [1, 1]} : vector<8x290xf32> to vector<8x256xf32>
    %c7_251 = arith.constant 7 : index
    %c0_252 = arith.constant 0 : index
    %c0_253 = arith.constant 0 : index
    %394 = vector.load %arg11[%c7_251, %c0_252, %c0_253] : memref<9x8x8xf32, #tpu.memory_space<vmem>>, vector<1x8x8xf32>
    %395 = vector.shape_cast %394 : vector<1x8x8xf32> to vector<8x8xf32>
    %cst_254 = arith.constant dense<0.000000e+00> : vector<8x256xf32>
    %396 = tpu.matmul %395, %393, %cst_254 {dimension_numbers = #tpu.dot_dimension_numbers<[1], [0], [0], [1], [0, 0, 1, 1], [], []>} : vector<8x8xf32>, vector<8x256xf32>, vector<8x256xf32> -> vector<8x256xf32>
    %397 = arith.addf %392, %396 : vector<8x256xf32>
    %398 = vector.extract_strided_slice %337 {offsets = [0, 34], sizes = [8, 256], strides = [1, 1]} : vector<8x290xf32> to vector<8x256xf32>
    %c2_255 = arith.constant 2 : index
    %c0_256 = arith.constant 0 : index
    %c0_257 = arith.constant 0 : index
    %399 = vector.load %arg3[%c2_255, %c0_256, %c0_257] : memref<3x1x256xf32, #tpu.memory_space<vmem>>, vector<1x1x256xf32>
    %400 = vector.shape_cast %399 : vector<1x1x256xf32> to vector<1x256xf32>
    %401 = vector.broadcast %400 : vector<1x256xf32> to vector<8x256xf32>
    %402 = arith.mulf %398, %401 : vector<8x256xf32>
    %c8_258 = arith.constant 8 : index
    %c0_259 = arith.constant 0 : index
    %c0_260 = arith.constant 0 : index
    %403 = vector.load %arg11[%c8_258, %c0_259, %c0_260] : memref<9x8x8xf32, #tpu.memory_space<vmem>>, vector<1x8x8xf32>
    %404 = vector.shape_cast %403 : vector<1x8x8xf32> to vector<8x8xf32>
    %cst_261 = arith.constant dense<0.000000e+00> : vector<8x256xf32>
    %405 = tpu.matmul %404, %402, %cst_261 {dimension_numbers = #tpu.dot_dimension_numbers<[1], [0], [0], [1], [0, 0, 1, 1], [], []>} : vector<8x8xf32>, vector<8x256xf32>, vector<8x256xf32> -> vector<8x256xf32>
    %406 = arith.addf %397, %405 : vector<8x256xf32>
    %407 = vector.shape_cast %406 : vector<8x256xf32> to vector<1x8x256xf32>
    %cst_262 = arith.constant dense<0.000000e+00> : vector<1xf32>
    %408 = vector.multi_reduction <add>, %407, %cst_262 [1, 2] : vector<1x8x256xf32> to vector<1xf32>
    %409 = vector.shape_cast %408 : vector<1xf32> to vector<1x1x1xf32>
    %410 = vector.extract %409[0, 0, 0] : f32 from vector<1x1x1xf32>
    %cst_263 = arith.constant 2.048000e+03 : f32
    %411 = arith.divf %410, %cst_263 : f32
    %412 = vector.broadcast %411 : f32 to vector<8x256xf32>
    %413 = arith.subf %406, %412 : vector<8x256xf32>
    %414 = arith.mulf %413, %413 : vector<8x256xf32>
    %415 = vector.shape_cast %414 : vector<8x256xf32> to vector<1x8x256xf32>
    %cst_264 = arith.constant dense<0.000000e+00> : vector<1xf32>
    %416 = vector.multi_reduction <add>, %415, %cst_264 [1, 2] : vector<1x8x256xf32> to vector<1xf32>
    %417 = vector.shape_cast %416 : vector<1xf32> to vector<1x1x1xf32>
    %418 = vector.extract %417[0, 0, 0] : f32 from vector<1x1x1xf32>
    %cst_265 = arith.constant 2.048000e+03 : f32
    %419 = arith.divf %418, %cst_265 : f32
    %420 = vector.broadcast %411 : f32 to vector<8x256xf32>
    %421 = arith.subf %406, %420 : vector<8x256xf32>
    %cst_266 = arith.constant 9.99999974E-6 : f32
    %422 = arith.addf %419, %cst_266 : f32
    %423 = math.rsqrt %422 : f32
    %424 = vector.broadcast %423 : f32 to vector<8x256xf32>
    %425 = arith.mulf %421, %424 : vector<8x256xf32>
    %c0_267 = arith.constant 0 : index
    %c0_268 = arith.constant 0 : index
    %c0_269 = arith.constant 0 : index
    %426 = vector.load %arg12[%c0_267, %c0_268, %c0_269] : memref<2x8x1xf32, #tpu.memory_space<vmem>>, vector<1x8x1xf32>
    %427 = vector.shape_cast %426 : vector<1x8x1xf32> to vector<8x1xf32>
    %428 = vector.broadcast %427 : vector<8x1xf32> to vector<8x256xf32>
    %429 = arith.mulf %425, %428 : vector<8x256xf32>
    %c1_270 = arith.constant 1 : index
    %c0_271 = arith.constant 0 : index
    %c0_272 = arith.constant 0 : index
    %430 = vector.load %arg12[%c1_270, %c0_271, %c0_272] : memref<2x8x1xf32, #tpu.memory_space<vmem>>, vector<1x8x1xf32>
    %431 = vector.shape_cast %430 : vector<1x8x1xf32> to vector<8x1xf32>
    %432 = vector.broadcast %431 : vector<8x1xf32> to vector<8x256xf32>
    %433 = arith.addf %429, %432 : vector<8x256xf32>
    %c0_273 = arith.constant 0 : index
    %c0_274 = arith.constant 0 : index
    %c0_275 = arith.constant 0 : index
    %434 = vector.load %arg24[%c0_273, %c0_274, %c0_275] : memref<1x8x256xf32, #tpu.memory_space<vmem>>, vector<1x8x256xf32>
    %435 = vector.shape_cast %434 : vector<1x8x256xf32> to vector<8x256xf32>
    %436 = vector.shape_cast %433 : vector<8x256xf32> to vector<1x8x256xf32>
    tpu.vector_store %arg24[%c0_273, %c0_274, %c0_275], %436 {strides = array<i32>} : memref<1x8x256xf32, #tpu.memory_space<vmem>>, vector<1x8x256xf32>,
    %cst_276 = arith.constant 0.000000e+00 : f32
    %437 = vector.broadcast %cst_276 : f32 to vector<8x17xf32>
    %438 = tpu.concatenate %433, %437 in 1 : vector<8x256xf32>, vector<8x17xf32> -> vector<8x273xf32>
    %439 = vector.extract_strided_slice %438 {offsets = [0, 1], sizes = [8, 256], strides = [1, 1]} : vector<8x273xf32> to vector<8x256xf32>
    %440 = arith.maximumf %433, %439 : vector<8x256xf32>
    %441 = vector.extract_strided_slice %438 {offsets = [0, 16], sizes = [8, 256], strides = [1, 1]} : vector<8x273xf32> to vector<8x256xf32>
    %442 = vector.extract_strided_slice %438 {offsets = [0, 17], sizes = [8, 256], strides = [1, 1]} : vector<8x273xf32> to vector<8x256xf32>
    %443 = arith.maximumf %441, %442 : vector<8x256xf32>
    %444 = arith.maximumf %440, %443 : vector<8x256xf32>
    %c0_277 = arith.constant 0 : index
    %c0_278 = arith.constant 0 : index
    %445 = vector.load %arg4[%c0_277, %c0_278] : memref<64x256xf32, #tpu.memory_space<vmem>>, vector<64x256xf32>
    %cst_279 = arith.constant dense<0.000000e+00> : vector<64x8xf32>
    %446 = tpu.matmul %445, %444, %cst_279 {dimension_numbers = #tpu.dot_dimension_numbers<[1], [1], [0], [0], [0, 0, 1, 0], [], []>} : vector<64x256xf32>, vector<8x256xf32>, vector<64x8xf32> -> vector<64x8xf32>
    %c0_280 = arith.constant 0 : index
    %c0_281 = arith.constant 0 : index
    %c0_282 = arith.constant 0 : index
    %447 = vector.load %arg2[%c0_280, %c0_281, %c0_282] : memref<1x1x32xf32, #tpu.memory_space<vmem>>, vector<1x1x32xf32>
    %448 = vector.shape_cast %447 : vector<1x1x32xf32> to vector<1x32xf32>
    %449 = arith.negf %448 : vector<1x32xf32>
    %450 = math.exp %449 : vector<1x32xf32>
    %cst_283 = arith.constant 1.000000e+00 : f32
    %451 = vector.broadcast %cst_283 : f32 to vector<1x32xf32>
    %452 = arith.addf %451, %450 : vector<1x32xf32>
    %453 = arith.divf %451, %452 : vector<1x32xf32>
    %454 = arith.mulf %448, %453 : vector<1x32xf32>
    %c0_284 = arith.constant 0 : index
    %c0_285 = arith.constant 0 : index
    %455 = vector.load %arg13[%c0_284, %c0_285] : memref<32x8xf32, #tpu.memory_space<vmem>>, vector<32x8xf32>
    %cst_286 = arith.constant dense<0.000000e+00> : vector<1x8xf32>
    %456 = tpu.matmul %454, %455, %cst_286 {dimension_numbers = #tpu.dot_dimension_numbers<[1], [0], [0], [1], [0, 0, 1, 1], [], []>} : vector<1x32xf32>, vector<32x8xf32>, vector<1x8xf32> -> vector<1x8xf32>
    %c0_287 = arith.constant 0 : index
    %c0_288 = arith.constant 0 : index
    %457 = vector.load %arg14[%c0_287, %c0_288] : memref<1x8xf32, #tpu.memory_space<vmem>>, vector<1x8xf32>
    %458 = arith.addf %456, %457 : vector<1x8xf32>
    %459 = vector.broadcast %458 : vector<1x8xf32> to vector<64x8xf32>
    %460 = arith.addf %446, %459 : vector<64x8xf32>
    %c0_289 = arith.constant 0 : index
    %c0_290 = arith.constant 0 : index
    %c0_291 = arith.constant 0 : index
    %461 = vector.load %arg15[%c0_289, %c0_290, %c0_291] : memref<2x1x8xf32, #tpu.memory_space<vmem>>, vector<1x1x8xf32>
    %462 = vector.shape_cast %461 : vector<1x1x8xf32> to vector<1x8xf32>
    %c1_292 = arith.constant 1 : index
    %c0_293 = arith.constant 0 : index
    %c0_294 = arith.constant 0 : index
    %463 = vector.load %arg15[%c1_292, %c0_293, %c0_294] : memref<2x1x8xf32, #tpu.memory_space<vmem>>, vector<1x1x8xf32>
    %464 = vector.shape_cast %463 : vector<1x1x8xf32> to vector<1x8xf32>
    %cst_295 = arith.constant dense<0.000000e+00> : vector<64xf32>
    %465 = vector.multi_reduction <add>, %460, %cst_295 [1] : vector<64x8xf32> to vector<64xf32>
    %466 = vector.shape_cast %465 : vector<64xf32> to vector<64x1xf32>
    %cst_296 = arith.constant 8.000000e+00 : f32
    %467 = vector.broadcast %cst_296 : f32 to vector<64x1xf32>
    %468 = arith.divf %466, %467 : vector<64x1xf32>
    %469 = vector.broadcast %468 : vector<64x1xf32> to vector<64x8xf32>
    %470 = arith.subf %460, %469 : vector<64x8xf32>
    %471 = arith.mulf %470, %470 : vector<64x8xf32>
    %cst_297 = arith.constant dense<0.000000e+00> : vector<64xf32>
    %472 = vector.multi_reduction <add>, %471, %cst_297 [1] : vector<64x8xf32> to vector<64xf32>
    %473 = vector.shape_cast %472 : vector<64xf32> to vector<64x1xf32>
    %cst_298 = arith.constant 8.000000e+00 : f32
    %474 = vector.broadcast %cst_298 : f32 to vector<64x1xf32>
    %475 = arith.divf %473, %474 : vector<64x1xf32>
    %476 = vector.broadcast %468 : vector<64x1xf32> to vector<64x8xf32>
    %477 = arith.subf %460, %476 : vector<64x8xf32>
    %cst_299 = arith.constant 9.99999974E-6 : f32
    %478 = vector.broadcast %cst_299 : f32 to vector<64x1xf32>
    %479 = arith.addf %475, %478 : vector<64x1xf32>
    %480 = math.rsqrt %479 : vector<64x1xf32>
    %481 = vector.broadcast %480 : vector<64x1xf32> to vector<64x8xf32>
    %482 = arith.mulf %477, %481 : vector<64x8xf32>
    %483 = vector.broadcast %462 : vector<1x8xf32> to vector<64x8xf32>
    %484 = arith.mulf %482, %483 : vector<64x8xf32>
    %485 = vector.broadcast %464 : vector<1x8xf32> to vector<64x8xf32>
    %486 = arith.addf %484, %485 : vector<64x8xf32>
    %c0_300 = arith.constant 0 : index
    %c0_301 = arith.constant 0 : index
    %c0_302 = arith.constant 0 : index
    %487 = vector.load %arg16[%c0_300, %c0_301, %c0_302] : memref<3x8x8xf32, #tpu.memory_space<vmem>>, vector<1x8x8xf32>
    %488 = vector.shape_cast %487 : vector<1x8x8xf32> to vector<8x8xf32>
    %cst_303 = arith.constant dense<0.000000e+00> : vector<64x8xf32>
    %489 = tpu.matmul %486, %488, %cst_303 {dimension_numbers = #tpu.dot_dimension_numbers<[1], [0], [0], [1], [0, 0, 1, 1], [], []>} : vector<64x8xf32>, vector<8x8xf32>, vector<64x8xf32> -> vector<64x8xf32>
    %c0_304 = arith.constant 0 : index
    %c0_305 = arith.constant 0 : index
    %c0_306 = arith.constant 0 : index
    %490 = vector.load %arg17[%c0_304, %c0_305, %c0_306] : memref<3x1x8xf32, #tpu.memory_space<vmem>>, vector<1x1x8xf32>
    %491 = vector.shape_cast %490 : vector<1x1x8xf32> to vector<1x8xf32>
    %492 = vector.broadcast %491 : vector<1x8xf32> to vector<64x8xf32>
    %493 = arith.addf %489, %492 : vector<64x8xf32>
    %c1_307 = arith.constant 1 : index
    %c0_308 = arith.constant 0 : index
    %c0_309 = arith.constant 0 : index
    %494 = vector.load %arg16[%c1_307, %c0_308, %c0_309] : memref<3x8x8xf32, #tpu.memory_space<vmem>>, vector<1x8x8xf32>
    %495 = vector.shape_cast %494 : vector<1x8x8xf32> to vector<8x8xf32>
    %cst_310 = arith.constant dense<0.000000e+00> : vector<64x8xf32>
    %496 = tpu.matmul %486, %495, %cst_310 {dimension_numbers = #tpu.dot_dimension_numbers<[1], [0], [0], [1], [0, 0, 1, 1], [], []>} : vector<64x8xf32>, vector<8x8xf32>, vector<64x8xf32> -> vector<64x8xf32>
    %c1_311 = arith.constant 1 : index
    %c0_312 = arith.constant 0 : index
    %c0_313 = arith.constant 0 : index
    %497 = vector.load %arg17[%c1_311, %c0_312, %c0_313] : memref<3x1x8xf32, #tpu.memory_space<vmem>>, vector<1x1x8xf32>
    %498 = vector.shape_cast %497 : vector<1x1x8xf32> to vector<1x8xf32>
    %499 = vector.broadcast %498 : vector<1x8xf32> to vector<64x8xf32>
    %500 = arith.addf %496, %499 : vector<64x8xf32>
    %c2_314 = arith.constant 2 : index
    %c0_315 = arith.constant 0 : index
    %c0_316 = arith.constant 0 : index
    %501 = vector.load %arg16[%c2_314, %c0_315, %c0_316] : memref<3x8x8xf32, #tpu.memory_space<vmem>>, vector<1x8x8xf32>
    %502 = vector.shape_cast %501 : vector<1x8x8xf32> to vector<8x8xf32>
    %cst_317 = arith.constant dense<0.000000e+00> : vector<64x8xf32>
    %503 = tpu.matmul %486, %502, %cst_317 {dimension_numbers = #tpu.dot_dimension_numbers<[1], [0], [0], [1], [0, 0, 1, 1], [], []>} : vector<64x8xf32>, vector<8x8xf32>, vector<64x8xf32> -> vector<64x8xf32>
    %c2_318 = arith.constant 2 : index
    %c0_319 = arith.constant 0 : index
    %c0_320 = arith.constant 0 : index
    %504 = vector.load %arg17[%c2_318, %c0_319, %c0_320] : memref<3x1x8xf32, #tpu.memory_space<vmem>>, vector<1x1x8xf32>
    %505 = vector.shape_cast %504 : vector<1x1x8xf32> to vector<1x8xf32>
    %506 = vector.broadcast %505 : vector<1x8xf32> to vector<64x8xf32>
    %507 = arith.addf %503, %506 : vector<64x8xf32>
    %cst_321 = arith.constant 0.707106769 : f32
    %508 = vector.broadcast %cst_321 : f32 to vector<64x8xf32>
    %509 = arith.mulf %493, %508 : vector<64x8xf32>
    %510 = tpu.iota {dimensions = array<i32: 1>} : vector<1x8xi32>
    %cst_322 = arith.constant 0.000000e+00 : f32
    %511 = vector.broadcast %cst_322 : f32 to vector<64x8xf32>
    %c0_i32 = arith.constant 0 : i32
    %512 = vector.broadcast %c0_i32 : i32 to vector<1x8xi32>
    %513 = arith.cmpi sge, %510, %512 : vector<1x8xi32>
    %c2_i32 = arith.constant 2 : i32
    %514 = vector.broadcast %c2_i32 : i32 to vector<1x8xi32>
    %515 = arith.cmpi slt, %510, %514 : vector<1x8xi32>
    %516 = arith.andi %513, %515 : vector<1x8xi1>
    %cst_323 = arith.constant 1.000000e+00 : f32
    %cst_324 = arith.constant 0.000000e+00 : f32
    %517 = vector.broadcast %cst_323 : f32 to vector<1x8xf32>
    %518 = vector.broadcast %cst_324 : f32 to vector<1x8xf32>
    %519 = arith.select %516, %517, %518 : vector<1x8xi1>, vector<1x8xf32>
    %520 = vector.broadcast %519 : vector<1x8xf32> to vector<64x8xf32>
    %521 = arith.mulf %509, %520 : vector<64x8xf32>
    %cst_325 = arith.constant dense<0.000000e+00> : vector<64x64xf32>
    %522 = tpu.matmul %521, %500, %cst_325 {dimension_numbers = #tpu.dot_dimension_numbers<[1], [1], [0], [0], [0, 0, 1, 0], [], []>} : vector<64x8xf32>, vector<64x8xf32>, vector<64x64xf32> -> vector<64x64xf32>
    %cst_326 = arith.constant dense<0xFF800000> : vector<64xf32>
    %523 = vector.multi_reduction <maximumf>, %522, %cst_326 [1] : vector<64x64xf32> to vector<64xf32>
    %524 = vector.shape_cast %523 : vector<64xf32> to vector<64x1xf32>
    %525 = vector.broadcast %524 : vector<64x1xf32> to vector<64x64xf32>
    %526 = arith.subf %522, %525 : vector<64x64xf32>
    %527 = math.exp %526 : vector<64x64xf32>
    %cst_327 = arith.constant dense<0.000000e+00> : vector<64xf32>
    %528 = vector.multi_reduction <add>, %527, %cst_327 [1] : vector<64x64xf32> to vector<64xf32>
    %529 = vector.shape_cast %528 : vector<64xf32> to vector<64x1xf32>
    %530 = tpu.reciprocal %529 {approx = true} : vector<64x1xf32> -> vector<64x1xf32>
    %531 = vector.broadcast %530 : vector<64x1xf32> to vector<64x64xf32>
    %532 = arith.mulf %527, %531 : vector<64x64xf32>
    %533 = vector.broadcast %519 : vector<1x8xf32> to vector<64x8xf32>
    %534 = arith.mulf %507, %533 : vector<64x8xf32>
    %cst_328 = arith.constant dense<0.000000e+00> : vector<64x8xf32>
    %535 = tpu.matmul %532, %534, %cst_328 {dimension_numbers = #tpu.dot_dimension_numbers<[1], [0], [0], [1], [0, 0, 1, 1], [], []>} : vector<64x64xf32>, vector<64x8xf32>, vector<64x8xf32> -> vector<64x8xf32>
    %536 = arith.addf %511, %535 : vector<64x8xf32>
    %c2_i32_329 = arith.constant 2 : i32
    %537 = vector.broadcast %c2_i32_329 : i32 to vector<1x8xi32>
    %538 = arith.cmpi sge, %510, %537 : vector<1x8xi32>
    %c4_i32 = arith.constant 4 : i32
    %539 = vector.broadcast %c4_i32 : i32 to vector<1x8xi32>
    %540 = arith.cmpi slt, %510, %539 : vector<1x8xi32>
    %541 = arith.andi %538, %540 : vector<1x8xi1>
    %cst_330 = arith.constant 1.000000e+00 : f32
    %cst_331 = arith.constant 0.000000e+00 : f32
    %542 = vector.broadcast %cst_330 : f32 to vector<1x8xf32>
    %543 = vector.broadcast %cst_331 : f32 to vector<1x8xf32>
    %544 = arith.select %541, %542, %543 : vector<1x8xi1>, vector<1x8xf32>
    %545 = vector.broadcast %544 : vector<1x8xf32> to vector<64x8xf32>
    %546 = arith.mulf %509, %545 : vector<64x8xf32>
    %cst_332 = arith.constant dense<0.000000e+00> : vector<64x64xf32>
    %547 = tpu.matmul %546, %500, %cst_332 {dimension_numbers = #tpu.dot_dimension_numbers<[1], [1], [0], [0], [0, 0, 1, 0], [], []>} : vector<64x8xf32>, vector<64x8xf32>, vector<64x64xf32> -> vector<64x64xf32>
    %cst_333 = arith.constant dense<0xFF800000> : vector<64xf32>
    %548 = vector.multi_reduction <maximumf>, %547, %cst_333 [1] : vector<64x64xf32> to vector<64xf32>
    %549 = vector.shape_cast %548 : vector<64xf32> to vector<64x1xf32>
    %550 = vector.broadcast %549 : vector<64x1xf32> to vector<64x64xf32>
    %551 = arith.subf %547, %550 : vector<64x64xf32>
    %552 = math.exp %551 : vector<64x64xf32>
    %cst_334 = arith.constant dense<0.000000e+00> : vector<64xf32>
    %553 = vector.multi_reduction <add>, %552, %cst_334 [1] : vector<64x64xf32> to vector<64xf32>
    %554 = vector.shape_cast %553 : vector<64xf32> to vector<64x1xf32>
    %555 = tpu.reciprocal %554 {approx = true} : vector<64x1xf32> -> vector<64x1xf32>
    %556 = vector.broadcast %555 : vector<64x1xf32> to vector<64x64xf32>
    %557 = arith.mulf %552, %556 : vector<64x64xf32>
    %558 = vector.broadcast %544 : vector<1x8xf32> to vector<64x8xf32>
    %559 = arith.mulf %507, %558 : vector<64x8xf32>
    %cst_335 = arith.constant dense<0.000000e+00> : vector<64x8xf32>
    %560 = tpu.matmul %557, %559, %cst_335 {dimension_numbers = #tpu.dot_dimension_numbers<[1], [0], [0], [1], [0, 0, 1, 1], [], []>} : vector<64x64xf32>, vector<64x8xf32>, vector<64x8xf32> -> vector<64x8xf32>
    %561 = arith.addf %536, %560 : vector<64x8xf32>
    %c4_i32_336 = arith.constant 4 : i32
    %562 = vector.broadcast %c4_i32_336 : i32 to vector<1x8xi32>
    %563 = arith.cmpi sge, %510, %562 : vector<1x8xi32>
    %c6_i32 = arith.constant 6 : i32
    %564 = vector.broadcast %c6_i32 : i32 to vector<1x8xi32>
    %565 = arith.cmpi slt, %510, %564 : vector<1x8xi32>
    %566 = arith.andi %563, %565 : vector<1x8xi1>
    %cst_337 = arith.constant 1.000000e+00 : f32
    %cst_338 = arith.constant 0.000000e+00 : f32
    %567 = vector.broadcast %cst_337 : f32 to vector<1x8xf32>
    %568 = vector.broadcast %cst_338 : f32 to vector<1x8xf32>
    %569 = arith.select %566, %567, %568 : vector<1x8xi1>, vector<1x8xf32>
    %570 = vector.broadcast %569 : vector<1x8xf32> to vector<64x8xf32>
    %571 = arith.mulf %509, %570 : vector<64x8xf32>
    %cst_339 = arith.constant dense<0.000000e+00> : vector<64x64xf32>
    %572 = tpu.matmul %571, %500, %cst_339 {dimension_numbers = #tpu.dot_dimension_numbers<[1], [1], [0], [0], [0, 0, 1, 0], [], []>} : vector<64x8xf32>, vector<64x8xf32>, vector<64x64xf32> -> vector<64x64xf32>
    %cst_340 = arith.constant dense<0xFF800000> : vector<64xf32>
    %573 = vector.multi_reduction <maximumf>, %572, %cst_340 [1] : vector<64x64xf32> to vector<64xf32>
    %574 = vector.shape_cast %573 : vector<64xf32> to vector<64x1xf32>
    %575 = vector.broadcast %574 : vector<64x1xf32> to vector<64x64xf32>
    %576 = arith.subf %572, %575 : vector<64x64xf32>
    %577 = math.exp %576 : vector<64x64xf32>
    %cst_341 = arith.constant dense<0.000000e+00> : vector<64xf32>
    %578 = vector.multi_reduction <add>, %577, %cst_341 [1] : vector<64x64xf32> to vector<64xf32>
    %579 = vector.shape_cast %578 : vector<64xf32> to vector<64x1xf32>
    %580 = tpu.reciprocal %579 {approx = true} : vector<64x1xf32> -> vector<64x1xf32>
    %581 = vector.broadcast %580 : vector<64x1xf32> to vector<64x64xf32>
    %582 = arith.mulf %577, %581 : vector<64x64xf32>
    %583 = vector.broadcast %569 : vector<1x8xf32> to vector<64x8xf32>
    %584 = arith.mulf %507, %583 : vector<64x8xf32>
    %cst_342 = arith.constant dense<0.000000e+00> : vector<64x8xf32>
    %585 = tpu.matmul %582, %584, %cst_342 {dimension_numbers = #tpu.dot_dimension_numbers<[1], [0], [0], [1], [0, 0, 1, 1], [], []>} : vector<64x64xf32>, vector<64x8xf32>, vector<64x8xf32> -> vector<64x8xf32>
    %586 = arith.addf %561, %585 : vector<64x8xf32>
    %c6_i32_343 = arith.constant 6 : i32
    %587 = vector.broadcast %c6_i32_343 : i32 to vector<1x8xi32>
    %588 = arith.cmpi sge, %510, %587 : vector<1x8xi32>
    %c8_i32 = arith.constant 8 : i32
    %589 = vector.broadcast %c8_i32 : i32 to vector<1x8xi32>
    %590 = arith.cmpi slt, %510, %589 : vector<1x8xi32>
    %591 = arith.andi %588, %590 : vector<1x8xi1>
    %cst_344 = arith.constant 1.000000e+00 : f32
    %cst_345 = arith.constant 0.000000e+00 : f32
    %592 = vector.broadcast %cst_344 : f32 to vector<1x8xf32>
    %593 = vector.broadcast %cst_345 : f32 to vector<1x8xf32>
    %594 = arith.select %591, %592, %593 : vector<1x8xi1>, vector<1x8xf32>
    %595 = vector.broadcast %594 : vector<1x8xf32> to vector<64x8xf32>
    %596 = arith.mulf %509, %595 : vector<64x8xf32>
    %cst_346 = arith.constant dense<0.000000e+00> : vector<64x64xf32>
    %597 = tpu.matmul %596, %500, %cst_346 {dimension_numbers = #tpu.dot_dimension_numbers<[1], [1], [0], [0], [0, 0, 1, 0], [], []>} : vector<64x8xf32>, vector<64x8xf32>, vector<64x64xf32> -> vector<64x64xf32>
    %cst_347 = arith.constant dense<0xFF800000> : vector<64xf32>
    %598 = vector.multi_reduction <maximumf>, %597, %cst_347 [1] : vector<64x64xf32> to vector<64xf32>
    %599 = vector.shape_cast %598 : vector<64xf32> to vector<64x1xf32>
    %600 = vector.broadcast %599 : vector<64x1xf32> to vector<64x64xf32>
    %601 = arith.subf %597, %600 : vector<64x64xf32>
    %602 = math.exp %601 : vector<64x64xf32>
    %cst_348 = arith.constant dense<0.000000e+00> : vector<64xf32>
    %603 = vector.multi_reduction <add>, %602, %cst_348 [1] : vector<64x64xf32> to vector<64xf32>
    %604 = vector.shape_cast %603 : vector<64xf32> to vector<64x1xf32>
    %605 = tpu.reciprocal %604 {approx = true} : vector<64x1xf32> -> vector<64x1xf32>
    %606 = vector.broadcast %605 : vector<64x1xf32> to vector<64x64xf32>
    %607 = arith.mulf %602, %606 : vector<64x64xf32>
    %608 = vector.broadcast %594 : vector<1x8xf32> to vector<64x8xf32>
    %609 = arith.mulf %507, %608 : vector<64x8xf32>
    %cst_349 = arith.constant dense<0.000000e+00> : vector<64x8xf32>
    %610 = tpu.matmul %607, %609, %cst_349 {dimension_numbers = #tpu.dot_dimension_numbers<[1], [0], [0], [1], [0, 0, 1, 1], [], []>} : vector<64x64xf32>, vector<64x8xf32>, vector<64x8xf32> -> vector<64x8xf32>
    %611 = arith.addf %586, %610 : vector<64x8xf32>
    %c0_350 = arith.constant 0 : index
    %c0_351 = arith.constant 0 : index
    %612 = vector.load %arg18[%c0_350, %c0_351] : memref<8x8xf32, #tpu.memory_space<vmem>>, vector<8x8xf32>
    %cst_352 = arith.constant dense<0.000000e+00> : vector<64x8xf32>
    %613 = tpu.matmul %611, %612, %cst_352 {dimension_numbers = #tpu.dot_dimension_numbers<[1], [0], [0], [1], [0, 0, 1, 1], [], []>} : vector<64x8xf32>, vector<8x8xf32>, vector<64x8xf32> -> vector<64x8xf32>
    %c0_353 = arith.constant 0 : index
    %c0_354 = arith.constant 0 : index
    %614 = vector.load %arg19[%c0_353, %c0_354] : memref<1x8xf32, #tpu.memory_space<vmem>>, vector<1x8xf32>
    %615 = vector.broadcast %614 : vector<1x8xf32> to vector<64x8xf32>
    %616 = arith.addf %613, %615 : vector<64x8xf32>
    %617 = arith.addf %616, %460 : vector<64x8xf32>
    %c0_355 = arith.constant 0 : index
    %c0_356 = arith.constant 0 : index
    %c0_357 = arith.constant 0 : index
    %618 = vector.load %arg20[%c0_355, %c0_356, %c0_357] : memref<2x1x8xf32, #tpu.memory_space<vmem>>, vector<1x1x8xf32>
    %619 = vector.shape_cast %618 : vector<1x1x8xf32> to vector<1x8xf32>
    %c1_358 = arith.constant 1 : index
    %c0_359 = arith.constant 0 : index
    %c0_360 = arith.constant 0 : index
    %620 = vector.load %arg20[%c1_358, %c0_359, %c0_360] : memref<2x1x8xf32, #tpu.memory_space<vmem>>, vector<1x1x8xf32>
    %621 = vector.shape_cast %620 : vector<1x1x8xf32> to vector<1x8xf32>
    %cst_361 = arith.constant dense<0.000000e+00> : vector<64xf32>
    %622 = vector.multi_reduction <add>, %617, %cst_361 [1] : vector<64x8xf32> to vector<64xf32>
    %623 = vector.shape_cast %622 : vector<64xf32> to vector<64x1xf32>
    %cst_362 = arith.constant 8.000000e+00 : f32
    %624 = vector.broadcast %cst_362 : f32 to vector<64x1xf32>
    %625 = arith.divf %623, %624 : vector<64x1xf32>
    %626 = vector.broadcast %625 : vector<64x1xf32> to vector<64x8xf32>
    %627 = arith.subf %617, %626 : vector<64x8xf32>
    %628 = arith.mulf %627, %627 : vector<64x8xf32>
    %cst_363 = arith.constant dense<0.000000e+00> : vector<64xf32>
    %629 = vector.multi_reduction <add>, %628, %cst_363 [1] : vector<64x8xf32> to vector<64xf32>
    %630 = vector.shape_cast %629 : vector<64xf32> to vector<64x1xf32>
    %cst_364 = arith.constant 8.000000e+00 : f32
    %631 = vector.broadcast %cst_364 : f32 to vector<64x1xf32>
    %632 = arith.divf %630, %631 : vector<64x1xf32>
    %633 = vector.broadcast %625 : vector<64x1xf32> to vector<64x8xf32>
    %634 = arith.subf %617, %633 : vector<64x8xf32>
    %cst_365 = arith.constant 9.99999974E-6 : f32
    %635 = vector.broadcast %cst_365 : f32 to vector<64x1xf32>
    %636 = arith.addf %632, %635 : vector<64x1xf32>
    %637 = math.rsqrt %636 : vector<64x1xf32>
    %638 = vector.broadcast %637 : vector<64x1xf32> to vector<64x8xf32>
    %639 = arith.mulf %634, %638 : vector<64x8xf32>
    %640 = vector.broadcast %619 : vector<1x8xf32> to vector<64x8xf32>
    %641 = arith.mulf %639, %640 : vector<64x8xf32>
    %642 = vector.broadcast %621 : vector<1x8xf32> to vector<64x8xf32>
    %643 = arith.addf %641, %642 : vector<64x8xf32>
    %c0_366 = arith.constant 0 : index
    %c0_367 = arith.constant 0 : index
    %c0_368 = arith.constant 0 : index
    %644 = vector.load %arg21[%c0_366, %c0_367, %c0_368] : memref<2x8x8xf32, #tpu.memory_space<vmem>>, vector<1x8x8xf32>
    %645 = vector.shape_cast %644 : vector<1x8x8xf32> to vector<8x8xf32>
    %cst_369 = arith.constant dense<0.000000e+00> : vector<64x8xf32>
    %646 = tpu.matmul %643, %645, %cst_369 {dimension_numbers = #tpu.dot_dimension_numbers<[1], [0], [0], [1], [0, 0, 1, 1], [], []>} : vector<64x8xf32>, vector<8x8xf32>, vector<64x8xf32> -> vector<64x8xf32>
    %c0_370 = arith.constant 0 : index
    %c0_371 = arith.constant 0 : index
    %c0_372 = arith.constant 0 : index
    %647 = vector.load %arg22[%c0_370, %c0_371, %c0_372] : memref<2x1x8xf32, #tpu.memory_space<vmem>>, vector<1x1x8xf32>
    %648 = vector.shape_cast %647 : vector<1x1x8xf32> to vector<1x8xf32>
    %649 = vector.broadcast %648 : vector<1x8xf32> to vector<64x8xf32>
    %650 = arith.addf %646, %649 : vector<64x8xf32>
    %cst_373 = arith.constant 5.000000e-01 : f32
    %651 = vector.broadcast %cst_373 : f32 to vector<64x8xf32>
    %652 = arith.mulf %651, %650 : vector<64x8xf32>
    %cst_374 = arith.constant 4.471500e-02 : f32
    %653 = vector.broadcast %cst_374 : f32 to vector<64x8xf32>
    %654 = arith.mulf %653, %650 : vector<64x8xf32>
    %655 = arith.mulf %654, %650 : vector<64x8xf32>
    %656 = arith.mulf %655, %650 : vector<64x8xf32>
    %657 = arith.addf %650, %656 : vector<64x8xf32>
    %cst_375 = arith.constant 0.797884583 : f32
    %658 = vector.broadcast %cst_375 : f32 to vector<64x8xf32>
    %659 = arith.mulf %658, %657 : vector<64x8xf32>
    %660 = math.tanh %659 : vector<64x8xf32>
    %cst_376 = arith.constant 1.000000e+00 : f32
    %661 = vector.broadcast %cst_376 : f32 to vector<64x8xf32>
    %662 = arith.addf %661, %660 : vector<64x8xf32>
    %663 = arith.mulf %652, %662 : vector<64x8xf32>
    %c1_377 = arith.constant 1 : index
    %c0_378 = arith.constant 0 : index
    %c0_379 = arith.constant 0 : index
    %664 = vector.load %arg21[%c1_377, %c0_378, %c0_379] : memref<2x8x8xf32, #tpu.memory_space<vmem>>, vector<1x8x8xf32>
    %665 = vector.shape_cast %664 : vector<1x8x8xf32> to vector<8x8xf32>
    %cst_380 = arith.constant dense<0.000000e+00> : vector<64x8xf32>
    %666 = tpu.matmul %663, %665, %cst_380 {dimension_numbers = #tpu.dot_dimension_numbers<[1], [0], [0], [1], [0, 0, 1, 1], [], []>} : vector<64x8xf32>, vector<8x8xf32>, vector<64x8xf32> -> vector<64x8xf32>
    %c1_381 = arith.constant 1 : index
    %c0_382 = arith.constant 0 : index
    %c0_383 = arith.constant 0 : index
    %667 = vector.load %arg22[%c1_381, %c0_382, %c0_383] : memref<2x1x8xf32, #tpu.memory_space<vmem>>, vector<1x1x8xf32>
    %668 = vector.shape_cast %667 : vector<1x1x8xf32> to vector<1x8xf32>
    %669 = vector.broadcast %668 : vector<1x8xf32> to vector<64x8xf32>
    %670 = arith.addf %666, %669 : vector<64x8xf32>
    %671 = arith.addf %670, %617 : vector<64x8xf32>
    %672 = tpu.transpose %671, [1, 0] : vector<64x8xf32> -> vector<8x64xf32>
    %c0_384 = arith.constant 0 : index
    %c0_385 = arith.constant 0 : index
    %c0_386 = arith.constant 0 : index
    %673 = vector.load %arg23[%c0_384, %c0_385, %c0_386] : memref<1x8x64xf32, #tpu.memory_space<vmem>>, vector<1x8x64xf32>
    %674 = vector.shape_cast %673 : vector<1x8x64xf32> to vector<8x64xf32>
    %675 = vector.shape_cast %672 : vector<8x64xf32> to vector<1x8x64xf32>
    tpu.vector_store %arg23[%c0_384, %c0_385, %c0_386], %675 {strides = array<i32>} : memref<1x8x64xf32, #tpu.memory_space<vmem>>, vector<1x8x64xf32>,
    return
  }
  func.func @transform_0(%arg0: i32) -> (i32, i32, i32) {
    %c0_i32 = arith.constant 0 : i32
    %c0_i32_0 = arith.constant 0 : i32
    %c0_i32_1 = arith.constant 0 : i32
    return %arg0, %c0_i32, %c0_i32_0 : i32, i32, i32
  }
  func.func @transform_1(%arg0: i32) -> (i32, i32, i32) {
    %c0_i32 = arith.constant 0 : i32
    %c0_i32_0 = arith.constant 0 : i32
    %c0_i32_1 = arith.constant 0 : i32
    return %arg0, %c0_i32, %c0_i32_0 : i32, i32, i32
  }
  func.func @transform_2(%arg0: i32) -> (i32, i32, i32) {
    %c0_i32 = arith.constant 0 : i32
    %c0_i32_0 = arith.constant 0 : i32
    %c0_i32_1 = arith.constant 0 : i32
    %c0_i32_2 = arith.constant 0 : i32
    return %c0_i32, %c0_i32_0, %c0_i32_1 : i32, i32, i32
  }
  func.func @transform_3(%arg0: i32) -> (i32, i32) {
    %c0_i32 = arith.constant 0 : i32
    %c0_i32_0 = arith.constant 0 : i32
    %c0_i32_1 = arith.constant 0 : i32
    return %c0_i32, %c0_i32_0 : i32, i32
  }
  func.func @transform_4(%arg0: i32) -> (i32, i32, i32) {
    %c0_i32 = arith.constant 0 : i32
    %c0_i32_0 = arith.constant 0 : i32
    %c0_i32_1 = arith.constant 0 : i32
    %c0_i32_2 = arith.constant 0 : i32
    return %c0_i32, %c0_i32_0, %c0_i32_1 : i32, i32, i32
  }
  func.func @transform_5(%arg0: i32) -> (i32, i32, i32) {
    %c0_i32 = arith.constant 0 : i32
    %c0_i32_0 = arith.constant 0 : i32
    %c0_i32_1 = arith.constant 0 : i32
    %c0_i32_2 = arith.constant 0 : i32
    return %c0_i32, %c0_i32_0, %c0_i32_1 : i32, i32, i32
  }
  func.func @transform_6(%arg0: i32) -> (i32, i32, i32) {
    %c0_i32 = arith.constant 0 : i32
    %c0_i32_0 = arith.constant 0 : i32
    %c0_i32_1 = arith.constant 0 : i32
    %c0_i32_2 = arith.constant 0 : i32
    return %c0_i32, %c0_i32_0, %c0_i32_1 : i32, i32, i32
  }
  func.func @transform_7(%arg0: i32) -> (i32, i32, i32) {
    %c0_i32 = arith.constant 0 : i32
    %c0_i32_0 = arith.constant 0 : i32
    %c0_i32_1 = arith.constant 0 : i32
    %c0_i32_2 = arith.constant 0 : i32
    return %c0_i32, %c0_i32_0, %c0_i32_1 : i32, i32, i32
  }
  func.func @transform_8(%arg0: i32) -> (i32, i32, i32) {
    %c0_i32 = arith.constant 0 : i32
    %c0_i32_0 = arith.constant 0 : i32
    %c0_i32_1 = arith.constant 0 : i32
    %c0_i32_2 = arith.constant 0 : i32
    return %c0_i32, %c0_i32_0, %c0_i32_1 : i32, i32, i32
  }
  func.func @transform_9(%arg0: i32) -> (i32, i32, i32) {
    %c0_i32 = arith.constant 0 : i32
    %c0_i32_0 = arith.constant 0 : i32
    %c0_i32_1 = arith.constant 0 : i32
    %c0_i32_2 = arith.constant 0 : i32
    return %c0_i32, %c0_i32_0, %c0_i32_1 : i32, i32, i32
  }
  func.func @transform_10(%arg0: i32) -> (i32, i32, i32) {
    %c0_i32 = arith.constant 0 : i32
    %c0_i32_0 = arith.constant 0 : i32
    %c0_i32_1 = arith.constant 0 : i32
    %c0_i32_2 = arith.constant 0 : i32
    return %c0_i32, %c0_i32_0, %c0_i32_1 : i32, i32, i32
  }
  func.func @transform_11(%arg0: i32) -> (i32, i32, i32) {
    %c0_i32 = arith.constant 0 : i32
    %c0_i32_0 = arith.constant 0 : i32
    %c0_i32_1 = arith.constant 0 : i32
    %c0_i32_2 = arith.constant 0 : i32
    return %c0_i32, %c0_i32_0, %c0_i32_1 : i32, i32, i32
  }
  func.func @transform_12(%arg0: i32) -> (i32, i32) {
    %c0_i32 = arith.constant 0 : i32
    %c0_i32_0 = arith.constant 0 : i32
    %c0_i32_1 = arith.constant 0 : i32
    return %c0_i32, %c0_i32_0 : i32, i32
  }
  func.func @transform_13(%arg0: i32) -> (i32, i32) {
    %c0_i32 = arith.constant 0 : i32
    %c0_i32_0 = arith.constant 0 : i32
    %c0_i32_1 = arith.constant 0 : i32
    return %c0_i32, %c0_i32_0 : i32, i32
  }
  func.func @transform_14(%arg0: i32) -> (i32, i32, i32) {
    %c0_i32 = arith.constant 0 : i32
    %c0_i32_0 = arith.constant 0 : i32
    %c0_i32_1 = arith.constant 0 : i32
    %c0_i32_2 = arith.constant 0 : i32
    return %c0_i32, %c0_i32_0, %c0_i32_1 : i32, i32, i32
  }
  func.func @transform_15(%arg0: i32) -> (i32, i32, i32) {
    %c0_i32 = arith.constant 0 : i32
    %c0_i32_0 = arith.constant 0 : i32
    %c0_i32_1 = arith.constant 0 : i32
    %c0_i32_2 = arith.constant 0 : i32
    return %c0_i32, %c0_i32_0, %c0_i32_1 : i32, i32, i32
  }
  func.func @transform_16(%arg0: i32) -> (i32, i32, i32) {
    %c0_i32 = arith.constant 0 : i32
    %c0_i32_0 = arith.constant 0 : i32
    %c0_i32_1 = arith.constant 0 : i32
    %c0_i32_2 = arith.constant 0 : i32
    return %c0_i32, %c0_i32_0, %c0_i32_1 : i32, i32, i32
  }
  func.func @transform_17(%arg0: i32) -> (i32, i32) {
    %c0_i32 = arith.constant 0 : i32
    %c0_i32_0 = arith.constant 0 : i32
    %c0_i32_1 = arith.constant 0 : i32
    return %c0_i32, %c0_i32_0 : i32, i32
  }
  func.func @transform_18(%arg0: i32) -> (i32, i32) {
    %c0_i32 = arith.constant 0 : i32
    %c0_i32_0 = arith.constant 0 : i32
    %c0_i32_1 = arith.constant 0 : i32
    return %c0_i32, %c0_i32_0 : i32, i32
  }
  func.func @transform_19(%arg0: i32) -> (i32, i32, i32) {
    %c0_i32 = arith.constant 0 : i32
    %c0_i32_0 = arith.constant 0 : i32
    %c0_i32_1 = arith.constant 0 : i32
    %c0_i32_2 = arith.constant 0 : i32
    return %c0_i32, %c0_i32_0, %c0_i32_1 : i32, i32, i32
  }
  func.func @transform_20(%arg0: i32) -> (i32, i32, i32) {
    %c0_i32 = arith.constant 0 : i32
    %c0_i32_0 = arith.constant 0 : i32
    %c0_i32_1 = arith.constant 0 : i32
    %c0_i32_2 = arith.constant 0 : i32
    return %c0_i32, %c0_i32_0, %c0_i32_1 : i32, i32, i32
  }
  func.func @transform_21(%arg0: i32) -> (i32, i32, i32) {
    %c0_i32 = arith.constant 0 : i32
    %c0_i32_0 = arith.constant 0 : i32
    %c0_i32_1 = arith.constant 0 : i32
    %c0_i32_2 = arith.constant 0 : i32
    return %c0_i32, %c0_i32_0, %c0_i32_1 : i32, i32, i32
  }
  func.func @transform_22(%arg0: i32) -> (i32, i32, i32) {
    %c0_i32 = arith.constant 0 : i32
    %c0_i32_0 = arith.constant 0 : i32
    %c0_i32_1 = arith.constant 0 : i32
    return %arg0, %c0_i32, %c0_i32_0 : i32, i32, i32
  }
  func.func @transform_23(%arg0: i32) -> (i32, i32, i32) {
    %c0_i32 = arith.constant 0 : i32
    %c0_i32_0 = arith.constant 0 : i32
    %c0_i32_1 = arith.constant 0 : i32
    return %arg0, %c0_i32, %c0_i32_0 : i32, i32, i32
  }
}

</mosaic_0001>

<llo_original>
// kernel: tpu_custom_call.1
$region0: #{tpu_custom_call.1}
  #allocation0 [shape = 'u32[]', space=smem, size = 0x4, offset = 0x4, fixed_abs, tag = 'smem constant byte address 0x4 - core index']
  #allocation1 [shape = 'u32[144,128]{1,0:T(1,128)}', space=vmem, size = 0x12000, scoped, tag = 'internal scratch']
  %s0 = inlined_call_operand.vmem [shape: f32[2,4,256], index: 0, kind: input, shape index: {}]
  %s1 = inlined_call_operand.vmem [shape: f32[2,1,32], index: 1, kind: input, shape index: {}]
  %s2 = inlined_call_operand.vmem [shape: f32[3,1,256], index: 2, kind: input, shape index: {}]
  %s3 = inlined_call_operand.vmem [shape: f32[64,256], index: 3, kind: input, shape index: {}]
  %s4 = inlined_call_operand.vmem [shape: f32[9,4,4], index: 4, kind: input, shape index: {}]
  %s5 = inlined_call_operand.vmem [shape: f32[2,4,1], index: 5, kind: input, shape index: {}]
  %s6 = inlined_call_operand.vmem [shape: f32[9,4,4], index: 6, kind: input, shape index: {}]
  %s7 = inlined_call_operand.vmem [shape: f32[2,4,1], index: 7, kind: input, shape index: {}]
  %s8 = inlined_call_operand.vmem [shape: f32[9,8,4], index: 8, kind: input, shape index: {}]
  %s9 = inlined_call_operand.vmem [shape: f32[2,8,1], index: 9, kind: input, shape index: {}]
  %s10 = inlined_call_operand.vmem [shape: f32[9,8,8], index: 10, kind: input, shape index: {}]
  %s11 = inlined_call_operand.vmem [shape: f32[2,8,1], index: 11, kind: input, shape index: {}]
  %s12 = inlined_call_operand.vmem [shape: f32[32,8], index: 12, kind: input, shape index: {}]
  %s13 = inlined_call_operand.vmem [shape: f32[1,8], index: 13, kind: input, shape index: {}]
  %s14 = inlined_call_operand.vmem [shape: f32[2,1,8], index: 14, kind: input, shape index: {}]
  %s15 = inlined_call_operand.vmem [shape: f32[3,8,8], index: 15, kind: input, shape index: {}]
  %s16 = inlined_call_operand.vmem [shape: f32[3,1,8], index: 16, kind: input, shape index: {}]
  %s17 = inlined_call_operand.vmem [shape: f32[8,8], index: 17, kind: input, shape index: {}]
  %s18 = inlined_call_operand.vmem [shape: f32[1,8], index: 18, kind: input, shape index: {}]
  %s19 = inlined_call_operand.vmem [shape: f32[2,1,8], index: 19, kind: input, shape index: {}]
  %s20 = inlined_call_operand.vmem [shape: f32[2,8,8], index: 20, kind: input, shape index: {}]
  %s21 = inlined_call_operand.vmem [shape: f32[2,1,8], index: 21, kind: input, shape index: {}]
  %s22 = inlined_call_operand.hbm [shape: f32[2,8,64], index: 22, kind: output, shape index: {0}]
  %s23 = inlined_call_operand.hbm [shape: f32[2,8,256], index: 23, kind: output, shape index: {1}]
  %24 = xla_tuple %s22, %s23
  %s25 = sld [smem:[#allocation0]]
  $region129: #{tpu_custom_call.1} parent=0
    _
  %s27 = ssub.s32 1, %s25
  %s28 = scalar_select 0, %s27, %s25
  $region1: #{tpu_custom_call.1} parent=0
    #allocation2 [shape = 'u8[8192]{0}', space=vmem, size = 0x2000, scoped, tag = 'output window, operand 0']
    #allocation3 [shape = 's32[2]{0}', space=sflag, size = 0x8, scoped, tag = 'scoped memory for tpu_custom_call.1']
    #allocation4 [shape = 'u8[16384]{0}', space=vmem, size = 0x4000, scoped, tag = 'output window, operand 1']
    #allocation5 [shape = 's32[2]{0}', space=sflag, size = 0x8, scoped, tag = 'scoped memory for tpu_custom_call.1']
    %29 = vsyncpa [#allocation3], 0
    %s30 = scalar_lea.sflag [#allocation3], 1
    %31 = vsyncpa %s30, 0
    %32 = vsyncpa [#allocation5], 0
    %s33 = scalar_lea.sflag [#allocation5], 1
    %34 = vsyncpa %s33, 0
    loop: start=0, step=1, limit=4
    $region2: #{tpu_custom_call.1} parent=1 // loop_pre_header
      _
    $region3: #{tpu_custom_call.1} parent=1 // loop_header
      %s36 = sphi 0, %s40
      %p37 = scmp.ge.s32.totalorder %s36, 4
      %s46 = sphi 0, %s48
      %s49 = sphi 0, %s46
      %s50 = sphi 0, %s49
      %s66 = sphi 0, %s50
      %s72 = sphi 0, %s74
      %s75 = sphi 0, %s72
      %s76 = sphi 0, %s75
      %s92 = sphi 0, %s76
      %s96 = sphi 0, %s96
      %s98 = sphi 0, %s96
      %s99 = sphi 0, %s98
      %s113 = sphi 0, %s99
      %s117 = sphi 0, %s117
      %s119 = sphi 0, %s117
      %s120 = sphi 0, %s119
      %s134 = sphi 0, %s120
      %s138 = sphi 0, %s138
      %s140 = sphi 0, %s138
      %s141 = sphi 0, %s140
      %s155 = sphi 0, %s141
      %s159 = sphi 0, %s159
      %s161 = sphi 0, %s159
      %s162 = sphi 0, %s161
      %s176 = sphi 0, %s162
      %s180 = sphi 0, %s180
      %s182 = sphi 0, %s180
      %s183 = sphi 0, %s182
      %s197 = sphi 0, %s183
      %s201 = sphi 0, %s201
      %s203 = sphi 0, %s201
      %s204 = sphi 0, %s203
      %s218 = sphi 0, %s204
      %s222 = sphi 0, %s222
      %s224 = sphi 0, %s222
      %s225 = sphi 0, %s224
      %s239 = sphi 0, %s225
      %s243 = sphi 0, %s243
      %s245 = sphi 0, %s243
      %s246 = sphi 0, %s245
      %s260 = sphi 0, %s246
      %s264 = sphi 0, %s264
      %s266 = sphi 0, %s264
      %s267 = sphi 0, %s266
      %s281 = sphi 0, %s267
      %s285 = sphi 0, %s285
      %s287 = sphi 0, %s285
      %s288 = sphi 0, %s287
      %s302 = sphi 0, %s288
      %s306 = sphi 0, %s306
      %s308 = sphi 0, %s306
      %s309 = sphi 0, %s308
      %s323 = sphi 0, %s309
      %s327 = sphi 0, %s327
      %s329 = sphi 0, %s327
      %s330 = sphi 0, %s329
      %s344 = sphi 0, %s330
      %s348 = sphi 0, %s348
      %s350 = sphi 0, %s348
      %s351 = sphi 0, %s350
      %s365 = sphi 0, %s351
      %s369 = sphi 0, %s369
      %s371 = sphi 0, %s369
      %s372 = sphi 0, %s371
      %s386 = sphi 0, %s372
      %s390 = sphi 0, %s390
      %s392 = sphi 0, %s390
      %s393 = sphi 0, %s392
      %s407 = sphi 0, %s393
      %s411 = sphi 0, %s411
      %s413 = sphi 0, %s411
      %s414 = sphi 0, %s413
      %s428 = sphi 0, %s414
      %s432 = sphi 0, %s432
      %s434 = sphi 0, %s432
      %s435 = sphi 0, %s434
      %s449 = sphi 0, %s435
      %s453 = sphi 0, %s453
      %s455 = sphi 0, %s453
      %s456 = sphi 0, %s455
      %s470 = sphi 0, %s456
      %s474 = sphi 0, %s474
      %s476 = sphi 0, %s474
      %s477 = sphi 0, %s476
      %s491 = sphi 0, %s477
      %s495 = sphi 0, %s495
      %s497 = sphi 0, %s495
      %s498 = sphi 0, %s497
      %s512 = sphi 0, %s498
      %s518 = sphi 0, %s520
      %s521 = sphi 0, %s518
      %s522 = sphi 0, %s521
      %s538 = sphi 0, %s522
      %s544 = sphi 0, %s546
      %s547 = sphi 0, %s544
      %s548 = sphi 0, %s547
      %s564 = sphi 0, %s548
    $region4: #{tpu_custom_call.1} parent=1 // loop_header_branch
      %39 = sbr.rel (%p37) target = $region8
    $region5: #{tpu_custom_call.1} parent=1 // loop_body
      %s41 = ssub.s32 %s36, 1
      %s42 = ssub.s32 %s36, 2
      %s43 = sadd.s32 %s36, 1
      %s44 = ssub.s32 %s36, %s43
      %p45 = scmp.eq.s32.totalorder %s44, 0
      %s47 = sadd.s32 %s46, 1
      %s48 = scalar_select %p45, %s46, %s47
      %p51 = pneg %p45
      %p52 = scmp.eq.s32.totalorder %s36, 1
      %p53 = por %p51, %p52
      %p54 = scmp.ne.s32.totalorder %s46, %s49
      %p55 = scmp.eq.s32.totalorder %s36, 0
      %p56 = por %p54, %p55
      %p57 = scmp.ne.s32.totalorder %s46, %s49
      %p58 = scmp.eq.s32.totalorder %s41, 1
      %p59 = por %p57, %p58
      %p60 = scmp.ne.s32.totalorder %s49, %s50
      %p61 = scmp.eq.s32.totalorder %s41, 0
      %p62 = por %p60, %p61
      %p63 = scmp.ne.s32.totalorder %s49, %s50
      %p64 = scmp.eq.s32.totalorder %s42, 1
      %p65 = por %p63, %p64
      %p67 = scmp.ne.s32.totalorder %s50, %s66
      %p68 = scmp.eq.s32.totalorder %s42, 0
      %p69 = por %p67, %p68
      %s70 = ssub.s32 %s36, %s43
      %p71 = scmp.eq.s32.totalorder %s70, 0
      %s73 = sadd.s32 %s72, 1
      %s74 = scalar_select %p71, %s72, %s73
      %p77 = pneg %p71
      %p78 = scmp.eq.s32.totalorder %s36, 1
      %p79 = por %p77, %p78
      %p80 = scmp.ne.s32.totalorder %s72, %s75
      %p81 = scmp.eq.s32.totalorder %s36, 0
      %p82 = por %p80, %p81
      %p83 = scmp.ne.s32.totalorder %s72, %s75
      %p84 = scmp.eq.s32.totalorder %s41, 1
      %p85 = por %p83, %p84
      %p86 = scmp.ne.s32.totalorder %s75, %s76
      %p87 = scmp.eq.s32.totalorder %s41, 0
      %p88 = por %p86, %p87
      %p89 = scmp.ne.s32.totalorder %s75, %s76
      %p90 = scmp.eq.s32.totalorder %s42, 1
      %p91 = por %p89, %p90
      %p93 = scmp.ne.s32.totalorder %s76, %s92
      %p94 = scmp.eq.s32.totalorder %s42, 0
      %p95 = por %p93, %p94
      %s97 = sadd.s32 %s96, 1
      %p100 = scmp.eq.s32.totalorder %s36, 1
      %p101 = scmp.ne.s32.totalorder %s96, %s98
      %p102 = scmp.eq.s32.totalorder %s36, 0
      %p103 = por %p101, %p102
      %p104 = scmp.ne.s32.totalorder %s96, %s98
      %p105 = scmp.eq.s32.totalorder %s41, 1
      %p106 = por %p104, %p105
      %p107 = scmp.ne.s32.totalorder %s98, %s99
      %p108 = scmp.eq.s32.totalorder %s41, 0
      %p109 = por %p107, %p108
      %p110 = scmp.ne.s32.totalorder %s98, %s99
      %p111 = scmp.eq.s32.totalorder %s42, 1
      %p112 = por %p110, %p111
      %p114 = scmp.ne.s32.totalorder %s99, %s113
      %p115 = scmp.eq.s32.totalorder %s42, 0
      %p116 = por %p114, %p115
      %s118 = sadd.s32 %s117, 1
      %p121 = scmp.eq.s32.totalorder %s36, 1
      %p122 = scmp.ne.s32.totalorder %s117, %s119
      %p123 = scmp.eq.s32.totalorder %s36, 0
      %p124 = por %p122, %p123
      %p125 = scmp.ne.s32.totalorder %s117, %s119
      %p126 = scmp.eq.s32.totalorder %s41, 1
      %p127 = por %p125, %p126
      %p128 = scmp.ne.s32.totalorder %s119, %s120
      %p129 = scmp.eq.s32.totalorder %s41, 0
      %p130 = por %p128, %p129
      %p131 = scmp.ne.s32.totalorder %s119, %s120
      %p132 = scmp.eq.s32.totalorder %s42, 1
      %p133 = por %p131, %p132
      %p135 = scmp.ne.s32.totalorder %s120, %s134
      %p136 = scmp.eq.s32.totalorder %s42, 0
      %p137 = por %p135, %p136
      %s139 = sadd.s32 %s138, 1
      %p142 = scmp.eq.s32.totalorder %s36, 1
      %p143 = scmp.ne.s32.totalorder %s138, %s140
      %p144 = scmp.eq.s32.totalorder %s36, 0
      %p145 = por %p143, %p144
      %p146 = scmp.ne.s32.totalorder %s138, %s140
      %p147 = scmp.eq.s32.totalorder %s41, 1
      %p148 = por %p146, %p147
      %p149 = scmp.ne.s32.totalorder %s140, %s141
      %p150 = scmp.eq.s32.totalorder %s41, 0
      %p151 = por %p149, %p150
      %p152 = scmp.ne.s32.totalorder %s140, %s141
      %p153 = scmp.eq.s32.totalorder %s42, 1
      %p154 = por %p152, %p153
      %p156 = scmp.ne.s32.totalorder %s141, %s155
      %p157 = scmp.eq.s32.totalorder %s42, 0
      %p158 = por %p156, %p157
      %s160 = sadd.s32 %s159, 1
      %p163 = scmp.eq.s32.totalorder %s36, 1
      %p164 = scmp.ne.s32.totalorder %s159, %s161
      %p165 = scmp.eq.s32.totalorder %s36, 0
      %p166 = por %p164, %p165
      %p167 = scmp.ne.s32.totalorder %s159, %s161
      %p168 = scmp.eq.s32.totalorder %s41, 1
      %p169 = por %p167, %p168
      %p170 = scmp.ne.s32.totalorder %s161, %s162
      %p171 = scmp.eq.s32.totalorder %s41, 0
      %p172 = por %p170, %p171
      %p173 = scmp.ne.s32.totalorder %s161, %s162
      %p174 = scmp.eq.s32.totalorder %s42, 1
      %p175 = por %p173, %p174
      %p177 = scmp.ne.s32.totalorder %s162, %s176
      %p178 = scmp.eq.s32.totalorder %s42, 0
      %p179 = por %p177, %p178
      %s181 = sadd.s32 %s180, 1
      %p184 = scmp.eq.s32.totalorder %s36, 1
      %p185 = scmp.ne.s32.totalorder %s180, %s182
      %p186 = scmp.eq.s32.totalorder %s36, 0
      %p187 = por %p185, %p186
      %p188 = scmp.ne.s32.totalorder %s180, %s182
      %p189 = scmp.eq.s32.totalorder %s41, 1
      %p190 = por %p188, %p189
      %p191 = scmp.ne.s32.totalorder %s182, %s183
      %p192 = scmp.eq.s32.totalorder %s41, 0
      %p193 = por %p191, %p192
      %p194 = scmp.ne.s32.totalorder %s182, %s183
      %p195 = scmp.eq.s32.totalorder %s42, 1
      %p196 = por %p194, %p195
      %p198 = scmp.ne.s32.totalorder %s183, %s197
      %p199 = scmp.eq.s32.totalorder %s42, 0
      %p200 = por %p198, %p199
      %s202 = sadd.s32 %s201, 1
      %p205 = scmp.eq.s32.totalorder %s36, 1
      %p206 = scmp.ne.s32.totalorder %s201, %s203
      %p207 = scmp.eq.s32.totalorder %s36, 0
      %p208 = por %p206, %p207
      %p209 = scmp.ne.s32.totalorder %s201, %s203
      %p210 = scmp.eq.s32.totalorder %s41, 1
      %p211 = por %p209, %p210
      %p212 = scmp.ne.s32.totalorder %s203, %s204
      %p213 = scmp.eq.s32.totalorder %s41, 0
      %p214 = por %p212, %p213
      %p215 = scmp.ne.s32.totalorder %s203, %s204
      %p216 = scmp.eq.s32.totalorder %s42, 1
      %p217 = por %p215, %p216
      %p219 = scmp.ne.s32.totalorder %s204, %s218
      %p220 = scmp.eq.s32.totalorder %s42, 0
      %p221 = por %p219, %p220
      %s223 = sadd.s32 %s222, 1
      %p226 = scmp.eq.s32.totalorder %s36, 1
      %p227 = scmp.ne.s32.totalorder %s222, %s224
      %p228 = scmp.eq.s32.totalorder %s36, 0
      %p229 = por %p227, %p228
      %p230 = scmp.ne.s32.totalorder %s222, %s224
      %p231 = scmp.eq.s32.totalorder %s41, 1
      %p232 = por %p230, %p231
      %p233 = scmp.ne.s32.totalorder %s224, %s225
      %p234 = scmp.eq.s32.totalorder %s41, 0
      %p235 = por %p233, %p234
      %p236 = scmp.ne.s32.totalorder %s224, %s225
      %p237 = scmp.eq.s32.totalorder %s42, 1
      %p238 = por %p236, %p237
      %p240 = scmp.ne.s32.totalorder %s225, %s239
      %p241 = scmp.eq.s32.totalorder %s42, 0
      %p242 = por %p240, %p241
      %s244 = sadd.s32 %s243, 1
      %p247 = scmp.eq.s32.totalorder %s36, 1
      %p248 = scmp.ne.s32.totalorder %s243, %s245
      %p249 = scmp.eq.s32.totalorder %s36, 0
      %p250 = por %p248, %p249
      %p251 = scmp.ne.s32.totalorder %s243, %s245
      %p252 = scmp.eq.s32.totalorder %s41, 1
      %p253 = por %p251, %p252
      %p254 = scmp.ne.s32.totalorder %s245, %s246
      %p255 = scmp.eq.s32.totalorder %s41, 0
      %p256 = por %p254, %p255
      %p257 = scmp.ne.s32.totalorder %s245, %s246
      %p258 = scmp.eq.s32.totalorder %s42, 1
      %p259 = por %p257, %p258
      %p261 = scmp.ne.s32.totalorder %s246, %s260
      %p262 = scmp.eq.s32.totalorder %s42, 0
      %p263 = por %p261, %p262
      %s265 = sadd.s32 %s264, 1
      %p268 = scmp.eq.s32.totalorder %s36, 1
      %p269 = scmp.ne.s32.totalorder %s264, %s266
      %p270 = scmp.eq.s32.totalorder %s36, 0
      %p271 = por %p269, %p270
      %p272 = scmp.ne.s32.totalorder %s264, %s266
      %p273 = scmp.eq.s32.totalorder %s41, 1
      %p274 = por %p272, %p273
      %p275 = scmp.ne.s32.totalorder %s266, %s267
      %p276 = scmp.eq.s32.totalorder %s41, 0
      %p277 = por %p275, %p276
      %p278 = scmp.ne.s32.totalorder %s266, %s267
      %p279 = scmp.eq.s32.totalorder %s42, 1
      %p280 = por %p278, %p279
      %p282 = scmp.ne.s32.totalorder %s267, %s281
      %p283 = scmp.eq.s32.totalorder %s42, 0
      %p284 = por %p282, %p283
      %s286 = sadd.s32 %s285, 1
      %p289 = scmp.eq.s32.totalorder %s36, 1
      %p290 = scmp.ne.s32.totalorder %s285, %s287
      %p291 = scmp.eq.s32.totalorder %s36, 0
      %p292 = por %p290, %p291
      %p293 = scmp.ne.s32.totalorder %s285, %s287
      %p294 = scmp.eq.s32.totalorder %s41, 1
      %p295 = por %p293, %p294
      %p296 = scmp.ne.s32.totalorder %s287, %s288
      %p297 = scmp.eq.s32.totalorder %s41, 0
      %p298 = por %p296, %p297
      %p299 = scmp.ne.s32.totalorder %s287, %s288
      %p300 = scmp.eq.s32.totalorder %s42, 1
      %p301 = por %p299, %p300
      %p303 = scmp.ne.s32.totalorder %s288, %s302
      %p304 = scmp.eq.s32.totalorder %s42, 0
      %p305 = por %p303, %p304
      %s307 = sadd.s32 %s306, 1
      %p310 = scmp.eq.s32.totalorder %s36, 1
      %p311 = scmp.ne.s32.totalorder %s306, %s308
      %p312 = scmp.eq.s32.totalorder %s36, 0
      %p313 = por %p311, %p312
      %p314 = scmp.ne.s32.totalorder %s306, %s308
      %p315 = scmp.eq.s32.totalorder %s41, 1
      %p316 = por %p314, %p315
      %p317 = scmp.ne.s32.totalorder %s308, %s309
      %p318 = scmp.eq.s32.totalorder %s41, 0
      %p319 = por %p317, %p318
      %p320 = scmp.ne.s32.totalorder %s308, %s309
      %p321 = scmp.eq.s32.totalorder %s42, 1
      %p322 = por %p320, %p321
      %p324 = scmp.ne.s32.totalorder %s309, %s323
      %p325 = scmp.eq.s32.totalorder %s42, 0
      %p326 = por %p324, %p325
      %s328 = sadd.s32 %s327, 1
      %p331 = scmp.eq.s32.totalorder %s36, 1
      %p332 = scmp.ne.s32.totalorder %s327, %s329
      %p333 = scmp.eq.s32.totalorder %s36, 0
      %p334 = por %p332, %p333
      %p335 = scmp.ne.s32.totalorder %s327, %s329
      %p336 = scmp.eq.s32.totalorder %s41, 1
      %p337 = por %p335, %p336
      %p338 = scmp.ne.s32.totalorder %s329, %s330
      %p339 = scmp.eq.s32.totalorder %s41, 0
      %p340 = por %p338, %p339
      %p341 = scmp.ne.s32.totalorder %s329, %s330
      %p342 = scmp.eq.s32.totalorder %s42, 1
      %p343 = por %p341, %p342
      %p345 = scmp.ne.s32.totalorder %s330, %s344
      %p346 = scmp.eq.s32.totalorder %s42, 0
      %p347 = por %p345, %p346
      %s349 = sadd.s32 %s348, 1
      %p352 = scmp.eq.s32.totalorder %s36, 1
      %p353 = scmp.ne.s32.totalorder %s348, %s350
      %p354 = scmp.eq.s32.totalorder %s36, 0
      %p355 = por %p353, %p354
      %p356 = scmp.ne.s32.totalorder %s348, %s350
      %p357 = scmp.eq.s32.totalorder %s41, 1
      %p358 = por %p356, %p357
      %p359 = scmp.ne.s32.totalorder %s350, %s351
      %p360 = scmp.eq.s32.totalorder %s41, 0
      %p361 = por %p359, %p360
      %p362 = scmp.ne.s32.totalorder %s350, %s351
      %p363 = scmp.eq.s32.totalorder %s42, 1
      %p364 = por %p362, %p363
      %p366 = scmp.ne.s32.totalorder %s351, %s365
      %p367 = scmp.eq.s32.totalorder %s42, 0
      %p368 = por %p366, %p367
      %s370 = sadd.s32 %s369, 1
      %p373 = scmp.eq.s32.totalorder %s36, 1
      %p374 = scmp.ne.s32.totalorder %s369, %s371
      %p375 = scmp.eq.s32.totalorder %s36, 0
      %p376 = por %p374, %p375
      %p377 = scmp.ne.s32.totalorder %s369, %s371
      %p378 = scmp.eq.s32.totalorder %s41, 1
      %p379 = por %p377, %p378
      %p380 = scmp.ne.s32.totalorder %s371, %s372
      %p381 = scmp.eq.s32.totalorder %s41, 0
      %p382 = por %p380, %p381
      %p383 = scmp.ne.s32.totalorder %s371, %s372
      %p384 = scmp.eq.s32.totalorder %s42, 1
      %p385 = por %p383, %p384
      %p387 = scmp.ne.s32.totalorder %s372, %s386
      %p388 = scmp.eq.s32.totalorder %s42, 0
      %p389 = por %p387, %p388
      %s391 = sadd.s32 %s390, 1
      %p394 = scmp.eq.s32.totalorder %s36, 1
      %p395 = scmp.ne.s32.totalorder %s390, %s392
      %p396 = scmp.eq.s32.totalorder %s36, 0
      %p397 = por %p395, %p396
      %p398 = scmp.ne.s32.totalorder %s390, %s392
      %p399 = scmp.eq.s32.totalorder %s41, 1
      %p400 = por %p398, %p399
      %p401 = scmp.ne.s32.totalorder %s392, %s393
      %p402 = scmp.eq.s32.totalorder %s41, 0
      %p403 = por %p401, %p402
      %p404 = scmp.ne.s32.totalorder %s392, %s393
      %p405 = scmp.eq.s32.totalorder %s42, 1
      %p406 = por %p404, %p405
      %p408 = scmp.ne.s32.totalorder %s393, %s407
      %p409 = scmp.eq.s32.totalorder %s42, 0
      %p410 = por %p408, %p409
      %s412 = sadd.s32 %s411, 1
      %p415 = scmp.eq.s32.totalorder %s36, 1
      %p416 = scmp.ne.s32.totalorder %s411, %s413
      %p417 = scmp.eq.s32.totalorder %s36, 0
      %p418 = por %p416, %p417
      %p419 = scmp.ne.s32.totalorder %s411, %s413
      %p420 = scmp.eq.s32.totalorder %s41, 1
      %p421 = por %p419, %p420
      %p422 = scmp.ne.s32.totalorder %s413, %s414
      %p423 = scmp.eq.s32.totalorder %s41, 0
      %p424 = por %p422, %p423
      %p425 = scmp.ne.s32.totalorder %s413, %s414
      %p426 = scmp.eq.s32.totalorder %s42, 1
      %p427 = por %p425, %p426
      %p429 = scmp.ne.s32.totalorder %s414, %s428
      %p430 = scmp.eq.s32.totalorder %s42, 0
      %p431 = por %p429, %p430
      %s433 = sadd.s32 %s432, 1
      %p436 = scmp.eq.s32.totalorder %s36, 1
      %p437 = scmp.ne.s32.totalorder %s432, %s434
      %p438 = scmp.eq.s32.totalorder %s36, 0
      %p439 = por %p437, %p438
      %p440 = scmp.ne.s32.totalorder %s432, %s434
      %p441 = scmp.eq.s32.totalorder %s41, 1
      %p442 = por %p440, %p441
      %p443 = scmp.ne.s32.totalorder %s434, %s435
      %p444 = scmp.eq.s32.totalorder %s41, 0
      %p445 = por %p443, %p444
      %p446 = scmp.ne.s32.totalorder %s434, %s435
      %p447 = scmp.eq.s32.totalorder %s42, 1
      %p448 = por %p446, %p447
      %p450 = scmp.ne.s32.totalorder %s435, %s449
      %p451 = scmp.eq.s32.totalorder %s42, 0
      %p452 = por %p450, %p451
      %s454 = sadd.s32 %s453, 1
      %p457 = scmp.eq.s32.totalorder %s36, 1
      %p458 = scmp.ne.s32.totalorder %s453, %s455
      %p459 = scmp.eq.s32.totalorder %s36, 0
      %p460 = por %p458, %p459
      %p461 = scmp.ne.s32.totalorder %s453, %s455
      %p462 = scmp.eq.s32.totalorder %s41, 1
      %p463 = por %p461, %p462
      %p464 = scmp.ne.s32.totalorder %s455, %s456
      %p465 = scmp.eq.s32.totalorder %s41, 0
      %p466 = por %p464, %p465
      %p467 = scmp.ne.s32.totalorder %s455, %s456
      %p468 = scmp.eq.s32.totalorder %s42, 1
      %p469 = por %p467, %p468
      %p471 = scmp.ne.s32.totalorder %s456, %s470
      %p472 = scmp.eq.s32.totalorder %s42, 0
      %p473 = por %p471, %p472
      %s475 = sadd.s32 %s474, 1
      %p478 = scmp.eq.s32.totalorder %s36, 1
      %p479 = scmp.ne.s32.totalorder %s474, %s476
      %p480 = scmp.eq.s32.totalorder %s36, 0
      %p481 = por %p479, %p480
      %p482 = scmp.ne.s32.totalorder %s474, %s476
      %p483 = scmp.eq.s32.totalorder %s41, 1
      %p484 = por %p482, %p483
      %p485 = scmp.ne.s32.totalorder %s476, %s477
      %p486 = scmp.eq.s32.totalorder %s41, 0
      %p487 = por %p485, %p486
      %p488 = scmp.ne.s32.totalorder %s476, %s477
      %p489 = scmp.eq.s32.totalorder %s42, 1
      %p490 = por %p488, %p489
      %p492 = scmp.ne.s32.totalorder %s477, %s491
      %p493 = scmp.eq.s32.totalorder %s42, 0
      %p494 = por %p492, %p493
      %s496 = sadd.s32 %s495, 1
      %p499 = scmp.eq.s32.totalorder %s36, 1
      %p500 = scmp.ne.s32.totalorder %s495, %s497
      %p501 = scmp.eq.s32.totalorder %s36, 0
      %p502 = por %p500, %p501
      %p503 = scmp.ne.s32.totalorder %s495, %s497
      %p504 = scmp.eq.s32.totalorder %s41, 1
      %p505 = por %p503, %p504
      %p506 = scmp.ne.s32.totalorder %s497, %s498
      %p507 = scmp.eq.s32.totalorder %s41, 0
      %p508 = por %p506, %p507
      %p509 = scmp.ne.s32.totalorder %s497, %s498
      %p510 = scmp.eq.s32.totalorder %s42, 1
      %p511 = por %p509, %p510
      %p513 = scmp.ne.s32.totalorder %s498, %s512
      %p514 = scmp.eq.s32.totalorder %s42, 0
      %p515 = por %p513, %p514
      %s516 = ssub.s32 %s36, %s43
      %p517 = scmp.eq.s32.totalorder %s516, 0
      %s519 = sadd.s32 %s518, 1
      %s520 = scalar_select %p517, %s518, %s519
      %p523 = pneg %p517
      %p524 = scmp.eq.s32.totalorder %s36, 1
      %p525 = por %p523, %p524
      %p526 = scmp.ne.s32.totalorder %s518, %s521
      %p527 = scmp.eq.s32.totalorder %s36, 0
      %p528 = por %p526, %p527
      %p529 = scmp.ne.s32.totalorder %s518, %s521
      %p530 = scmp.eq.s32.totalorder %s41, 1
      %p531 = por %p529, %p530
      %p532 = scmp.ne.s32.totalorder %s521, %s522
      %p533 = scmp.eq.s32.totalorder %s41, 0
      %p534 = por %p532, %p533
      %p535 = scmp.ne.s32.totalorder %s521, %s522
      %p536 = scmp.eq.s32.totalorder %s42, 1
      %p537 = por %p535, %p536
      %p539 = scmp.ne.s32.totalorder %s522, %s538
      %p540 = scmp.eq.s32.totalorder %s42, 0
      %p541 = por %p539, %p540
      %s542 = ssub.s32 %s36, %s43
      %p543 = scmp.eq.s32.totalorder %s542, 0
      %s545 = sadd.s32 %s544, 1
      %s546 = scalar_select %p543, %s544, %s545
      %p549 = pneg %p543
      %p550 = scmp.eq.s32.totalorder %s36, 1
      %p551 = por %p549, %p550
      %p552 = scmp.ne.s32.totalorder %s544, %s547
      %p553 = scmp.eq.s32.totalorder %s36, 0
      %p554 = por %p552, %p553
      %p555 = scmp.ne.s32.totalorder %s544, %s547
      %p556 = scmp.eq.s32.totalorder %s41, 1
      %p557 = por %p555, %p556
      %p558 = scmp.ne.s32.totalorder %s547, %s548
      %p559 = scmp.eq.s32.totalorder %s41, 0
      %p560 = por %p558, %p559
      %p561 = scmp.ne.s32.totalorder %s547, %s548
      %p562 = scmp.eq.s32.totalorder %s42, 1
      %p563 = por %p561, %p562
      %p565 = scmp.ne.s32.totalorder %s548, %s564
      %p566 = scmp.eq.s32.totalorder %s42, 0
      %p567 = por %p565, %p566
      %p568 = scmp.le.s32.totalorder 1, %s36
      %p569 = scmp.lt.s32.totalorder %s36, 3
      %p570 = pnand %p568, %p569
      %p571 = pneg %p570
      // Predicated region
      $region9: #{tpu_custom_call.1} parent=5 // pred_check
        _
      $region10: #{tpu_custom_call.1} parent=5 // pred_check_branch
        %573 = sbr.rel (%p570) target = $region12
      $region11: #{tpu_custom_call.1} parent=5 // pred_region
        %s574 = ssub.s32 %s36, 1
        // Predicated region
        $region13: #{tpu_custom_call.1} parent=11 // pred_check
          %p575 = pneg %p109
        $region14: #{tpu_custom_call.1} parent=11 // pred_check_branch
          %577 = sbr.rel (%p575) target = $region16
        $region15: #{tpu_custom_call.1} parent=11 // pred_region
          _
        $region16: #{tpu_custom_call.1} parent=11 // pred_fallthru
          _
        // Predicated region
        $region17: #{tpu_custom_call.1} parent=11 // pred_check
          %p578 = pneg %p130
        $region18: #{tpu_custom_call.1} parent=11 // pred_check_branch
          %580 = sbr.rel (%p578) target = $region20
        $region19: #{tpu_custom_call.1} parent=11 // pred_region
          _
        $region20: #{tpu_custom_call.1} parent=11 // pred_fallthru
          _
        // Predicated region
        $region21: #{tpu_custom_call.1} parent=11 // pred_check
          %p581 = pneg %p151
        $region22: #{tpu_custom_call.1} parent=11 // pred_check_branch
          %583 = sbr.rel (%p581) target = $region24
        $region23: #{tpu_custom_call.1} parent=11 // pred_region
          _
        $region24: #{tpu_custom_call.1} parent=11 // pred_fallthru
          _
        // Predicated region
        $region25: #{tpu_custom_call.1} parent=11 // pred_check
          %p584 = pneg %p172
        $region26: #{tpu_custom_call.1} parent=11 // pred_check_branch
          %586 = sbr.rel (%p584) target = $region28
        $region27: #{tpu_custom_call.1} parent=11 // pred_region
          _
        $region28: #{tpu_custom_call.1} parent=11 // pred_fallthru
          _
        // Predicated region
        $region29: #{tpu_custom_call.1} parent=11 // pred_check
          %p587 = pneg %p193
        $region30: #{tpu_custom_call.1} parent=11 // pred_check_branch
          %589 = sbr.rel (%p587) target = $region32
        $region31: #{tpu_custom_call.1} parent=11 // pred_region
          _
        $region32: #{tpu_custom_call.1} parent=11 // pred_fallthru
          _
        // Predicated region
        $region33: #{tpu_custom_call.1} parent=11 // pred_check
          %p590 = pneg %p214
        $region34: #{tpu_custom_call.1} parent=11 // pred_check_branch
          %592 = sbr.rel (%p590) target = $region36
        $region35: #{tpu_custom_call.1} parent=11 // pred_region
          _
        $region36: #{tpu_custom_call.1} parent=11 // pred_fallthru
          _
        // Predicated region
        $region37: #{tpu_custom_call.1} parent=11 // pred_check
          %p593 = pneg %p235
        $region38: #{tpu_custom_call.1} parent=11 // pred_check_branch
          %595 = sbr.rel (%p593) target = $region40
        $region39: #{tpu_custom_call.1} parent=11 // pred_region
          _
        $region40: #{tpu_custom_call.1} parent=11 // pred_fallthru
          _
        // Predicated region
        $region41: #{tpu_custom_call.1} parent=11 // pred_check
          %p596 = pneg %p256
        $region42: #{tpu_custom_call.1} parent=11 // pred_check_branch
          %598 = sbr.rel (%p596) target = $region44
        $region43: #{tpu_custom_call.1} parent=11 // pred_region
          _
        $region44: #{tpu_custom_call.1} parent=11 // pred_fallthru
          _
        // Predicated region
        $region45: #{tpu_custom_call.1} parent=11 // pred_check
          %p599 = pneg %p277
        $region46: #{tpu_custom_call.1} parent=11 // pred_check_branch
          %601 = sbr.rel (%p599) target = $region48
        $region47: #{tpu_custom_call.1} parent=11 // pred_region
          _
        $region48: #{tpu_custom_call.1} parent=11 // pred_fallthru
          _
        // Predicated region
        $region49: #{tpu_custom_call.1} parent=11 // pred_check
          %p602 = pneg %p298
        $region50: #{tpu_custom_call.1} parent=11 // pred_check_branch
          %604 = sbr.rel (%p602) target = $region52
        $region51: #{tpu_custom_call.1} parent=11 // pred_region
          _
        $region52: #{tpu_custom_call.1} parent=11 // pred_fallthru
          _
        // Predicated region
        $region53: #{tpu_custom_call.1} parent=11 // pred_check
          %p605 = pneg %p319
        $region54: #{tpu_custom_call.1} parent=11 // pred_check_branch
          %607 = sbr.rel (%p605) target = $region56
        $region55: #{tpu_custom_call.1} parent=11 // pred_region
          _
        $region56: #{tpu_custom_call.1} parent=11 // pred_fallthru
          _
        // Predicated region
        $region57: #{tpu_custom_call.1} parent=11 // pred_check
          %p608 = pneg %p340
        $region58: #{tpu_custom_call.1} parent=11 // pred_check_branch
          %610 = sbr.rel (%p608) target = $region60
        $region59: #{tpu_custom_call.1} parent=11 // pred_region
          _
        $region60: #{tpu_custom_call.1} parent=11 // pred_fallthru
          _
        // Predicated region
        $region61: #{tpu_custom_call.1} parent=11 // pred_check
          %p611 = pneg %p361
        $region62: #{tpu_custom_call.1} parent=11 // pred_check_branch
          %613 = sbr.rel (%p611) target = $region64
        $region63: #{tpu_custom_call.1} parent=11 // pred_region
          _
        $region64: #{tpu_custom_call.1} parent=11 // pred_fallthru
          _
        // Predicated region
        $region65: #{tpu_custom_call.1} parent=11 // pred_check
          %p614 = pneg %p382
        $region66: #{tpu_custom_call.1} parent=11 // pred_check_branch
          %616 = sbr.rel (%p614) target = $region68
        $region67: #{tpu_custom_call.1} parent=11 // pred_region
          _
        $region68: #{tpu_custom_call.1} parent=11 // pred_fallthru
          _
        // Predicated region
        $region69: #{tpu_custom_call.1} parent=11 // pred_check
          %p617 = pneg %p403
        $region70: #{tpu_custom_call.1} parent=11 // pred_check_branch
          %619 = sbr.rel (%p617) target = $region72
        $region71: #{tpu_custom_call.1} parent=11 // pred_region
          _
        $region72: #{tpu_custom_call.1} parent=11 // pred_fallthru
          _
        // Predicated region
        $region73: #{tpu_custom_call.1} parent=11 // pred_check
          %p620 = pneg %p424
        $region74: #{tpu_custom_call.1} parent=11 // pred_check_branch
          %622 = sbr.rel (%p620) target = $region76
        $region75: #{tpu_custom_call.1} parent=11 // pred_region
          _
        $region76: #{tpu_custom_call.1} parent=11 // pred_fallthru
          _
        // Predicated region
        $region77: #{tpu_custom_call.1} parent=11 // pred_check
          %p623 = pneg %p445
        $region78: #{tpu_custom_call.1} parent=11 // pred_check_branch
          %625 = sbr.rel (%p623) target = $region80
        $region79: #{tpu_custom_call.1} parent=11 // pred_region
          _
        $region80: #{tpu_custom_call.1} parent=11 // pred_fallthru
          _
        // Predicated region
        $region81: #{tpu_custom_call.1} parent=11 // pred_check
          %p626 = pneg %p466
        $region82: #{tpu_custom_call.1} parent=11 // pred_check_branch
          %628 = sbr.rel (%p626) target = $region84
        $region83: #{tpu_custom_call.1} parent=11 // pred_region
          _
        $region84: #{tpu_custom_call.1} parent=11 // pred_fallthru
          _
        // Predicated region
        $region85: #{tpu_custom_call.1} parent=11 // pred_check
          %p629 = pneg %p487
        $region86: #{tpu_custom_call.1} parent=11 // pred_check_branch
          %631 = sbr.rel (%p629) target = $region88
        $region87: #{tpu_custom_call.1} parent=11 // pred_region
          _
        $region88: #{tpu_custom_call.1} parent=11 // pred_fallthru
          _
        // Predicated region
        $region89: #{tpu_custom_call.1} parent=11 // pred_check
          %p632 = pneg %p508
        $region90: #{tpu_custom_call.1} parent=11 // pred_check_branch
          %634 = sbr.rel (%p632) target = $region92
        $region91: #{tpu_custom_call.1} parent=11 // pred_region
          _
        $region92: #{tpu_custom_call.1} parent=11 // pred_fallthru
          _
      $region12: #{tpu_custom_call.1} parent=5 // pred_fallthru
        _
      %p635 = scmp.lt.s32.totalorder %s36, 2
      // Predicated region
      $region93: #{tpu_custom_call.1} parent=5 // pred_check
        %p636 = pneg %p635
      $region94: #{tpu_custom_call.1} parent=5 // pred_check_branch
        %638 = sbr.rel (%p636) target = $region96
      $region95: #{tpu_custom_call.1} parent=5 // pred_region
        // Predicated region
        $region97: #{tpu_custom_call.1} parent=95 // pred_check
          %p639 = pneg %p56
        $region98: #{tpu_custom_call.1} parent=95 // pred_check_branch
          %641 = sbr.rel (%p639) target = $region100
        $region99: #{tpu_custom_call.1} parent=95 // pred_region
          %p642 = scmp.lt.s32.totalorder %s36, 1
          %s643 = scalar_select %p642, %s36, 1
          %s644 = smul.addr %s643, 2
          %s645 = smul.addr %s644, 4
          %s646 = scalar_lea.vmem %s0, %s645
        $region100: #{tpu_custom_call.1} parent=95 // pred_fallthru
          _
        // Predicated region
        $region101: #{tpu_custom_call.1} parent=95 // pred_check
          %p647 = pneg %p82
        $region102: #{tpu_custom_call.1} parent=95 // pred_check_branch
          %649 = sbr.rel (%p647) target = $region104
        $region103: #{tpu_custom_call.1} parent=95 // pred_region
          %p650 = scmp.lt.s32.totalorder %s36, 1
          %s651 = scalar_select %p650, %s36, 1
          %s652 = scalar_lea.vmem %s1, %s651
        $region104: #{tpu_custom_call.1} parent=95 // pred_fallthru
          _
      $region96: #{tpu_custom_call.1} parent=5 // pred_fallthru
        _
      %p653 = scmp.le.s32.totalorder 1, %s36
      %p654 = scmp.lt.s32.totalorder %s36, 3
      %p655 = pnand %p653, %p654
      %p656 = pneg %p655
      // Predicated region
      $region105: #{tpu_custom_call.1} parent=5 // pred_check
        _
      $region106: #{tpu_custom_call.1} parent=5 // pred_check_branch
        %658 = sbr.rel (%p655) target = $region108
      $region107: #{tpu_custom_call.1} parent=5 // pred_region
        %s659 = ssub.s32 %s36, 1
        %p660 = scmp.lt.s32.totalorder %s41, 1
        %s661 = scalar_select %p660, %s41, 1
        %s662 = smul.addr %s661, 2
        %s663 = smul.addr %s662, 4
        %s664 = scalar_lea.vmem %s0, %s663
        %p665 = pneg %p62
        %p666 = pneg %p59
        %p667 = scmp.lt.s32.totalorder %s41, 1
        %s668 = scalar_select %p667, %s41, 1
        %s669 = scalar_lea.vmem %s1, %s668
        %p670 = pneg %p88
        %p671 = pneg %p85
        %p672 = pneg %p109
        %p673 = pneg %p106
        %p674 = pneg %p130
        %p675 = pneg %p127
        %p676 = pneg %p151
        %p677 = pneg %p148
        %p678 = pneg %p172
        %p679 = pneg %p169
        %p680 = pneg %p193
        %p681 = pneg %p190
        %p682 = pneg %p214
        %p683 = pneg %p211
        %p684 = pneg %p235
        %p685 = pneg %p232
        %p686 = pneg %p256
        %p687 = pneg %p253
        %p688 = pneg %p277
        %p689 = pneg %p274
        %p690 = pneg %p298
        %p691 = pneg %p295
        %p692 = pneg %p319
        %p693 = pneg %p316
        %p694 = pneg %p340
        %p695 = pneg %p337
        %p696 = pneg %p361
        %p697 = pneg %p358
        %p698 = pneg %p382
        %p699 = pneg %p379
        %p700 = pneg %p403
        %p701 = pneg %p400
        %p702 = pneg %p424
        %p703 = pneg %p421
        %p704 = pneg %p445
        %p705 = pneg %p442
        %p706 = pneg %p466
        %p707 = pneg %p463
        %p708 = pneg %p487
        %p709 = pneg %p484
        %p710 = pneg %p508
        %p711 = pneg %p505
        %p712 = pneg %p534
        %p713 = pneg %p531
        %s714 = sand.u32 %s521, 1
        %s715 = scalar_lea.sflag [#allocation3], %s714
        %s716 = sand.u32 %s521, 1
        %s717 = smul.addr %s716, 8
        %s718 = scalar_lea.vmem [#allocation2], %s717
        %p719 = pneg %p560
        %p720 = pneg %p557
        %s721 = sand.u32 %s547, 1
        %s722 = scalar_lea.sflag [#allocation5], %s721
        %s723 = sand.u32 %s547, 1
        %s724 = smul.addr %s723, 16
        %s725 = scalar_lea.vmem [#allocation4], %s724
        %p726 = scmp.lt.s32.totalorder %s41, 1
        %s727 = scalar_select %p726, %s41, 1
        %s728 = smul.addr %s727, 2
        %s729 = smul.addr %s728, 4
        %s730 = scalar_lea.vmem %s0, %s729
        %p731 = scmp.lt.s32.totalorder %s41, 1
        %s732 = scalar_select %p731, %s41, 1
        %s733 = scalar_lea.vmem %s1, %s732
        %v734 = vld [vmem:[%s730] sm:$0xff]
        %v736 = vcombine.high %v734, %v734
        %737 = vrot.lane.b32.xlu0 %v734, 17
        %v738 = vpop.permute.xlu0 %737
        %739 = vrot.lane.b32.xlu0 %v736, 17
        %v740 = vpop.permute.xlu0 %739
        %vm741 = vcmask 138240
        %v742 = vsel %vm741, %v738, %v740
        %v746 = vsel %vm741, 0.0, %v738
        %v747 = vsel %vm741, %v740, 0.0
        %v748 = vld [vmem:[%s2] sm:$0x3]
        %v750 = vlaneseq
        %v751 = vshrl.u32 %v750, 7
        %v752 = vsub.s32 0, %v751
        %v753 = vrot.slane %v748, %v752
        %v754 = vlaneseq
        %v755 = vshrl.u32 %v754, 7
        %v756 = vsub.s32 1, %v755
        %v757 = vrot.slane %v748, %v756
        %v760 = vmul.f32 %v746, %v753
        %v761 = vmul.f32 %v742, %v757
        %v762 = vld [vmem:[%s4] sm:$0xf]
        %s763 = scalar_lea.vmem %s4, 4
        %v764 = vld [vmem:[%s763] sm:$0xf]
        %767 = vrot.lane.b32.xlu0 %v746, 127
        %v768 = vpop.permute.xlu0 %767
        %769 = vrot.lane.b32.xlu0 %v742, 127
        %v770 = vpop.permute.xlu0 %769
        %771 = vrot.lane.b32.xlu0 %v747, 127
        %v772 = vpop.permute.xlu0 %771
        %vm773 = vcmask 1039360
        %v774 = vsel %vm773, %v768, %v770
        %v775 = vsel %vm773, %v770, %v772
        %vm776 = vcmask 31744
        %v778 = vsel %vm776, %v764, 0
        %vm780 = vcmask 1043456
        %v781 = vsel %vm780, %v774, 0
        %v783 = vsel %vm780, %v775, 0
        %785 = vmatprep.subr.mxu0 %v783
        %786 = vmatpush1.msra.mxu0 %v781
        %787 = vmatprep.subr.mxu0 0.0
        %788 = vmatpush1.msra.mxu0 0.0
        %789 = vmatprep.subr.mxu0 0.0
        %790 = vmatpush1.msra.mxu0 0.0
        %791 = vmatprep.subr.mxu0 0.0
        %792 = vmatpush1.msra.mxu0 0.0
        %793 = vmatprep.subr.mxu0 0.0
        %794 = vmatpush1.msra.mxu0 0.0
        %795 = vmatprep.subr.mxu0 0.0
        %796 = vmatpush1.msra.mxu0 0.0
        %797 = vmatprep.subr.mxu0 0.0
        %798 = vmatpush1.msra.mxu0 0.0
        %799 = vmatprep.subr.mxu0 0.0
        %800 = vmatpush1.msra.mxu0 0.0
        %801 = vmatprep.subr.mxu0 0.0
        %802 = vmatpush1.msra.mxu0 0.0
        %803 = vmatprep.subr.mxu0 0.0
        %804 = vmatpush1.msra.mxu0 0.0
        %805 = vmatprep.subr.mxu0 0.0
        %806 = vmatpush1.msra.mxu0 0.0
        %807 = vmatprep.subr.mxu0 0.0
        %808 = vmatpush1.msra.mxu0 0.0
        %809 = vmatprep.subr.mxu0 0.0
        %810 = vmatpush1.msra.mxu0 0.0
        %811 = vmatprep.subr.mxu0 0.0
        %812 = vmatpush1.msra.mxu0 0.0
        %813 = vmatprep.subr.mxu0 0.0
        %814 = vmatpush1.msra.mxu0 0.0
        %815 = vmatprep.subr.mxu0 0.0
        %816 = vmatpush1.msra.mxu0 0.0
        %817 = vmatprep.subr.mxu0 0.0
        %818 = vmatpush1.msra.mxu0 0.0
        %819 = vmatprep.subr.mxu0 0.0
        %820 = vmatpush1.msra.mxu0 0.0
        %821 = vmatprep.subr.mxu0 0.0
        %822 = vmatpush1.msra.mxu0 0.0
        %823 = vmatprep.subr.mxu0 0.0
        %824 = vmatpush1.msra.mxu0 0.0
        %825 = vmatprep.subr.mxu0 0.0
        %826 = vmatpush1.msra.mxu0 0.0
        %827 = vmatprep.subr.mxu0 0.0
        %828 = vmatpush1.msra.mxu0 0.0
        %829 = vmatprep.subr.mxu0 0.0
        %830 = vmatpush1.msra.mxu0 0.0
        %831 = vmatprep.subr.mxu0 0.0
        %832 = vmatpush1.msra.mxu0 0.0
        %833 = vmatprep.subr.mxu0 0.0
        %834 = vmatpush1.msra.mxu0 0.0
        %835 = vmatprep.subr.mxu0 0.0
        %836 = vmatpush1.msra.mxu0 0.0
        %837 = vmatprep.subr.mxu0 0.0
        %838 = vmatpush1.msra.mxu0 0.0
        %839 = vmatprep.subr.mxu0 0.0
        %840 = vmatpush1.msra.mxu0 0.0
        %841 = vmatprep.subr.mxu0 0.0
        %842 = vmatpush1.msra.mxu0 0.0
        %843 = vmatprep.subr.mxu0 0.0
        %844 = vmatpush1.msra.mxu0 0.0
        %845 = vmatprep.subr.mxu0 0.0
        %846 = vmatpush1.msra.mxu0 0.0
        %847 = vmatprep.subr.mxu0 0.0
        %848 = vmatpush1.msra.mxu0 0.0
        %849 = vmatprep.mubr.f32.mxu0 0.0
        %850 = vmatmul.mubr.f32.gmra.mrb[0].mxu0 %v778
        %v851 = vpop.f32.mrb[0].mxu0
        %v852 = vadd.f32 0.0, %v851
        %v853 = vpop.f32.mrb[0].mxu0
        %v854 = vadd.f32 0.0, %v853
        %855 = vdwg.mxu0
        %v857 = vsel %vm776, %v762, 0
        %v860 = vsel %vm780, %v760, 0
        %v863 = vsel %vm780, %v761, 0
        %865 = vmatprep.subr.mxu0 %v863
        %866 = vmatpush1.msra.mxu0 %v860
        %867 = vmatprep.subr.mxu0 0.0
        %868 = vmatpush1.msra.mxu0 0.0
        %869 = vmatprep.subr.mxu0 0.0
        %870 = vmatpush1.msra.mxu0 0.0
        %871 = vmatprep.subr.mxu0 0.0
        %872 = vmatpush1.msra.mxu0 0.0
        %873 = vmatprep.subr.mxu0 0.0
        %874 = vmatpush1.msra.mxu0 0.0
        %875 = vmatprep.subr.mxu0 0.0
        %876 = vmatpush1.msra.mxu0 0.0
        %877 = vmatprep.subr.mxu0 0.0
        %878 = vmatpush1.msra.mxu0 0.0
        %879 = vmatprep.subr.mxu0 0.0
        %880 = vmatpush1.msra.mxu0 0.0
        %881 = vmatprep.subr.mxu0 0.0
        %882 = vmatpush1.msra.mxu0 0.0
        %883 = vmatprep.subr.mxu0 0.0
        %884 = vmatpush1.msra.mxu0 0.0
        %885 = vmatprep.subr.mxu0 0.0
        %886 = vmatpush1.msra.mxu0 0.0
        %887 = vmatprep.subr.mxu0 0.0
        %888 = vmatpush1.msra.mxu0 0.0
        %889 = vmatprep.subr.mxu0 0.0
        %890 = vmatpush1.msra.mxu0 0.0
        %891 = vmatprep.subr.mxu0 0.0
        %892 = vmatpush1.msra.mxu0 0.0
        %893 = vmatprep.subr.mxu0 0.0
        %894 = vmatpush1.msra.mxu0 0.0
        %895 = vmatprep.subr.mxu0 0.0
        %896 = vmatpush1.msra.mxu0 0.0
        %897 = vmatprep.subr.mxu0 0.0
        %898 = vmatpush1.msra.mxu0 0.0
        %899 = vmatprep.subr.mxu0 0.0
        %900 = vmatpush1.msra.mxu0 0.0
        %901 = vmatprep.subr.mxu0 0.0
        %902 = vmatpush1.msra.mxu0 0.0
        %903 = vmatprep.subr.mxu0 0.0
        %904 = vmatpush1.msra.mxu0 0.0
        %905 = vmatprep.subr.mxu0 0.0
        %906 = vmatpush1.msra.mxu0 0.0
        %907 = vmatprep.subr.mxu0 0.0
        %908 = vmatpush1.msra.mxu0 0.0
        %909 = vmatprep.subr.mxu0 0.0
        %910 = vmatpush1.msra.mxu0 0.0
        %911 = vmatprep.subr.mxu0 0.0
        %912 = vmatpush1.msra.mxu0 0.0
        %913 = vmatprep.subr.mxu0 0.0
        %914 = vmatpush1.msra.mxu0 0.0
        %915 = vmatprep.subr.mxu0 0.0
        %916 = vmatpush1.msra.mxu0 0.0
        %917 = vmatprep.subr.mxu0 0.0
        %918 = vmatpush1.msra.mxu0 0.0
        %919 = vmatprep.subr.mxu0 0.0
        %920 = vmatpush1.msra.mxu0 0.0
        %921 = vmatprep.subr.mxu0 0.0
        %922 = vmatpush1.msra.mxu0 0.0
        %923 = vmatprep.subr.mxu0 0.0
        %924 = vmatpush1.msra.mxu0 0.0
        %925 = vmatprep.subr.mxu0 0.0
        %926 = vmatpush1.msra.mxu0 0.0
        %927 = vmatprep.subr.mxu0 0.0
        %928 = vmatpush1.msra.mxu0 0.0
        %929 = vmatprep.mubr.f32.mxu0 0.0
        %930 = vmatmul.mubr.f32.gmra.mrb[0].mxu0 %v857
        %v931 = vpop.f32.mrb[0].mxu0
        %v932 = vadd.f32 %v852, %v931
        %v933 = vpop.f32.mrb[0].mxu0
        %v934 = vadd.f32 %v854, %v933
        %935 = vdwg.mxu0
        %s936 = scalar_lea.vmem %s2, 4
        %v937 = vld [vmem:[%s936] sm:$0x3]
        %v939 = vlaneseq
        %v940 = vshrl.u32 %v939, 7
        %v941 = vsub.s32 0, %v940
        %v942 = vrot.slane %v937, %v941
        %v943 = vlaneseq
        %v944 = vshrl.u32 %v943, 7
        %v945 = vsub.s32 1, %v944
        %v946 = vrot.slane %v937, %v945
        %947 = vrot.lane.b32.xlu0 %v942, 2
        %v948 = vpop.permute.xlu0 %947
        %949 = vrot.lane.b32.xlu0 %v946, 2
        %v950 = vpop.permute.xlu0 %949
        %vm951 = vcmask 15360
        %v952 = vsel %vm951, %v948, %v950
        %v956 = vmul.f32 %v746, %v948
        %v957 = vmul.f32 %v742, %v952
        %v958 = vmul.f32 %v747, %v950
        %s959 = scalar_lea.vmem %s4, 8
        %v960 = vld [vmem:[%s959] sm:$0xf]
        %964 = vrot.lane.b32.xlu0 %v956, 126
        %v965 = vpop.permute.xlu0 %964
        %966 = vrot.lane.b32.xlu0 %v957, 126
        %v967 = vpop.permute.xlu0 %966
        %968 = vrot.lane.b32.xlu0 %v958, 126
        %v969 = vpop.permute.xlu0 %968
        %vm970 = vcmask 1031168
        %v971 = vsel %vm970, %v965, %v967
        %v972 = vsel %vm970, %v967, %v969
        %v974 = vsel %vm776, %v960, 0
        %v976 = vsel %vm780, %v971, 0
        %v978 = vsel %vm780, %v972, 0
        %980 = vmatprep.subr.mxu0 %v978
        %981 = vmatpush1.msra.mxu0 %v976
        %982 = vmatprep.subr.mxu0 0.0
        %983 = vmatpush1.msra.mxu0 0.0
        %984 = vmatprep.subr.mxu0 0.0
        %985 = vmatpush1.msra.mxu0 0.0
        %986 = vmatprep.subr.mxu0 0.0
        %987 = vmatpush1.msra.mxu0 0.0
        %988 = vmatprep.subr.mxu0 0.0
        %989 = vmatpush1.msra.mxu0 0.0
        %990 = vmatprep.subr.mxu0 0.0
        %991 = vmatpush1.msra.mxu0 0.0
        %992 = vmatprep.subr.mxu0 0.0
        %993 = vmatpush1.msra.mxu0 0.0
        %994 = vmatprep.subr.mxu0 0.0
        %995 = vmatpush1.msra.mxu0 0.0
        %996 = vmatprep.subr.mxu0 0.0
        %997 = vmatpush1.msra.mxu0 0.0
        %998 = vmatprep.subr.mxu0 0.0
        %999 = vmatpush1.msra.mxu0 0.0
        %1000 = vmatprep.subr.mxu0 0.0
        %1001 = vmatpush1.msra.mxu0 0.0
        %1002 = vmatprep.subr.mxu0 0.0
        %1003 = vmatpush1.msra.mxu0 0.0
        %1004 = vmatprep.subr.mxu0 0.0
        %1005 = vmatpush1.msra.mxu0 0.0
        %1006 = vmatprep.subr.mxu0 0.0
        %1007 = vmatpush1.msra.mxu0 0.0
        %1008 = vmatprep.subr.mxu0 0.0
        %1009 = vmatpush1.msra.mxu0 0.0
        %1010 = vmatprep.subr.mxu0 0.0
        %1011 = vmatpush1.msra.mxu0 0.0
        %1012 = vmatprep.subr.mxu0 0.0
        %1013 = vmatpush1.msra.mxu0 0.0
        %1014 = vmatprep.subr.mxu0 0.0
        %1015 = vmatpush1.msra.mxu0 0.0
        %1016 = vmatprep.subr.mxu0 0.0
        %1017 = vmatpush1.msra.mxu0 0.0
        %1018 = vmatprep.subr.mxu0 0.0
        %1019 = vmatpush1.msra.mxu0 0.0
        %1020 = vmatprep.subr.mxu0 0.0
        %1021 = vmatpush1.msra.mxu0 0.0
        %1022 = vmatprep.subr.mxu0 0.0
        %1023 = vmatpush1.msra.mxu0 0.0
        %1024 = vmatprep.subr.mxu0 0.0
        %1025 = vmatpush1.msra.mxu0 0.0
        %1026 = vmatprep.subr.mxu0 0.0
        %1027 = vmatpush1.msra.mxu0 0.0
        %1028 = vmatprep.subr.mxu0 0.0
        %1029 = vmatpush1.msra.mxu0 0.0
        %1030 = vmatprep.subr.mxu0 0.0
        %1031 = vmatpush1.msra.mxu0 0.0
        %1032 = vmatprep.subr.mxu0 0.0
        %1033 = vmatpush1.msra.mxu0 0.0
        %1034 = vmatprep.subr.mxu0 0.0
        %1035 = vmatpush1.msra.mxu0 0.0
        %1036 = vmatprep.subr.mxu0 0.0
        %1037 = vmatpush1.msra.mxu0 0.0
        %1038 = vmatprep.subr.mxu0 0.0
        %1039 = vmatpush1.msra.mxu0 0.0
        %1040 = vmatprep.subr.mxu0 0.0
        %1041 = vmatpush1.msra.mxu0 0.0
        %1042 = vmatprep.subr.mxu0 0.0
        %1043 = vmatpush1.msra.mxu0 0.0
        %1044 = vmatprep.mubr.f32.mxu0 0.0
        %1045 = vmatmul.mubr.f32.gmra.mrb[0].mxu0 %v974
        %v1046 = vpop.f32.mrb[0].mxu0
        %v1047 = vadd.f32 0.0, %v1046
        %v1048 = vpop.f32.mrb[0].mxu0
        %v1049 = vadd.f32 0.0, %v1048
        %1050 = vdwg.mxu0
        %v1051 = vadd.f32 %v932, %v1047
        %v1052 = vadd.f32 %v934, %v1049
        %1053 = vrot.lane.b32.xlu0 %v753, 16
        %v1054 = vpop.permute.xlu0 %1053
        %1055 = vrot.lane.b32.xlu0 %v757, 16
        %v1056 = vpop.permute.xlu0 %1055
        %vm1057 = vcmask 130048
        %v1058 = vsel %vm1057, %v1054, %v1056
        %v1062 = vmul.f32 %v746, %v1054
        %v1063 = vmul.f32 %v742, %v1058
        %v1064 = vmul.f32 %v747, %v1056
        %s1065 = scalar_lea.vmem %s4, 12
        %v1066 = vld [vmem:[%s1065] sm:$0xf]
        %1070 = vrot.lane.b32.xlu0 %v1062, 112
        %v1071 = vpop.permute.xlu0 %1070
        %1072 = vrot.lane.b32.xlu0 %v1063, 112
        %v1073 = vpop.permute.xlu0 %1072
        %1074 = vrot.lane.b32.xlu0 %v1064, 112
        %v1075 = vpop.permute.xlu0 %1074
        %vm1076 = vcmask 916480
        %v1077 = vsel %vm1076, %v1071, %v1073
        %v1078 = vsel %vm1076, %v1073, %v1075
        %v1080 = vsel %vm776, %v1066, 0
        %v1082 = vsel %vm780, %v1077, 0
        %v1084 = vsel %vm780, %v1078, 0
        %1086 = vmatprep.subr.mxu0 %v1084
        %1087 = vmatpush1.msra.mxu0 %v1082
        %1088 = vmatprep.subr.mxu0 0.0
        %1089 = vmatpush1.msra.mxu0 0.0
        %1090 = vmatprep.subr.mxu0 0.0
        %1091 = vmatpush1.msra.mxu0 0.0
        %1092 = vmatprep.subr.mxu0 0.0
        %1093 = vmatpush1.msra.mxu0 0.0
        %1094 = vmatprep.subr.mxu0 0.0
        %1095 = vmatpush1.msra.mxu0 0.0
        %1096 = vmatprep.subr.mxu0 0.0
        %1097 = vmatpush1.msra.mxu0 0.0
        %1098 = vmatprep.subr.mxu0 0.0
        %1099 = vmatpush1.msra.mxu0 0.0
        %1100 = vmatprep.subr.mxu0 0.0
        %1101 = vmatpush1.msra.mxu0 0.0
        %1102 = vmatprep.subr.mxu0 0.0
        %1103 = vmatpush1.msra.mxu0 0.0
        %1104 = vmatprep.subr.mxu0 0.0
        %1105 = vmatpush1.msra.mxu0 0.0
        %1106 = vmatprep.subr.mxu0 0.0
        %1107 = vmatpush1.msra.mxu0 0.0
        %1108 = vmatprep.subr.mxu0 0.0
        %1109 = vmatpush1.msra.mxu0 0.0
        %1110 = vmatprep.subr.mxu0 0.0
        %1111 = vmatpush1.msra.mxu0 0.0
        %1112 = vmatprep.subr.mxu0 0.0
        %1113 = vmatpush1.msra.mxu0 0.0
        %1114 = vmatprep.subr.mxu0 0.0
        %1115 = vmatpush1.msra.mxu0 0.0
        %1116 = vmatprep.subr.mxu0 0.0
        %1117 = vmatpush1.msra.mxu0 0.0
        %1118 = vmatprep.subr.mxu0 0.0
        %1119 = vmatpush1.msra.mxu0 0.0
        %1120 = vmatprep.subr.mxu0 0.0
        %1121 = vmatpush1.msra.mxu0 0.0
        %1122 = vmatprep.subr.mxu0 0.0
        %1123 = vmatpush1.msra.mxu0 0.0
        %1124 = vmatprep.subr.mxu0 0.0
        %1125 = vmatpush1.msra.mxu0 0.0
        %1126 = vmatprep.subr.mxu0 0.0
        %1127 = vmatpush1.msra.mxu0 0.0
        %1128 = vmatprep.subr.mxu0 0.0
        %1129 = vmatpush1.msra.mxu0 0.0
        %1130 = vmatprep.subr.mxu0 0.0
        %1131 = vmatpush1.msra.mxu0 0.0
        %1132 = vmatprep.subr.mxu0 0.0
        %1133 = vmatpush1.msra.mxu0 0.0
        %1134 = vmatprep.subr.mxu0 0.0
        %1135 = vmatpush1.msra.mxu0 0.0
        %1136 = vmatprep.subr.mxu0 0.0
        %1137 = vmatpush1.msra.mxu0 0.0
        %1138 = vmatprep.subr.mxu0 0.0
        %1139 = vmatpush1.msra.mxu0 0.0
        %1140 = vmatprep.subr.mxu0 0.0
        %1141 = vmatpush1.msra.mxu0 0.0
        %1142 = vmatprep.subr.mxu0 0.0
        %1143 = vmatpush1.msra.mxu0 0.0
        %1144 = vmatprep.subr.mxu0 0.0
        %1145 = vmatpush1.msra.mxu0 0.0
        %1146 = vmatprep.subr.mxu0 0.0
        %1147 = vmatpush1.msra.mxu0 0.0
        %1148 = vmatprep.subr.mxu0 0.0
        %1149 = vmatpush1.msra.mxu0 0.0
        %1150 = vmatprep.mubr.f32.mxu0 0.0
        %1151 = vmatmul.mubr.f32.gmra.mrb[0].mxu0 %v1080
        %v1152 = vpop.f32.mrb[0].mxu0
        %v1153 = vadd.f32 0.0, %v1152
        %v1154 = vpop.f32.mrb[0].mxu0
        %v1155 = vadd.f32 0.0, %v1154
        %1156 = vdwg.mxu0
        %v1157 = vadd.f32 %v1051, %v1153
        %v1158 = vadd.f32 %v1052, %v1155
        %s1159 = scalar_lea.vmem %s4, 16
        %v1160 = vld [vmem:[%s1159] sm:$0xf]
        %v1162 = vsel %vm776, %v1160, 0
        %v1164 = vsel %vm780, %v734, 0
        %v1166 = vsel %vm780, %v736, 0
        %1168 = vmatprep.subr.mxu0 %v1166
        %1169 = vmatpush1.msra.mxu0 %v1164
        %1170 = vmatprep.subr.mxu0 0.0
        %1171 = vmatpush1.msra.mxu0 0.0
        %1172 = vmatprep.subr.mxu0 0.0
        %1173 = vmatpush1.msra.mxu0 0.0
        %1174 = vmatprep.subr.mxu0 0.0
        %1175 = vmatpush1.msra.mxu0 0.0
        %1176 = vmatprep.subr.mxu0 0.0
        %1177 = vmatpush1.msra.mxu0 0.0
        %1178 = vmatprep.subr.mxu0 0.0
        %1179 = vmatpush1.msra.mxu0 0.0
        %1180 = vmatprep.subr.mxu0 0.0
        %1181 = vmatpush1.msra.mxu0 0.0
        %1182 = vmatprep.subr.mxu0 0.0
        %1183 = vmatpush1.msra.mxu0 0.0
        %1184 = vmatprep.subr.mxu0 0.0
        %1185 = vmatpush1.msra.mxu0 0.0
        %1186 = vmatprep.subr.mxu0 0.0
        %1187 = vmatpush1.msra.mxu0 0.0
        %1188 = vmatprep.subr.mxu0 0.0
        %1189 = vmatpush1.msra.mxu0 0.0
        %1190 = vmatprep.subr.mxu0 0.0
        %1191 = vmatpush1.msra.mxu0 0.0
        %1192 = vmatprep.subr.mxu0 0.0
        %1193 = vmatpush1.msra.mxu0 0.0
        %1194 = vmatprep.subr.mxu0 0.0
        %1195 = vmatpush1.msra.mxu0 0.0
        %1196 = vmatprep.subr.mxu0 0.0
        %1197 = vmatpush1.msra.mxu0 0.0
        %1198 = vmatprep.subr.mxu0 0.0
        %1199 = vmatpush1.msra.mxu0 0.0
        %1200 = vmatprep.subr.mxu0 0.0
        %1201 = vmatpush1.msra.mxu0 0.0
        %1202 = vmatprep.subr.mxu0 0.0
        %1203 = vmatpush1.msra.mxu0 0.0
        %1204 = vmatprep.subr.mxu0 0.0
        %1205 = vmatpush1.msra.mxu0 0.0
        %1206 = vmatprep.subr.mxu0 0.0
        %1207 = vmatpush1.msra.mxu0 0.0
        %1208 = vmatprep.subr.mxu0 0.0
        %1209 = vmatpush1.msra.mxu0 0.0
        %1210 = vmatprep.subr.mxu0 0.0
        %1211 = vmatpush1.msra.mxu0 0.0
        %1212 = vmatprep.subr.mxu0 0.0
        %1213 = vmatpush1.msra.mxu0 0.0
        %1214 = vmatprep.subr.mxu0 0.0
        %1215 = vmatpush1.msra.mxu0 0.0
        %1216 = vmatprep.subr.mxu0 0.0
        %1217 = vmatpush1.msra.mxu0 0.0
        %1218 = vmatprep.subr.mxu0 0.0
        %1219 = vmatpush1.msra.mxu0 0.0
        %1220 = vmatprep.subr.mxu0 0.0
        %1221 = vmatpush1.msra.mxu0 0.0
        %1222 = vmatprep.subr.mxu0 0.0
        %1223 = vmatpush1.msra.mxu0 0.0
        %1224 = vmatprep.subr.mxu0 0.0
        %1225 = vmatpush1.msra.mxu0 0.0
        %1226 = vmatprep.subr.mxu0 0.0
        %1227 = vmatpush1.msra.mxu0 0.0
        %1228 = vmatprep.subr.mxu0 0.0
        %1229 = vmatpush1.msra.mxu0 0.0
        %1230 = vmatprep.subr.mxu0 0.0
        %1231 = vmatpush1.msra.mxu0 0.0
        %1232 = vmatprep.mubr.f32.mxu0 0.0
        %1233 = vmatmul.mubr.f32.gmra.mrb[0].mxu0 %v1162
        %v1234 = vpop.f32.mrb[0].mxu0
        %v1235 = vadd.f32 0.0, %v1234
        %v1236 = vpop.f32.mrb[0].mxu0
        %v1237 = vadd.f32 0.0, %v1236
        %1238 = vdwg.mxu0
        %v1239 = vadd.f32 %v1157, %v1235
        %v1240 = vadd.f32 %v1158, %v1237
        %1241 = vrot.lane.b32.xlu0 %v942, 18
        %v1242 = vpop.permute.xlu0 %1241
        %1243 = vrot.lane.b32.xlu0 %v946, 18
        %v1244 = vpop.permute.xlu0 %1243
        %vm1245 = vcmask 146432
        %v1246 = vsel %vm1245, %v1242, %v1244
        %v1250 = vmul.f32 %v746, %v1242
        %v1251 = vmul.f32 %v742, %v1246
        %v1252 = vmul.f32 %v747, %v1244
        %s1253 = scalar_lea.vmem %s4, 20
        %v1254 = vld [vmem:[%s1253] sm:$0xf]
        %1258 = vrot.lane.b32.xlu0 %v1250, 110
        %v1259 = vpop.permute.xlu0 %1258
        %1260 = vrot.lane.b32.xlu0 %v1251, 110
        %v1261 = vpop.permute.xlu0 %1260
        %1262 = vrot.lane.b32.xlu0 %v1252, 110
        %v1263 = vpop.permute.xlu0 %1262
        %vm1264 = vcmask 900096
        %v1265 = vsel %vm1264, %v1259, %v1261
        %v1266 = vsel %vm1264, %v1261, %v1263
        %v1268 = vsel %vm776, %v1254, 0
        %v1270 = vsel %vm780, %v1265, 0
        %v1272 = vsel %vm780, %v1266, 0
        %1274 = vmatprep.subr.mxu0 %v1272
        %1275 = vmatpush1.msra.mxu0 %v1270
        %1276 = vmatprep.subr.mxu0 0.0
        %1277 = vmatpush1.msra.mxu0 0.0
        %1278 = vmatprep.subr.mxu0 0.0
        %1279 = vmatpush1.msra.mxu0 0.0
        %1280 = vmatprep.subr.mxu0 0.0
        %1281 = vmatpush1.msra.mxu0 0.0
        %1282 = vmatprep.subr.mxu0 0.0
        %1283 = vmatpush1.msra.mxu0 0.0
        %1284 = vmatprep.subr.mxu0 0.0
        %1285 = vmatpush1.msra.mxu0 0.0
        %1286 = vmatprep.subr.mxu0 0.0
        %1287 = vmatpush1.msra.mxu0 0.0
        %1288 = vmatprep.subr.mxu0 0.0
        %1289 = vmatpush1.msra.mxu0 0.0
        %1290 = vmatprep.subr.mxu0 0.0
        %1291 = vmatpush1.msra.mxu0 0.0
        %1292 = vmatprep.subr.mxu0 0.0
        %1293 = vmatpush1.msra.mxu0 0.0
        %1294 = vmatprep.subr.mxu0 0.0
        %1295 = vmatpush1.msra.mxu0 0.0
        %1296 = vmatprep.subr.mxu0 0.0
        %1297 = vmatpush1.msra.mxu0 0.0
        %1298 = vmatprep.subr.mxu0 0.0
        %1299 = vmatpush1.msra.mxu0 0.0
        %1300 = vmatprep.subr.mxu0 0.0
        %1301 = vmatpush1.msra.mxu0 0.0
        %1302 = vmatprep.subr.mxu0 0.0
        %1303 = vmatpush1.msra.mxu0 0.0
        %1304 = vmatprep.subr.mxu0 0.0
        %1305 = vmatpush1.msra.mxu0 0.0
        %1306 = vmatprep.subr.mxu0 0.0
        %1307 = vmatpush1.msra.mxu0 0.0
        %1308 = vmatprep.subr.mxu0 0.0
        %1309 = vmatpush1.msra.mxu0 0.0
        %1310 = vmatprep.subr.mxu0 0.0
        %1311 = vmatpush1.msra.mxu0 0.0
        %1312 = vmatprep.subr.mxu0 0.0
        %1313 = vmatpush1.msra.mxu0 0.0
        %1314 = vmatprep.subr.mxu0 0.0
        %1315 = vmatpush1.msra.mxu0 0.0
        %1316 = vmatprep.subr.mxu0 0.0
        %1317 = vmatpush1.msra.mxu0 0.0
        %1318 = vmatprep.subr.mxu0 0.0
        %1319 = vmatpush1.msra.mxu0 0.0
        %1320 = vmatprep.subr.mxu0 0.0
        %1321 = vmatpush1.msra.mxu0 0.0
        %1322 = vmatprep.subr.mxu0 0.0
        %1323 = vmatpush1.msra.mxu0 0.0
        %1324 = vmatprep.subr.mxu0 0.0
        %1325 = vmatpush1.msra.mxu0 0.0
        %1326 = vmatprep.subr.mxu0 0.0
        %1327 = vmatpush1.msra.mxu0 0.0
        %1328 = vmatprep.subr.mxu0 0.0
        %1329 = vmatpush1.msra.mxu0 0.0
        %1330 = vmatprep.subr.mxu0 0.0
        %1331 = vmatpush1.msra.mxu0 0.0
        %1332 = vmatprep.subr.mxu0 0.0
        %1333 = vmatpush1.msra.mxu0 0.0
        %1334 = vmatprep.subr.mxu0 0.0
        %1335 = vmatpush1.msra.mxu0 0.0
        %1336 = vmatprep.subr.mxu0 0.0
        %1337 = vmatpush1.msra.mxu0 0.0
        %1338 = vmatprep.mubr.f32.mxu0 0.0
        %1339 = vmatmul.mubr.f32.gmra.mrb[0].mxu0 %v1268
        %v1340 = vpop.f32.mrb[0].mxu0
        %v1341 = vadd.f32 0.0, %v1340
        %v1342 = vpop.f32.mrb[0].mxu0
        %v1343 = vadd.f32 0.0, %v1342
        %1344 = vdwg.mxu0
        %v1345 = vadd.f32 %v1239, %v1341
        %v1346 = vadd.f32 %v1240, %v1343
        %1347 = vrot.lane.b32.xlu0 %v753, 32
        %v1348 = vpop.permute.xlu0 %1347
        %1349 = vrot.lane.b32.xlu0 %v757, 32
        %v1350 = vpop.permute.xlu0 %1349
        %vm1351 = vcmask 261120
        %v1352 = vsel %vm1351, %v1348, %v1350
        %v1356 = vmul.f32 %v746, %v1348
        %v1357 = vmul.f32 %v742, %v1352
        %v1358 = vmul.f32 %v747, %v1350
        %s1359 = scalar_lea.vmem %s4, 24
        %v1360 = vld [vmem:[%s1359] sm:$0xf]
        %1364 = vrot.lane.b32.xlu0 %v1356, 96
        %v1365 = vpop.permute.xlu0 %1364
        %1366 = vrot.lane.b32.xlu0 %v1357, 96
        %v1367 = vpop.permute.xlu0 %1366
        %1368 = vrot.lane.b32.xlu0 %v1358, 96
        %v1369 = vpop.permute.xlu0 %1368
        %vm1370 = vcmask 785408
        %v1371 = vsel %vm1370, %v1365, %v1367
        %v1372 = vsel %vm1370, %v1367, %v1369
        %v1374 = vsel %vm776, %v1360, 0
        %v1376 = vsel %vm780, %v1371, 0
        %v1378 = vsel %vm780, %v1372, 0
        %1380 = vmatprep.subr.mxu0 %v1378
        %1381 = vmatpush1.msra.mxu0 %v1376
        %1382 = vmatprep.subr.mxu0 0.0
        %1383 = vmatpush1.msra.mxu0 0.0
        %1384 = vmatprep.subr.mxu0 0.0
        %1385 = vmatpush1.msra.mxu0 0.0
        %1386 = vmatprep.subr.mxu0 0.0
        %1387 = vmatpush1.msra.mxu0 0.0
        %1388 = vmatprep.subr.mxu0 0.0
        %1389 = vmatpush1.msra.mxu0 0.0
        %1390 = vmatprep.subr.mxu0 0.0
        %1391 = vmatpush1.msra.mxu0 0.0
        %1392 = vmatprep.subr.mxu0 0.0
        %1393 = vmatpush1.msra.mxu0 0.0
        %1394 = vmatprep.subr.mxu0 0.0
        %1395 = vmatpush1.msra.mxu0 0.0
        %1396 = vmatprep.subr.mxu0 0.0
        %1397 = vmatpush1.msra.mxu0 0.0
        %1398 = vmatprep.subr.mxu0 0.0
        %1399 = vmatpush1.msra.mxu0 0.0
        %1400 = vmatprep.subr.mxu0 0.0
        %1401 = vmatpush1.msra.mxu0 0.0
        %1402 = vmatprep.subr.mxu0 0.0
        %1403 = vmatpush1.msra.mxu0 0.0
        %1404 = vmatprep.subr.mxu0 0.0
        %1405 = vmatpush1.msra.mxu0 0.0
        %1406 = vmatprep.subr.mxu0 0.0
        %1407 = vmatpush1.msra.mxu0 0.0
        %1408 = vmatprep.subr.mxu0 0.0
        %1409 = vmatpush1.msra.mxu0 0.0
        %1410 = vmatprep.subr.mxu0 0.0
        %1411 = vmatpush1.msra.mxu0 0.0
        %1412 = vmatprep.subr.mxu0 0.0
        %1413 = vmatpush1.msra.mxu0 0.0
        %1414 = vmatprep.subr.mxu0 0.0
        %1415 = vmatpush1.msra.mxu0 0.0
        %1416 = vmatprep.subr.mxu0 0.0
        %1417 = vmatpush1.msra.mxu0 0.0
        %1418 = vmatprep.subr.mxu0 0.0
        %1419 = vmatpush1.msra.mxu0 0.0
        %1420 = vmatprep.subr.mxu0 0.0
        %1421 = vmatpush1.msra.mxu0 0.0
        %1422 = vmatprep.subr.mxu0 0.0
        %1423 = vmatpush1.msra.mxu0 0.0
        %1424 = vmatprep.subr.mxu0 0.0
        %1425 = vmatpush1.msra.mxu0 0.0
        %1426 = vmatprep.subr.mxu0 0.0
        %1427 = vmatpush1.msra.mxu0 0.0
        %1428 = vmatprep.subr.mxu0 0.0
        %1429 = vmatpush1.msra.mxu0 0.0
        %1430 = vmatprep.subr.mxu0 0.0
        %1431 = vmatpush1.msra.mxu0 0.0
        %1432 = vmatprep.subr.mxu0 0.0
        %1433 = vmatpush1.msra.mxu0 0.0
        %1434 = vmatprep.subr.mxu0 0.0
        %1435 = vmatpush1.msra.mxu0 0.0
        %1436 = vmatprep.subr.mxu0 0.0
        %1437 = vmatpush1.msra.mxu0 0.0
        %1438 = vmatprep.subr.mxu0 0.0
        %1439 = vmatpush1.msra.mxu0 0.0
        %1440 = vmatprep.subr.mxu0 0.0
        %1441 = vmatpush1.msra.mxu0 0.0
        %1442 = vmatprep.subr.mxu0 0.0
        %1443 = vmatpush1.msra.mxu0 0.0
        %1444 = vmatprep.mubr.f32.mxu0 0.0
        %1445 = vmatmul.mubr.f32.gmra.mrb[0].mxu0 %v1374
        %v1446 = vpop.f32.mrb[0].mxu0
        %v1447 = vadd.f32 0.0, %v1446
        %v1448 = vpop.f32.mrb[0].mxu0
        %v1449 = vadd.f32 0.0, %v1448
        %1450 = vdwg.mxu0
        %v1451 = vadd.f32 %v1345, %v1447
        %v1452 = vadd.f32 %v1346, %v1449
        %s1453 = scalar_lea.vmem %s4, 28
        %v1454 = vld [vmem:[%s1453] sm:$0xf]
        %1455 = vrot.lane.b32.xlu0 %v746, 95
        %v1456 = vpop.permute.xlu0 %1455
        %1457 = vrot.lane.b32.xlu0 %v742, 95
        %v1458 = vpop.permute.xlu0 %1457
        %1459 = vrot.lane.b32.xlu0 %v747, 95
        %v1460 = vpop.permute.xlu0 %1459
        %vm1461 = vcmask 777216
        %v1462 = vsel %vm1461, %v1456, %v1458
        %v1463 = vsel %vm1461, %v1458, %v1460
        %v1465 = vsel %vm776, %v1454, 0
        %v1467 = vsel %vm780, %v1462, 0
        %v1469 = vsel %vm780, %v1463, 0
        %1471 = vmatprep.subr.mxu0 %v1469
        %1472 = vmatpush1.msra.mxu0 %v1467
        %1473 = vmatprep.subr.mxu0 0.0
        %1474 = vmatpush1.msra.mxu0 0.0
        %1475 = vmatprep.subr.mxu0 0.0
        %1476 = vmatpush1.msra.mxu0 0.0
        %1477 = vmatprep.subr.mxu0 0.0
        %1478 = vmatpush1.msra.mxu0 0.0
        %1479 = vmatprep.subr.mxu0 0.0
        %1480 = vmatpush1.msra.mxu0 0.0
        %1481 = vmatprep.subr.mxu0 0.0
        %1482 = vmatpush1.msra.mxu0 0.0
        %1483 = vmatprep.subr.mxu0 0.0
        %1484 = vmatpush1.msra.mxu0 0.0
        %1485 = vmatprep.subr.mxu0 0.0
        %1486 = vmatpush1.msra.mxu0 0.0
        %1487 = vmatprep.subr.mxu0 0.0
        %1488 = vmatpush1.msra.mxu0 0.0
        %1489 = vmatprep.subr.mxu0 0.0
        %1490 = vmatpush1.msra.mxu0 0.0
        %1491 = vmatprep.subr.mxu0 0.0
        %1492 = vmatpush1.msra.mxu0 0.0
        %1493 = vmatprep.subr.mxu0 0.0
        %1494 = vmatpush1.msra.mxu0 0.0
        %1495 = vmatprep.subr.mxu0 0.0
        %1496 = vmatpush1.msra.mxu0 0.0
        %1497 = vmatprep.subr.mxu0 0.0
        %1498 = vmatpush1.msra.mxu0 0.0
        %1499 = vmatprep.subr.mxu0 0.0
        %1500 = vmatpush1.msra.mxu0 0.0
        %1501 = vmatprep.subr.mxu0 0.0
        %1502 = vmatpush1.msra.mxu0 0.0
        %1503 = vmatprep.subr.mxu0 0.0
        %1504 = vmatpush1.msra.mxu0 0.0
        %1505 = vmatprep.subr.mxu0 0.0
        %1506 = vmatpush1.msra.mxu0 0.0
        %1507 = vmatprep.subr.mxu0 0.0
        %1508 = vmatpush1.msra.mxu0 0.0
        %1509 = vmatprep.subr.mxu0 0.0
        %1510 = vmatpush1.msra.mxu0 0.0
        %1511 = vmatprep.subr.mxu0 0.0
        %1512 = vmatpush1.msra.mxu0 0.0
        %1513 = vmatprep.subr.mxu0 0.0
        %1514 = vmatpush1.msra.mxu0 0.0
        %1515 = vmatprep.subr.mxu0 0.0
        %1516 = vmatpush1.msra.mxu0 0.0
        %1517 = vmatprep.subr.mxu0 0.0
        %1518 = vmatpush1.msra.mxu0 0.0
        %1519 = vmatprep.subr.mxu0 0.0
        %1520 = vmatpush1.msra.mxu0 0.0
        %1521 = vmatprep.subr.mxu0 0.0
        %1522 = vmatpush1.msra.mxu0 0.0
        %1523 = vmatprep.subr.mxu0 0.0
        %1524 = vmatpush1.msra.mxu0 0.0
        %1525 = vmatprep.subr.mxu0 0.0
        %1526 = vmatpush1.msra.mxu0 0.0
        %1527 = vmatprep.subr.mxu0 0.0
        %1528 = vmatpush1.msra.mxu0 0.0
        %1529 = vmatprep.subr.mxu0 0.0
        %1530 = vmatpush1.msra.mxu0 0.0
        %1531 = vmatprep.subr.mxu0 0.0
        %1532 = vmatpush1.msra.mxu0 0.0
        %1533 = vmatprep.subr.mxu0 0.0
        %1534 = vmatpush1.msra.mxu0 0.0
        %1535 = vmatprep.mubr.f32.mxu0 0.0
        %1536 = vmatmul.mubr.f32.gmra.mrb[0].mxu0 %v1465
        %v1537 = vpop.f32.mrb[0].mxu0
        %v1538 = vadd.f32 0.0, %v1537
        %v1539 = vpop.f32.mrb[0].mxu0
        %v1540 = vadd.f32 0.0, %v1539
        %1541 = vdwg.mxu0
        %v1542 = vadd.f32 %v1451, %v1538
        %v1543 = vadd.f32 %v1452, %v1540
        %1544 = vrot.lane.b32.xlu0 %v942, 34
        %v1545 = vpop.permute.xlu0 %1544
        %1546 = vrot.lane.b32.xlu0 %v946, 34
        %v1547 = vpop.permute.xlu0 %1546
        %vm1548 = vcmask 277504
        %v1549 = vsel %vm1548, %v1545, %v1547
        %v1553 = vmul.f32 %v746, %v1545
        %v1554 = vmul.f32 %v742, %v1549
        %v1555 = vmul.f32 %v747, %v1547
        %s1556 = scalar_lea.vmem %s4, 32
        %v1557 = vld [vmem:[%s1556] sm:$0xf]
        %1561 = vrot.lane.b32.xlu0 %v1553, 94
        %v1562 = vpop.permute.xlu0 %1561
        %1563 = vrot.lane.b32.xlu0 %v1554, 94
        %v1564 = vpop.permute.xlu0 %1563
        %1565 = vrot.lane.b32.xlu0 %v1555, 94
        %v1566 = vpop.permute.xlu0 %1565
        %vm1567 = vcmask 769024
        %v1568 = vsel %vm1567, %v1562, %v1564
        %v1569 = vsel %vm1567, %v1564, %v1566
        %v1571 = vsel %vm776, %v1557, 0
        %v1573 = vsel %vm780, %v1568, 0
        %v1575 = vsel %vm780, %v1569, 0
        %1577 = vmatprep.subr.mxu0 %v1575
        %1578 = vmatpush1.msra.mxu0 %v1573
        %1579 = vmatprep.subr.mxu0 0.0
        %1580 = vmatpush1.msra.mxu0 0.0
        %1581 = vmatprep.subr.mxu0 0.0
        %1582 = vmatpush1.msra.mxu0 0.0
        %1583 = vmatprep.subr.mxu0 0.0
        %1584 = vmatpush1.msra.mxu0 0.0
        %1585 = vmatprep.subr.mxu0 0.0
        %1586 = vmatpush1.msra.mxu0 0.0
        %1587 = vmatprep.subr.mxu0 0.0
        %1588 = vmatpush1.msra.mxu0 0.0
        %1589 = vmatprep.subr.mxu0 0.0
        %1590 = vmatpush1.msra.mxu0 0.0
        %1591 = vmatprep.subr.mxu0 0.0
        %1592 = vmatpush1.msra.mxu0 0.0
        %1593 = vmatprep.subr.mxu0 0.0
        %1594 = vmatpush1.msra.mxu0 0.0
        %1595 = vmatprep.subr.mxu0 0.0
        %1596 = vmatpush1.msra.mxu0 0.0
        %1597 = vmatprep.subr.mxu0 0.0
        %1598 = vmatpush1.msra.mxu0 0.0
        %1599 = vmatprep.subr.mxu0 0.0
        %1600 = vmatpush1.msra.mxu0 0.0
        %1601 = vmatprep.subr.mxu0 0.0
        %1602 = vmatpush1.msra.mxu0 0.0
        %1603 = vmatprep.subr.mxu0 0.0
        %1604 = vmatpush1.msra.mxu0 0.0
        %1605 = vmatprep.subr.mxu0 0.0
        %1606 = vmatpush1.msra.mxu0 0.0
        %1607 = vmatprep.subr.mxu0 0.0
        %1608 = vmatpush1.msra.mxu0 0.0
        %1609 = vmatprep.subr.mxu0 0.0
        %1610 = vmatpush1.msra.mxu0 0.0
        %1611 = vmatprep.subr.mxu0 0.0
        %1612 = vmatpush1.msra.mxu0 0.0
        %1613 = vmatprep.subr.mxu0 0.0
        %1614 = vmatpush1.msra.mxu0 0.0
        %1615 = vmatprep.subr.mxu0 0.0
        %1616 = vmatpush1.msra.mxu0 0.0
        %1617 = vmatprep.subr.mxu0 0.0
        %1618 = vmatpush1.msra.mxu0 0.0
        %1619 = vmatprep.subr.mxu0 0.0
        %1620 = vmatpush1.msra.mxu0 0.0
        %1621 = vmatprep.subr.mxu0 0.0
        %1622 = vmatpush1.msra.mxu0 0.0
        %1623 = vmatprep.subr.mxu0 0.0
        %1624 = vmatpush1.msra.mxu0 0.0
        %1625 = vmatprep.subr.mxu0 0.0
        %1626 = vmatpush1.msra.mxu0 0.0
        %1627 = vmatprep.subr.mxu0 0.0
        %1628 = vmatpush1.msra.mxu0 0.0
        %1629 = vmatprep.subr.mxu0 0.0
        %1630 = vmatpush1.msra.mxu0 0.0
        %1631 = vmatprep.subr.mxu0 0.0
        %1632 = vmatpush1.msra.mxu0 0.0
        %1633 = vmatprep.subr.mxu0 0.0
        %1634 = vmatpush1.msra.mxu0 0.0
        %1635 = vmatprep.subr.mxu0 0.0
        %1636 = vmatpush1.msra.mxu0 0.0
        %1637 = vmatprep.subr.mxu0 0.0
        %1638 = vmatpush1.msra.mxu0 0.0
        %1639 = vmatprep.subr.mxu0 0.0
        %1640 = vmatpush1.msra.mxu0 0.0
        %1641 = vmatprep.mubr.f32.mxu0 0.0
        %1642 = vmatmul.mubr.f32.gmra.mrb[0].mxu0 %v1571
        %v1643 = vpop.f32.mrb[0].mxu0
        %v1644 = vadd.f32 0.0, %v1643
        %v1645 = vpop.f32.mrb[0].mxu0
        %v1646 = vadd.f32 0.0, %v1645
        %1647 = vdwg.mxu0
        %v1648 = vadd.f32 %v1542, %v1644
        %v1649 = vadd.f32 %v1543, %v1646
        %v1650 = vsel %vm780, %v1648, 0.0
        %v1651 = vsel %vm780, %v1649, 0.0
        %v1652 = vadd.f32 %v1650, %v1651
        %1653 = vadd.xlane.f32.xlu0 %v1652
        %v1654 = vpop.xlane.xlu0 %1653
        %v1655 = vrot.slane %v1654, 4
        %v1656 = vadd.f32 %v1654, %v1655
        %v1657 = vrot.slane %v1656, 2
        %v1658 = vadd.f32 %v1656, %v1657
        %v1659 = vrot.slane %v1658, 1
        %v1660 = vadd.f32 %v1658, %v1659
        %s1661 = vtos %v1660
        %v1662 = vrcp.pop 1024.0
        %s1663 = vtos %v1662
        %s1664 = smul.f32 %s1661, %s1663
        %v1665 = vstv %s1664
        %v1666 = vsub.f32 %v1648, %v1665
        %v1667 = vsub.f32 %v1649, %v1665
        %v1668 = vmul.f32 %v1666, %v1666
        %v1669 = vmul.f32 %v1667, %v1667
        %v1670 = vsel %vm780, %v1668, 0.0
        %v1671 = vsel %vm780, %v1669, 0.0
        %v1672 = vadd.f32 %v1670, %v1671
        %1673 = vadd.xlane.f32.xlu0 %v1672
        %v1674 = vpop.xlane.xlu0 %1673
        %v1675 = vrot.slane %v1674, 4
        %v1676 = vadd.f32 %v1674, %v1675
        %v1677 = vrot.slane %v1676, 2
        %v1678 = vadd.f32 %v1676, %v1677
        %v1679 = vrot.slane %v1678, 1
        %v1680 = vadd.f32 %v1678, %v1679
        %s1681 = vtos %v1680
        %v1682 = vrcp.pop 1024.0
        %s1683 = vtos %v1682
        %s1684 = smul.f32 %s1681, %s1683
        %s1685 = sadd.f32 %s1684, 1e-05
        %v1686 = vstv %s1685
        %v1687 = vrsqrt.pop %v1686
        %s1688 = vtos %v1687
        %v1689 = vstv %s1688
        %v1690 = vmul.f32 %v1666, %v1689
        %v1691 = vmul.f32 %v1667, %v1689
        %v1692 = vld [vmem:[%s5] sm:$0xf]
        %1694 = vset.pattern.permute.xlu0 0
        %1695 = vperm.xlu0 %1694, %v1692
        %v1696 = vpop.permute.xlu0 %1695
        %v1698 = vmul.f32 %v1690, %v1696
        %v1699 = vmul.f32 %v1691, %v1696
        %s1700 = scalar_lea.vmem %s5, 4
        %v1701 = vld [vmem:[%s1700] sm:$0xf]
        %1703 = vset.pattern.permute.xlu0 0
        %1704 = vperm.xlu0 %1703, %v1701
        %v1705 = vpop.permute.xlu0 %1704
        %v1707 = vadd.f32 %v1698, %v1705
        %v1708 = vadd.f32 %v1699, %v1705
        %v1709 = vmul.f32 %v1707, 0.5
        %v1710 = vmul.f32 %v1708, 0.5
        %v1711 = vmul.f32 %v1707, 0.044715
        %v1712 = vmul.f32 %v1708, 0.044715
        %v1713 = vmul.f32 %v1711, %v1707
        %v1714 = vmul.f32 %v1712, %v1708
        %v1715 = vmul.f32 %v1713, %v1707
        %v1716 = vmul.f32 %v1714, %v1708
        %v1717 = vadd.f32 %v1707, %v1715
        %v1718 = vadd.f32 %v1708, %v1716
        %v1719 = vmul.f32 %v1717, 0.7978846
        %v1720 = vmul.f32 %v1718, 0.7978846
        %v1721 = vtanh.pop %v1719
        %v1722 = vtanh.pop %v1720
        %v1723 = vadd.f32 %v1721, 1.0
        %v1724 = vadd.f32 %v1722, 1.0
        %v1725 = vmul.f32 %v1709, %v1723
        %v1726 = vmul.f32 %v1710, %v1724
        %1729 = vrot.lane.b32.xlu0 %v1725, 17
        %v1730 = vpop.permute.xlu0 %1729
        %1731 = vrot.lane.b32.xlu0 %v1726, 17
        %v1732 = vpop.permute.xlu0 %1731
        %v1733 = vsel %vm741, %v1730, %v1732
        %v1737 = vsel %vm741, 0.0, %v1730
        %v1738 = vsel %vm741, %v1732, 0.0
        %v1739 = vmul.f32 %v1737, %v753
        %v1740 = vmul.f32 %v1733, %v757
        %v1741 = vld [vmem:[%s6] sm:$0xf]
        %s1742 = scalar_lea.vmem %s6, 4
        %v1743 = vld [vmem:[%s1742] sm:$0xf]
        %1746 = vrot.lane.b32.xlu0 %v1737, 127
        %v1747 = vpop.permute.xlu0 %1746
        %1748 = vrot.lane.b32.xlu0 %v1733, 127
        %v1749 = vpop.permute.xlu0 %1748
        %1750 = vrot.lane.b32.xlu0 %v1738, 127
        %v1751 = vpop.permute.xlu0 %1750
        %v1752 = vsel %vm773, %v1747, %v1749
        %v1753 = vsel %vm773, %v1749, %v1751
        %v1755 = vsel %vm776, %v1743, 0
        %v1757 = vsel %vm780, %v1752, 0
        %v1759 = vsel %vm780, %v1753, 0
        %1761 = vmatprep.subr.mxu0 %v1759
        %1762 = vmatpush1.msra.mxu0 %v1757
        %1763 = vmatprep.subr.mxu0 0.0
        %1764 = vmatpush1.msra.mxu0 0.0
        %1765 = vmatprep.subr.mxu0 0.0
        %1766 = vmatpush1.msra.mxu0 0.0
        %1767 = vmatprep.subr.mxu0 0.0
        %1768 = vmatpush1.msra.mxu0 0.0
        %1769 = vmatprep.subr.mxu0 0.0
        %1770 = vmatpush1.msra.mxu0 0.0
        %1771 = vmatprep.subr.mxu0 0.0
        %1772 = vmatpush1.msra.mxu0 0.0
        %1773 = vmatprep.subr.mxu0 0.0
        %1774 = vmatpush1.msra.mxu0 0.0
        %1775 = vmatprep.subr.mxu0 0.0
        %1776 = vmatpush1.msra.mxu0 0.0
        %1777 = vmatprep.subr.mxu0 0.0
        %1778 = vmatpush1.msra.mxu0 0.0
        %1779 = vmatprep.subr.mxu0 0.0
        %1780 = vmatpush1.msra.mxu0 0.0
        %1781 = vmatprep.subr.mxu0 0.0
        %1782 = vmatpush1.msra.mxu0 0.0
        %1783 = vmatprep.subr.mxu0 0.0
        %1784 = vmatpush1.msra.mxu0 0.0
        %1785 = vmatprep.subr.mxu0 0.0
        %1786 = vmatpush1.msra.mxu0 0.0
        %1787 = vmatprep.subr.mxu0 0.0
        %1788 = vmatpush1.msra.mxu0 0.0
        %1789 = vmatprep.subr.mxu0 0.0
        %1790 = vmatpush1.msra.mxu0 0.0
        %1791 = vmatprep.subr.mxu0 0.0
        %1792 = vmatpush1.msra.mxu0 0.0
        %1793 = vmatprep.subr.mxu0 0.0
        %1794 = vmatpush1.msra.mxu0 0.0
        %1795 = vmatprep.subr.mxu0 0.0
        %1796 = vmatpush1.msra.mxu0 0.0
        %1797 = vmatprep.subr.mxu0 0.0
        %1798 = vmatpush1.msra.mxu0 0.0
        %1799 = vmatprep.subr.mxu0 0.0
        %1800 = vmatpush1.msra.mxu0 0.0
        %1801 = vmatprep.subr.mxu0 0.0
        %1802 = vmatpush1.msra.mxu0 0.0
        %1803 = vmatprep.subr.mxu0 0.0
        %1804 = vmatpush1.msra.mxu0 0.0
        %1805 = vmatprep.subr.mxu0 0.0
        %1806 = vmatpush1.msra.mxu0 0.0
        %1807 = vmatprep.subr.mxu0 0.0
        %1808 = vmatpush1.msra.mxu0 0.0
        %1809 = vmatprep.subr.mxu0 0.0
        %1810 = vmatpush1.msra.mxu0 0.0
        %1811 = vmatprep.subr.mxu0 0.0
        %1812 = vmatpush1.msra.mxu0 0.0
        %1813 = vmatprep.subr.mxu0 0.0
        %1814 = vmatpush1.msra.mxu0 0.0
        %1815 = vmatprep.subr.mxu0 0.0
        %1816 = vmatpush1.msra.mxu0 0.0
        %1817 = vmatprep.subr.mxu0 0.0
        %1818 = vmatpush1.msra.mxu0 0.0
        %1819 = vmatprep.subr.mxu0 0.0
        %1820 = vmatpush1.msra.mxu0 0.0
        %1821 = vmatprep.subr.mxu0 0.0
        %1822 = vmatpush1.msra.mxu0 0.0
        %1823 = vmatprep.subr.mxu0 0.0
        %1824 = vmatpush1.msra.mxu0 0.0
        %1825 = vmatprep.mubr.f32.mxu0 0.0
        %1826 = vmatmul.mubr.f32.gmra.mrb[0].mxu0 %v1755
        %v1827 = vpop.f32.mrb[0].mxu0
        %v1828 = vadd.f32 0.0, %v1827
        %v1829 = vpop.f32.mrb[0].mxu0
        %v1830 = vadd.f32 0.0, %v1829
        %1831 = vdwg.mxu0
        %v1833 = vsel %vm776, %v1741, 0
        %v1836 = vsel %vm780, %v1739, 0
        %v1839 = vsel %vm780, %v1740, 0
        %1841 = vmatprep.subr.mxu0 %v1839
        %1842 = vmatpush1.msra.mxu0 %v1836
        %1843 = vmatprep.subr.mxu0 0.0
        %1844 = vmatpush1.msra.mxu0 0.0
        %1845 = vmatprep.subr.mxu0 0.0
        %1846 = vmatpush1.msra.mxu0 0.0
        %1847 = vmatprep.subr.mxu0 0.0
        %1848 = vmatpush1.msra.mxu0 0.0
        %1849 = vmatprep.subr.mxu0 0.0
        %1850 = vmatpush1.msra.mxu0 0.0
        %1851 = vmatprep.subr.mxu0 0.0
        %1852 = vmatpush1.msra.mxu0 0.0
        %1853 = vmatprep.subr.mxu0 0.0
        %1854 = vmatpush1.msra.mxu0 0.0
        %1855 = vmatprep.subr.mxu0 0.0
        %1856 = vmatpush1.msra.mxu0 0.0
        %1857 = vmatprep.subr.mxu0 0.0
        %1858 = vmatpush1.msra.mxu0 0.0
        %1859 = vmatprep.subr.mxu0 0.0
        %1860 = vmatpush1.msra.mxu0 0.0
        %1861 = vmatprep.subr.mxu0 0.0
        %1862 = vmatpush1.msra.mxu0 0.0
        %1863 = vmatprep.subr.mxu0 0.0
        %1864 = vmatpush1.msra.mxu0 0.0
        %1865 = vmatprep.subr.mxu0 0.0
        %1866 = vmatpush1.msra.mxu0 0.0
        %1867 = vmatprep.subr.mxu0 0.0
        %1868 = vmatpush1.msra.mxu0 0.0
        %1869 = vmatprep.subr.mxu0 0.0
        %1870 = vmatpush1.msra.mxu0 0.0
        %1871 = vmatprep.subr.mxu0 0.0
        %1872 = vmatpush1.msra.mxu0 0.0
        %1873 = vmatprep.subr.mxu0 0.0
        %1874 = vmatpush1.msra.mxu0 0.0
        %1875 = vmatprep.subr.mxu0 0.0
        %1876 = vmatpush1.msra.mxu0 0.0
        %1877 = vmatprep.subr.mxu0 0.0
        %1878 = vmatpush1.msra.mxu0 0.0
        %1879 = vmatprep.subr.mxu0 0.0
        %1880 = vmatpush1.msra.mxu0 0.0
        %1881 = vmatprep.subr.mxu0 0.0
        %1882 = vmatpush1.msra.mxu0 0.0
        %1883 = vmatprep.subr.mxu0 0.0
        %1884 = vmatpush1.msra.mxu0 0.0
        %1885 = vmatprep.subr.mxu0 0.0
        %1886 = vmatpush1.msra.mxu0 0.0
        %1887 = vmatprep.subr.mxu0 0.0
        %1888 = vmatpush1.msra.mxu0 0.0
        %1889 = vmatprep.subr.mxu0 0.0
        %1890 = vmatpush1.msra.mxu0 0.0
        %1891 = vmatprep.subr.mxu0 0.0
        %1892 = vmatpush1.msra.mxu0 0.0
        %1893 = vmatprep.subr.mxu0 0.0
        %1894 = vmatpush1.msra.mxu0 0.0
        %1895 = vmatprep.subr.mxu0 0.0
        %1896 = vmatpush1.msra.mxu0 0.0
        %1897 = vmatprep.subr.mxu0 0.0
        %1898 = vmatpush1.msra.mxu0 0.0
        %1899 = vmatprep.subr.mxu0 0.0
        %1900 = vmatpush1.msra.mxu0 0.0
        %1901 = vmatprep.subr.mxu0 0.0
        %1902 = vmatpush1.msra.mxu0 0.0
        %1903 = vmatprep.subr.mxu0 0.0
        %1904 = vmatpush1.msra.mxu0 0.0
        %1905 = vmatprep.mubr.f32.mxu0 0.0
        %1906 = vmatmul.mubr.f32.gmra.mrb[0].mxu0 %v1833
        %v1907 = vpop.f32.mrb[0].mxu0
        %v1908 = vadd.f32 %v1828, %v1907
        %v1909 = vpop.f32.mrb[0].mxu0
        %v1910 = vadd.f32 %v1830, %v1909
        %1911 = vdwg.mxu0
        %v1912 = vmul.f32 %v1737, %v948
        %v1913 = vmul.f32 %v1733, %v952
        %v1914 = vmul.f32 %v1738, %v950
        %s1915 = scalar_lea.vmem %s6, 8
        %v1916 = vld [vmem:[%s1915] sm:$0xf]
        %1920 = vrot.lane.b32.xlu0 %v1912, 126
        %v1921 = vpop.permute.xlu0 %1920
        %1922 = vrot.lane.b32.xlu0 %v1913, 126
        %v1923 = vpop.permute.xlu0 %1922
        %1924 = vrot.lane.b32.xlu0 %v1914, 126
        %v1925 = vpop.permute.xlu0 %1924
        %v1926 = vsel %vm970, %v1921, %v1923
        %v1927 = vsel %vm970, %v1923, %v1925
        %v1929 = vsel %vm776, %v1916, 0
        %v1931 = vsel %vm780, %v1926, 0
        %v1933 = vsel %vm780, %v1927, 0
        %1935 = vmatprep.subr.mxu0 %v1933
        %1936 = vmatpush1.msra.mxu0 %v1931
        %1937 = vmatprep.subr.mxu0 0.0
        %1938 = vmatpush1.msra.mxu0 0.0
        %1939 = vmatprep.subr.mxu0 0.0
        %1940 = vmatpush1.msra.mxu0 0.0
        %1941 = vmatprep.subr.mxu0 0.0
        %1942 = vmatpush1.msra.mxu0 0.0
        %1943 = vmatprep.subr.mxu0 0.0
        %1944 = vmatpush1.msra.mxu0 0.0
        %1945 = vmatprep.subr.mxu0 0.0
        %1946 = vmatpush1.msra.mxu0 0.0
        %1947 = vmatprep.subr.mxu0 0.0
        %1948 = vmatpush1.msra.mxu0 0.0
        %1949 = vmatprep.subr.mxu0 0.0
        %1950 = vmatpush1.msra.mxu0 0.0
        %1951 = vmatprep.subr.mxu0 0.0
        %1952 = vmatpush1.msra.mxu0 0.0
        %1953 = vmatprep.subr.mxu0 0.0
        %1954 = vmatpush1.msra.mxu0 0.0
        %1955 = vmatprep.subr.mxu0 0.0
        %1956 = vmatpush1.msra.mxu0 0.0
        %1957 = vmatprep.subr.mxu0 0.0
        %1958 = vmatpush1.msra.mxu0 0.0
        %1959 = vmatprep.subr.mxu0 0.0
        %1960 = vmatpush1.msra.mxu0 0.0
        %1961 = vmatprep.subr.mxu0 0.0
        %1962 = vmatpush1.msra.mxu0 0.0
        %1963 = vmatprep.subr.mxu0 0.0
        %1964 = vmatpush1.msra.mxu0 0.0
        %1965 = vmatprep.subr.mxu0 0.0
        %1966 = vmatpush1.msra.mxu0 0.0
        %1967 = vmatprep.subr.mxu0 0.0
        %1968 = vmatpush1.msra.mxu0 0.0
        %1969 = vmatprep.subr.mxu0 0.0
        %1970 = vmatpush1.msra.mxu0 0.0
        %1971 = vmatprep.subr.mxu0 0.0
        %1972 = vmatpush1.msra.mxu0 0.0
        %1973 = vmatprep.subr.mxu0 0.0
        %1974 = vmatpush1.msra.mxu0 0.0
        %1975 = vmatprep.subr.mxu0 0.0
        %1976 = vmatpush1.msra.mxu0 0.0
        %1977 = vmatprep.subr.mxu0 0.0
        %1978 = vmatpush1.msra.mxu0 0.0
        %1979 = vmatprep.subr.mxu0 0.0
        %1980 = vmatpush1.msra.mxu0 0.0
        %1981 = vmatprep.subr.mxu0 0.0
        %1982 = vmatpush1.msra.mxu0 0.0
        %1983 = vmatprep.subr.mxu0 0.0
        %1984 = vmatpush1.msra.mxu0 0.0
        %1985 = vmatprep.subr.mxu0 0.0
        %1986 = vmatpush1.msra.mxu0 0.0
        %1987 = vmatprep.subr.mxu0 0.0
        %1988 = vmatpush1.msra.mxu0 0.0
        %1989 = vmatprep.subr.mxu0 0.0
        %1990 = vmatpush1.msra.mxu0 0.0
        %1991 = vmatprep.subr.mxu0 0.0
        %1992 = vmatpush1.msra.mxu0 0.0
        %1993 = vmatprep.subr.mxu0 0.0
        %1994 = vmatpush1.msra.mxu0 0.0
        %1995 = vmatprep.subr.mxu0 0.0
        %1996 = vmatpush1.msra.mxu0 0.0
        %1997 = vmatprep.subr.mxu0 0.0
        %1998 = vmatpush1.msra.mxu0 0.0
        %1999 = vmatprep.mubr.f32.mxu0 0.0
        %2000 = vmatmul.mubr.f32.gmra.mrb[0].mxu0 %v1929
        %v2001 = vpop.f32.mrb[0].mxu0
        %v2002 = vadd.f32 0.0, %v2001
        %v2003 = vpop.f32.mrb[0].mxu0
        %v2004 = vadd.f32 0.0, %v2003
        %2005 = vdwg.mxu0
        %v2006 = vadd.f32 %v1908, %v2002
        %v2007 = vadd.f32 %v1910, %v2004
        %v2008 = vmul.f32 %v1737, %v1054
        %v2009 = vmul.f32 %v1733, %v1058
        %v2010 = vmul.f32 %v1738, %v1056
        %s2011 = scalar_lea.vmem %s6, 12
        %v2012 = vld [vmem:[%s2011] sm:$0xf]
        %2016 = vrot.lane.b32.xlu0 %v2008, 112
        %v2017 = vpop.permute.xlu0 %2016
        %2018 = vrot.lane.b32.xlu0 %v2009, 112
        %v2019 = vpop.permute.xlu0 %2018
        %2020 = vrot.lane.b32.xlu0 %v2010, 112
        %v2021 = vpop.permute.xlu0 %2020
        %v2022 = vsel %vm1076, %v2017, %v2019
        %v2023 = vsel %vm1076, %v2019, %v2021
        %v2025 = vsel %vm776, %v2012, 0
        %v2027 = vsel %vm780, %v2022, 0
        %v2029 = vsel %vm780, %v2023, 0
        %2031 = vmatprep.subr.mxu0 %v2029
        %2032 = vmatpush1.msra.mxu0 %v2027
        %2033 = vmatprep.subr.mxu0 0.0
        %2034 = vmatpush1.msra.mxu0 0.0
        %2035 = vmatprep.subr.mxu0 0.0
        %2036 = vmatpush1.msra.mxu0 0.0
        %2037 = vmatprep.subr.mxu0 0.0
        %2038 = vmatpush1.msra.mxu0 0.0
        %2039 = vmatprep.subr.mxu0 0.0
        %2040 = vmatpush1.msra.mxu0 0.0
        %2041 = vmatprep.subr.mxu0 0.0
        %2042 = vmatpush1.msra.mxu0 0.0
        %2043 = vmatprep.subr.mxu0 0.0
        %2044 = vmatpush1.msra.mxu0 0.0
        %2045 = vmatprep.subr.mxu0 0.0
        %2046 = vmatpush1.msra.mxu0 0.0
        %2047 = vmatprep.subr.mxu0 0.0
        %2048 = vmatpush1.msra.mxu0 0.0
        %2049 = vmatprep.subr.mxu0 0.0
        %2050 = vmatpush1.msra.mxu0 0.0
        %2051 = vmatprep.subr.mxu0 0.0
        %2052 = vmatpush1.msra.mxu0 0.0
        %2053 = vmatprep.subr.mxu0 0.0
        %2054 = vmatpush1.msra.mxu0 0.0
        %2055 = vmatprep.subr.mxu0 0.0
        %2056 = vmatpush1.msra.mxu0 0.0
        %2057 = vmatprep.subr.mxu0 0.0
        %2058 = vmatpush1.msra.mxu0 0.0
        %2059 = vmatprep.subr.mxu0 0.0
        %2060 = vmatpush1.msra.mxu0 0.0
        %2061 = vmatprep.subr.mxu0 0.0
        %2062 = vmatpush1.msra.mxu0 0.0
        %2063 = vmatprep.subr.mxu0 0.0
        %2064 = vmatpush1.msra.mxu0 0.0
        %2065 = vmatprep.subr.mxu0 0.0
        %2066 = vmatpush1.msra.mxu0 0.0
        %2067 = vmatprep.subr.mxu0 0.0
        %2068 = vmatpush1.msra.mxu0 0.0
        %2069 = vmatprep.subr.mxu0 0.0
        %2070 = vmatpush1.msra.mxu0 0.0
        %2071 = vmatprep.subr.mxu0 0.0
        %2072 = vmatpush1.msra.mxu0 0.0
        %2073 = vmatprep.subr.mxu0 0.0
        %2074 = vmatpush1.msra.mxu0 0.0
        %2075 = vmatprep.subr.mxu0 0.0
        %2076 = vmatpush1.msra.mxu0 0.0
        %2077 = vmatprep.subr.mxu0 0.0
        %2078 = vmatpush1.msra.mxu0 0.0
        %2079 = vmatprep.subr.mxu0 0.0
        %2080 = vmatpush1.msra.mxu0 0.0
        %2081 = vmatprep.subr.mxu0 0.0
        %2082 = vmatpush1.msra.mxu0 0.0
        %2083 = vmatprep.subr.mxu0 0.0
        %2084 = vmatpush1.msra.mxu0 0.0
        %2085 = vmatprep.subr.mxu0 0.0
        %2086 = vmatpush1.msra.mxu0 0.0
        %2087 = vmatprep.subr.mxu0 0.0
        %2088 = vmatpush1.msra.mxu0 0.0
        %2089 = vmatprep.subr.mxu0 0.0
        %2090 = vmatpush1.msra.mxu0 0.0
        %2091 = vmatprep.subr.mxu0 0.0
        %2092 = vmatpush1.msra.mxu0 0.0
        %2093 = vmatprep.subr.mxu0 0.0
        %2094 = vmatpush1.msra.mxu0 0.0
        %2095 = vmatprep.mubr.f32.mxu0 0.0
        %2096 = vmatmul.mubr.f32.gmra.mrb[0].mxu0 %v2025
        %v2097 = vpop.f32.mrb[0].mxu0
        %v2098 = vadd.f32 0.0, %v2097
        %v2099 = vpop.f32.mrb[0].mxu0
        %v2100 = vadd.f32 0.0, %v2099
        %2101 = vdwg.mxu0
        %v2102 = vadd.f32 %v2006, %v2098
        %v2103 = vadd.f32 %v2007, %v2100
        %s2104 = scalar_lea.vmem %s6, 16
        %v2105 = vld [vmem:[%s2104] sm:$0xf]
        %v2107 = vsel %vm776, %v2105, 0
        %v2109 = vsel %vm780, %v1725, 0
        %v2111 = vsel %vm780, %v1726, 0
        %2113 = vmatprep.subr.mxu0 %v2111
        %2114 = vmatpush1.msra.mxu0 %v2109
        %2115 = vmatprep.subr.mxu0 0.0
        %2116 = vmatpush1.msra.mxu0 0.0
        %2117 = vmatprep.subr.mxu0 0.0
        %2118 = vmatpush1.msra.mxu0 0.0
        %2119 = vmatprep.subr.mxu0 0.0
        %2120 = vmatpush1.msra.mxu0 0.0
        %2121 = vmatprep.subr.mxu0 0.0
        %2122 = vmatpush1.msra.mxu0 0.0
        %2123 = vmatprep.subr.mxu0 0.0
        %2124 = vmatpush1.msra.mxu0 0.0
        %2125 = vmatprep.subr.mxu0 0.0
        %2126 = vmatpush1.msra.mxu0 0.0
        %2127 = vmatprep.subr.mxu0 0.0
        %2128 = vmatpush1.msra.mxu0 0.0
        %2129 = vmatprep.subr.mxu0 0.0
        %2130 = vmatpush1.msra.mxu0 0.0
        %2131 = vmatprep.subr.mxu0 0.0
        %2132 = vmatpush1.msra.mxu0 0.0
        %2133 = vmatprep.subr.mxu0 0.0
        %2134 = vmatpush1.msra.mxu0 0.0
        %2135 = vmatprep.subr.mxu0 0.0
        %2136 = vmatpush1.msra.mxu0 0.0
        %2137 = vmatprep.subr.mxu0 0.0
        %2138 = vmatpush1.msra.mxu0 0.0
        %2139 = vmatprep.subr.mxu0 0.0
        %2140 = vmatpush1.msra.mxu0 0.0
        %2141 = vmatprep.subr.mxu0 0.0
        %2142 = vmatpush1.msra.mxu0 0.0
        %2143 = vmatprep.subr.mxu0 0.0
        %2144 = vmatpush1.msra.mxu0 0.0
        %2145 = vmatprep.subr.mxu0 0.0
        %2146 = vmatpush1.msra.mxu0 0.0
        %2147 = vmatprep.subr.mxu0 0.0
        %2148 = vmatpush1.msra.mxu0 0.0
        %2149 = vmatprep.subr.mxu0 0.0
        %2150 = vmatpush1.msra.mxu0 0.0
        %2151 = vmatprep.subr.mxu0 0.0
        %2152 = vmatpush1.msra.mxu0 0.0
        %2153 = vmatprep.subr.mxu0 0.0
        %2154 = vmatpush1.msra.mxu0 0.0
        %2155 = vmatprep.subr.mxu0 0.0
        %2156 = vmatpush1.msra.mxu0 0.0
        %2157 = vmatprep.subr.mxu0 0.0
        %2158 = vmatpush1.msra.mxu0 0.0
        %2159 = vmatprep.subr.mxu0 0.0
        %2160 = vmatpush1.msra.mxu0 0.0
        %2161 = vmatprep.subr.mxu0 0.0
        %2162 = vmatpush1.msra.mxu0 0.0
        %2163 = vmatprep.subr.mxu0 0.0
        %2164 = vmatpush1.msra.mxu0 0.0
        %2165 = vmatprep.subr.mxu0 0.0
        %2166 = vmatpush1.msra.mxu0 0.0
        %2167 = vmatprep.subr.mxu0 0.0
        %2168 = vmatpush1.msra.mxu0 0.0
        %2169 = vmatprep.subr.mxu0 0.0
        %2170 = vmatpush1.msra.mxu0 0.0
        %2171 = vmatprep.subr.mxu0 0.0
        %2172 = vmatpush1.msra.mxu0 0.0
        %2173 = vmatprep.subr.mxu0 0.0
        %2174 = vmatpush1.msra.mxu0 0.0
        %2175 = vmatprep.subr.mxu0 0.0
        %2176 = vmatpush1.msra.mxu0 0.0
        %2177 = vmatprep.mubr.f32.mxu0 0.0
        %2178 = vmatmul.mubr.f32.gmra.mrb[0].mxu0 %v2107
        %v2179 = vpop.f32.mrb[0].mxu0
        %v2180 = vadd.f32 0.0, %v2179
        %v2181 = vpop.f32.mrb[0].mxu0
        %v2182 = vadd.f32 0.0, %v2181
        %2183 = vdwg.mxu0
        %v2184 = vadd.f32 %v2102, %v2180
        %v2185 = vadd.f32 %v2103, %v2182
        %v2186 = vmul.f32 %v1737, %v1242
        %v2187 = vmul.f32 %v1733, %v1246
        %v2188 = vmul.f32 %v1738, %v1244
        %s2189 = scalar_lea.vmem %s6, 20
        %v2190 = vld [vmem:[%s2189] sm:$0xf]
        %2194 = vrot.lane.b32.xlu0 %v2186, 110
        %v2195 = vpop.permute.xlu0 %2194
        %2196 = vrot.lane.b32.xlu0 %v2187, 110
        %v2197 = vpop.permute.xlu0 %2196
        %2198 = vrot.lane.b32.xlu0 %v2188, 110
        %v2199 = vpop.permute.xlu0 %2198
        %v2200 = vsel %vm1264, %v2195, %v2197
        %v2201 = vsel %vm1264, %v2197, %v2199
        %v2203 = vsel %vm776, %v2190, 0
        %v2205 = vsel %vm780, %v2200, 0
        %v2207 = vsel %vm780, %v2201, 0
        %2209 = vmatprep.subr.mxu0 %v2207
        %2210 = vmatpush1.msra.mxu0 %v2205
        %2211 = vmatprep.subr.mxu0 0.0
        %2212 = vmatpush1.msra.mxu0 0.0
        %2213 = vmatprep.subr.mxu0 0.0
        %2214 = vmatpush1.msra.mxu0 0.0
        %2215 = vmatprep.subr.mxu0 0.0
        %2216 = vmatpush1.msra.mxu0 0.0
        %2217 = vmatprep.subr.mxu0 0.0
        %2218 = vmatpush1.msra.mxu0 0.0
        %2219 = vmatprep.subr.mxu0 0.0
        %2220 = vmatpush1.msra.mxu0 0.0
        %2221 = vmatprep.subr.mxu0 0.0
        %2222 = vmatpush1.msra.mxu0 0.0
        %2223 = vmatprep.subr.mxu0 0.0
        %2224 = vmatpush1.msra.mxu0 0.0
        %2225 = vmatprep.subr.mxu0 0.0
        %2226 = vmatpush1.msra.mxu0 0.0
        %2227 = vmatprep.subr.mxu0 0.0
        %2228 = vmatpush1.msra.mxu0 0.0
        %2229 = vmatprep.subr.mxu0 0.0
        %2230 = vmatpush1.msra.mxu0 0.0
        %2231 = vmatprep.subr.mxu0 0.0
        %2232 = vmatpush1.msra.mxu0 0.0
        %2233 = vmatprep.subr.mxu0 0.0
        %2234 = vmatpush1.msra.mxu0 0.0
        %2235 = vmatprep.subr.mxu0 0.0
        %2236 = vmatpush1.msra.mxu0 0.0
        %2237 = vmatprep.subr.mxu0 0.0
        %2238 = vmatpush1.msra.mxu0 0.0
        %2239 = vmatprep.subr.mxu0 0.0
        %2240 = vmatpush1.msra.mxu0 0.0
        %2241 = vmatprep.subr.mxu0 0.0
        %2242 = vmatpush1.msra.mxu0 0.0
        %2243 = vmatprep.subr.mxu0 0.0
        %2244 = vmatpush1.msra.mxu0 0.0
        %2245 = vmatprep.subr.mxu0 0.0
        %2246 = vmatpush1.msra.mxu0 0.0
        %2247 = vmatprep.subr.mxu0 0.0
        %2248 = vmatpush1.msra.mxu0 0.0
        %2249 = vmatprep.subr.mxu0 0.0
        %2250 = vmatpush1.msra.mxu0 0.0
        %2251 = vmatprep.subr.mxu0 0.0
        %2252 = vmatpush1.msra.mxu0 0.0
        %2253 = vmatprep.subr.mxu0 0.0
        %2254 = vmatpush1.msra.mxu0 0.0
        %2255 = vmatprep.subr.mxu0 0.0
        %2256 = vmatpush1.msra.mxu0 0.0
        %2257 = vmatprep.subr.mxu0 0.0
        %2258 = vmatpush1.msra.mxu0 0.0
        %2259 = vmatprep.subr.mxu0 0.0
        %2260 = vmatpush1.msra.mxu0 0.0
        %2261 = vmatprep.subr.mxu0 0.0
        %2262 = vmatpush1.msra.mxu0 0.0
        %2263 = vmatprep.subr.mxu0 0.0
        %2264 = vmatpush1.msra.mxu0 0.0
        %2265 = vmatprep.subr.mxu0 0.0
        %2266 = vmatpush1.msra.mxu0 0.0
        %2267 = vmatprep.subr.mxu0 0.0
        %2268 = vmatpush1.msra.mxu0 0.0
        %2269 = vmatprep.subr.mxu0 0.0
        %2270 = vmatpush1.msra.mxu0 0.0
        %2271 = vmatprep.subr.mxu0 0.0
        %2272 = vmatpush1.msra.mxu0 0.0
        %2273 = vmatprep.mubr.f32.mxu0 0.0
        %2274 = vmatmul.mubr.f32.gmra.mrb[0].mxu0 %v2203
        %v2275 = vpop.f32.mrb[0].mxu0
        %v2276 = vadd.f32 0.0, %v2275
        %v2277 = vpop.f32.mrb[0].mxu0
        %v2278 = vadd.f32 0.0, %v2277
        %2279 = vdwg.mxu0
        %v2280 = vadd.f32 %v2184, %v2276
        %v2281 = vadd.f32 %v2185, %v2278
        %v2282 = vmul.f32 %v1737, %v1348
        %v2283 = vmul.f32 %v1733, %v1352
        %v2284 = vmul.f32 %v1738, %v1350
        %s2285 = scalar_lea.vmem %s6, 24
        %v2286 = vld [vmem:[%s2285] sm:$0xf]
        %2290 = vrot.lane.b32.xlu0 %v2282, 96
        %v2291 = vpop.permute.xlu0 %2290
        %2292 = vrot.lane.b32.xlu0 %v2283, 96
        %v2293 = vpop.permute.xlu0 %2292
        %2294 = vrot.lane.b32.xlu0 %v2284, 96
        %v2295 = vpop.permute.xlu0 %2294
        %v2296 = vsel %vm1370, %v2291, %v2293
        %v2297 = vsel %vm1370, %v2293, %v2295
        %v2299 = vsel %vm776, %v2286, 0
        %v2301 = vsel %vm780, %v2296, 0
        %v2303 = vsel %vm780, %v2297, 0
        %2305 = vmatprep.subr.mxu0 %v2303
        %2306 = vmatpush1.msra.mxu0 %v2301
        %2307 = vmatprep.subr.mxu0 0.0
        %2308 = vmatpush1.msra.mxu0 0.0
        %2309 = vmatprep.subr.mxu0 0.0
        %2310 = vmatpush1.msra.mxu0 0.0
        %2311 = vmatprep.subr.mxu0 0.0
        %2312 = vmatpush1.msra.mxu0 0.0
        %2313 = vmatprep.subr.mxu0 0.0
        %2314 = vmatpush1.msra.mxu0 0.0
        %2315 = vmatprep.subr.mxu0 0.0
        %2316 = vmatpush1.msra.mxu0 0.0
        %2317 = vmatprep.subr.mxu0 0.0
        %2318 = vmatpush1.msra.mxu0 0.0
        %2319 = vmatprep.subr.mxu0 0.0
        %2320 = vmatpush1.msra.mxu0 0.0
        %2321 = vmatprep.subr.mxu0 0.0
        %2322 = vmatpush1.msra.mxu0 0.0
        %2323 = vmatprep.subr.mxu0 0.0
        %2324 = vmatpush1.msra.mxu0 0.0
        %2325 = vmatprep.subr.mxu0 0.0
        %2326 = vmatpush1.msra.mxu0 0.0
        %2327 = vmatprep.subr.mxu0 0.0
        %2328 = vmatpush1.msra.mxu0 0.0
        %2329 = vmatprep.subr.mxu0 0.0
        %2330 = vmatpush1.msra.mxu0 0.0
        %2331 = vmatprep.subr.mxu0 0.0
        %2332 = vmatpush1.msra.mxu0 0.0
        %2333 = vmatprep.subr.mxu0 0.0
        %2334 = vmatpush1.msra.mxu0 0.0
        %2335 = vmatprep.subr.mxu0 0.0
        %2336 = vmatpush1.msra.mxu0 0.0
        %2337 = vmatprep.subr.mxu0 0.0
        %2338 = vmatpush1.msra.mxu0 0.0
        %2339 = vmatprep.subr.mxu0 0.0
        %2340 = vmatpush1.msra.mxu0 0.0
        %2341 = vmatprep.subr.mxu0 0.0
        %2342 = vmatpush1.msra.mxu0 0.0
        %2343 = vmatprep.subr.mxu0 0.0
        %2344 = vmatpush1.msra.mxu0 0.0
        %2345 = vmatprep.subr.mxu0 0.0
        %2346 = vmatpush1.msra.mxu0 0.0
        %2347 = vmatprep.subr.mxu0 0.0
        %2348 = vmatpush1.msra.mxu0 0.0
        %2349 = vmatprep.subr.mxu0 0.0
        %2350 = vmatpush1.msra.mxu0 0.0
        %2351 = vmatprep.subr.mxu0 0.0
        %2352 = vmatpush1.msra.mxu0 0.0
        %2353 = vmatprep.subr.mxu0 0.0
        %2354 = vmatpush1.msra.mxu0 0.0
        %2355 = vmatprep.subr.mxu0 0.0
        %2356 = vmatpush1.msra.mxu0 0.0
        %2357 = vmatprep.subr.mxu0 0.0
        %2358 = vmatpush1.msra.mxu0 0.0
        %2359 = vmatprep.subr.mxu0 0.0
        %2360 = vmatpush1.msra.mxu0 0.0
        %2361 = vmatprep.subr.mxu0 0.0
        %2362 = vmatpush1.msra.mxu0 0.0
        %2363 = vmatprep.subr.mxu0 0.0
        %2364 = vmatpush1.msra.mxu0 0.0
        %2365 = vmatprep.subr.mxu0 0.0
        %2366 = vmatpush1.msra.mxu0 0.0
        %2367 = vmatprep.subr.mxu0 0.0
        %2368 = vmatpush1.msra.mxu0 0.0
        %2369 = vmatprep.mubr.f32.mxu0 0.0
        %2370 = vmatmul.mubr.f32.gmra.mrb[0].mxu0 %v2299
        %v2371 = vpop.f32.mrb[0].mxu0
        %v2372 = vadd.f32 0.0, %v2371
        %v2373 = vpop.f32.mrb[0].mxu0
        %v2374 = vadd.f32 0.0, %v2373
        %2375 = vdwg.mxu0
        %v2376 = vadd.f32 %v2280, %v2372
        %v2377 = vadd.f32 %v2281, %v2374
        %s2378 = scalar_lea.vmem %s6, 28
        %v2379 = vld [vmem:[%s2378] sm:$0xf]
        %2380 = vrot.lane.b32.xlu0 %v1737, 95
        %v2381 = vpop.permute.xlu0 %2380
        %2382 = vrot.lane.b32.xlu0 %v1733, 95
        %v2383 = vpop.permute.xlu0 %2382
        %2384 = vrot.lane.b32.xlu0 %v1738, 95
        %v2385 = vpop.permute.xlu0 %2384
        %v2386 = vsel %vm1461, %v2381, %v2383
        %v2387 = vsel %vm1461, %v2383, %v2385
        %v2389 = vsel %vm776, %v2379, 0
        %v2391 = vsel %vm780, %v2386, 0
        %v2393 = vsel %vm780, %v2387, 0
        %2395 = vmatprep.subr.mxu0 %v2393
        %2396 = vmatpush1.msra.mxu0 %v2391
        %2397 = vmatprep.subr.mxu0 0.0
        %2398 = vmatpush1.msra.mxu0 0.0
        %2399 = vmatprep.subr.mxu0 0.0
        %2400 = vmatpush1.msra.mxu0 0.0
        %2401 = vmatprep.subr.mxu0 0.0
        %2402 = vmatpush1.msra.mxu0 0.0
        %2403 = vmatprep.subr.mxu0 0.0
        %2404 = vmatpush1.msra.mxu0 0.0
        %2405 = vmatprep.subr.mxu0 0.0
        %2406 = vmatpush1.msra.mxu0 0.0
        %2407 = vmatprep.subr.mxu0 0.0
        %2408 = vmatpush1.msra.mxu0 0.0
        %2409 = vmatprep.subr.mxu0 0.0
        %2410 = vmatpush1.msra.mxu0 0.0
        %2411 = vmatprep.subr.mxu0 0.0
        %2412 = vmatpush1.msra.mxu0 0.0
        %2413 = vmatprep.subr.mxu0 0.0
        %2414 = vmatpush1.msra.mxu0 0.0
        %2415 = vmatprep.subr.mxu0 0.0
        %2416 = vmatpush1.msra.mxu0 0.0
        %2417 = vmatprep.subr.mxu0 0.0
        %2418 = vmatpush1.msra.mxu0 0.0
        %2419 = vmatprep.subr.mxu0 0.0
        %2420 = vmatpush1.msra.mxu0 0.0
        %2421 = vmatprep.subr.mxu0 0.0
        %2422 = vmatpush1.msra.mxu0 0.0
        %2423 = vmatprep.subr.mxu0 0.0
        %2424 = vmatpush1.msra.mxu0 0.0
        %2425 = vmatprep.subr.mxu0 0.0
        %2426 = vmatpush1.msra.mxu0 0.0
        %2427 = vmatprep.subr.mxu0 0.0
        %2428 = vmatpush1.msra.mxu0 0.0
        %2429 = vmatprep.subr.mxu0 0.0
        %2430 = vmatpush1.msra.mxu0 0.0
        %2431 = vmatprep.subr.mxu0 0.0
        %2432 = vmatpush1.msra.mxu0 0.0
        %2433 = vmatprep.subr.mxu0 0.0
        %2434 = vmatpush1.msra.mxu0 0.0
        %2435 = vmatprep.subr.mxu0 0.0
        %2436 = vmatpush1.msra.mxu0 0.0
        %2437 = vmatprep.subr.mxu0 0.0
        %2438 = vmatpush1.msra.mxu0 0.0
        %2439 = vmatprep.subr.mxu0 0.0
        %2440 = vmatpush1.msra.mxu0 0.0
        %2441 = vmatprep.subr.mxu0 0.0
        %2442 = vmatpush1.msra.mxu0 0.0
        %2443 = vmatprep.subr.mxu0 0.0
        %2444 = vmatpush1.msra.mxu0 0.0
        %2445 = vmatprep.subr.mxu0 0.0
        %2446 = vmatpush1.msra.mxu0 0.0
        %2447 = vmatprep.subr.mxu0 0.0
        %2448 = vmatpush1.msra.mxu0 0.0
        %2449 = vmatprep.subr.mxu0 0.0
        %2450 = vmatpush1.msra.mxu0 0.0
        %2451 = vmatprep.subr.mxu0 0.0
        %2452 = vmatpush1.msra.mxu0 0.0
        %2453 = vmatprep.subr.mxu0 0.0
        %2454 = vmatpush1.msra.mxu0 0.0
        %2455 = vmatprep.subr.mxu0 0.0
        %2456 = vmatpush1.msra.mxu0 0.0
        %2457 = vmatprep.subr.mxu0 0.0
        %2458 = vmatpush1.msra.mxu0 0.0
        %2459 = vmatprep.mubr.f32.mxu0 0.0
        %2460 = vmatmul.mubr.f32.gmra.mrb[0].mxu0 %v2389
        %v2461 = vpop.f32.mrb[0].mxu0
        %v2462 = vadd.f32 0.0, %v2461
        %v2463 = vpop.f32.mrb[0].mxu0
        %v2464 = vadd.f32 0.0, %v2463
        %2465 = vdwg.mxu0
        %v2466 = vadd.f32 %v2376, %v2462
        %v2467 = vadd.f32 %v2377, %v2464
        %v2468 = vmul.f32 %v1737, %v1545
        %v2469 = vmul.f32 %v1733, %v1549
        %v2470 = vmul.f32 %v1738, %v1547
        %s2471 = scalar_lea.vmem %s6, 32
        %v2472 = vld [vmem:[%s2471] sm:$0xf]
        %2476 = vrot.lane.b32.xlu0 %v2468, 94
        %v2477 = vpop.permute.xlu0 %2476
        %2478 = vrot.lane.b32.xlu0 %v2469, 94
        %v2479 = vpop.permute.xlu0 %2478
        %2480 = vrot.lane.b32.xlu0 %v2470, 94
        %v2481 = vpop.permute.xlu0 %2480
        %v2482 = vsel %vm1567, %v2477, %v2479
        %v2483 = vsel %vm1567, %v2479, %v2481
        %v2485 = vsel %vm776, %v2472, 0
        %v2487 = vsel %vm780, %v2482, 0
        %v2489 = vsel %vm780, %v2483, 0
        %2491 = vmatprep.subr.mxu0 %v2489
        %2492 = vmatpush1.msra.mxu0 %v2487
        %2493 = vmatprep.subr.mxu0 0.0
        %2494 = vmatpush1.msra.mxu0 0.0
        %2495 = vmatprep.subr.mxu0 0.0
        %2496 = vmatpush1.msra.mxu0 0.0
        %2497 = vmatprep.subr.mxu0 0.0
        %2498 = vmatpush1.msra.mxu0 0.0
        %2499 = vmatprep.subr.mxu0 0.0
        %2500 = vmatpush1.msra.mxu0 0.0
        %2501 = vmatprep.subr.mxu0 0.0
        %2502 = vmatpush1.msra.mxu0 0.0
        %2503 = vmatprep.subr.mxu0 0.0
        %2504 = vmatpush1.msra.mxu0 0.0
        %2505 = vmatprep.subr.mxu0 0.0
        %2506 = vmatpush1.msra.mxu0 0.0
        %2507 = vmatprep.subr.mxu0 0.0
        %2508 = vmatpush1.msra.mxu0 0.0
        %2509 = vmatprep.subr.mxu0 0.0
        %2510 = vmatpush1.msra.mxu0 0.0
        %2511 = vmatprep.subr.mxu0 0.0
        %2512 = vmatpush1.msra.mxu0 0.0
        %2513 = vmatprep.subr.mxu0 0.0
        %2514 = vmatpush1.msra.mxu0 0.0
        %2515 = vmatprep.subr.mxu0 0.0
        %2516 = vmatpush1.msra.mxu0 0.0
        %2517 = vmatprep.subr.mxu0 0.0
        %2518 = vmatpush1.msra.mxu0 0.0
        %2519 = vmatprep.subr.mxu0 0.0
        %2520 = vmatpush1.msra.mxu0 0.0
        %2521 = vmatprep.subr.mxu0 0.0
        %2522 = vmatpush1.msra.mxu0 0.0
        %2523 = vmatprep.subr.mxu0 0.0
        %2524 = vmatpush1.msra.mxu0 0.0
        %2525 = vmatprep.subr.mxu0 0.0
        %2526 = vmatpush1.msra.mxu0 0.0
        %2527 = vmatprep.subr.mxu0 0.0
        %2528 = vmatpush1.msra.mxu0 0.0
        %2529 = vmatprep.subr.mxu0 0.0
        %2530 = vmatpush1.msra.mxu0 0.0
        %2531 = vmatprep.subr.mxu0 0.0
        %2532 = vmatpush1.msra.mxu0 0.0
        %2533 = vmatprep.subr.mxu0 0.0
        %2534 = vmatpush1.msra.mxu0 0.0
        %2535 = vmatprep.subr.mxu0 0.0
        %2536 = vmatpush1.msra.mxu0 0.0
        %2537 = vmatprep.subr.mxu0 0.0
        %2538 = vmatpush1.msra.mxu0 0.0
        %2539 = vmatprep.subr.mxu0 0.0
        %2540 = vmatpush1.msra.mxu0 0.0
        %2541 = vmatprep.subr.mxu0 0.0
        %2542 = vmatpush1.msra.mxu0 0.0
        %2543 = vmatprep.subr.mxu0 0.0
        %2544 = vmatpush1.msra.mxu0 0.0
        %2545 = vmatprep.subr.mxu0 0.0
        %2546 = vmatpush1.msra.mxu0 0.0
        %2547 = vmatprep.subr.mxu0 0.0
        %2548 = vmatpush1.msra.mxu0 0.0
        %2549 = vmatprep.subr.mxu0 0.0
        %2550 = vmatpush1.msra.mxu0 0.0
        %2551 = vmatprep.subr.mxu0 0.0
        %2552 = vmatpush1.msra.mxu0 0.0
        %2553 = vmatprep.subr.mxu0 0.0
        %2554 = vmatpush1.msra.mxu0 0.0
        %2555 = vmatprep.mubr.f32.mxu0 0.0
        %2556 = vmatmul.mubr.f32.gmra.mrb[0].mxu0 %v2485
        %v2557 = vpop.f32.mrb[0].mxu0
        %v2558 = vadd.f32 0.0, %v2557
        %v2559 = vpop.f32.mrb[0].mxu0
        %v2560 = vadd.f32 0.0, %v2559
        %2561 = vdwg.mxu0
        %v2562 = vadd.f32 %v2466, %v2558
        %v2563 = vadd.f32 %v2467, %v2560
        %v2564 = vsel %vm780, %v2562, 0.0
        %v2565 = vsel %vm780, %v2563, 0.0
        %v2566 = vadd.f32 %v2564, %v2565
        %2567 = vadd.xlane.f32.xlu0 %v2566
        %v2568 = vpop.xlane.xlu0 %2567
        %v2569 = vrot.slane %v2568, 4
        %v2570 = vadd.f32 %v2568, %v2569
        %v2571 = vrot.slane %v2570, 2
        %v2572 = vadd.f32 %v2570, %v2571
        %v2573 = vrot.slane %v2572, 1
        %v2574 = vadd.f32 %v2572, %v2573
        %s2575 = vtos %v2574
        %v2576 = vrcp.pop 1024.0
        %s2577 = vtos %v2576
        %s2578 = smul.f32 %s2575, %s2577
        %v2579 = vstv %s2578
        %v2580 = vsub.f32 %v2562, %v2579
        %v2581 = vsub.f32 %v2563, %v2579
        %v2582 = vmul.f32 %v2580, %v2580
        %v2583 = vmul.f32 %v2581, %v2581
        %v2584 = vsel %vm780, %v2582, 0.0
        %v2585 = vsel %vm780, %v2583, 0.0
        %v2586 = vadd.f32 %v2584, %v2585
        %2587 = vadd.xlane.f32.xlu0 %v2586
        %v2588 = vpop.xlane.xlu0 %2587
        %v2589 = vrot.slane %v2588, 4
        %v2590 = vadd.f32 %v2588, %v2589
        %v2591 = vrot.slane %v2590, 2
        %v2592 = vadd.f32 %v2590, %v2591
        %v2593 = vrot.slane %v2592, 1
        %v2594 = vadd.f32 %v2592, %v2593
        %s2595 = vtos %v2594
        %v2596 = vrcp.pop 1024.0
        %s2597 = vtos %v2596
        %s2598 = smul.f32 %s2595, %s2597
        %s2599 = sadd.f32 %s2598, 1e-05
        %v2600 = vstv %s2599
        %v2601 = vrsqrt.pop %v2600
        %s2602 = vtos %v2601
        %v2603 = vstv %s2602
        %v2604 = vmul.f32 %v2580, %v2603
        %v2605 = vmul.f32 %v2581, %v2603
        %v2606 = vld [vmem:[%s7] sm:$0xf]
        %2608 = vset.pattern.permute.xlu0 0
        %2609 = vperm.xlu0 %2608, %v2606
        %v2610 = vpop.permute.xlu0 %2609
        %v2612 = vmul.f32 %v2604, %v2610
        %v2613 = vmul.f32 %v2605, %v2610
        %s2614 = scalar_lea.vmem %s7, 4
        %v2615 = vld [vmem:[%s2614] sm:$0xf]
        %2617 = vset.pattern.permute.xlu0 0
        %2618 = vperm.xlu0 %2617, %v2615
        %v2619 = vpop.permute.xlu0 %2618
        %v2621 = vadd.f32 %v2612, %v2619
        %v2622 = vadd.f32 %v2613, %v2619
        %v2625 = vcombine.low %v2621, %v2622
        %v2627 = vadd.f32 %v734, %v2625
        %v2628 = vmul.f32 %v2627, 0.5
        %v2629 = vmul.f32 %v2627, 0.044715
        %v2630 = vmul.f32 %v2629, %v2627
        %v2631 = vmul.f32 %v2630, %v2627
        %v2632 = vadd.f32 %v2627, %v2631
        %v2633 = vmul.f32 %v2632, 0.7978846
        %v2634 = vtanh.pop %v2633
        %v2635 = vadd.f32 %v2634, 1.0
        %v2636 = vmul.f32 %v2628, %v2635
        %v2638 = vcombine.high %v2636, %v2636
        %2639 = vrot.lane.b32.xlu0 %v2636, 17
        %v2640 = vpop.permute.xlu0 %2639
        %2641 = vrot.lane.b32.xlu0 %v2638, 17
        %v2642 = vpop.permute.xlu0 %2641
        %v2643 = vsel %vm741, %v2640, %v2642
        %v2647 = vsel %vm741, 0.0, %v2640
        %v2648 = vsel %vm741, %v2642, 0.0
        %v2649 = vmul.f32 %v2647, %v753
        %v2650 = vmul.f32 %v2643, %v757
        %v2651 = vld [vmem:[%s8] sm:$0xff]
        %s2652 = scalar_lea.vmem %s8, 8
        %v2653 = vld [vmem:[%s2652] sm:$0xff]
        %2656 = vrot.lane.b32.xlu0 %v2647, 127
        %v2657 = vpop.permute.xlu0 %2656
        %2658 = vrot.lane.b32.xlu0 %v2643, 127
        %v2659 = vpop.permute.xlu0 %2658
        %2660 = vrot.lane.b32.xlu0 %v2648, 127
        %v2661 = vpop.permute.xlu0 %2660
        %v2662 = vsel %vm773, %v2657, %v2659
        %v2663 = vsel %vm773, %v2659, %v2661
        %v2665 = vsel %vm776, %v2653, 0
        %v2667 = vsel %vm780, %v2662, 0
        %v2669 = vsel %vm780, %v2663, 0
        %2671 = vmatprep.subr.mxu0 %v2669
        %2672 = vmatpush1.msra.mxu0 %v2667
        %2673 = vmatprep.subr.mxu0 0.0
        %2674 = vmatpush1.msra.mxu0 0.0
        %2675 = vmatprep.subr.mxu0 0.0
        %2676 = vmatpush1.msra.mxu0 0.0
        %2677 = vmatprep.subr.mxu0 0.0
        %2678 = vmatpush1.msra.mxu0 0.0
        %2679 = vmatprep.subr.mxu0 0.0
        %2680 = vmatpush1.msra.mxu0 0.0
        %2681 = vmatprep.subr.mxu0 0.0
        %2682 = vmatpush1.msra.mxu0 0.0
        %2683 = vmatprep.subr.mxu0 0.0
        %2684 = vmatpush1.msra.mxu0 0.0
        %2685 = vmatprep.subr.mxu0 0.0
        %2686 = vmatpush1.msra.mxu0 0.0
        %2687 = vmatprep.subr.mxu0 0.0
        %2688 = vmatpush1.msra.mxu0 0.0
        %2689 = vmatprep.subr.mxu0 0.0
        %2690 = vmatpush1.msra.mxu0 0.0
        %2691 = vmatprep.subr.mxu0 0.0
        %2692 = vmatpush1.msra.mxu0 0.0
        %2693 = vmatprep.subr.mxu0 0.0
        %2694 = vmatpush1.msra.mxu0 0.0
        %2695 = vmatprep.subr.mxu0 0.0
        %2696 = vmatpush1.msra.mxu0 0.0
        %2697 = vmatprep.subr.mxu0 0.0
        %2698 = vmatpush1.msra.mxu0 0.0
        %2699 = vmatprep.subr.mxu0 0.0
        %2700 = vmatpush1.msra.mxu0 0.0
        %2701 = vmatprep.subr.mxu0 0.0
        %2702 = vmatpush1.msra.mxu0 0.0
        %2703 = vmatprep.subr.mxu0 0.0
        %2704 = vmatpush1.msra.mxu0 0.0
        %2705 = vmatprep.subr.mxu0 0.0
        %2706 = vmatpush1.msra.mxu0 0.0
        %2707 = vmatprep.subr.mxu0 0.0
        %2708 = vmatpush1.msra.mxu0 0.0
        %2709 = vmatprep.subr.mxu0 0.0
        %2710 = vmatpush1.msra.mxu0 0.0
        %2711 = vmatprep.subr.mxu0 0.0
        %2712 = vmatpush1.msra.mxu0 0.0
        %2713 = vmatprep.subr.mxu0 0.0
        %2714 = vmatpush1.msra.mxu0 0.0
        %2715 = vmatprep.subr.mxu0 0.0
        %2716 = vmatpush1.msra.mxu0 0.0
        %2717 = vmatprep.subr.mxu0 0.0
        %2718 = vmatpush1.msra.mxu0 0.0
        %2719 = vmatprep.subr.mxu0 0.0
        %2720 = vmatpush1.msra.mxu0 0.0
        %2721 = vmatprep.subr.mxu0 0.0
        %2722 = vmatpush1.msra.mxu0 0.0
        %2723 = vmatprep.subr.mxu0 0.0
        %2724 = vmatpush1.msra.mxu0 0.0
        %2725 = vmatprep.subr.mxu0 0.0
        %2726 = vmatpush1.msra.mxu0 0.0
        %2727 = vmatprep.subr.mxu0 0.0
        %2728 = vmatpush1.msra.mxu0 0.0
        %2729 = vmatprep.subr.mxu0 0.0
        %2730 = vmatpush1.msra.mxu0 0.0
        %2731 = vmatprep.subr.mxu0 0.0
        %2732 = vmatpush1.msra.mxu0 0.0
        %2733 = vmatprep.subr.mxu0 0.0
        %2734 = vmatpush1.msra.mxu0 0.0
        %2735 = vmatprep.mubr.f32.mxu0 0.0
        %2736 = vmatmul.mubr.f32.gmra.mrb[0].mxu0 %v2665
        %v2737 = vpop.f32.mrb[0].mxu0
        %v2738 = vadd.f32 0.0, %v2737
        %v2739 = vpop.f32.mrb[0].mxu0
        %v2740 = vadd.f32 0.0, %v2739
        %2741 = vdwg.mxu0
        %v2743 = vsel %vm776, %v2651, 0
        %v2746 = vsel %vm780, %v2649, 0
        %v2749 = vsel %vm780, %v2650, 0
        %2751 = vmatprep.subr.mxu0 %v2749
        %2752 = vmatpush1.msra.mxu0 %v2746
        %2753 = vmatprep.subr.mxu0 0.0
        %2754 = vmatpush1.msra.mxu0 0.0
        %2755 = vmatprep.subr.mxu0 0.0
        %2756 = vmatpush1.msra.mxu0 0.0
        %2757 = vmatprep.subr.mxu0 0.0
        %2758 = vmatpush1.msra.mxu0 0.0
        %2759 = vmatprep.subr.mxu0 0.0
        %2760 = vmatpush1.msra.mxu0 0.0
        %2761 = vmatprep.subr.mxu0 0.0
        %2762 = vmatpush1.msra.mxu0 0.0
        %2763 = vmatprep.subr.mxu0 0.0
        %2764 = vmatpush1.msra.mxu0 0.0
        %2765 = vmatprep.subr.mxu0 0.0
        %2766 = vmatpush1.msra.mxu0 0.0
        %2767 = vmatprep.subr.mxu0 0.0
        %2768 = vmatpush1.msra.mxu0 0.0
        %2769 = vmatprep.subr.mxu0 0.0
        %2770 = vmatpush1.msra.mxu0 0.0
        %2771 = vmatprep.subr.mxu0 0.0
        %2772 = vmatpush1.msra.mxu0 0.0
        %2773 = vmatprep.subr.mxu0 0.0
        %2774 = vmatpush1.msra.mxu0 0.0
        %2775 = vmatprep.subr.mxu0 0.0
        %2776 = vmatpush1.msra.mxu0 0.0
        %2777 = vmatprep.subr.mxu0 0.0
        %2778 = vmatpush1.msra.mxu0 0.0
        %2779 = vmatprep.subr.mxu0 0.0
        %2780 = vmatpush1.msra.mxu0 0.0
        %2781 = vmatprep.subr.mxu0 0.0
        %2782 = vmatpush1.msra.mxu0 0.0
        %2783 = vmatprep.subr.mxu0 0.0
        %2784 = vmatpush1.msra.mxu0 0.0
        %2785 = vmatprep.subr.mxu0 0.0
        %2786 = vmatpush1.msra.mxu0 0.0
        %2787 = vmatprep.subr.mxu0 0.0
        %2788 = vmatpush1.msra.mxu0 0.0
        %2789 = vmatprep.subr.mxu0 0.0
        %2790 = vmatpush1.msra.mxu0 0.0
        %2791 = vmatprep.subr.mxu0 0.0
        %2792 = vmatpush1.msra.mxu0 0.0
        %2793 = vmatprep.subr.mxu0 0.0
        %2794 = vmatpush1.msra.mxu0 0.0
        %2795 = vmatprep.subr.mxu0 0.0
        %2796 = vmatpush1.msra.mxu0 0.0
        %2797 = vmatprep.subr.mxu0 0.0
        %2798 = vmatpush1.msra.mxu0 0.0
        %2799 = vmatprep.subr.mxu0 0.0
        %2800 = vmatpush1.msra.mxu0 0.0
        %2801 = vmatprep.subr.mxu0 0.0
        %2802 = vmatpush1.msra.mxu0 0.0
        %2803 = vmatprep.subr.mxu0 0.0
        %2804 = vmatpush1.msra.mxu0 0.0
        %2805 = vmatprep.subr.mxu0 0.0
        %2806 = vmatpush1.msra.mxu0 0.0
        %2807 = vmatprep.subr.mxu0 0.0
        %2808 = vmatpush1.msra.mxu0 0.0
        %2809 = vmatprep.subr.mxu0 0.0
        %2810 = vmatpush1.msra.mxu0 0.0
        %2811 = vmatprep.subr.mxu0 0.0
        %2812 = vmatpush1.msra.mxu0 0.0
        %2813 = vmatprep.subr.mxu0 0.0
        %2814 = vmatpush1.msra.mxu0 0.0
        %2815 = vmatprep.mubr.f32.mxu0 0.0
        %2816 = vmatmul.mubr.f32.gmra.mrb[0].mxu0 %v2743
        %v2817 = vpop.f32.mrb[0].mxu0
        %v2818 = vadd.f32 %v2738, %v2817
        %v2819 = vpop.f32.mrb[0].mxu0
        %v2820 = vadd.f32 %v2740, %v2819
        %2821 = vdwg.mxu0
        %v2822 = vmul.f32 %v2647, %v948
        %v2823 = vmul.f32 %v2643, %v952
        %v2824 = vmul.f32 %v2648, %v950
        %s2825 = scalar_lea.vmem %s8, 16
        %v2826 = vld [vmem:[%s2825] sm:$0xff]
        %2830 = vrot.lane.b32.xlu0 %v2822, 126
        %v2831 = vpop.permute.xlu0 %2830
        %2832 = vrot.lane.b32.xlu0 %v2823, 126
        %v2833 = vpop.permute.xlu0 %2832
        %2834 = vrot.lane.b32.xlu0 %v2824, 126
        %v2835 = vpop.permute.xlu0 %2834
        %v2836 = vsel %vm970, %v2831, %v2833
        %v2837 = vsel %vm970, %v2833, %v2835
        %v2839 = vsel %vm776, %v2826, 0
        %v2841 = vsel %vm780, %v2836, 0
        %v2843 = vsel %vm780, %v2837, 0
        %2845 = vmatprep.subr.mxu0 %v2843
        %2846 = vmatpush1.msra.mxu0 %v2841
        %2847 = vmatprep.subr.mxu0 0.0
        %2848 = vmatpush1.msra.mxu0 0.0
        %2849 = vmatprep.subr.mxu0 0.0
        %2850 = vmatpush1.msra.mxu0 0.0
        %2851 = vmatprep.subr.mxu0 0.0
        %2852 = vmatpush1.msra.mxu0 0.0
        %2853 = vmatprep.subr.mxu0 0.0
        %2854 = vmatpush1.msra.mxu0 0.0
        %2855 = vmatprep.subr.mxu0 0.0
        %2856 = vmatpush1.msra.mxu0 0.0
        %2857 = vmatprep.subr.mxu0 0.0
        %2858 = vmatpush1.msra.mxu0 0.0
        %2859 = vmatprep.subr.mxu0 0.0
        %2860 = vmatpush1.msra.mxu0 0.0
        %2861 = vmatprep.subr.mxu0 0.0
        %2862 = vmatpush1.msra.mxu0 0.0
        %2863 = vmatprep.subr.mxu0 0.0
        %2864 = vmatpush1.msra.mxu0 0.0
        %2865 = vmatprep.subr.mxu0 0.0
        %2866 = vmatpush1.msra.mxu0 0.0
        %2867 = vmatprep.subr.mxu0 0.0
        %2868 = vmatpush1.msra.mxu0 0.0
        %2869 = vmatprep.subr.mxu0 0.0
        %2870 = vmatpush1.msra.mxu0 0.0
        %2871 = vmatprep.subr.mxu0 0.0
        %2872 = vmatpush1.msra.mxu0 0.0
        %2873 = vmatprep.subr.mxu0 0.0
        %2874 = vmatpush1.msra.mxu0 0.0
        %2875 = vmatprep.subr.mxu0 0.0
        %2876 = vmatpush1.msra.mxu0 0.0
        %2877 = vmatprep.subr.mxu0 0.0
        %2878 = vmatpush1.msra.mxu0 0.0
        %2879 = vmatprep.subr.mxu0 0.0
        %2880 = vmatpush1.msra.mxu0 0.0
        %2881 = vmatprep.subr.mxu0 0.0
        %2882 = vmatpush1.msra.mxu0 0.0
        %2883 = vmatprep.subr.mxu0 0.0
        %2884 = vmatpush1.msra.mxu0 0.0
        %2885 = vmatprep.subr.mxu0 0.0
        %2886 = vmatpush1.msra.mxu0 0.0
        %2887 = vmatprep.subr.mxu0 0.0
        %2888 = vmatpush1.msra.mxu0 0.0
        %2889 = vmatprep.subr.mxu0 0.0
        %2890 = vmatpush1.msra.mxu0 0.0
        %2891 = vmatprep.subr.mxu0 0.0
        %2892 = vmatpush1.msra.mxu0 0.0
        %2893 = vmatprep.subr.mxu0 0.0
        %2894 = vmatpush1.msra.mxu0 0.0
        %2895 = vmatprep.subr.mxu0 0.0
        %2896 = vmatpush1.msra.mxu0 0.0
        %2897 = vmatprep.subr.mxu0 0.0
        %2898 = vmatpush1.msra.mxu0 0.0
        %2899 = vmatprep.subr.mxu0 0.0
        %2900 = vmatpush1.msra.mxu0 0.0
        %2901 = vmatprep.subr.mxu0 0.0
        %2902 = vmatpush1.msra.mxu0 0.0
        %2903 = vmatprep.subr.mxu0 0.0
        %2904 = vmatpush1.msra.mxu0 0.0
        %2905 = vmatprep.subr.mxu0 0.0
        %2906 = vmatpush1.msra.mxu0 0.0
        %2907 = vmatprep.subr.mxu0 0.0
        %2908 = vmatpush1.msra.mxu0 0.0
        %2909 = vmatprep.mubr.f32.mxu0 0.0
        %2910 = vmatmul.mubr.f32.gmra.mrb[0].mxu0 %v2839
        %v2911 = vpop.f32.mrb[0].mxu0
        %v2912 = vadd.f32 0.0, %v2911
        %v2913 = vpop.f32.mrb[0].mxu0
        %v2914 = vadd.f32 0.0, %v2913
        %2915 = vdwg.mxu0
        %v2916 = vadd.f32 %v2818, %v2912
        %v2917 = vadd.f32 %v2820, %v2914
        %v2918 = vmul.f32 %v2647, %v1054
        %v2919 = vmul.f32 %v2643, %v1058
        %v2920 = vmul.f32 %v2648, %v1056
        %s2921 = scalar_lea.vmem %s8, 24
        %v2922 = vld [vmem:[%s2921] sm:$0xff]
        %2926 = vrot.lane.b32.xlu0 %v2918, 112
        %v2927 = vpop.permute.xlu0 %2926
        %2928 = vrot.lane.b32.xlu0 %v2919, 112
        %v2929 = vpop.permute.xlu0 %2928
        %2930 = vrot.lane.b32.xlu0 %v2920, 112
        %v2931 = vpop.permute.xlu0 %2930
        %v2932 = vsel %vm1076, %v2927, %v2929
        %v2933 = vsel %vm1076, %v2929, %v2931
        %v2935 = vsel %vm776, %v2922, 0
        %v2937 = vsel %vm780, %v2932, 0
        %v2939 = vsel %vm780, %v2933, 0
        %2941 = vmatprep.subr.mxu0 %v2939
        %2942 = vmatpush1.msra.mxu0 %v2937
        %2943 = vmatprep.subr.mxu0 0.0
        %2944 = vmatpush1.msra.mxu0 0.0
        %2945 = vmatprep.subr.mxu0 0.0
        %2946 = vmatpush1.msra.mxu0 0.0
        %2947 = vmatprep.subr.mxu0 0.0
        %2948 = vmatpush1.msra.mxu0 0.0
        %2949 = vmatprep.subr.mxu0 0.0
        %2950 = vmatpush1.msra.mxu0 0.0
        %2951 = vmatprep.subr.mxu0 0.0
        %2952 = vmatpush1.msra.mxu0 0.0
        %2953 = vmatprep.subr.mxu0 0.0
        %2954 = vmatpush1.msra.mxu0 0.0
        %2955 = vmatprep.subr.mxu0 0.0
        %2956 = vmatpush1.msra.mxu0 0.0
        %2957 = vmatprep.subr.mxu0 0.0
        %2958 = vmatpush1.msra.mxu0 0.0
        %2959 = vmatprep.subr.mxu0 0.0
        %2960 = vmatpush1.msra.mxu0 0.0
        %2961 = vmatprep.subr.mxu0 0.0
        %2962 = vmatpush1.msra.mxu0 0.0
        %2963 = vmatprep.subr.mxu0 0.0
        %2964 = vmatpush1.msra.mxu0 0.0
        %2965 = vmatprep.subr.mxu0 0.0
        %2966 = vmatpush1.msra.mxu0 0.0
        %2967 = vmatprep.subr.mxu0 0.0
        %2968 = vmatpush1.msra.mxu0 0.0
        %2969 = vmatprep.subr.mxu0 0.0
        %2970 = vmatpush1.msra.mxu0 0.0
        %2971 = vmatprep.subr.mxu0 0.0
        %2972 = vmatpush1.msra.mxu0 0.0
        %2973 = vmatprep.subr.mxu0 0.0
        %2974 = vmatpush1.msra.mxu0 0.0
        %2975 = vmatprep.subr.mxu0 0.0
        %2976 = vmatpush1.msra.mxu0 0.0
        %2977 = vmatprep.subr.mxu0 0.0
        %2978 = vmatpush1.msra.mxu0 0.0
        %2979 = vmatprep.subr.mxu0 0.0
        %2980 = vmatpush1.msra.mxu0 0.0
        %2981 = vmatprep.subr.mxu0 0.0
        %2982 = vmatpush1.msra.mxu0 0.0
        %2983 = vmatprep.subr.mxu0 0.0
        %2984 = vmatpush1.msra.mxu0 0.0
        %2985 = vmatprep.subr.mxu0 0.0
        %2986 = vmatpush1.msra.mxu0 0.0
        %2987 = vmatprep.subr.mxu0 0.0
        %2988 = vmatpush1.msra.mxu0 0.0
        %2989 = vmatprep.subr.mxu0 0.0
        %2990 = vmatpush1.msra.mxu0 0.0
        %2991 = vmatprep.subr.mxu0 0.0
        %2992 = vmatpush1.msra.mxu0 0.0
        %2993 = vmatprep.subr.mxu0 0.0
        %2994 = vmatpush1.msra.mxu0 0.0
        %2995 = vmatprep.subr.mxu0 0.0
        %2996 = vmatpush1.msra.mxu0 0.0
        %2997 = vmatprep.subr.mxu0 0.0
        %2998 = vmatpush1.msra.mxu0 0.0
        %2999 = vmatprep.subr.mxu0 0.0
        %3000 = vmatpush1.msra.mxu0 0.0
        %3001 = vmatprep.subr.mxu0 0.0
        %3002 = vmatpush1.msra.mxu0 0.0
        %3003 = vmatprep.subr.mxu0 0.0
        %3004 = vmatpush1.msra.mxu0 0.0
        %3005 = vmatprep.mubr.f32.mxu0 0.0
        %3006 = vmatmul.mubr.f32.gmra.mrb[0].mxu0 %v2935
        %v3007 = vpop.f32.mrb[0].mxu0
        %v3008 = vadd.f32 0.0, %v3007
        %v3009 = vpop.f32.mrb[0].mxu0
        %v3010 = vadd.f32 0.0, %v3009
        %3011 = vdwg.mxu0
        %v3012 = vadd.f32 %v2916, %v3008
        %v3013 = vadd.f32 %v2917, %v3010
        %s3014 = scalar_lea.vmem %s8, 32
        %v3015 = vld [vmem:[%s3014] sm:$0xff]
        %v3017 = vsel %vm776, %v3015, 0
        %v3019 = vsel %vm780, %v2636, 0
        %v3021 = vsel %vm780, %v2638, 0
        %3023 = vmatprep.subr.mxu0 %v3021
        %3024 = vmatpush1.msra.mxu0 %v3019
        %3025 = vmatprep.subr.mxu0 0.0
        %3026 = vmatpush1.msra.mxu0 0.0
        %3027 = vmatprep.subr.mxu0 0.0
        %3028 = vmatpush1.msra.mxu0 0.0
        %3029 = vmatprep.subr.mxu0 0.0
        %3030 = vmatpush1.msra.mxu0 0.0
        %3031 = vmatprep.subr.mxu0 0.0
        %3032 = vmatpush1.msra.mxu0 0.0
        %3033 = vmatprep.subr.mxu0 0.0
        %3034 = vmatpush1.msra.mxu0 0.0
        %3035 = vmatprep.subr.mxu0 0.0
        %3036 = vmatpush1.msra.mxu0 0.0
        %3037 = vmatprep.subr.mxu0 0.0
        %3038 = vmatpush1.msra.mxu0 0.0
        %3039 = vmatprep.subr.mxu0 0.0
        %3040 = vmatpush1.msra.mxu0 0.0
        %3041 = vmatprep.subr.mxu0 0.0
        %3042 = vmatpush1.msra.mxu0 0.0
        %3043 = vmatprep.subr.mxu0 0.0
        %3044 = vmatpush1.msra.mxu0 0.0
        %3045 = vmatprep.subr.mxu0 0.0
        %3046 = vmatpush1.msra.mxu0 0.0
        %3047 = vmatprep.subr.mxu0 0.0
        %3048 = vmatpush1.msra.mxu0 0.0
        %3049 = vmatprep.subr.mxu0 0.0
        %3050 = vmatpush1.msra.mxu0 0.0
        %3051 = vmatprep.subr.mxu0 0.0
        %3052 = vmatpush1.msra.mxu0 0.0
        %3053 = vmatprep.subr.mxu0 0.0
        %3054 = vmatpush1.msra.mxu0 0.0
        %3055 = vmatprep.subr.mxu0 0.0
        %3056 = vmatpush1.msra.mxu0 0.0
        %3057 = vmatprep.subr.mxu0 0.0
        %3058 = vmatpush1.msra.mxu0 0.0
        %3059 = vmatprep.subr.mxu0 0.0
        %3060 = vmatpush1.msra.mxu0 0.0
        %3061 = vmatprep.subr.mxu0 0.0
        %3062 = vmatpush1.msra.mxu0 0.0
        %3063 = vmatprep.subr.mxu0 0.0
        %3064 = vmatpush1.msra.mxu0 0.0
        %3065 = vmatprep.subr.mxu0 0.0
        %3066 = vmatpush1.msra.mxu0 0.0
        %3067 = vmatprep.subr.mxu0 0.0
        %3068 = vmatpush1.msra.mxu0 0.0
        %3069 = vmatprep.subr.mxu0 0.0
        %3070 = vmatpush1.msra.mxu0 0.0
        %3071 = vmatprep.subr.mxu0 0.0
        %3072 = vmatpush1.msra.mxu0 0.0
        %3073 = vmatprep.subr.mxu0 0.0
        %3074 = vmatpush1.msra.mxu0 0.0
        %3075 = vmatprep.subr.mxu0 0.0
        %3076 = vmatpush1.msra.mxu0 0.0
        %3077 = vmatprep.subr.mxu0 0.0
        %3078 = vmatpush1.msra.mxu0 0.0
        %3079 = vmatprep.subr.mxu0 0.0
        %3080 = vmatpush1.msra.mxu0 0.0
        %3081 = vmatprep.subr.mxu0 0.0
        %3082 = vmatpush1.msra.mxu0 0.0
        %3083 = vmatprep.subr.mxu0 0.0
        %3084 = vmatpush1.msra.mxu0 0.0
        %3085 = vmatprep.subr.mxu0 0.0
        %3086 = vmatpush1.msra.mxu0 0.0
        %3087 = vmatprep.mubr.f32.mxu0 0.0
        %3088 = vmatmul.mubr.f32.gmra.mrb[0].mxu0 %v3017
        %v3089 = vpop.f32.mrb[0].mxu0
        %v3090 = vadd.f32 0.0, %v3089
        %v3091 = vpop.f32.mrb[0].mxu0
        %v3092 = vadd.f32 0.0, %v3091
        %3093 = vdwg.mxu0
        %v3094 = vadd.f32 %v3012, %v3090
        %v3095 = vadd.f32 %v3013, %v3092
        %v3096 = vmul.f32 %v2647, %v1242
        %v3097 = vmul.f32 %v2643, %v1246
        %v3098 = vmul.f32 %v2648, %v1244
        %s3099 = scalar_lea.vmem %s8, 40
        %v3100 = vld [vmem:[%s3099] sm:$0xff]
        %3104 = vrot.lane.b32.xlu0 %v3096, 110
        %v3105 = vpop.permute.xlu0 %3104
        %3106 = vrot.lane.b32.xlu0 %v3097, 110
        %v3107 = vpop.permute.xlu0 %3106
        %3108 = vrot.lane.b32.xlu0 %v3098, 110
        %v3109 = vpop.permute.xlu0 %3108
        %v3110 = vsel %vm1264, %v3105, %v3107
        %v3111 = vsel %vm1264, %v3107, %v3109
        %v3113 = vsel %vm776, %v3100, 0
        %v3115 = vsel %vm780, %v3110, 0
        %v3117 = vsel %vm780, %v3111, 0
        %3119 = vmatprep.subr.mxu0 %v3117
        %3120 = vmatpush1.msra.mxu0 %v3115
        %3121 = vmatprep.subr.mxu0 0.0
        %3122 = vmatpush1.msra.mxu0 0.0
        %3123 = vmatprep.subr.mxu0 0.0
        %3124 = vmatpush1.msra.mxu0 0.0
        %3125 = vmatprep.subr.mxu0 0.0
        %3126 = vmatpush1.msra.mxu0 0.0
        %3127 = vmatprep.subr.mxu0 0.0
        %3128 = vmatpush1.msra.mxu0 0.0
        %3129 = vmatprep.subr.mxu0 0.0
        %3130 = vmatpush1.msra.mxu0 0.0
        %3131 = vmatprep.subr.mxu0 0.0
        %3132 = vmatpush1.msra.mxu0 0.0
        %3133 = vmatprep.subr.mxu0 0.0
        %3134 = vmatpush1.msra.mxu0 0.0
        %3135 = vmatprep.subr.mxu0 0.0
        %3136 = vmatpush1.msra.mxu0 0.0
        %3137 = vmatprep.subr.mxu0 0.0
        %3138 = vmatpush1.msra.mxu0 0.0
        %3139 = vmatprep.subr.mxu0 0.0
        %3140 = vmatpush1.msra.mxu0 0.0
        %3141 = vmatprep.subr.mxu0 0.0
        %3142 = vmatpush1.msra.mxu0 0.0
        %3143 = vmatprep.subr.mxu0 0.0
        %3144 = vmatpush1.msra.mxu0 0.0
        %3145 = vmatprep.subr.mxu0 0.0
        %3146 = vmatpush1.msra.mxu0 0.0
        %3147 = vmatprep.subr.mxu0 0.0
        %3148 = vmatpush1.msra.mxu0 0.0
        %3149 = vmatprep.subr.mxu0 0.0
        %3150 = vmatpush1.msra.mxu0 0.0
        %3151 = vmatprep.subr.mxu0 0.0
        %3152 = vmatpush1.msra.mxu0 0.0
        %3153 = vmatprep.subr.mxu0 0.0
        %3154 = vmatpush1.msra.mxu0 0.0
        %3155 = vmatprep.subr.mxu0 0.0
        %3156 = vmatpush1.msra.mxu0 0.0
        %3157 = vmatprep.subr.mxu0 0.0
        %3158 = vmatpush1.msra.mxu0 0.0
        %3159 = vmatprep.subr.mxu0 0.0
        %3160 = vmatpush1.msra.mxu0 0.0
        %3161 = vmatprep.subr.mxu0 0.0
        %3162 = vmatpush1.msra.mxu0 0.0
        %3163 = vmatprep.subr.mxu0 0.0
        %3164 = vmatpush1.msra.mxu0 0.0
        %3165 = vmatprep.subr.mxu0 0.0
        %3166 = vmatpush1.msra.mxu0 0.0
        %3167 = vmatprep.subr.mxu0 0.0
        %3168 = vmatpush1.msra.mxu0 0.0
        %3169 = vmatprep.subr.mxu0 0.0
        %3170 = vmatpush1.msra.mxu0 0.0
        %3171 = vmatprep.subr.mxu0 0.0
        %3172 = vmatpush1.msra.mxu0 0.0
        %3173 = vmatprep.subr.mxu0 0.0
        %3174 = vmatpush1.msra.mxu0 0.0
        %3175 = vmatprep.subr.mxu0 0.0
        %3176 = vmatpush1.msra.mxu0 0.0
        %3177 = vmatprep.subr.mxu0 0.0
        %3178 = vmatpush1.msra.mxu0 0.0
        %3179 = vmatprep.subr.mxu0 0.0
        %3180 = vmatpush1.msra.mxu0 0.0
        %3181 = vmatprep.subr.mxu0 0.0
        %3182 = vmatpush1.msra.mxu0 0.0
        %3183 = vmatprep.mubr.f32.mxu0 0.0
        %3184 = vmatmul.mubr.f32.gmra.mrb[0].mxu0 %v3113
        %v3185 = vpop.f32.mrb[0].mxu0
        %v3186 = vadd.f32 0.0, %v3185
        %v3187 = vpop.f32.mrb[0].mxu0
        %v3188 = vadd.f32 0.0, %v3187
        %3189 = vdwg.mxu0
        %v3190 = vadd.f32 %v3094, %v3186
        %v3191 = vadd.f32 %v3095, %v3188
        %v3192 = vmul.f32 %v2647, %v1348
        %v3193 = vmul.f32 %v2643, %v1352
        %v3194 = vmul.f32 %v2648, %v1350
        %s3195 = scalar_lea.vmem %s8, 48
        %v3196 = vld [vmem:[%s3195] sm:$0xff]
        %3200 = vrot.lane.b32.xlu0 %v3192, 96
        %v3201 = vpop.permute.xlu0 %3200
        %3202 = vrot.lane.b32.xlu0 %v3193, 96
        %v3203 = vpop.permute.xlu0 %3202
        %3204 = vrot.lane.b32.xlu0 %v3194, 96
        %v3205 = vpop.permute.xlu0 %3204
        %v3206 = vsel %vm1370, %v3201, %v3203
        %v3207 = vsel %vm1370, %v3203, %v3205
        %v3209 = vsel %vm776, %v3196, 0
        %v3211 = vsel %vm780, %v3206, 0
        %v3213 = vsel %vm780, %v3207, 0
        %3215 = vmatprep.subr.mxu0 %v3213
        %3216 = vmatpush1.msra.mxu0 %v3211
        %3217 = vmatprep.subr.mxu0 0.0
        %3218 = vmatpush1.msra.mxu0 0.0
        %3219 = vmatprep.subr.mxu0 0.0
        %3220 = vmatpush1.msra.mxu0 0.0
        %3221 = vmatprep.subr.mxu0 0.0
        %3222 = vmatpush1.msra.mxu0 0.0
        %3223 = vmatprep.subr.mxu0 0.0
        %3224 = vmatpush1.msra.mxu0 0.0
        %3225 = vmatprep.subr.mxu0 0.0
        %3226 = vmatpush1.msra.mxu0 0.0
        %3227 = vmatprep.subr.mxu0 0.0
        %3228 = vmatpush1.msra.mxu0 0.0
        %3229 = vmatprep.subr.mxu0 0.0
        %3230 = vmatpush1.msra.mxu0 0.0
        %3231 = vmatprep.subr.mxu0 0.0
        %3232 = vmatpush1.msra.mxu0 0.0
        %3233 = vmatprep.subr.mxu0 0.0
        %3234 = vmatpush1.msra.mxu0 0.0
        %3235 = vmatprep.subr.mxu0 0.0
        %3236 = vmatpush1.msra.mxu0 0.0
        %3237 = vmatprep.subr.mxu0 0.0
        %3238 = vmatpush1.msra.mxu0 0.0
        %3239 = vmatprep.subr.mxu0 0.0
        %3240 = vmatpush1.msra.mxu0 0.0
        %3241 = vmatprep.subr.mxu0 0.0
        %3242 = vmatpush1.msra.mxu0 0.0
        %3243 = vmatprep.subr.mxu0 0.0
        %3244 = vmatpush1.msra.mxu0 0.0
        %3245 = vmatprep.subr.mxu0 0.0
        %3246 = vmatpush1.msra.mxu0 0.0
        %3247 = vmatprep.subr.mxu0 0.0
        %3248 = vmatpush1.msra.mxu0 0.0
        %3249 = vmatprep.subr.mxu0 0.0
        %3250 = vmatpush1.msra.mxu0 0.0
        %3251 = vmatprep.subr.mxu0 0.0
        %3252 = vmatpush1.msra.mxu0 0.0
        %3253 = vmatprep.subr.mxu0 0.0
        %3254 = vmatpush1.msra.mxu0 0.0
        %3255 = vmatprep.subr.mxu0 0.0
        %3256 = vmatpush1.msra.mxu0 0.0
        %3257 = vmatprep.subr.mxu0 0.0
        %3258 = vmatpush1.msra.mxu0 0.0
        %3259 = vmatprep.subr.mxu0 0.0
        %3260 = vmatpush1.msra.mxu0 0.0
        %3261 = vmatprep.subr.mxu0 0.0
        %3262 = vmatpush1.msra.mxu0 0.0
        %3263 = vmatprep.subr.mxu0 0.0
        %3264 = vmatpush1.msra.mxu0 0.0
        %3265 = vmatprep.subr.mxu0 0.0
        %3266 = vmatpush1.msra.mxu0 0.0
        %3267 = vmatprep.subr.mxu0 0.0
        %3268 = vmatpush1.msra.mxu0 0.0
        %3269 = vmatprep.subr.mxu0 0.0
        %3270 = vmatpush1.msra.mxu0 0.0
        %3271 = vmatprep.subr.mxu0 0.0
        %3272 = vmatpush1.msra.mxu0 0.0
        %3273 = vmatprep.subr.mxu0 0.0
        %3274 = vmatpush1.msra.mxu0 0.0
        %3275 = vmatprep.subr.mxu0 0.0
        %3276 = vmatpush1.msra.mxu0 0.0
        %3277 = vmatprep.subr.mxu0 0.0
        %3278 = vmatpush1.msra.mxu0 0.0
        %3279 = vmatprep.mubr.f32.mxu0 0.0
        %3280 = vmatmul.mubr.f32.gmra.mrb[0].mxu0 %v3209
        %v3281 = vpop.f32.mrb[0].mxu0
        %v3282 = vadd.f32 0.0, %v3281
        %v3283 = vpop.f32.mrb[0].mxu0
        %v3284 = vadd.f32 0.0, %v3283
        %3285 = vdwg.mxu0
        %v3286 = vadd.f32 %v3190, %v3282
        %v3287 = vadd.f32 %v3191, %v3284
        %s3288 = scalar_lea.vmem %s8, 56
        %v3289 = vld [vmem:[%s3288] sm:$0xff]
        %3290 = vrot.lane.b32.xlu0 %v2647, 95
        %v3291 = vpop.permute.xlu0 %3290
        %3292 = vrot.lane.b32.xlu0 %v2643, 95
        %v3293 = vpop.permute.xlu0 %3292
        %3294 = vrot.lane.b32.xlu0 %v2648, 95
        %v3295 = vpop.permute.xlu0 %3294
        %v3296 = vsel %vm1461, %v3291, %v3293
        %v3297 = vsel %vm1461, %v3293, %v3295
        %v3299 = vsel %vm776, %v3289, 0
        %v3301 = vsel %vm780, %v3296, 0
        %v3303 = vsel %vm780, %v3297, 0
        %3305 = vmatprep.subr.mxu0 %v3303
        %3306 = vmatpush1.msra.mxu0 %v3301
        %3307 = vmatprep.subr.mxu0 0.0
        %3308 = vmatpush1.msra.mxu0 0.0
        %3309 = vmatprep.subr.mxu0 0.0
        %3310 = vmatpush1.msra.mxu0 0.0
        %3311 = vmatprep.subr.mxu0 0.0
        %3312 = vmatpush1.msra.mxu0 0.0
        %3313 = vmatprep.subr.mxu0 0.0
        %3314 = vmatpush1.msra.mxu0 0.0
        %3315 = vmatprep.subr.mxu0 0.0
        %3316 = vmatpush1.msra.mxu0 0.0
        %3317 = vmatprep.subr.mxu0 0.0
        %3318 = vmatpush1.msra.mxu0 0.0
        %3319 = vmatprep.subr.mxu0 0.0
        %3320 = vmatpush1.msra.mxu0 0.0
        %3321 = vmatprep.subr.mxu0 0.0
        %3322 = vmatpush1.msra.mxu0 0.0
        %3323 = vmatprep.subr.mxu0 0.0
        %3324 = vmatpush1.msra.mxu0 0.0
        %3325 = vmatprep.subr.mxu0 0.0
        %3326 = vmatpush1.msra.mxu0 0.0
        %3327 = vmatprep.subr.mxu0 0.0
        %3328 = vmatpush1.msra.mxu0 0.0
        %3329 = vmatprep.subr.mxu0 0.0
        %3330 = vmatpush1.msra.mxu0 0.0
        %3331 = vmatprep.subr.mxu0 0.0
        %3332 = vmatpush1.msra.mxu0 0.0
        %3333 = vmatprep.subr.mxu0 0.0
        %3334 = vmatpush1.msra.mxu0 0.0
        %3335 = vmatprep.subr.mxu0 0.0
        %3336 = vmatpush1.msra.mxu0 0.0
        %3337 = vmatprep.subr.mxu0 0.0
        %3338 = vmatpush1.msra.mxu0 0.0
        %3339 = vmatprep.subr.mxu0 0.0
        %3340 = vmatpush1.msra.mxu0 0.0
        %3341 = vmatprep.subr.mxu0 0.0
        %3342 = vmatpush1.msra.mxu0 0.0
        %3343 = vmatprep.subr.mxu0 0.0
        %3344 = vmatpush1.msra.mxu0 0.0
        %3345 = vmatprep.subr.mxu0 0.0
        %3346 = vmatpush1.msra.mxu0 0.0
        %3347 = vmatprep.subr.mxu0 0.0
        %3348 = vmatpush1.msra.mxu0 0.0
        %3349 = vmatprep.subr.mxu0 0.0
        %3350 = vmatpush1.msra.mxu0 0.0
        %3351 = vmatprep.subr.mxu0 0.0
        %3352 = vmatpush1.msra.mxu0 0.0
        %3353 = vmatprep.subr.mxu0 0.0
        %3354 = vmatpush1.msra.mxu0 0.0
        %3355 = vmatprep.subr.mxu0 0.0
        %3356 = vmatpush1.msra.mxu0 0.0
        %3357 = vmatprep.subr.mxu0 0.0
        %3358 = vmatpush1.msra.mxu0 0.0
        %3359 = vmatprep.subr.mxu0 0.0
        %3360 = vmatpush1.msra.mxu0 0.0
        %3361 = vmatprep.subr.mxu0 0.0
        %3362 = vmatpush1.msra.mxu0 0.0
        %3363 = vmatprep.subr.mxu0 0.0
        %3364 = vmatpush1.msra.mxu0 0.0
        %3365 = vmatprep.subr.mxu0 0.0
        %3366 = vmatpush1.msra.mxu0 0.0
        %3367 = vmatprep.subr.mxu0 0.0
        %3368 = vmatpush1.msra.mxu0 0.0
        %3369 = vmatprep.mubr.f32.mxu0 0.0
        %3370 = vmatmul.mubr.f32.gmra.mrb[0].mxu0 %v3299
        %v3371 = vpop.f32.mrb[0].mxu0
        %v3372 = vadd.f32 0.0, %v3371
        %v3373 = vpop.f32.mrb[0].mxu0
        %v3374 = vadd.f32 0.0, %v3373
        %3375 = vdwg.mxu0
        %v3376 = vadd.f32 %v3286, %v3372
        %v3377 = vadd.f32 %v3287, %v3374
        %v3378 = vmul.f32 %v2647, %v1545
        %v3379 = vmul.f32 %v2643, %v1549
        %v3380 = vmul.f32 %v2648, %v1547
        %s3381 = scalar_lea.vmem %s8, 64
        %v3382 = vld [vmem:[%s3381] sm:$0xff]
        %3386 = vrot.lane.b32.xlu0 %v3378, 94
        %v3387 = vpop.permute.xlu0 %3386
        %3388 = vrot.lane.b32.xlu0 %v3379, 94
        %v3389 = vpop.permute.xlu0 %3388
        %3390 = vrot.lane.b32.xlu0 %v3380, 94
        %v3391 = vpop.permute.xlu0 %3390
        %v3392 = vsel %vm1567, %v3387, %v3389
        %v3393 = vsel %vm1567, %v3389, %v3391
        %v3395 = vsel %vm776, %v3382, 0
        %v3397 = vsel %vm780, %v3392, 0
        %v3399 = vsel %vm780, %v3393, 0
        %3401 = vmatprep.subr.mxu0 %v3399
        %3402 = vmatpush1.msra.mxu0 %v3397
        %3403 = vmatprep.subr.mxu0 0.0
        %3404 = vmatpush1.msra.mxu0 0.0
        %3405 = vmatprep.subr.mxu0 0.0
        %3406 = vmatpush1.msra.mxu0 0.0
        %3407 = vmatprep.subr.mxu0 0.0
        %3408 = vmatpush1.msra.mxu0 0.0
        %3409 = vmatprep.subr.mxu0 0.0
        %3410 = vmatpush1.msra.mxu0 0.0
        %3411 = vmatprep.subr.mxu0 0.0
        %3412 = vmatpush1.msra.mxu0 0.0
        %3413 = vmatprep.subr.mxu0 0.0
        %3414 = vmatpush1.msra.mxu0 0.0
        %3415 = vmatprep.subr.mxu0 0.0
        %3416 = vmatpush1.msra.mxu0 0.0
        %3417 = vmatprep.subr.mxu0 0.0
        %3418 = vmatpush1.msra.mxu0 0.0
        %3419 = vmatprep.subr.mxu0 0.0
        %3420 = vmatpush1.msra.mxu0 0.0
        %3421 = vmatprep.subr.mxu0 0.0
        %3422 = vmatpush1.msra.mxu0 0.0
        %3423 = vmatprep.subr.mxu0 0.0
        %3424 = vmatpush1.msra.mxu0 0.0
        %3425 = vmatprep.subr.mxu0 0.0
        %3426 = vmatpush1.msra.mxu0 0.0
        %3427 = vmatprep.subr.mxu0 0.0
        %3428 = vmatpush1.msra.mxu0 0.0
        %3429 = vmatprep.subr.mxu0 0.0
        %3430 = vmatpush1.msra.mxu0 0.0
        %3431 = vmatprep.subr.mxu0 0.0
        %3432 = vmatpush1.msra.mxu0 0.0
        %3433 = vmatprep.subr.mxu0 0.0
        %3434 = vmatpush1.msra.mxu0 0.0
        %3435 = vmatprep.subr.mxu0 0.0
        %3436 = vmatpush1.msra.mxu0 0.0
        %3437 = vmatprep.subr.mxu0 0.0
        %3438 = vmatpush1.msra.mxu0 0.0
        %3439 = vmatprep.subr.mxu0 0.0
        %3440 = vmatpush1.msra.mxu0 0.0
        %3441 = vmatprep.subr.mxu0 0.0
        %3442 = vmatpush1.msra.mxu0 0.0
        %3443 = vmatprep.subr.mxu0 0.0
        %3444 = vmatpush1.msra.mxu0 0.0
        %3445 = vmatprep.subr.mxu0 0.0
        %3446 = vmatpush1.msra.mxu0 0.0
        %3447 = vmatprep.subr.mxu0 0.0
        %3448 = vmatpush1.msra.mxu0 0.0
        %3449 = vmatprep.subr.mxu0 0.0
        %3450 = vmatpush1.msra.mxu0 0.0
        %3451 = vmatprep.subr.mxu0 0.0
        %3452 = vmatpush1.msra.mxu0 0.0
        %3453 = vmatprep.subr.mxu0 0.0
        %3454 = vmatpush1.msra.mxu0 0.0
        %3455 = vmatprep.subr.mxu0 0.0
        %3456 = vmatpush1.msra.mxu0 0.0
        %3457 = vmatprep.subr.mxu0 0.0
        %3458 = vmatpush1.msra.mxu0 0.0
        %3459 = vmatprep.subr.mxu0 0.0
        %3460 = vmatpush1.msra.mxu0 0.0
        %3461 = vmatprep.subr.mxu0 0.0
        %3462 = vmatpush1.msra.mxu0 0.0
        %3463 = vmatprep.subr.mxu0 0.0
        %3464 = vmatpush1.msra.mxu0 0.0
        %3465 = vmatprep.mubr.f32.mxu0 0.0
        %3466 = vmatmul.mubr.f32.gmra.mrb[0].mxu0 %v3395
        %v3467 = vpop.f32.mrb[0].mxu0
        %v3468 = vadd.f32 0.0, %v3467
        %v3469 = vpop.f32.mrb[0].mxu0
        %v3470 = vadd.f32 0.0, %v3469
        %3471 = vdwg.mxu0
        %v3472 = vadd.f32 %v3376, %v3468
        %v3473 = vadd.f32 %v3377, %v3470
        %v3474 = vadd.f32 %v3472, %v3473
        %3475 = vadd.xlane.f32.xlu0 %v3474
        %v3476 = vpop.xlane.xlu0 %3475
        %v3477 = vrot.slane %v3476, 4
        %v3478 = vadd.f32 %v3476, %v3477
        %v3479 = vrot.slane %v3478, 2
        %v3480 = vadd.f32 %v3478, %v3479
        %v3481 = vrot.slane %v3480, 1
        %v3482 = vadd.f32 %v3480, %v3481
        %s3483 = vtos %v3482
        %v3484 = vrcp.pop 2048.0
        %s3485 = vtos %v3484
        %s3486 = smul.f32 %s3483, %s3485
        %v3487 = vstv %s3486
        %v3488 = vsub.f32 %v3472, %v3487
        %v3489 = vsub.f32 %v3473, %v3487
        %v3490 = vmul.f32 %v3488, %v3488
        %v3491 = vmul.f32 %v3489, %v3489
        %v3492 = vadd.f32 %v3490, %v3491
        %3493 = vadd.xlane.f32.xlu0 %v3492
        %v3494 = vpop.xlane.xlu0 %3493
        %v3495 = vrot.slane %v3494, 4
        %v3496 = vadd.f32 %v3494, %v3495
        %v3497 = vrot.slane %v3496, 2
        %v3498 = vadd.f32 %v3496, %v3497
        %v3499 = vrot.slane %v3498, 1
        %v3500 = vadd.f32 %v3498, %v3499
        %s3501 = vtos %v3500
        %v3502 = vrcp.pop 2048.0
        %s3503 = vtos %v3502
        %s3504 = smul.f32 %s3501, %s3503
        %s3505 = sadd.f32 %s3504, 1e-05
        %v3506 = vstv %s3505
        %v3507 = vrsqrt.pop %v3506
        %s3508 = vtos %v3507
        %v3509 = vstv %s3508
        %v3510 = vmul.f32 %v3488, %v3509
        %v3511 = vmul.f32 %v3489, %v3509
        %v3512 = vld [vmem:[%s9] sm:$0xff]
        %3514 = vset.pattern.permute.xlu0 0
        %3515 = vperm.xlu0 %3514, %v3512
        %v3516 = vpop.permute.xlu0 %3515
        %v3518 = vmul.f32 %v3510, %v3516
        %v3519 = vmul.f32 %v3511, %v3516
        %s3520 = scalar_lea.vmem %s9, 8
        %v3521 = vld [vmem:[%s3520] sm:$0xff]
        %3523 = vset.pattern.permute.xlu0 0
        %3524 = vperm.xlu0 %3523, %v3521
        %v3525 = vpop.permute.xlu0 %3524
        %v3527 = vadd.f32 %v3518, %v3525
        %v3528 = vadd.f32 %v3519, %v3525
        %v3529 = vmul.f32 %v3527, 0.5
        %v3530 = vmul.f32 %v3528, 0.5
        %v3531 = vmul.f32 %v3527, 0.044715
        %v3532 = vmul.f32 %v3528, 0.044715
        %v3533 = vmul.f32 %v3531, %v3527
        %v3534 = vmul.f32 %v3532, %v3528
        %v3535 = vmul.f32 %v3533, %v3527
        %v3536 = vmul.f32 %v3534, %v3528
        %v3537 = vadd.f32 %v3527, %v3535
        %v3538 = vadd.f32 %v3528, %v3536
        %v3539 = vmul.f32 %v3537, 0.7978846
        %v3540 = vmul.f32 %v3538, 0.7978846
        %v3541 = vtanh.pop %v3539
        %v3542 = vtanh.pop %v3540
        %v3543 = vadd.f32 %v3541, 1.0
        %v3544 = vadd.f32 %v3542, 1.0
        %v3545 = vmul.f32 %v3529, %v3543
        %v3546 = vmul.f32 %v3530, %v3544
        %3549 = vrot.lane.b32.xlu0 %v3545, 17
        %v3550 = vpop.permute.xlu0 %3549
        %3551 = vrot.lane.b32.xlu0 %v3546, 17
        %v3552 = vpop.permute.xlu0 %3551
        %v3553 = vsel %vm741, %v3550, %v3552
        %v3557 = vsel %vm741, 0.0, %v3550
        %v3558 = vsel %vm741, %v3552, 0.0
        %v3559 = vmul.f32 %v3557, %v753
        %v3560 = vmul.f32 %v3553, %v757
        %v3561 = vld [vmem:[%s10] sm:$0xff]
        %s3562 = scalar_lea.vmem %s10, 8
        %v3563 = vld [vmem:[%s3562] sm:$0xff]
        %3566 = vrot.lane.b32.xlu0 %v3557, 127
        %v3567 = vpop.permute.xlu0 %3566
        %3568 = vrot.lane.b32.xlu0 %v3553, 127
        %v3569 = vpop.permute.xlu0 %3568
        %3570 = vrot.lane.b32.xlu0 %v3558, 127
        %v3571 = vpop.permute.xlu0 %3570
        %v3572 = vsel %vm773, %v3567, %v3569
        %v3573 = vsel %vm773, %v3569, %v3571
        %vm3576 = vcmask 64512
        %v3578 = vsel %vm3576, %v3563, 0
        %3580 = vmatprep.subr.mxu0 %v3573
        %3581 = vmatpush1.msra.mxu0 %v3572
        %3582 = vmatprep.subr.mxu0 0.0
        %3583 = vmatpush1.msra.mxu0 0.0
        %3584 = vmatprep.subr.mxu0 0.0
        %3585 = vmatpush1.msra.mxu0 0.0
        %3586 = vmatprep.subr.mxu0 0.0
        %3587 = vmatpush1.msra.mxu0 0.0
        %3588 = vmatprep.subr.mxu0 0.0
        %3589 = vmatpush1.msra.mxu0 0.0
        %3590 = vmatprep.subr.mxu0 0.0
        %3591 = vmatpush1.msra.mxu0 0.0
        %3592 = vmatprep.subr.mxu0 0.0
        %3593 = vmatpush1.msra.mxu0 0.0
        %3594 = vmatprep.subr.mxu0 0.0
        %3595 = vmatpush1.msra.mxu0 0.0
        %3596 = vmatprep.subr.mxu0 0.0
        %3597 = vmatpush1.msra.mxu0 0.0
        %3598 = vmatprep.subr.mxu0 0.0
        %3599 = vmatpush1.msra.mxu0 0.0
        %3600 = vmatprep.subr.mxu0 0.0
        %3601 = vmatpush1.msra.mxu0 0.0
        %3602 = vmatprep.subr.mxu0 0.0
        %3603 = vmatpush1.msra.mxu0 0.0
        %3604 = vmatprep.subr.mxu0 0.0
        %3605 = vmatpush1.msra.mxu0 0.0
        %3606 = vmatprep.subr.mxu0 0.0
        %3607 = vmatpush1.msra.mxu0 0.0
        %3608 = vmatprep.subr.mxu0 0.0
        %3609 = vmatpush1.msra.mxu0 0.0
        %3610 = vmatprep.subr.mxu0 0.0
        %3611 = vmatpush1.msra.mxu0 0.0
        %3612 = vmatprep.subr.mxu0 0.0
        %3613 = vmatpush1.msra.mxu0 0.0
        %3614 = vmatprep.subr.mxu0 0.0
        %3615 = vmatpush1.msra.mxu0 0.0
        %3616 = vmatprep.subr.mxu0 0.0
        %3617 = vmatpush1.msra.mxu0 0.0
        %3618 = vmatprep.subr.mxu0 0.0
        %3619 = vmatpush1.msra.mxu0 0.0
        %3620 = vmatprep.subr.mxu0 0.0
        %3621 = vmatpush1.msra.mxu0 0.0
        %3622 = vmatprep.subr.mxu0 0.0
        %3623 = vmatpush1.msra.mxu0 0.0
        %3624 = vmatprep.subr.mxu0 0.0
        %3625 = vmatpush1.msra.mxu0 0.0
        %3626 = vmatprep.subr.mxu0 0.0
        %3627 = vmatpush1.msra.mxu0 0.0
        %3628 = vmatprep.subr.mxu0 0.0
        %3629 = vmatpush1.msra.mxu0 0.0
        %3630 = vmatprep.subr.mxu0 0.0
        %3631 = vmatpush1.msra.mxu0 0.0
        %3632 = vmatprep.subr.mxu0 0.0
        %3633 = vmatpush1.msra.mxu0 0.0
        %3634 = vmatprep.subr.mxu0 0.0
        %3635 = vmatpush1.msra.mxu0 0.0
        %3636 = vmatprep.subr.mxu0 0.0
        %3637 = vmatpush1.msra.mxu0 0.0
        %3638 = vmatprep.subr.mxu0 0.0
        %3639 = vmatpush1.msra.mxu0 0.0
        %3640 = vmatprep.subr.mxu0 0.0
        %3641 = vmatpush1.msra.mxu0 0.0
        %3642 = vmatprep.subr.mxu0 0.0
        %3643 = vmatpush1.msra.mxu0 0.0
        %3644 = vmatprep.mubr.f32.mxu0 0.0
        %3645 = vmatmul.mubr.f32.gmra.mrb[0].mxu0 %v3578
        %v3646 = vpop.f32.mrb[0].mxu0
        %v3647 = vadd.f32 0.0, %v3646
        %v3648 = vpop.f32.mrb[0].mxu0
        %v3649 = vadd.f32 0.0, %v3648
        %3650 = vdwg.mxu0
        %v3652 = vsel %vm3576, %v3561, 0
        %3654 = vmatprep.subr.mxu0 %v3560
        %3655 = vmatpush1.msra.mxu0 %v3559
        %3656 = vmatprep.subr.mxu0 0.0
        %3657 = vmatpush1.msra.mxu0 0.0
        %3658 = vmatprep.subr.mxu0 0.0
        %3659 = vmatpush1.msra.mxu0 0.0
        %3660 = vmatprep.subr.mxu0 0.0
        %3661 = vmatpush1.msra.mxu0 0.0
        %3662 = vmatprep.subr.mxu0 0.0
        %3663 = vmatpush1.msra.mxu0 0.0
        %3664 = vmatprep.subr.mxu0 0.0
        %3665 = vmatpush1.msra.mxu0 0.0
        %3666 = vmatprep.subr.mxu0 0.0
        %3667 = vmatpush1.msra.mxu0 0.0
        %3668 = vmatprep.subr.mxu0 0.0
        %3669 = vmatpush1.msra.mxu0 0.0
        %3670 = vmatprep.subr.mxu0 0.0
        %3671 = vmatpush1.msra.mxu0 0.0
        %3672 = vmatprep.subr.mxu0 0.0
        %3673 = vmatpush1.msra.mxu0 0.0
        %3674 = vmatprep.subr.mxu0 0.0
        %3675 = vmatpush1.msra.mxu0 0.0
        %3676 = vmatprep.subr.mxu0 0.0
        %3677 = vmatpush1.msra.mxu0 0.0
        %3678 = vmatprep.subr.mxu0 0.0
        %3679 = vmatpush1.msra.mxu0 0.0
        %3680 = vmatprep.subr.mxu0 0.0
        %3681 = vmatpush1.msra.mxu0 0.0
        %3682 = vmatprep.subr.mxu0 0.0
        %3683 = vmatpush1.msra.mxu0 0.0
        %3684 = vmatprep.subr.mxu0 0.0
        %3685 = vmatpush1.msra.mxu0 0.0
        %3686 = vmatprep.subr.mxu0 0.0
        %3687 = vmatpush1.msra.mxu0 0.0
        %3688 = vmatprep.subr.mxu0 0.0
        %3689 = vmatpush1.msra.mxu0 0.0
        %3690 = vmatprep.subr.mxu0 0.0
        %3691 = vmatpush1.msra.mxu0 0.0
        %3692 = vmatprep.subr.mxu0 0.0
        %3693 = vmatpush1.msra.mxu0 0.0
        %3694 = vmatprep.subr.mxu0 0.0
        %3695 = vmatpush1.msra.mxu0 0.0
        %3696 = vmatprep.subr.mxu0 0.0
        %3697 = vmatpush1.msra.mxu0 0.0
        %3698 = vmatprep.subr.mxu0 0.0
        %3699 = vmatpush1.msra.mxu0 0.0
        %3700 = vmatprep.subr.mxu0 0.0
        %3701 = vmatpush1.msra.mxu0 0.0
        %3702 = vmatprep.subr.mxu0 0.0
        %3703 = vmatpush1.msra.mxu0 0.0
        %3704 = vmatprep.subr.mxu0 0.0
        %3705 = vmatpush1.msra.mxu0 0.0
        %3706 = vmatprep.subr.mxu0 0.0
        %3707 = vmatpush1.msra.mxu0 0.0
        %3708 = vmatprep.subr.mxu0 0.0
        %3709 = vmatpush1.msra.mxu0 0.0
        %3710 = vmatprep.subr.mxu0 0.0
        %3711 = vmatpush1.msra.mxu0 0.0
        %3712 = vmatprep.subr.mxu0 0.0
        %3713 = vmatpush1.msra.mxu0 0.0
        %3714 = vmatprep.subr.mxu0 0.0
        %3715 = vmatpush1.msra.mxu0 0.0
        %3716 = vmatprep.subr.mxu0 0.0
        %3717 = vmatpush1.msra.mxu0 0.0
        %3718 = vmatprep.mubr.f32.mxu0 0.0
        %3719 = vmatmul.mubr.f32.gmra.mrb[0].mxu0 %v3652
        %v3720 = vpop.f32.mrb[0].mxu0
        %v3721 = vadd.f32 %v3647, %v3720
        %v3722 = vpop.f32.mrb[0].mxu0
        %v3723 = vadd.f32 %v3649, %v3722
        %3724 = vdwg.mxu0
        %v3725 = vmul.f32 %v3557, %v948
        %v3726 = vmul.f32 %v3553, %v952
        %v3727 = vmul.f32 %v3558, %v950
        %s3728 = scalar_lea.vmem %s10, 16
        %v3729 = vld [vmem:[%s3728] sm:$0xff]
        %3733 = vrot.lane.b32.xlu0 %v3725, 126
        %v3734 = vpop.permute.xlu0 %3733
        %3735 = vrot.lane.b32.xlu0 %v3726, 126
        %v3736 = vpop.permute.xlu0 %3735
        %3737 = vrot.lane.b32.xlu0 %v3727, 126
        %v3738 = vpop.permute.xlu0 %3737
        %v3739 = vsel %vm970, %v3734, %v3736
        %v3740 = vsel %vm970, %v3736, %v3738
        %v3744 = vsel %vm3576, %v3729, 0
        %3746 = vmatprep.subr.mxu0 %v3740
        %3747 = vmatpush1.msra.mxu0 %v3739
        %3748 = vmatprep.subr.mxu0 0.0
        %3749 = vmatpush1.msra.mxu0 0.0
        %3750 = vmatprep.subr.mxu0 0.0
        %3751 = vmatpush1.msra.mxu0 0.0
        %3752 = vmatprep.subr.mxu0 0.0
        %3753 = vmatpush1.msra.mxu0 0.0
        %3754 = vmatprep.subr.mxu0 0.0
        %3755 = vmatpush1.msra.mxu0 0.0
        %3756 = vmatprep.subr.mxu0 0.0
        %3757 = vmatpush1.msra.mxu0 0.0
        %3758 = vmatprep.subr.mxu0 0.0
        %3759 = vmatpush1.msra.mxu0 0.0
        %3760 = vmatprep.subr.mxu0 0.0
        %3761 = vmatpush1.msra.mxu0 0.0
        %3762 = vmatprep.subr.mxu0 0.0
        %3763 = vmatpush1.msra.mxu0 0.0
        %3764 = vmatprep.subr.mxu0 0.0
        %3765 = vmatpush1.msra.mxu0 0.0
        %3766 = vmatprep.subr.mxu0 0.0
        %3767 = vmatpush1.msra.mxu0 0.0
        %3768 = vmatprep.subr.mxu0 0.0
        %3769 = vmatpush1.msra.mxu0 0.0
        %3770 = vmatprep.subr.mxu0 0.0
        %3771 = vmatpush1.msra.mxu0 0.0
        %3772 = vmatprep.subr.mxu0 0.0
        %3773 = vmatpush1.msra.mxu0 0.0
        %3774 = vmatprep.subr.mxu0 0.0
        %3775 = vmatpush1.msra.mxu0 0.0
        %3776 = vmatprep.subr.mxu0 0.0
        %3777 = vmatpush1.msra.mxu0 0.0
        %3778 = vmatprep.subr.mxu0 0.0
        %3779 = vmatpush1.msra.mxu0 0.0
        %3780 = vmatprep.subr.mxu0 0.0
        %3781 = vmatpush1.msra.mxu0 0.0
        %3782 = vmatprep.subr.mxu0 0.0
        %3783 = vmatpush1.msra.mxu0 0.0
        %3784 = vmatprep.subr.mxu0 0.0
        %3785 = vmatpush1.msra.mxu0 0.0
        %3786 = vmatprep.subr.mxu0 0.0
        %3787 = vmatpush1.msra.mxu0 0.0
        %3788 = vmatprep.subr.mxu0 0.0
        %3789 = vmatpush1.msra.mxu0 0.0
        %3790 = vmatprep.subr.mxu0 0.0
        %3791 = vmatpush1.msra.mxu0 0.0
        %3792 = vmatprep.subr.mxu0 0.0
        %3793 = vmatpush1.msra.mxu0 0.0
        %3794 = vmatprep.subr.mxu0 0.0
        %3795 = vmatpush1.msra.mxu0 0.0
        %3796 = vmatprep.subr.mxu0 0.0
        %3797 = vmatpush1.msra.mxu0 0.0
        %3798 = vmatprep.subr.mxu0 0.0
        %3799 = vmatpush1.msra.mxu0 0.0
        %3800 = vmatprep.subr.mxu0 0.0
        %3801 = vmatpush1.msra.mxu0 0.0
        %3802 = vmatprep.subr.mxu0 0.0
        %3803 = vmatpush1.msra.mxu0 0.0
        %3804 = vmatprep.subr.mxu0 0.0
        %3805 = vmatpush1.msra.mxu0 0.0
        %3806 = vmatprep.subr.mxu0 0.0
        %3807 = vmatpush1.msra.mxu0 0.0
        %3808 = vmatprep.subr.mxu0 0.0
        %3809 = vmatpush1.msra.mxu0 0.0
        %3810 = vmatprep.mubr.f32.mxu0 0.0
        %3811 = vmatmul.mubr.f32.gmra.mrb[0].mxu0 %v3744
        %v3812 = vpop.f32.mrb[0].mxu0
        %v3813 = vadd.f32 0.0, %v3812
        %v3814 = vpop.f32.mrb[0].mxu0
        %v3815 = vadd.f32 0.0, %v3814
        %3816 = vdwg.mxu0
        %v3817 = vadd.f32 %v3721, %v3813
        %v3818 = vadd.f32 %v3723, %v3815
        %v3819 = vmul.f32 %v3557, %v1054
        %v3820 = vmul.f32 %v3553, %v1058
        %v3821 = vmul.f32 %v3558, %v1056
        %s3822 = scalar_lea.vmem %s10, 24
        %v3823 = vld [vmem:[%s3822] sm:$0xff]
        %3827 = vrot.lane.b32.xlu0 %v3819, 112
        %v3828 = vpop.permute.xlu0 %3827
        %3829 = vrot.lane.b32.xlu0 %v3820, 112
        %v3830 = vpop.permute.xlu0 %3829
        %3831 = vrot.lane.b32.xlu0 %v3821, 112
        %v3832 = vpop.permute.xlu0 %3831
        %v3833 = vsel %vm1076, %v3828, %v3830
        %v3834 = vsel %vm1076, %v3830, %v3832
        %v3838 = vsel %vm3576, %v3823, 0
        %3840 = vmatprep.subr.mxu0 %v3834
        %3841 = vmatpush1.msra.mxu0 %v3833
        %3842 = vmatprep.subr.mxu0 0.0
        %3843 = vmatpush1.msra.mxu0 0.0
        %3844 = vmatprep.subr.mxu0 0.0
        %3845 = vmatpush1.msra.mxu0 0.0
        %3846 = vmatprep.subr.mxu0 0.0
        %3847 = vmatpush1.msra.mxu0 0.0
        %3848 = vmatprep.subr.mxu0 0.0
        %3849 = vmatpush1.msra.mxu0 0.0
        %3850 = vmatprep.subr.mxu0 0.0
        %3851 = vmatpush1.msra.mxu0 0.0
        %3852 = vmatprep.subr.mxu0 0.0
        %3853 = vmatpush1.msra.mxu0 0.0
        %3854 = vmatprep.subr.mxu0 0.0
        %3855 = vmatpush1.msra.mxu0 0.0
        %3856 = vmatprep.subr.mxu0 0.0
        %3857 = vmatpush1.msra.mxu0 0.0
        %3858 = vmatprep.subr.mxu0 0.0
        %3859 = vmatpush1.msra.mxu0 0.0
        %3860 = vmatprep.subr.mxu0 0.0
        %3861 = vmatpush1.msra.mxu0 0.0
        %3862 = vmatprep.subr.mxu0 0.0
        %3863 = vmatpush1.msra.mxu0 0.0
        %3864 = vmatprep.subr.mxu0 0.0
        %3865 = vmatpush1.msra.mxu0 0.0
        %3866 = vmatprep.subr.mxu0 0.0
        %3867 = vmatpush1.msra.mxu0 0.0
        %3868 = vmatprep.subr.mxu0 0.0
        %3869 = vmatpush1.msra.mxu0 0.0
        %3870 = vmatprep.subr.mxu0 0.0
        %3871 = vmatpush1.msra.mxu0 0.0
        %3872 = vmatprep.subr.mxu0 0.0
        %3873 = vmatpush1.msra.mxu0 0.0
        %3874 = vmatprep.subr.mxu0 0.0
        %3875 = vmatpush1.msra.mxu0 0.0
        %3876 = vmatprep.subr.mxu0 0.0
        %3877 = vmatpush1.msra.mxu0 0.0
        %3878 = vmatprep.subr.mxu0 0.0
        %3879 = vmatpush1.msra.mxu0 0.0
        %3880 = vmatprep.subr.mxu0 0.0
        %3881 = vmatpush1.msra.mxu0 0.0
        %3882 = vmatprep.subr.mxu0 0.0
        %3883 = vmatpush1.msra.mxu0 0.0
        %3884 = vmatprep.subr.mxu0 0.0
        %3885 = vmatpush1.msra.mxu0 0.0
        %3886 = vmatprep.subr.mxu0 0.0
        %3887 = vmatpush1.msra.mxu0 0.0
        %3888 = vmatprep.subr.mxu0 0.0
        %3889 = vmatpush1.msra.mxu0 0.0
        %3890 = vmatprep.subr.mxu0 0.0
        %3891 = vmatpush1.msra.mxu0 0.0
        %3892 = vmatprep.subr.mxu0 0.0
        %3893 = vmatpush1.msra.mxu0 0.0
        %3894 = vmatprep.subr.mxu0 0.0
        %3895 = vmatpush1.msra.mxu0 0.0
        %3896 = vmatprep.subr.mxu0 0.0
        %3897 = vmatpush1.msra.mxu0 0.0
        %3898 = vmatprep.subr.mxu0 0.0
        %3899 = vmatpush1.msra.mxu0 0.0
        %3900 = vmatprep.subr.mxu0 0.0
        %3901 = vmatpush1.msra.mxu0 0.0
        %3902 = vmatprep.subr.mxu0 0.0
        %3903 = vmatpush1.msra.mxu0 0.0
        %3904 = vmatprep.mubr.f32.mxu0 0.0
        %3905 = vmatmul.mubr.f32.gmra.mrb[0].mxu0 %v3838
        %v3906 = vpop.f32.mrb[0].mxu0
        %v3907 = vadd.f32 0.0, %v3906
        %v3908 = vpop.f32.mrb[0].mxu0
        %v3909 = vadd.f32 0.0, %v3908
        %3910 = vdwg.mxu0
        %v3911 = vadd.f32 %v3817, %v3907
        %v3912 = vadd.f32 %v3818, %v3909
        %s3913 = scalar_lea.vmem %s10, 32
        %v3914 = vld [vmem:[%s3913] sm:$0xff]
        %v3916 = vsel %vm3576, %v3914, 0
        %3918 = vmatprep.subr.mxu0 %v3546
        %3919 = vmatpush1.msra.mxu0 %v3545
        %3920 = vmatprep.subr.mxu0 0.0
        %3921 = vmatpush1.msra.mxu0 0.0
        %3922 = vmatprep.subr.mxu0 0.0
        %3923 = vmatpush1.msra.mxu0 0.0
        %3924 = vmatprep.subr.mxu0 0.0
        %3925 = vmatpush1.msra.mxu0 0.0
        %3926 = vmatprep.subr.mxu0 0.0
        %3927 = vmatpush1.msra.mxu0 0.0
        %3928 = vmatprep.subr.mxu0 0.0
        %3929 = vmatpush1.msra.mxu0 0.0
        %3930 = vmatprep.subr.mxu0 0.0
        %3931 = vmatpush1.msra.mxu0 0.0
        %3932 = vmatprep.subr.mxu0 0.0
        %3933 = vmatpush1.msra.mxu0 0.0
        %3934 = vmatprep.subr.mxu0 0.0
        %3935 = vmatpush1.msra.mxu0 0.0
        %3936 = vmatprep.subr.mxu0 0.0
        %3937 = vmatpush1.msra.mxu0 0.0
        %3938 = vmatprep.subr.mxu0 0.0
        %3939 = vmatpush1.msra.mxu0 0.0
        %3940 = vmatprep.subr.mxu0 0.0
        %3941 = vmatpush1.msra.mxu0 0.0
        %3942 = vmatprep.subr.mxu0 0.0
        %3943 = vmatpush1.msra.mxu0 0.0
        %3944 = vmatprep.subr.mxu0 0.0
        %3945 = vmatpush1.msra.mxu0 0.0
        %3946 = vmatprep.subr.mxu0 0.0
        %3947 = vmatpush1.msra.mxu0 0.0
        %3948 = vmatprep.subr.mxu0 0.0
        %3949 = vmatpush1.msra.mxu0 0.0
        %3950 = vmatprep.subr.mxu0 0.0
        %3951 = vmatpush1.msra.mxu0 0.0
        %3952 = vmatprep.subr.mxu0 0.0
        %3953 = vmatpush1.msra.mxu0 0.0
        %3954 = vmatprep.subr.mxu0 0.0
        %3955 = vmatpush1.msra.mxu0 0.0
        %3956 = vmatprep.subr.mxu0 0.0
        %3957 = vmatpush1.msra.mxu0 0.0
        %3958 = vmatprep.subr.mxu0 0.0
        %3959 = vmatpush1.msra.mxu0 0.0
        %3960 = vmatprep.subr.mxu0 0.0
        %3961 = vmatpush1.msra.mxu0 0.0
        %3962 = vmatprep.subr.mxu0 0.0
        %3963 = vmatpush1.msra.mxu0 0.0
        %3964 = vmatprep.subr.mxu0 0.0
        %3965 = vmatpush1.msra.mxu0 0.0
        %3966 = vmatprep.subr.mxu0 0.0
        %3967 = vmatpush1.msra.mxu0 0.0
        %3968 = vmatprep.subr.mxu0 0.0
        %3969 = vmatpush1.msra.mxu0 0.0
        %3970 = vmatprep.subr.mxu0 0.0
        %3971 = vmatpush1.msra.mxu0 0.0
        %3972 = vmatprep.subr.mxu0 0.0
        %3973 = vmatpush1.msra.mxu0 0.0
        %3974 = vmatprep.subr.mxu0 0.0
        %3975 = vmatpush1.msra.mxu0 0.0
        %3976 = vmatprep.subr.mxu0 0.0
        %3977 = vmatpush1.msra.mxu0 0.0
        %3978 = vmatprep.subr.mxu0 0.0
        %3979 = vmatpush1.msra.mxu0 0.0
        %3980 = vmatprep.subr.mxu0 0.0
        %3981 = vmatpush1.msra.mxu0 0.0
        %3982 = vmatprep.mubr.f32.mxu0 0.0
        %3983 = vmatmul.mubr.f32.gmra.mrb[0].mxu0 %v3916
        %v3984 = vpop.f32.mrb[0].mxu0
        %v3985 = vadd.f32 0.0, %v3984
        %v3986 = vpop.f32.mrb[0].mxu0
        %v3987 = vadd.f32 0.0, %v3986
        %3988 = vdwg.mxu0
        %v3989 = vadd.f32 %v3911, %v3985
        %v3990 = vadd.f32 %v3912, %v3987
        %v3991 = vmul.f32 %v3557, %v1242
        %v3992 = vmul.f32 %v3553, %v1246
        %v3993 = vmul.f32 %v3558, %v1244
        %s3994 = scalar_lea.vmem %s10, 40
        %v3995 = vld [vmem:[%s3994] sm:$0xff]
        %3999 = vrot.lane.b32.xlu0 %v3991, 110
        %v4000 = vpop.permute.xlu0 %3999
        %4001 = vrot.lane.b32.xlu0 %v3992, 110
        %v4002 = vpop.permute.xlu0 %4001
        %4003 = vrot.lane.b32.xlu0 %v3993, 110
        %v4004 = vpop.permute.xlu0 %4003
        %v4005 = vsel %vm1264, %v4000, %v4002
        %v4006 = vsel %vm1264, %v4002, %v4004
        %v4010 = vsel %vm3576, %v3995, 0
        %4012 = vmatprep.subr.mxu0 %v4006
        %4013 = vmatpush1.msra.mxu0 %v4005
        %4014 = vmatprep.subr.mxu0 0.0
        %4015 = vmatpush1.msra.mxu0 0.0
        %4016 = vmatprep.subr.mxu0 0.0
        %4017 = vmatpush1.msra.mxu0 0.0
        %4018 = vmatprep.subr.mxu0 0.0
        %4019 = vmatpush1.msra.mxu0 0.0
        %4020 = vmatprep.subr.mxu0 0.0
        %4021 = vmatpush1.msra.mxu0 0.0
        %4022 = vmatprep.subr.mxu0 0.0
        %4023 = vmatpush1.msra.mxu0 0.0
        %4024 = vmatprep.subr.mxu0 0.0
        %4025 = vmatpush1.msra.mxu0 0.0
        %4026 = vmatprep.subr.mxu0 0.0
        %4027 = vmatpush1.msra.mxu0 0.0
        %4028 = vmatprep.subr.mxu0 0.0
        %4029 = vmatpush1.msra.mxu0 0.0
        %4030 = vmatprep.subr.mxu0 0.0
        %4031 = vmatpush1.msra.mxu0 0.0
        %4032 = vmatprep.subr.mxu0 0.0
        %4033 = vmatpush1.msra.mxu0 0.0
        %4034 = vmatprep.subr.mxu0 0.0
        %4035 = vmatpush1.msra.mxu0 0.0
        %4036 = vmatprep.subr.mxu0 0.0
        %4037 = vmatpush1.msra.mxu0 0.0
        %4038 = vmatprep.subr.mxu0 0.0
        %4039 = vmatpush1.msra.mxu0 0.0
        %4040 = vmatprep.subr.mxu0 0.0
        %4041 = vmatpush1.msra.mxu0 0.0
        %4042 = vmatprep.subr.mxu0 0.0
        %4043 = vmatpush1.msra.mxu0 0.0
        %4044 = vmatprep.subr.mxu0 0.0
        %4045 = vmatpush1.msra.mxu0 0.0
        %4046 = vmatprep.subr.mxu0 0.0
        %4047 = vmatpush1.msra.mxu0 0.0
        %4048 = vmatprep.subr.mxu0 0.0
        %4049 = vmatpush1.msra.mxu0 0.0
        %4050 = vmatprep.subr.mxu0 0.0
        %4051 = vmatpush1.msra.mxu0 0.0
        %4052 = vmatprep.subr.mxu0 0.0
        %4053 = vmatpush1.msra.mxu0 0.0
        %4054 = vmatprep.subr.mxu0 0.0
        %4055 = vmatpush1.msra.mxu0 0.0
        %4056 = vmatprep.subr.mxu0 0.0
        %4057 = vmatpush1.msra.mxu0 0.0
        %4058 = vmatprep.subr.mxu0 0.0
        %4059 = vmatpush1.msra.mxu0 0.0
        %4060 = vmatprep.subr.mxu0 0.0
        %4061 = vmatpush1.msra.mxu0 0.0
        %4062 = vmatprep.subr.mxu0 0.0
        %4063 = vmatpush1.msra.mxu0 0.0
        %4064 = vmatprep.subr.mxu0 0.0
        %4065 = vmatpush1.msra.mxu0 0.0
        %4066 = vmatprep.subr.mxu0 0.0
        %4067 = vmatpush1.msra.mxu0 0.0
        %4068 = vmatprep.subr.mxu0 0.0
        %4069 = vmatpush1.msra.mxu0 0.0
        %4070 = vmatprep.subr.mxu0 0.0
        %4071 = vmatpush1.msra.mxu0 0.0
        %4072 = vmatprep.subr.mxu0 0.0
        %4073 = vmatpush1.msra.mxu0 0.0
        %4074 = vmatprep.subr.mxu0 0.0
        %4075 = vmatpush1.msra.mxu0 0.0
        %4076 = vmatprep.mubr.f32.mxu0 0.0
        %4077 = vmatmul.mubr.f32.gmra.mrb[0].mxu0 %v4010
        %v4078 = vpop.f32.mrb[0].mxu0
        %v4079 = vadd.f32 0.0, %v4078
        %v4080 = vpop.f32.mrb[0].mxu0
        %v4081 = vadd.f32 0.0, %v4080
        %4082 = vdwg.mxu0
        %v4083 = vadd.f32 %v3989, %v4079
        %v4084 = vadd.f32 %v3990, %v4081
        %v4085 = vmul.f32 %v3557, %v1348
        %v4086 = vmul.f32 %v3553, %v1352
        %v4087 = vmul.f32 %v3558, %v1350
        %s4088 = scalar_lea.vmem %s10, 48
        %v4089 = vld [vmem:[%s4088] sm:$0xff]
        %4093 = vrot.lane.b32.xlu0 %v4085, 96
        %v4094 = vpop.permute.xlu0 %4093
        %4095 = vrot.lane.b32.xlu0 %v4086, 96
        %v4096 = vpop.permute.xlu0 %4095
        %4097 = vrot.lane.b32.xlu0 %v4087, 96
        %v4098 = vpop.permute.xlu0 %4097
        %v4099 = vsel %vm1370, %v4094, %v4096
        %v4100 = vsel %vm1370, %v4096, %v4098
        %v4104 = vsel %vm3576, %v4089, 0
        %4106 = vmatprep.subr.mxu0 %v4100
        %4107 = vmatpush1.msra.mxu0 %v4099
        %4108 = vmatprep.subr.mxu0 0.0
        %4109 = vmatpush1.msra.mxu0 0.0
        %4110 = vmatprep.subr.mxu0 0.0
        %4111 = vmatpush1.msra.mxu0 0.0
        %4112 = vmatprep.subr.mxu0 0.0
        %4113 = vmatpush1.msra.mxu0 0.0
        %4114 = vmatprep.subr.mxu0 0.0
        %4115 = vmatpush1.msra.mxu0 0.0
        %4116 = vmatprep.subr.mxu0 0.0
        %4117 = vmatpush1.msra.mxu0 0.0
        %4118 = vmatprep.subr.mxu0 0.0
        %4119 = vmatpush1.msra.mxu0 0.0
        %4120 = vmatprep.subr.mxu0 0.0
        %4121 = vmatpush1.msra.mxu0 0.0
        %4122 = vmatprep.subr.mxu0 0.0
        %4123 = vmatpush1.msra.mxu0 0.0
        %4124 = vmatprep.subr.mxu0 0.0
        %4125 = vmatpush1.msra.mxu0 0.0
        %4126 = vmatprep.subr.mxu0 0.0
        %4127 = vmatpush1.msra.mxu0 0.0
        %4128 = vmatprep.subr.mxu0 0.0
        %4129 = vmatpush1.msra.mxu0 0.0
        %4130 = vmatprep.subr.mxu0 0.0
        %4131 = vmatpush1.msra.mxu0 0.0
        %4132 = vmatprep.subr.mxu0 0.0
        %4133 = vmatpush1.msra.mxu0 0.0
        %4134 = vmatprep.subr.mxu0 0.0
        %4135 = vmatpush1.msra.mxu0 0.0
        %4136 = vmatprep.subr.mxu0 0.0
        %4137 = vmatpush1.msra.mxu0 0.0
        %4138 = vmatprep.subr.mxu0 0.0
        %4139 = vmatpush1.msra.mxu0 0.0
        %4140 = vmatprep.subr.mxu0 0.0
        %4141 = vmatpush1.msra.mxu0 0.0
        %4142 = vmatprep.subr.mxu0 0.0
        %4143 = vmatpush1.msra.mxu0 0.0
        %4144 = vmatprep.subr.mxu0 0.0
        %4145 = vmatpush1.msra.mxu0 0.0
        %4146 = vmatprep.subr.mxu0 0.0
        %4147 = vmatpush1.msra.mxu0 0.0
        %4148 = vmatprep.subr.mxu0 0.0
        %4149 = vmatpush1.msra.mxu0 0.0
        %4150 = vmatprep.subr.mxu0 0.0
        %4151 = vmatpush1.msra.mxu0 0.0
        %4152 = vmatprep.subr.mxu0 0.0
        %4153 = vmatpush1.msra.mxu0 0.0
        %4154 = vmatprep.subr.mxu0 0.0
        %4155 = vmatpush1.msra.mxu0 0.0
        %4156 = vmatprep.subr.mxu0 0.0
        %4157 = vmatpush1.msra.mxu0 0.0
        %4158 = vmatprep.subr.mxu0 0.0
        %4159 = vmatpush1.msra.mxu0 0.0
        %4160 = vmatprep.subr.mxu0 0.0
        %4161 = vmatpush1.msra.mxu0 0.0
        %4162 = vmatprep.subr.mxu0 0.0
        %4163 = vmatpush1.msra.mxu0 0.0
        %4164 = vmatprep.subr.mxu0 0.0
        %4165 = vmatpush1.msra.mxu0 0.0
        %4166 = vmatprep.subr.mxu0 0.0
        %4167 = vmatpush1.msra.mxu0 0.0
        %4168 = vmatprep.subr.mxu0 0.0
        %4169 = vmatpush1.msra.mxu0 0.0
        %4170 = vmatprep.mubr.f32.mxu0 0.0
        %4171 = vmatmul.mubr.f32.gmra.mrb[0].mxu0 %v4104
        %v4172 = vpop.f32.mrb[0].mxu0
        %v4173 = vadd.f32 0.0, %v4172
        %v4174 = vpop.f32.mrb[0].mxu0
        %v4175 = vadd.f32 0.0, %v4174
        %4176 = vdwg.mxu0
        %v4177 = vadd.f32 %v4083, %v4173
        %v4178 = vadd.f32 %v4084, %v4175
        %s4179 = scalar_lea.vmem %s10, 56
        %v4180 = vld [vmem:[%s4179] sm:$0xff]
        %4181 = vrot.lane.b32.xlu0 %v3557, 95
        %v4182 = vpop.permute.xlu0 %4181
        %4183 = vrot.lane.b32.xlu0 %v3553, 95
        %v4184 = vpop.permute.xlu0 %4183
        %4185 = vrot.lane.b32.xlu0 %v3558, 95
        %v4186 = vpop.permute.xlu0 %4185
        %v4187 = vsel %vm1461, %v4182, %v4184
        %v4188 = vsel %vm1461, %v4184, %v4186
        %v4192 = vsel %vm3576, %v4180, 0
        %4194 = vmatprep.subr.mxu0 %v4188
        %4195 = vmatpush1.msra.mxu0 %v4187
        %4196 = vmatprep.subr.mxu0 0.0
        %4197 = vmatpush1.msra.mxu0 0.0
        %4198 = vmatprep.subr.mxu0 0.0
        %4199 = vmatpush1.msra.mxu0 0.0
        %4200 = vmatprep.subr.mxu0 0.0
        %4201 = vmatpush1.msra.mxu0 0.0
        %4202 = vmatprep.subr.mxu0 0.0
        %4203 = vmatpush1.msra.mxu0 0.0
        %4204 = vmatprep.subr.mxu0 0.0
        %4205 = vmatpush1.msra.mxu0 0.0
        %4206 = vmatprep.subr.mxu0 0.0
        %4207 = vmatpush1.msra.mxu0 0.0
        %4208 = vmatprep.subr.mxu0 0.0
        %4209 = vmatpush1.msra.mxu0 0.0
        %4210 = vmatprep.subr.mxu0 0.0
        %4211 = vmatpush1.msra.mxu0 0.0
        %4212 = vmatprep.subr.mxu0 0.0
        %4213 = vmatpush1.msra.mxu0 0.0
        %4214 = vmatprep.subr.mxu0 0.0
        %4215 = vmatpush1.msra.mxu0 0.0
        %4216 = vmatprep.subr.mxu0 0.0
        %4217 = vmatpush1.msra.mxu0 0.0
        %4218 = vmatprep.subr.mxu0 0.0
        %4219 = vmatpush1.msra.mxu0 0.0
        %4220 = vmatprep.subr.mxu0 0.0
        %4221 = vmatpush1.msra.mxu0 0.0
        %4222 = vmatprep.subr.mxu0 0.0
        %4223 = vmatpush1.msra.mxu0 0.0
        %4224 = vmatprep.subr.mxu0 0.0
        %4225 = vmatpush1.msra.mxu0 0.0
        %4226 = vmatprep.subr.mxu0 0.0
        %4227 = vmatpush1.msra.mxu0 0.0
        %4228 = vmatprep.subr.mxu0 0.0
        %4229 = vmatpush1.msra.mxu0 0.0
        %4230 = vmatprep.subr.mxu0 0.0
        %4231 = vmatpush1.msra.mxu0 0.0
        %4232 = vmatprep.subr.mxu0 0.0
        %4233 = vmatpush1.msra.mxu0 0.0
        %4234 = vmatprep.subr.mxu0 0.0
        %4235 = vmatpush1.msra.mxu0 0.0
        %4236 = vmatprep.subr.mxu0 0.0
        %4237 = vmatpush1.msra.mxu0 0.0
        %4238 = vmatprep.subr.mxu0 0.0
        %4239 = vmatpush1.msra.mxu0 0.0
        %4240 = vmatprep.subr.mxu0 0.0
        %4241 = vmatpush1.msra.mxu0 0.0
        %4242 = vmatprep.subr.mxu0 0.0
        %4243 = vmatpush1.msra.mxu0 0.0
        %4244 = vmatprep.subr.mxu0 0.0
        %4245 = vmatpush1.msra.mxu0 0.0
        %4246 = vmatprep.subr.mxu0 0.0
        %4247 = vmatpush1.msra.mxu0 0.0
        %4248 = vmatprep.subr.mxu0 0.0
        %4249 = vmatpush1.msra.mxu0 0.0
        %4250 = vmatprep.subr.mxu0 0.0
        %4251 = vmatpush1.msra.mxu0 0.0
        %4252 = vmatprep.subr.mxu0 0.0
        %4253 = vmatpush1.msra.mxu0 0.0
        %4254 = vmatprep.subr.mxu0 0.0
        %4255 = vmatpush1.msra.mxu0 0.0
        %4256 = vmatprep.subr.mxu0 0.0
        %4257 = vmatpush1.msra.mxu0 0.0
        %4258 = vmatprep.mubr.f32.mxu0 0.0
        %4259 = vmatmul.mubr.f32.gmra.mrb[0].mxu0 %v4192
        %v4260 = vpop.f32.mrb[0].mxu0
        %v4261 = vadd.f32 0.0, %v4260
        %v4262 = vpop.f32.mrb[0].mxu0
        %v4263 = vadd.f32 0.0, %v4262
        %4264 = vdwg.mxu0
        %v4265 = vadd.f32 %v4177, %v4261
        %v4266 = vadd.f32 %v4178, %v4263
        %v4267 = vmul.f32 %v3557, %v1545
        %v4268 = vmul.f32 %v3553, %v1549
        %v4269 = vmul.f32 %v3558, %v1547
        %s4270 = scalar_lea.vmem %s10, 64
        %v4271 = vld [vmem:[%s4270] sm:$0xff]
        %4275 = vrot.lane.b32.xlu0 %v4267, 94
        %v4276 = vpop.permute.xlu0 %4275
        %4277 = vrot.lane.b32.xlu0 %v4268, 94
        %v4278 = vpop.permute.xlu0 %4277
        %4279 = vrot.lane.b32.xlu0 %v4269, 94
        %v4280 = vpop.permute.xlu0 %4279
        %v4281 = vsel %vm1567, %v4276, %v4278
        %v4282 = vsel %vm1567, %v4278, %v4280
        %v4286 = vsel %vm3576, %v4271, 0
        %4288 = vmatprep.subr.mxu0 %v4282
        %4289 = vmatpush1.msra.mxu0 %v4281
        %4290 = vmatprep.subr.mxu0 0.0
        %4291 = vmatpush1.msra.mxu0 0.0
        %4292 = vmatprep.subr.mxu0 0.0
        %4293 = vmatpush1.msra.mxu0 0.0
        %4294 = vmatprep.subr.mxu0 0.0
        %4295 = vmatpush1.msra.mxu0 0.0
        %4296 = vmatprep.subr.mxu0 0.0
        %4297 = vmatpush1.msra.mxu0 0.0
        %4298 = vmatprep.subr.mxu0 0.0
        %4299 = vmatpush1.msra.mxu0 0.0
        %4300 = vmatprep.subr.mxu0 0.0
        %4301 = vmatpush1.msra.mxu0 0.0
        %4302 = vmatprep.subr.mxu0 0.0
        %4303 = vmatpush1.msra.mxu0 0.0
        %4304 = vmatprep.subr.mxu0 0.0
        %4305 = vmatpush1.msra.mxu0 0.0
        %4306 = vmatprep.subr.mxu0 0.0
        %4307 = vmatpush1.msra.mxu0 0.0
        %4308 = vmatprep.subr.mxu0 0.0
        %4309 = vmatpush1.msra.mxu0 0.0
        %4310 = vmatprep.subr.mxu0 0.0
        %4311 = vmatpush1.msra.mxu0 0.0
        %4312 = vmatprep.subr.mxu0 0.0
        %4313 = vmatpush1.msra.mxu0 0.0
        %4314 = vmatprep.subr.mxu0 0.0
        %4315 = vmatpush1.msra.mxu0 0.0
        %4316 = vmatprep.subr.mxu0 0.0
        %4317 = vmatpush1.msra.mxu0 0.0
        %4318 = vmatprep.subr.mxu0 0.0
        %4319 = vmatpush1.msra.mxu0 0.0
        %4320 = vmatprep.subr.mxu0 0.0
        %4321 = vmatpush1.msra.mxu0 0.0
        %4322 = vmatprep.subr.mxu0 0.0
        %4323 = vmatpush1.msra.mxu0 0.0
        %4324 = vmatprep.subr.mxu0 0.0
        %4325 = vmatpush1.msra.mxu0 0.0
        %4326 = vmatprep.subr.mxu0 0.0
        %4327 = vmatpush1.msra.mxu0 0.0
        %4328 = vmatprep.subr.mxu0 0.0
        %4329 = vmatpush1.msra.mxu0 0.0
        %4330 = vmatprep.subr.mxu0 0.0
        %4331 = vmatpush1.msra.mxu0 0.0
        %4332 = vmatprep.subr.mxu0 0.0
        %4333 = vmatpush1.msra.mxu0 0.0
        %4334 = vmatprep.subr.mxu0 0.0
        %4335 = vmatpush1.msra.mxu0 0.0
        %4336 = vmatprep.subr.mxu0 0.0
        %4337 = vmatpush1.msra.mxu0 0.0
        %4338 = vmatprep.subr.mxu0 0.0
        %4339 = vmatpush1.msra.mxu0 0.0
        %4340 = vmatprep.subr.mxu0 0.0
        %4341 = vmatpush1.msra.mxu0 0.0
        %4342 = vmatprep.subr.mxu0 0.0
        %4343 = vmatpush1.msra.mxu0 0.0
        %4344 = vmatprep.subr.mxu0 0.0
        %4345 = vmatpush1.msra.mxu0 0.0
        %4346 = vmatprep.subr.mxu0 0.0
        %4347 = vmatpush1.msra.mxu0 0.0
        %4348 = vmatprep.subr.mxu0 0.0
        %4349 = vmatpush1.msra.mxu0 0.0
        %4350 = vmatprep.subr.mxu0 0.0
        %4351 = vmatpush1.msra.mxu0 0.0
        %4352 = vmatprep.mubr.f32.mxu0 0.0
        %4353 = vmatmul.mubr.f32.gmra.mrb[0].mxu0 %v4286
        %v4354 = vpop.f32.mrb[0].mxu0
        %v4355 = vadd.f32 0.0, %v4354
        %v4356 = vpop.f32.mrb[0].mxu0
        %v4357 = vadd.f32 0.0, %v4356
        %4358 = vdwg.mxu0
        %v4359 = vadd.f32 %v4265, %v4355
        %v4360 = vadd.f32 %v4266, %v4357
        %v4361 = vadd.f32 %v4359, %v4360
        %4362 = vadd.xlane.f32.xlu0 %v4361
        %v4363 = vpop.xlane.xlu0 %4362
        %v4364 = vrot.slane %v4363, 4
        %v4365 = vadd.f32 %v4363, %v4364
        %v4366 = vrot.slane %v4365, 2
        %v4367 = vadd.f32 %v4365, %v4366
        %v4368 = vrot.slane %v4367, 1
        %v4369 = vadd.f32 %v4367, %v4368
        %s4370 = vtos %v4369
        %v4371 = vrcp.pop 2048.0
        %s4372 = vtos %v4371
        %s4373 = smul.f32 %s4370, %s4372
        %v4374 = vstv %s4373
        %v4375 = vsub.f32 %v4359, %v4374
        %v4376 = vsub.f32 %v4360, %v4374
        %v4377 = vmul.f32 %v4375, %v4375
        %v4378 = vmul.f32 %v4376, %v4376
        %v4379 = vadd.f32 %v4377, %v4378
        %4380 = vadd.xlane.f32.xlu0 %v4379
        %v4381 = vpop.xlane.xlu0 %4380
        %v4382 = vrot.slane %v4381, 4
        %v4383 = vadd.f32 %v4381, %v4382
        %v4384 = vrot.slane %v4383, 2
        %v4385 = vadd.f32 %v4383, %v4384
        %v4386 = vrot.slane %v4385, 1
        %v4387 = vadd.f32 %v4385, %v4386
        %s4388 = vtos %v4387
        %v4389 = vrcp.pop 2048.0
        %s4390 = vtos %v4389
        %s4391 = smul.f32 %s4388, %s4390
        %s4392 = sadd.f32 %s4391, 1e-05
        %v4393 = vstv %s4392
        %v4394 = vrsqrt.pop %v4393
        %s4395 = vtos %v4394
        %v4396 = vstv %s4395
        %v4397 = vmul.f32 %v4375, %v4396
        %v4398 = vmul.f32 %v4376, %v4396
        %v4399 = vld [vmem:[%s11] sm:$0xff]
        %4401 = vset.pattern.permute.xlu0 0
        %4402 = vperm.xlu0 %4401, %v4399
        %v4403 = vpop.permute.xlu0 %4402
        %v4405 = vmul.f32 %v4397, %v4403
        %v4406 = vmul.f32 %v4398, %v4403
        %s4407 = scalar_lea.vmem %s11, 8
        %v4408 = vld [vmem:[%s4407] sm:$0xff]
        %4410 = vset.pattern.permute.xlu0 0
        %4411 = vperm.xlu0 %4410, %v4408
        %v4412 = vpop.permute.xlu0 %4411
        %v4414 = vadd.f32 %v4405, %v4412
        %v4415 = vadd.f32 %v4406, %v4412
        %4416 = vst [vmem:[%s725] sm:$0xff] %v4414
        %4417 = vst [vmem:[%s725 + $0x8] sm:$0xff] %v4415
        %4421 = vrot.lane.b32.xlu0 %v4414, 127
        %v4422 = vpop.permute.xlu0 %4421
        %4423 = vrot.lane.b32.xlu0 %v4415, 127
        %v4424 = vpop.permute.xlu0 %4423
        %4425 = vrot.lane.b32.xlu0 0.0, 127
        %v4426 = vpop.permute.xlu0 %4425
        %v4427 = vsel %vm773, %v4422, %v4424
        %v4428 = vsel %vm773, %v4424, %v4426
        %v4431 = vmax.f32 %v4414, %v4427
        %v4432 = vmax.f32 %v4415, %v4428
        %v4434 = vmax.f32 %v4426, 0.0
        %4438 = vrot.lane.b32.xlu0 %v4431, 112
        %v4439 = vpop.permute.xlu0 %4438
        %4440 = vrot.lane.b32.xlu0 %v4432, 112
        %v4441 = vpop.permute.xlu0 %4440
        %4442 = vrot.lane.b32.xlu0 %v4434, 112
        %v4443 = vpop.permute.xlu0 %4442
        %v4444 = vsel %vm1076, %v4439, %v4441
        %v4445 = vsel %vm1076, %v4441, %v4443
        %v4448 = vmax.f32 %v4431, %v4444
        %v4449 = vmax.f32 %v4432, %v4445
        %v4450 = vld [vmem:[%s3] sm:$0xff]
        %v4451 = vld [vmem:[%s3 + $0x8] sm:$0xff]
        %v4452 = vld [vmem:[%s3 + $0x10] sm:$0xff]
        %v4453 = vld [vmem:[%s3 + $0x18] sm:$0xff]
        %v4454 = vld [vmem:[%s3 + $0x20] sm:$0xff]
        %v4455 = vld [vmem:[%s3 + $0x28] sm:$0xff]
        %v4456 = vld [vmem:[%s3 + $0x30] sm:$0xff]
        %v4457 = vld [vmem:[%s3 + $0x38] sm:$0xff]
        %v4458 = vld [vmem:[%s3 + $0x40] sm:$0xff]
        %v4459 = vld [vmem:[%s3 + $0x48] sm:$0xff]
        %v4460 = vld [vmem:[%s3 + $0x50] sm:$0xff]
        %v4461 = vld [vmem:[%s3 + $0x58] sm:$0xff]
        %v4462 = vld [vmem:[%s3 + $0x60] sm:$0xff]
        %v4463 = vld [vmem:[%s3 + $0x68] sm:$0xff]
        %v4464 = vld [vmem:[%s3 + $0x70] sm:$0xff]
        %v4465 = vld [vmem:[%s3 + $0x78] sm:$0xff]
        %v4466 = vld [vmem:[%s733] sm:$0x1]
        %v4467 = vxor.u32 %v4466, 2147483648
        %v4468 = vmul.f32 %v4467, 1.442695
        %v4469 = vpow.pop %v4468
        %v4470 = vadd.f32 %v4469, 1.0
        %v4471 = vrcp.pop %v4470
        %v4472 = vmul.f32 1.0, %v4471
        %v4473 = vmul.f32 %v4466, %v4472
        %v4474 = vld [vmem:[%s12] sm:$0xff]
        %v4475 = vld [vmem:[%s12 + $0x8] sm:$0xff]
        %v4476 = vld [vmem:[%s12 + $0x10] sm:$0xff]
        %v4477 = vld [vmem:[%s12 + $0x18] sm:$0xff]
        %v4478 = vld [vmem:[%s13] sm:$0x1]
        %v4480 = vsel %vm1351, %v4473, 0
        %4482 = vmatprep.subr.mxu0 0.0
        %4483 = vmatpush1.msra.mxu0 %v4474
        %4484 = vmatprep.subr.mxu0 0.0
        %4485 = vmatpush1.msra.mxu0 %v4475
        %4486 = vmatprep.subr.mxu0 0.0
        %4487 = vmatpush1.msra.mxu0 %v4476
        %4488 = vmatprep.subr.mxu0 0.0
        %4489 = vmatpush1.msra.mxu0 %v4477
        %4490 = vmatprep.subr.mxu0 0.0
        %4491 = vmatpush1.msra.mxu0 0.0
        %4492 = vmatprep.subr.mxu0 0.0
        %4493 = vmatpush1.msra.mxu0 0.0
        %4494 = vmatprep.subr.mxu0 0.0
        %4495 = vmatpush1.msra.mxu0 0.0
        %4496 = vmatprep.subr.mxu0 0.0
        %4497 = vmatpush1.msra.mxu0 0.0
        %4498 = vmatprep.subr.mxu0 0.0
        %4499 = vmatpush1.msra.mxu0 0.0
        %4500 = vmatprep.subr.mxu0 0.0
        %4501 = vmatpush1.msra.mxu0 0.0
        %4502 = vmatprep.subr.mxu0 0.0
        %4503 = vmatpush1.msra.mxu0 0.0
        %4504 = vmatprep.subr.mxu0 0.0
        %4505 = vmatpush1.msra.mxu0 0.0
        %4506 = vmatprep.subr.mxu0 0.0
        %4507 = vmatpush1.msra.mxu0 0.0
        %4508 = vmatprep.subr.mxu0 0.0
        %4509 = vmatpush1.msra.mxu0 0.0
        %4510 = vmatprep.subr.mxu0 0.0
        %4511 = vmatpush1.msra.mxu0 0.0
        %4512 = vmatprep.subr.mxu0 0.0
        %4513 = vmatpush1.msra.mxu0 0.0
        %4514 = vmatprep.subr.mxu0 0.0
        %4515 = vmatpush1.msra.mxu0 0.0
        %4516 = vmatprep.subr.mxu0 0.0
        %4517 = vmatpush1.msra.mxu0 0.0
        %4518 = vmatprep.subr.mxu0 0.0
        %4519 = vmatpush1.msra.mxu0 0.0
        %4520 = vmatprep.subr.mxu0 0.0
        %4521 = vmatpush1.msra.mxu0 0.0
        %4522 = vmatprep.subr.mxu0 0.0
        %4523 = vmatpush1.msra.mxu0 0.0
        %4524 = vmatprep.subr.mxu0 0.0
        %4525 = vmatpush1.msra.mxu0 0.0
        %4526 = vmatprep.subr.mxu0 0.0
        %4527 = vmatpush1.msra.mxu0 0.0
        %4528 = vmatprep.subr.mxu0 0.0
        %4529 = vmatpush1.msra.mxu0 0.0
        %4530 = vmatprep.subr.mxu0 0.0
        %4531 = vmatpush1.msra.mxu0 0.0
        %4532 = vmatprep.subr.mxu0 0.0
        %4533 = vmatpush1.msra.mxu0 0.0
        %4534 = vmatprep.subr.mxu0 0.0
        %4535 = vmatpush1.msra.mxu0 0.0
        %4536 = vmatprep.subr.mxu0 0.0
        %4537 = vmatpush1.msra.mxu0 0.0
        %4538 = vmatprep.subr.mxu0 0.0
        %4539 = vmatpush1.msra.mxu0 0.0
        %4540 = vmatprep.subr.mxu0 0.0
        %4541 = vmatpush1.msra.mxu0 0.0
        %4542 = vmatprep.subr.mxu0 0.0
        %4543 = vmatpush1.msra.mxu0 0.0
        %4544 = vmatprep.subr.mxu0 0.0
        %4545 = vmatpush1.msra.mxu0 0.0
        %4546 = vmatprep.mubr.f32.mxu0 0.0
        %4547 = vmatmul.mubr.f32.gmra.mrb[0].mxu0 %v4480
        %v4548 = vpop.f32.mrb[0].mxu0
        %v4549 = vadd.f32 %v4478, %v4548
        %v4550 = vpop.f32.mrb[0].mxu0
        %4551 = vdwg.mxu0
        %v4552 = vlaneseq
        %v4553 = vshrl.u32 %v4552, 7
        %v4554 = vsub.s32 0, %v4553
        %v4555 = vrot.slane %v4549, %v4554
        %4556 = vmatprep.subr.mxu0 %v4449
        %4557 = vmatpush1.xpose.msra.mxu0 %v4448
        %4558 = vmatprep.subr.mxu0 0.0
        %4559 = vmatpush1.xpose.msra.mxu0 0.0
        %4560 = vmatprep.subr.mxu0 0.0
        %4561 = vmatpush1.xpose.msra.mxu0 0.0
        %4562 = vmatprep.subr.mxu0 0.0
        %4563 = vmatpush1.xpose.msra.mxu0 0.0
        %4564 = vmatprep.subr.mxu0 0.0
        %4565 = vmatpush1.xpose.msra.mxu0 0.0
        %4566 = vmatprep.subr.mxu0 0.0
        %4567 = vmatpush1.xpose.msra.mxu0 0.0
        %4568 = vmatprep.subr.mxu0 0.0
        %4569 = vmatpush1.xpose.msra.mxu0 0.0
        %4570 = vmatprep.subr.mxu0 0.0
        %4571 = vmatpush1.xpose.msra.mxu0 0.0
        %4572 = vmatprep.subr.mxu0 0.0
        %4573 = vmatpush1.xpose.msra.mxu0 0.0
        %4574 = vmatprep.subr.mxu0 0.0
        %4575 = vmatpush1.xpose.msra.mxu0 0.0
        %4576 = vmatprep.subr.mxu0 0.0
        %4577 = vmatpush1.xpose.msra.mxu0 0.0
        %4578 = vmatprep.subr.mxu0 0.0
        %4579 = vmatpush1.xpose.msra.mxu0 0.0
        %4580 = vmatprep.subr.mxu0 0.0
        %4581 = vmatpush1.xpose.msra.mxu0 0.0
        %4582 = vmatprep.subr.mxu0 0.0
        %4583 = vmatpush1.xpose.msra.mxu0 0.0
        %4584 = vmatprep.subr.mxu0 0.0
        %4585 = vmatpush1.xpose.msra.mxu0 0.0
        %4586 = vmatprep.subr.mxu0 0.0
        %4587 = vmatpush1.xpose.msra.mxu0 0.0
        %4588 = vmatprep.subr.mxu0 0.0
        %4589 = vmatpush1.xpose.msra.mxu0 0.0
        %4590 = vmatprep.subr.mxu0 0.0
        %4591 = vmatpush1.xpose.msra.mxu0 0.0
        %4592 = vmatprep.subr.mxu0 0.0
        %4593 = vmatpush1.xpose.msra.mxu0 0.0
        %4594 = vmatprep.subr.mxu0 0.0
        %4595 = vmatpush1.xpose.msra.mxu0 0.0
        %4596 = vmatprep.subr.mxu0 0.0
        %4597 = vmatpush1.xpose.msra.mxu0 0.0
        %4598 = vmatprep.subr.mxu0 0.0
        %4599 = vmatpush1.xpose.msra.mxu0 0.0
        %4600 = vmatprep.subr.mxu0 0.0
        %4601 = vmatpush1.xpose.msra.mxu0 0.0
        %4602 = vmatprep.subr.mxu0 0.0
        %4603 = vmatpush1.xpose.msra.mxu0 0.0
        %4604 = vmatprep.subr.mxu0 0.0
        %4605 = vmatpush1.xpose.msra.mxu0 0.0
        %4606 = vmatprep.subr.mxu0 0.0
        %4607 = vmatpush1.xpose.msra.mxu0 0.0
        %4608 = vmatprep.subr.mxu0 0.0
        %4609 = vmatpush1.xpose.msra.mxu0 0.0
        %4610 = vmatprep.subr.mxu0 0.0
        %4611 = vmatpush1.xpose.msra.mxu0 0.0
        %4612 = vmatprep.subr.mxu0 0.0
        %4613 = vmatpush1.xpose.msra.mxu0 0.0
        %4614 = vmatprep.subr.mxu0 0.0
        %4615 = vmatpush1.xpose.msra.mxu0 0.0
        %4616 = vmatprep.subr.mxu0 0.0
        %4617 = vmatpush1.xpose.msra.mxu0 0.0
        %4618 = vmatprep.subr.mxu0 0.0
        %4619 = vmatpush1.xpose.msra.mxu0 0.0
        %4620 = vmatprep.mubr.f32.mxu0 %v4451
        %4621 = vmatmul.mubr.f32.gmra.mrb[0].mxu0 %v4450
        %v4622 = vpop.f32.mrb[0].mxu0
        %v4623 = vadd.f32 %v4555, %v4622
        %v4624 = vpop.f32.mrb[0].mxu0
        %4625 = vmatprep.mubr.f32.mxu0 %v4453
        %4626 = vmatmul.mubr.f32.gmra.mrb[0].mxu0 %v4452
        %v4627 = vpop.f32.mrb[0].mxu0
        %v4628 = vadd.f32 %v4555, %v4627
        %v4629 = vpop.f32.mrb[0].mxu0
        %4630 = vmatprep.mubr.f32.mxu0 %v4455
        %4631 = vmatmul.mubr.f32.gmra.mrb[0].mxu0 %v4454
        %v4632 = vpop.f32.mrb[0].mxu0
        %v4633 = vadd.f32 %v4555, %v4632
        %v4634 = vpop.f32.mrb[0].mxu0
        %4635 = vmatprep.mubr.f32.mxu0 %v4457
        %4636 = vmatmul.mubr.f32.gmra.mrb[0].mxu0 %v4456
        %v4637 = vpop.f32.mrb[0].mxu0
        %v4638 = vadd.f32 %v4555, %v4637
        %v4639 = vpop.f32.mrb[0].mxu0
        %4640 = vmatprep.mubr.f32.mxu0 %v4459
        %4641 = vmatmul.mubr.f32.gmra.mrb[0].mxu0 %v4458
        %v4642 = vpop.f32.mrb[0].mxu0
        %v4643 = vadd.f32 %v4555, %v4642
        %v4644 = vpop.f32.mrb[0].mxu0
        %4645 = vmatprep.mubr.f32.mxu0 %v4461
        %4646 = vmatmul.mubr.f32.gmra.mrb[0].mxu0 %v4460
        %v4647 = vpop.f32.mrb[0].mxu0
        %v4648 = vadd.f32 %v4555, %v4647
        %v4649 = vpop.f32.mrb[0].mxu0
        %4650 = vmatprep.mubr.f32.mxu0 %v4463
        %4651 = vmatmul.mubr.f32.gmra.mrb[0].mxu0 %v4462
        %v4652 = vpop.f32.mrb[0].mxu0
        %v4653 = vadd.f32 %v4555, %v4652
        %v4654 = vpop.f32.mrb[0].mxu0
        %4655 = vmatprep.mubr.f32.mxu0 %v4465
        %4656 = vmatmul.mubr.f32.gmra.mrb[0].mxu0 %v4464
        %v4657 = vpop.f32.mrb[0].mxu0
        %v4658 = vadd.f32 %v4555, %v4657
        %v4659 = vpop.f32.mrb[0].mxu0
        %4660 = vdwg.mxu0
        %v4661 = vld [vmem:[%s14] sm:$0x1]
        %s4662 = scalar_lea.vmem %s14, 1
        %v4663 = vld [vmem:[%s4662] sm:$0x1]
        %v4664 = vsel %vm3576, %v4623, 0.0
        %4665 = vadd.xlane.f32.xlu0 %v4664
        %v4666 = vpop.xlane.xlu0 %4665
        %v4667 = vsel %vm3576, %v4628, 0.0
        %4668 = vadd.xlane.f32.xlu0 %v4667
        %v4669 = vpop.xlane.xlu0 %4668
        %v4670 = vsel %vm3576, %v4633, 0.0
        %4671 = vadd.xlane.f32.xlu0 %v4670
        %v4672 = vpop.xlane.xlu0 %4671
        %v4673 = vsel %vm3576, %v4638, 0.0
        %4674 = vadd.xlane.f32.xlu0 %v4673
        %v4675 = vpop.xlane.xlu0 %4674
        %v4676 = vsel %vm3576, %v4643, 0.0
        %4677 = vadd.xlane.f32.xlu0 %v4676
        %v4678 = vpop.xlane.xlu0 %4677
        %v4679 = vsel %vm3576, %v4648, 0.0
        %4680 = vadd.xlane.f32.xlu0 %v4679
        %v4681 = vpop.xlane.xlu0 %4680
        %v4682 = vsel %vm3576, %v4653, 0.0
        %4683 = vadd.xlane.f32.xlu0 %v4682
        %v4684 = vpop.xlane.xlu0 %4683
        %v4685 = vsel %vm3576, %v4658, 0.0
        %4686 = vadd.xlane.f32.xlu0 %v4685
        %v4687 = vpop.xlane.xlu0 %4686
        %v4688 = vrcp.pop 8.0
        %v4689 = vmul.f32 %v4666, %v4688
        %v4690 = vmul.f32 %v4669, %v4688
        %v4691 = vmul.f32 %v4672, %v4688
        %v4692 = vmul.f32 %v4675, %v4688
        %v4693 = vmul.f32 %v4678, %v4688
        %v4694 = vmul.f32 %v4681, %v4688
        %v4695 = vmul.f32 %v4684, %v4688
        %v4696 = vmul.f32 %v4687, %v4688
        %v4697 = vsub.f32 %v4623, %v4689
        %v4698 = vsub.f32 %v4628, %v4690
        %v4699 = vsub.f32 %v4633, %v4691
        %v4700 = vsub.f32 %v4638, %v4692
        %v4701 = vsub.f32 %v4643, %v4693
        %v4702 = vsub.f32 %v4648, %v4694
        %v4703 = vsub.f32 %v4653, %v4695
        %v4704 = vsub.f32 %v4658, %v4696
        %v4705 = vmul.f32 %v4697, %v4697
        %v4706 = vmul.f32 %v4698, %v4698
        %v4707 = vmul.f32 %v4699, %v4699
        %v4708 = vmul.f32 %v4700, %v4700
        %v4709 = vmul.f32 %v4701, %v4701
        %v4710 = vmul.f32 %v4702, %v4702
        %v4711 = vmul.f32 %v4703, %v4703
        %v4712 = vmul.f32 %v4704, %v4704
        %v4713 = vsel %vm3576, %v4705, 0.0
        %4714 = vadd.xlane.f32.xlu0 %v4713
        %v4715 = vpop.xlane.xlu0 %4714
        %v4716 = vsel %vm3576, %v4706, 0.0
        %4717 = vadd.xlane.f32.xlu0 %v4716
        %v4718 = vpop.xlane.xlu0 %4717
        %v4719 = vsel %vm3576, %v4707, 0.0
        %4720 = vadd.xlane.f32.xlu0 %v4719
        %v4721 = vpop.xlane.xlu0 %4720
        %v4722 = vsel %vm3576, %v4708, 0.0
        %4723 = vadd.xlane.f32.xlu0 %v4722
        %v4724 = vpop.xlane.xlu0 %4723
        %v4725 = vsel %vm3576, %v4709, 0.0
        %4726 = vadd.xlane.f32.xlu0 %v4725
        %v4727 = vpop.xlane.xlu0 %4726
        %v4728 = vsel %vm3576, %v4710, 0.0
        %4729 = vadd.xlane.f32.xlu0 %v4728
        %v4730 = vpop.xlane.xlu0 %4729
        %v4731 = vsel %vm3576, %v4711, 0.0
        %4732 = vadd.xlane.f32.xlu0 %v4731
        %v4733 = vpop.xlane.xlu0 %4732
        %v4734 = vsel %vm3576, %v4712, 0.0
        %4735 = vadd.xlane.f32.xlu0 %v4734
        %v4736 = vpop.xlane.xlu0 %4735
        %v4737 = vmul.f32 %v4715, %v4688
        %v4738 = vmul.f32 %v4718, %v4688
        %v4739 = vmul.f32 %v4721, %v4688
        %v4740 = vmul.f32 %v4724, %v4688
        %v4741 = vmul.f32 %v4727, %v4688
        %v4742 = vmul.f32 %v4730, %v4688
        %v4743 = vmul.f32 %v4733, %v4688
        %v4744 = vmul.f32 %v4736, %v4688
        %v4745 = vadd.f32 %v4737, 1e-05
        %v4746 = vadd.f32 %v4738, 1e-05
        %v4747 = vadd.f32 %v4739, 1e-05
        %v4748 = vadd.f32 %v4740, 1e-05
        %v4749 = vadd.f32 %v4741, 1e-05
        %v4750 = vadd.f32 %v4742, 1e-05
        %v4751 = vadd.f32 %v4743, 1e-05
        %v4752 = vadd.f32 %v4744, 1e-05
        %v4753 = vrsqrt.pop %v4745
        %v4754 = vrsqrt.pop %v4746
        %v4755 = vrsqrt.pop %v4747
        %v4756 = vrsqrt.pop %v4748
        %v4757 = vrsqrt.pop %v4749
        %v4758 = vrsqrt.pop %v4750
        %v4759 = vrsqrt.pop %v4751
        %v4760 = vrsqrt.pop %v4752
        %v4761 = vmul.f32 %v4697, %v4753
        %v4762 = vmul.f32 %v4698, %v4754
        %v4763 = vmul.f32 %v4699, %v4755
        %v4764 = vmul.f32 %v4700, %v4756
        %v4765 = vmul.f32 %v4701, %v4757
        %v4766 = vmul.f32 %v4702, %v4758
        %v4767 = vmul.f32 %v4703, %v4759
        %v4768 = vmul.f32 %v4704, %v4760
        %v4770 = vlaneseq
        %v4771 = vshrl.u32 %v4770, 7
        %v4772 = vsub.s32 0, %v4771
        %v4773 = vrot.slane %v4661, %v4772
        %v4775 = vmul.f32 %v4761, %v4773
        %v4776 = vmul.f32 %v4762, %v4773
        %v4777 = vmul.f32 %v4763, %v4773
        %v4778 = vmul.f32 %v4764, %v4773
        %v4779 = vmul.f32 %v4765, %v4773
        %v4780 = vmul.f32 %v4766, %v4773
        %v4781 = vmul.f32 %v4767, %v4773
        %v4782 = vmul.f32 %v4768, %v4773
        %v4784 = vlaneseq
        %v4785 = vshrl.u32 %v4784, 7
        %v4786 = vsub.s32 0, %v4785
        %v4787 = vrot.slane %v4663, %v4786
        %v4789 = vadd.f32 %v4775, %v4787
        %v4790 = vadd.f32 %v4776, %v4787
        %v4791 = vadd.f32 %v4777, %v4787
        %v4792 = vadd.f32 %v4778, %v4787
        %v4793 = vadd.f32 %v4779, %v4787
        %v4794 = vadd.f32 %v4780, %v4787
        %v4795 = vadd.f32 %v4781, %v4787
        %v4796 = vadd.f32 %v4782, %v4787
        %v4797 = vld [vmem:[%s15] sm:$0xff]
        %v4798 = vld [vmem:[%s16] sm:$0x1]
        %v4800 = vlaneseq
        %v4801 = vshrl.u32 %v4800, 7
        %v4802 = vsub.s32 0, %v4801
        %v4803 = vrot.slane %v4798, %v4802
        %v4806 = vsel %vm3576, %v4789, 0
        %v4809 = vsel %vm3576, %v4790, 0
        %v4812 = vsel %vm3576, %v4791, 0
        %v4815 = vsel %vm3576, %v4792, 0
        %v4818 = vsel %vm3576, %v4793, 0
        %v4821 = vsel %vm3576, %v4794, 0
        %v4824 = vsel %vm3576, %v4795, 0
        %v4827 = vsel %vm3576, %v4796, 0
        %4829 = vmatprep.subr.mxu0 0.0
        %4830 = vmatpush1.msra.mxu0 %v4797
        %4831 = vmatprep.subr.mxu0 0.0
        %4832 = vmatpush1.msra.mxu0 0.0
        %4833 = vmatprep.subr.mxu0 0.0
        %4834 = vmatpush1.msra.mxu0 0.0
        %4835 = vmatprep.subr.mxu0 0.0
        %4836 = vmatpush1.msra.mxu0 0.0
        %4837 = vmatprep.subr.mxu0 0.0
        %4838 = vmatpush1.msra.mxu0 0.0
        %4839 = vmatprep.subr.mxu0 0.0
        %4840 = vmatpush1.msra.mxu0 0.0
        %4841 = vmatprep.subr.mxu0 0.0
        %4842 = vmatpush1.msra.mxu0 0.0
        %4843 = vmatprep.subr.mxu0 0.0
        %4844 = vmatpush1.msra.mxu0 0.0
        %4845 = vmatprep.subr.mxu0 0.0
        %4846 = vmatpush1.msra.mxu0 0.0
        %4847 = vmatprep.subr.mxu0 0.0
        %4848 = vmatpush1.msra.mxu0 0.0
        %4849 = vmatprep.subr.mxu0 0.0
        %4850 = vmatpush1.msra.mxu0 0.0
        %4851 = vmatprep.subr.mxu0 0.0
        %4852 = vmatpush1.msra.mxu0 0.0
        %4853 = vmatprep.subr.mxu0 0.0
        %4854 = vmatpush1.msra.mxu0 0.0
        %4855 = vmatprep.subr.mxu0 0.0
        %4856 = vmatpush1.msra.mxu0 0.0
        %4857 = vmatprep.subr.mxu0 0.0
        %4858 = vmatpush1.msra.mxu0 0.0
        %4859 = vmatprep.subr.mxu0 0.0
        %4860 = vmatpush1.msra.mxu0 0.0
        %4861 = vmatprep.subr.mxu0 0.0
        %4862 = vmatpush1.msra.mxu0 0.0
        %4863 = vmatprep.subr.mxu0 0.0
        %4864 = vmatpush1.msra.mxu0 0.0
        %4865 = vmatprep.subr.mxu0 0.0
        %4866 = vmatpush1.msra.mxu0 0.0
        %4867 = vmatprep.subr.mxu0 0.0
        %4868 = vmatpush1.msra.mxu0 0.0
        %4869 = vmatprep.subr.mxu0 0.0
        %4870 = vmatpush1.msra.mxu0 0.0
        %4871 = vmatprep.subr.mxu0 0.0
        %4872 = vmatpush1.msra.mxu0 0.0
        %4873 = vmatprep.subr.mxu0 0.0
        %4874 = vmatpush1.msra.mxu0 0.0
        %4875 = vmatprep.subr.mxu0 0.0
        %4876 = vmatpush1.msra.mxu0 0.0
        %4877 = vmatprep.subr.mxu0 0.0
        %4878 = vmatpush1.msra.mxu0 0.0
        %4879 = vmatprep.subr.mxu0 0.0
        %4880 = vmatpush1.msra.mxu0 0.0
        %4881 = vmatprep.subr.mxu0 0.0
        %4882 = vmatpush1.msra.mxu0 0.0
        %4883 = vmatprep.subr.mxu0 0.0
        %4884 = vmatpush1.msra.mxu0 0.0
        %4885 = vmatprep.subr.mxu0 0.0
        %4886 = vmatpush1.msra.mxu0 0.0
        %4887 = vmatprep.subr.mxu0 0.0
        %4888 = vmatpush1.msra.mxu0 0.0
        %4889 = vmatprep.subr.mxu0 0.0
        %4890 = vmatpush1.msra.mxu0 0.0
        %4891 = vmatprep.subr.mxu0 0.0
        %4892 = vmatpush1.msra.mxu0 0.0
        %4893 = vmatprep.mubr.f32.mxu0 0.0
        %4894 = vmatmul.mubr.f32.gmra.mrb[0].mxu0 %v4806
        %v4895 = vpop.f32.mrb[0].mxu0
        %v4896 = vadd.f32 %v4803, %v4895
        %v4897 = vpop.f32.mrb[0].mxu0
        %4898 = vmatprep.mubr.f32.mxu0 0.0
        %4899 = vmatmul.mubr.f32.gmra.mrb[0].mxu0 %v4809
        %v4900 = vpop.f32.mrb[0].mxu0
        %v4901 = vadd.f32 %v4803, %v4900
        %v4902 = vpop.f32.mrb[0].mxu0
        %4903 = vmatprep.mubr.f32.mxu0 0.0
        %4904 = vmatmul.mubr.f32.gmra.mrb[0].mxu0 %v4812
        %v4905 = vpop.f32.mrb[0].mxu0
        %v4906 = vadd.f32 %v4803, %v4905
        %v4907 = vpop.f32.mrb[0].mxu0
        %4908 = vmatprep.mubr.f32.mxu0 0.0
        %4909 = vmatmul.mubr.f32.gmra.mrb[0].mxu0 %v4815
        %v4910 = vpop.f32.mrb[0].mxu0
        %v4911 = vadd.f32 %v4803, %v4910
        %v4912 = vpop.f32.mrb[0].mxu0
        %4913 = vmatprep.mubr.f32.mxu0 0.0
        %4914 = vmatmul.mubr.f32.gmra.mrb[0].mxu0 %v4818
        %v4915 = vpop.f32.mrb[0].mxu0
        %v4916 = vadd.f32 %v4803, %v4915
        %v4917 = vpop.f32.mrb[0].mxu0
        %4918 = vmatprep.mubr.f32.mxu0 0.0
        %4919 = vmatmul.mubr.f32.gmra.mrb[0].mxu0 %v4821
        %v4920 = vpop.f32.mrb[0].mxu0
        %v4921 = vadd.f32 %v4803, %v4920
        %v4922 = vpop.f32.mrb[0].mxu0
        %4923 = vmatprep.mubr.f32.mxu0 0.0
        %4924 = vmatmul.mubr.f32.gmra.mrb[0].mxu0 %v4824
        %v4925 = vpop.f32.mrb[0].mxu0
        %v4926 = vadd.f32 %v4803, %v4925
        %v4927 = vpop.f32.mrb[0].mxu0
        %4928 = vmatprep.mubr.f32.mxu0 0.0
        %4929 = vmatmul.mubr.f32.gmra.mrb[0].mxu0 %v4827
        %v4930 = vpop.f32.mrb[0].mxu0
        %v4931 = vadd.f32 %v4803, %v4930
        %v4932 = vpop.f32.mrb[0].mxu0
        %4933 = vdwg.mxu0
        %s4934 = scalar_lea.vmem %s15, 8
        %v4935 = vld [vmem:[%s4934] sm:$0xff]
        %s4936 = scalar_lea.vmem %s16, 1
        %v4937 = vld [vmem:[%s4936] sm:$0x1]
        %v4939 = vlaneseq
        %v4940 = vshrl.u32 %v4939, 7
        %v4941 = vsub.s32 0, %v4940
        %v4942 = vrot.slane %v4937, %v4941
        %4944 = vmatprep.subr.mxu0 0.0
        %4945 = vmatpush1.msra.mxu0 %v4935
        %4946 = vmatprep.subr.mxu0 0.0
        %4947 = vmatpush1.msra.mxu0 0.0
        %4948 = vmatprep.subr.mxu0 0.0
        %4949 = vmatpush1.msra.mxu0 0.0
        %4950 = vmatprep.subr.mxu0 0.0
        %4951 = vmatpush1.msra.mxu0 0.0
        %4952 = vmatprep.subr.mxu0 0.0
        %4953 = vmatpush1.msra.mxu0 0.0
        %4954 = vmatprep.subr.mxu0 0.0
        %4955 = vmatpush1.msra.mxu0 0.0
        %4956 = vmatprep.subr.mxu0 0.0
        %4957 = vmatpush1.msra.mxu0 0.0
        %4958 = vmatprep.subr.mxu0 0.0
        %4959 = vmatpush1.msra.mxu0 0.0
        %4960 = vmatprep.subr.mxu0 0.0
        %4961 = vmatpush1.msra.mxu0 0.0
        %4962 = vmatprep.subr.mxu0 0.0
        %4963 = vmatpush1.msra.mxu0 0.0
        %4964 = vmatprep.subr.mxu0 0.0
        %4965 = vmatpush1.msra.mxu0 0.0
        %4966 = vmatprep.subr.mxu0 0.0
        %4967 = vmatpush1.msra.mxu0 0.0
        %4968 = vmatprep.subr.mxu0 0.0
        %4969 = vmatpush1.msra.mxu0 0.0
        %4970 = vmatprep.subr.mxu0 0.0
        %4971 = vmatpush1.msra.mxu0 0.0
        %4972 = vmatprep.subr.mxu0 0.0
        %4973 = vmatpush1.msra.mxu0 0.0
        %4974 = vmatprep.subr.mxu0 0.0
        %4975 = vmatpush1.msra.mxu0 0.0
        %4976 = vmatprep.subr.mxu0 0.0
        %4977 = vmatpush1.msra.mxu0 0.0
        %4978 = vmatprep.subr.mxu0 0.0
        %4979 = vmatpush1.msra.mxu0 0.0
        %4980 = vmatprep.subr.mxu0 0.0
        %4981 = vmatpush1.msra.mxu0 0.0
        %4982 = vmatprep.subr.mxu0 0.0
        %4983 = vmatpush1.msra.mxu0 0.0
        %4984 = vmatprep.subr.mxu0 0.0
        %4985 = vmatpush1.msra.mxu0 0.0
        %4986 = vmatprep.subr.mxu0 0.0
        %4987 = vmatpush1.msra.mxu0 0.0
        %4988 = vmatprep.subr.mxu0 0.0
        %4989 = vmatpush1.msra.mxu0 0.0
        %4990 = vmatprep.subr.mxu0 0.0
        %4991 = vmatpush1.msra.mxu0 0.0
        %4992 = vmatprep.subr.mxu0 0.0
        %4993 = vmatpush1.msra.mxu0 0.0
        %4994 = vmatprep.subr.mxu0 0.0
        %4995 = vmatpush1.msra.mxu0 0.0
        %4996 = vmatprep.subr.mxu0 0.0
        %4997 = vmatpush1.msra.mxu0 0.0
        %4998 = vmatprep.subr.mxu0 0.0
        %4999 = vmatpush1.msra.mxu0 0.0
        %5000 = vmatprep.subr.mxu0 0.0
        %5001 = vmatpush1.msra.mxu0 0.0
        %5002 = vmatprep.subr.mxu0 0.0
        %5003 = vmatpush1.msra.mxu0 0.0
        %5004 = vmatprep.subr.mxu0 0.0
        %5005 = vmatpush1.msra.mxu0 0.0
        %5006 = vmatprep.subr.mxu0 0.0
        %5007 = vmatpush1.msra.mxu0 0.0
        %5008 = vmatprep.mubr.f32.mxu0 0.0
        %5009 = vmatmul.mubr.f32.gmra.mrb[0].mxu0 %v4806
        %v5010 = vpop.f32.mrb[0].mxu0
        %v5011 = vadd.f32 %v4942, %v5010
        %v5012 = vpop.f32.mrb[0].mxu0
        %5013 = vmatprep.mubr.f32.mxu0 0.0
        %5014 = vmatmul.mubr.f32.gmra.mrb[0].mxu0 %v4809
        %v5015 = vpop.f32.mrb[0].mxu0
        %v5016 = vadd.f32 %v4942, %v5015
        %v5017 = vpop.f32.mrb[0].mxu0
        %5018 = vmatprep.mubr.f32.mxu0 0.0
        %5019 = vmatmul.mubr.f32.gmra.mrb[0].mxu0 %v4812
        %v5020 = vpop.f32.mrb[0].mxu0
        %v5021 = vadd.f32 %v4942, %v5020
        %v5022 = vpop.f32.mrb[0].mxu0
        %5023 = vmatprep.mubr.f32.mxu0 0.0
        %5024 = vmatmul.mubr.f32.gmra.mrb[0].mxu0 %v4815
        %v5025 = vpop.f32.mrb[0].mxu0
        %v5026 = vadd.f32 %v4942, %v5025
        %v5027 = vpop.f32.mrb[0].mxu0
        %5028 = vmatprep.mubr.f32.mxu0 0.0
        %5029 = vmatmul.mubr.f32.gmra.mrb[0].mxu0 %v4818
        %v5030 = vpop.f32.mrb[0].mxu0
        %v5031 = vadd.f32 %v4942, %v5030
        %v5032 = vpop.f32.mrb[0].mxu0
        %5033 = vmatprep.mubr.f32.mxu0 0.0
        %5034 = vmatmul.mubr.f32.gmra.mrb[0].mxu0 %v4821
        %v5035 = vpop.f32.mrb[0].mxu0
        %v5036 = vadd.f32 %v4942, %v5035
        %v5037 = vpop.f32.mrb[0].mxu0
        %5038 = vmatprep.mubr.f32.mxu0 0.0
        %5039 = vmatmul.mubr.f32.gmra.mrb[0].mxu0 %v4824
        %v5040 = vpop.f32.mrb[0].mxu0
        %v5041 = vadd.f32 %v4942, %v5040
        %v5042 = vpop.f32.mrb[0].mxu0
        %5043 = vmatprep.mubr.f32.mxu0 0.0
        %5044 = vmatmul.mubr.f32.gmra.mrb[0].mxu0 %v4827
        %v5045 = vpop.f32.mrb[0].mxu0
        %v5046 = vadd.f32 %v4942, %v5045
        %v5047 = vpop.f32.mrb[0].mxu0
        %5048 = vdwg.mxu0
        %s5049 = scalar_lea.vmem %s15, 16
        %v5050 = vld [vmem:[%s5049] sm:$0xff]
        %s5051 = scalar_lea.vmem %s16, 2
        %v5052 = vld [vmem:[%s5051] sm:$0x1]
        %v5054 = vlaneseq
        %v5055 = vshrl.u32 %v5054, 7
        %v5056 = vsub.s32 0, %v5055
        %v5057 = vrot.slane %v5052, %v5056
        %5059 = vmatprep.subr.mxu0 0.0
        %5060 = vmatpush1.msra.mxu0 %v5050
        %5061 = vmatprep.subr.mxu0 0.0
        %5062 = vmatpush1.msra.mxu0 0.0
        %5063 = vmatprep.subr.mxu0 0.0
        %5064 = vmatpush1.msra.mxu0 0.0
        %5065 = vmatprep.subr.mxu0 0.0
        %5066 = vmatpush1.msra.mxu0 0.0
        %5067 = vmatprep.subr.mxu0 0.0
        %5068 = vmatpush1.msra.mxu0 0.0
        %5069 = vmatprep.subr.mxu0 0.0
        %5070 = vmatpush1.msra.mxu0 0.0
        %5071 = vmatprep.subr.mxu0 0.0
        %5072 = vmatpush1.msra.mxu0 0.0
        %5073 = vmatprep.subr.mxu0 0.0
        %5074 = vmatpush1.msra.mxu0 0.0
        %5075 = vmatprep.subr.mxu0 0.0
        %5076 = vmatpush1.msra.mxu0 0.0
        %5077 = vmatprep.subr.mxu0 0.0
        %5078 = vmatpush1.msra.mxu0 0.0
        %5079 = vmatprep.subr.mxu0 0.0
        %5080 = vmatpush1.msra.mxu0 0.0
        %5081 = vmatprep.subr.mxu0 0.0
        %5082 = vmatpush1.msra.mxu0 0.0
        %5083 = vmatprep.subr.mxu0 0.0
        %5084 = vmatpush1.msra.mxu0 0.0
        %5085 = vmatprep.subr.mxu0 0.0
        %5086 = vmatpush1.msra.mxu0 0.0
        %5087 = vmatprep.subr.mxu0 0.0
        %5088 = vmatpush1.msra.mxu0 0.0
        %5089 = vmatprep.subr.mxu0 0.0
        %5090 = vmatpush1.msra.mxu0 0.0
        %5091 = vmatprep.subr.mxu0 0.0
        %5092 = vmatpush1.msra.mxu0 0.0
        %5093 = vmatprep.subr.mxu0 0.0
        %5094 = vmatpush1.msra.mxu0 0.0
        %5095 = vmatprep.subr.mxu0 0.0
        %5096 = vmatpush1.msra.mxu0 0.0
        %5097 = vmatprep.subr.mxu0 0.0
        %5098 = vmatpush1.msra.mxu0 0.0
        %5099 = vmatprep.subr.mxu0 0.0
        %5100 = vmatpush1.msra.mxu0 0.0
        %5101 = vmatprep.subr.mxu0 0.0
        %5102 = vmatpush1.msra.mxu0 0.0
        %5103 = vmatprep.subr.mxu0 0.0
        %5104 = vmatpush1.msra.mxu0 0.0
        %5105 = vmatprep.subr.mxu0 0.0
        %5106 = vmatpush1.msra.mxu0 0.0
        %5107 = vmatprep.subr.mxu0 0.0
        %5108 = vmatpush1.msra.mxu0 0.0
        %5109 = vmatprep.subr.mxu0 0.0
        %5110 = vmatpush1.msra.mxu0 0.0
        %5111 = vmatprep.subr.mxu0 0.0
        %5112 = vmatpush1.msra.mxu0 0.0
        %5113 = vmatprep.subr.mxu0 0.0
        %5114 = vmatpush1.msra.mxu0 0.0
        %5115 = vmatprep.subr.mxu0 0.0
        %5116 = vmatpush1.msra.mxu0 0.0
        %5117 = vmatprep.subr.mxu0 0.0
        %5118 = vmatpush1.msra.mxu0 0.0
        %5119 = vmatprep.subr.mxu0 0.0
        %5120 = vmatpush1.msra.mxu0 0.0
        %5121 = vmatprep.subr.mxu0 0.0
        %5122 = vmatpush1.msra.mxu0 0.0
        %5123 = vmatprep.mubr.f32.mxu0 0.0
        %5124 = vmatmul.mubr.f32.gmra.mrb[0].mxu0 %v4806
        %v5125 = vpop.f32.mrb[0].mxu0
        %v5126 = vadd.f32 %v5057, %v5125
        %v5127 = vpop.f32.mrb[0].mxu0
        %5128 = vmatprep.mubr.f32.mxu0 0.0
        %5129 = vmatmul.mubr.f32.gmra.mrb[0].mxu0 %v4809
        %v5130 = vpop.f32.mrb[0].mxu0
        %v5131 = vadd.f32 %v5057, %v5130
        %v5132 = vpop.f32.mrb[0].mxu0
        %5133 = vmatprep.mubr.f32.mxu0 0.0
        %5134 = vmatmul.mubr.f32.gmra.mrb[0].mxu0 %v4812
        %v5135 = vpop.f32.mrb[0].mxu0
        %v5136 = vadd.f32 %v5057, %v5135
        %v5137 = vpop.f32.mrb[0].mxu0
        %5138 = vmatprep.mubr.f32.mxu0 0.0
        %5139 = vmatmul.mubr.f32.gmra.mrb[0].mxu0 %v4815
        %v5140 = vpop.f32.mrb[0].mxu0
        %v5141 = vadd.f32 %v5057, %v5140
        %v5142 = vpop.f32.mrb[0].mxu0
        %5143 = vmatprep.mubr.f32.mxu0 0.0
        %5144 = vmatmul.mubr.f32.gmra.mrb[0].mxu0 %v4818
        %v5145 = vpop.f32.mrb[0].mxu0
        %v5146 = vadd.f32 %v5057, %v5145
        %v5147 = vpop.f32.mrb[0].mxu0
        %5148 = vmatprep.mubr.f32.mxu0 0.0
        %5149 = vmatmul.mubr.f32.gmra.mrb[0].mxu0 %v4821
        %v5150 = vpop.f32.mrb[0].mxu0
        %v5151 = vadd.f32 %v5057, %v5150
        %v5152 = vpop.f32.mrb[0].mxu0
        %5153 = vmatprep.mubr.f32.mxu0 0.0
        %5154 = vmatmul.mubr.f32.gmra.mrb[0].mxu0 %v4824
        %v5155 = vpop.f32.mrb[0].mxu0
        %v5156 = vadd.f32 %v5057, %v5155
        %v5157 = vpop.f32.mrb[0].mxu0
        %5158 = vmatprep.mubr.f32.mxu0 0.0
        %5159 = vmatmul.mubr.f32.gmra.mrb[0].mxu0 %v4827
        %v5160 = vpop.f32.mrb[0].mxu0
        %v5161 = vadd.f32 %v5057, %v5160
        %v5162 = vpop.f32.mrb[0].mxu0
        %5163 = vdwg.mxu0
        %v5164 = vmul.f32 %v4896, 0.70710677
        %v5165 = vmul.f32 %v4901, 0.70710677
        %v5166 = vmul.f32 %v4906, 0.70710677
        %v5167 = vmul.f32 %v4911, 0.70710677
        %v5168 = vmul.f32 %v4916, 0.70710677
        %v5169 = vmul.f32 %v4921, 0.70710677
        %v5170 = vmul.f32 %v4926, 0.70710677
        %v5171 = vmul.f32 %v4931, 0.70710677
        %v5172 = vlaneseq
        %v5173 = vand.u32 %v5172, 127
        %vm5174 = vcmp.ge.s32.totalorder %v5173, 0
        %vm5175 = vcmp.lt.s32.totalorder %v5173, 2
        %vm5176 = vmand %vm5174, %vm5175
        %v5177 = vsel %vm5176, 1.0, 0.0
        %v5178 = vmul.f32 %v5164, %v5177
        %v5179 = vmul.f32 %v5165, %v5177
        %v5180 = vmul.f32 %v5166, %v5177
        %v5181 = vmul.f32 %v5167, %v5177
        %v5182 = vmul.f32 %v5168, %v5177
        %v5183 = vmul.f32 %v5169, %v5177
        %v5184 = vmul.f32 %v5170, %v5177
        %v5185 = vmul.f32 %v5171, %v5177
        %v5187 = vsel %vm3576, %v5178, 0
        %v5190 = vsel %vm3576, %v5179, 0
        %v5193 = vsel %vm3576, %v5180, 0
        %v5196 = vsel %vm3576, %v5181, 0
        %v5199 = vsel %vm3576, %v5182, 0
        %v5202 = vsel %vm3576, %v5183, 0
        %v5205 = vsel %vm3576, %v5184, 0
        %v5208 = vsel %vm3576, %v5185, 0
        %v5211 = vsel %vm3576, %v5011, 0
        %v5214 = vsel %vm3576, %v5016, 0
        %v5217 = vsel %vm3576, %v5021, 0
        %v5220 = vsel %vm3576, %v5026, 0
        %v5223 = vsel %vm3576, %v5031, 0
        %v5226 = vsel %vm3576, %v5036, 0
        %v5229 = vsel %vm3576, %v5041, 0
        %v5232 = vsel %vm3576, %v5046, 0
        %5234 = vmatprep.subr.mxu0 0.0
        %5235 = vmatpush1.xpose.msra.mxu0 %v5211
        %5236 = vmatprep.subr.mxu0 0.0
        %5237 = vmatpush1.xpose.msra.mxu0 %v5214
        %5238 = vmatprep.subr.mxu0 0.0
        %5239 = vmatpush1.xpose.msra.mxu0 %v5217
        %5240 = vmatprep.subr.mxu0 0.0
        %5241 = vmatpush1.xpose.msra.mxu0 %v5220
        %5242 = vmatprep.subr.mxu0 0.0
        %5243 = vmatpush1.xpose.msra.mxu0 %v5223
        %5244 = vmatprep.subr.mxu0 0.0
        %5245 = vmatpush1.xpose.msra.mxu0 %v5226
        %5246 = vmatprep.subr.mxu0 0.0
        %5247 = vmatpush1.xpose.msra.mxu0 %v5229
        %5248 = vmatprep.subr.mxu0 0.0
        %5249 = vmatpush1.xpose.msra.mxu0 %v5232
        %5250 = vmatprep.subr.mxu0 0.0
        %5251 = vmatpush1.xpose.msra.mxu0 0.0
        %5252 = vmatprep.subr.mxu0 0.0
        %5253 = vmatpush1.xpose.msra.mxu0 0.0
        %5254 = vmatprep.subr.mxu0 0.0
        %5255 = vmatpush1.xpose.msra.mxu0 0.0
        %5256 = vmatprep.subr.mxu0 0.0
        %5257 = vmatpush1.xpose.msra.mxu0 0.0
        %5258 = vmatprep.subr.mxu0 0.0
        %5259 = vmatpush1.xpose.msra.mxu0 0.0
        %5260 = vmatprep.subr.mxu0 0.0
        %5261 = vmatpush1.xpose.msra.mxu0 0.0
        %5262 = vmatprep.subr.mxu0 0.0
        %5263 = vmatpush1.xpose.msra.mxu0 0.0
        %5264 = vmatprep.subr.mxu0 0.0
        %5265 = vmatpush1.xpose.msra.mxu0 0.0
        %5266 = vmatprep.subr.mxu0 0.0
        %5267 = vmatpush1.xpose.msra.mxu0 0.0
        %5268 = vmatprep.subr.mxu0 0.0
        %5269 = vmatpush1.xpose.msra.mxu0 0.0
        %5270 = vmatprep.subr.mxu0 0.0
        %5271 = vmatpush1.xpose.msra.mxu0 0.0
        %5272 = vmatprep.subr.mxu0 0.0
        %5273 = vmatpush1.xpose.msra.mxu0 0.0
        %5274 = vmatprep.subr.mxu0 0.0
        %5275 = vmatpush1.xpose.msra.mxu0 0.0
        %5276 = vmatprep.subr.mxu0 0.0
        %5277 = vmatpush1.xpose.msra.mxu0 0.0
        %5278 = vmatprep.subr.mxu0 0.0
        %5279 = vmatpush1.xpose.msra.mxu0 0.0
        %5280 = vmatprep.subr.mxu0 0.0
        %5281 = vmatpush1.xpose.msra.mxu0 0.0
        %5282 = vmatprep.subr.mxu0 0.0
        %5283 = vmatpush1.xpose.msra.mxu0 0.0
        %5284 = vmatprep.subr.mxu0 0.0
        %5285 = vmatpush1.xpose.msra.mxu0 0.0
        %5286 = vmatprep.subr.mxu0 0.0
        %5287 = vmatpush1.xpose.msra.mxu0 0.0
        %5288 = vmatprep.subr.mxu0 0.0
        %5289 = vmatpush1.xpose.msra.mxu0 0.0
        %5290 = vmatprep.subr.mxu0 0.0
        %5291 = vmatpush1.xpose.msra.mxu0 0.0
        %5292 = vmatprep.subr.mxu0 0.0
        %5293 = vmatpush1.xpose.msra.mxu0 0.0
        %5294 = vmatprep.subr.mxu0 0.0
        %5295 = vmatpush1.xpose.msra.mxu0 0.0
        %5296 = vmatprep.subr.mxu0 0.0
        %5297 = vmatpush1.xpose.msra.mxu0 0.0
        %5298 = vmatprep.mubr.f32.mxu0 0.0
        %5299 = vmatmul.mubr.f32.gmra.mrb[0].mxu0 %v5187
        %v5300 = vpop.f32.mrb[0].mxu0
        %v5301 = vadd.f32 0.0, %v5300
        %v5302 = vpop.f32.mrb[0].mxu0
        %5303 = vmatprep.mubr.f32.mxu0 0.0
        %5304 = vmatmul.mubr.f32.gmra.mrb[0].mxu0 %v5190
        %v5305 = vpop.f32.mrb[0].mxu0
        %v5306 = vadd.f32 0.0, %v5305
        %v5307 = vpop.f32.mrb[0].mxu0
        %5308 = vmatprep.mubr.f32.mxu0 0.0
        %5309 = vmatmul.mubr.f32.gmra.mrb[0].mxu0 %v5193
        %v5310 = vpop.f32.mrb[0].mxu0
        %v5311 = vadd.f32 0.0, %v5310
        %v5312 = vpop.f32.mrb[0].mxu0
        %5313 = vmatprep.mubr.f32.mxu0 0.0
        %5314 = vmatmul.mubr.f32.gmra.mrb[0].mxu0 %v5196
        %v5315 = vpop.f32.mrb[0].mxu0
        %v5316 = vadd.f32 0.0, %v5315
        %v5317 = vpop.f32.mrb[0].mxu0
        %5318 = vmatprep.mubr.f32.mxu0 0.0
        %5319 = vmatmul.mubr.f32.gmra.mrb[0].mxu0 %v5199
        %v5320 = vpop.f32.mrb[0].mxu0
        %v5321 = vadd.f32 0.0, %v5320
        %v5322 = vpop.f32.mrb[0].mxu0
        %5323 = vmatprep.mubr.f32.mxu0 0.0
        %5324 = vmatmul.mubr.f32.gmra.mrb[0].mxu0 %v5202
        %v5325 = vpop.f32.mrb[0].mxu0
        %v5326 = vadd.f32 0.0, %v5325
        %v5327 = vpop.f32.mrb[0].mxu0
        %5328 = vmatprep.mubr.f32.mxu0 0.0
        %5329 = vmatmul.mubr.f32.gmra.mrb[0].mxu0 %v5205
        %v5330 = vpop.f32.mrb[0].mxu0
        %v5331 = vadd.f32 0.0, %v5330
        %v5332 = vpop.f32.mrb[0].mxu0
        %5333 = vmatprep.mubr.f32.mxu0 0.0
        %5334 = vmatmul.mubr.f32.gmra.mrb[0].mxu0 %v5208
        %v5335 = vpop.f32.mrb[0].mxu0
        %v5336 = vadd.f32 0.0, %v5335
        %v5337 = vpop.f32.mrb[0].mxu0
        %5338 = vdwg.mxu0
        %vm5339 = vcmask 523264
        %v5340 = vsel %vm5339, %v5301, -inf
        %5341 = vmax.xlane.f32.xlu0 %v5340
        %v5342 = vpop.xlane.xlu0 %5341
        %v5343 = vsel %vm5339, %v5306, -inf
        %5344 = vmax.xlane.f32.xlu0 %v5343
        %v5345 = vpop.xlane.xlu0 %5344
        %v5346 = vsel %vm5339, %v5311, -inf
        %5347 = vmax.xlane.f32.xlu0 %v5346
        %v5348 = vpop.xlane.xlu0 %5347
        %v5349 = vsel %vm5339, %v5316, -inf
        %5350 = vmax.xlane.f32.xlu0 %v5349
        %v5351 = vpop.xlane.xlu0 %5350
        %v5352 = vsel %vm5339, %v5321, -inf
        %5353 = vmax.xlane.f32.xlu0 %v5352
        %v5354 = vpop.xlane.xlu0 %5353
        %v5355 = vsel %vm5339, %v5326, -inf
        %5356 = vmax.xlane.f32.xlu0 %v5355
        %v5357 = vpop.xlane.xlu0 %5356
        %v5358 = vsel %vm5339, %v5331, -inf
        %5359 = vmax.xlane.f32.xlu0 %v5358
        %v5360 = vpop.xlane.xlu0 %5359
        %v5361 = vsel %vm5339, %v5336, -inf
        %5362 = vmax.xlane.f32.xlu0 %v5361
        %v5363 = vpop.xlane.xlu0 %5362
        %v5364 = vsub.f32 %v5301, %v5342
        %v5365 = vsub.f32 %v5306, %v5345
        %v5366 = vsub.f32 %v5311, %v5348
        %v5367 = vsub.f32 %v5316, %v5351
        %v5368 = vsub.f32 %v5321, %v5354
        %v5369 = vsub.f32 %v5326, %v5357
        %v5370 = vsub.f32 %v5331, %v5360
        %v5371 = vsub.f32 %v5336, %v5363
        %v5372 = vmul.f32 %v5364, 1.442695
        %v5373 = vpow.pop %v5372
        %v5374 = vmul.f32 %v5365, 1.442695
        %v5375 = vpow.pop %v5374
        %v5376 = vmul.f32 %v5366, 1.442695
        %v5377 = vpow.pop %v5376
        %v5378 = vmul.f32 %v5367, 1.442695
        %v5379 = vpow.pop %v5378
        %v5380 = vmul.f32 %v5368, 1.442695
        %v5381 = vpow.pop %v5380
        %v5382 = vmul.f32 %v5369, 1.442695
        %v5383 = vpow.pop %v5382
        %v5384 = vmul.f32 %v5370, 1.442695
        %v5385 = vpow.pop %v5384
        %v5386 = vmul.f32 %v5371, 1.442695
        %v5387 = vpow.pop %v5386
        %v5388 = vsel %vm5339, %v5373, 0.0
        %5389 = vadd.xlane.f32.xlu0 %v5388
        %v5390 = vpop.xlane.xlu0 %5389
        %v5391 = vsel %vm5339, %v5375, 0.0
        %5392 = vadd.xlane.f32.xlu0 %v5391
        %v5393 = vpop.xlane.xlu0 %5392
        %v5394 = vsel %vm5339, %v5377, 0.0
        %5395 = vadd.xlane.f32.xlu0 %v5394
        %v5396 = vpop.xlane.xlu0 %5395
        %v5397 = vsel %vm5339, %v5379, 0.0
        %5398 = vadd.xlane.f32.xlu0 %v5397
        %v5399 = vpop.xlane.xlu0 %5398
        %v5400 = vsel %vm5339, %v5381, 0.0
        %5401 = vadd.xlane.f32.xlu0 %v5400
        %v5402 = vpop.xlane.xlu0 %5401
        %v5403 = vsel %vm5339, %v5383, 0.0
        %5404 = vadd.xlane.f32.xlu0 %v5403
        %v5405 = vpop.xlane.xlu0 %5404
        %v5406 = vsel %vm5339, %v5385, 0.0
        %5407 = vadd.xlane.f32.xlu0 %v5406
        %v5408 = vpop.xlane.xlu0 %5407
        %v5409 = vsel %vm5339, %v5387, 0.0
        %5410 = vadd.xlane.f32.xlu0 %v5409
        %v5411 = vpop.xlane.xlu0 %5410
        %v5412 = vrcp.pop %v5390
        %v5413 = vrcp.pop %v5393
        %v5414 = vrcp.pop %v5396
        %v5415 = vrcp.pop %v5399
        %v5416 = vrcp.pop %v5402
        %v5417 = vrcp.pop %v5405
        %v5418 = vrcp.pop %v5408
        %v5419 = vrcp.pop %v5411
        %v5420 = vmul.f32 %v5373, %v5412
        %v5421 = vmul.f32 %v5375, %v5413
        %v5422 = vmul.f32 %v5377, %v5414
        %v5423 = vmul.f32 %v5379, %v5415
        %v5424 = vmul.f32 %v5381, %v5416
        %v5425 = vmul.f32 %v5383, %v5417
        %v5426 = vmul.f32 %v5385, %v5418
        %v5427 = vmul.f32 %v5387, %v5419
        %v5428 = vmul.f32 %v5126, %v5177
        %v5429 = vmul.f32 %v5131, %v5177
        %v5430 = vmul.f32 %v5136, %v5177
        %v5431 = vmul.f32 %v5141, %v5177
        %v5432 = vmul.f32 %v5146, %v5177
        %v5433 = vmul.f32 %v5151, %v5177
        %v5434 = vmul.f32 %v5156, %v5177
        %v5435 = vmul.f32 %v5161, %v5177
        %vm5436 = vcmp.ge.s32.totalorder %v5173, 2
        %vm5437 = vcmp.lt.s32.totalorder %v5173, 4
        %vm5438 = vmand %vm5436, %vm5437
        %v5439 = vsel %vm5438, 1.0, 0.0
        %v5440 = vmul.f32 %v5164, %v5439
        %v5441 = vmul.f32 %v5165, %v5439
        %v5442 = vmul.f32 %v5166, %v5439
        %v5443 = vmul.f32 %v5167, %v5439
        %v5444 = vmul.f32 %v5168, %v5439
        %v5445 = vmul.f32 %v5169, %v5439
        %v5446 = vmul.f32 %v5170, %v5439
        %v5447 = vmul.f32 %v5171, %v5439
        %v5449 = vsel %vm3576, %v5440, 0
        %v5452 = vsel %vm3576, %v5441, 0
        %v5455 = vsel %vm3576, %v5442, 0
        %v5458 = vsel %vm3576, %v5443, 0
        %v5461 = vsel %vm3576, %v5444, 0
        %v5464 = vsel %vm3576, %v5445, 0
        %v5467 = vsel %vm3576, %v5446, 0
        %v5470 = vsel %vm3576, %v5447, 0
        %5472 = vmatprep.subr.mxu0 0.0
        %5473 = vmatpush1.xpose.msra.mxu0 %v5211
        %5474 = vmatprep.subr.mxu0 0.0
        %5475 = vmatpush1.xpose.msra.mxu0 %v5214
        %5476 = vmatprep.subr.mxu0 0.0
        %5477 = vmatpush1.xpose.msra.mxu0 %v5217
        %5478 = vmatprep.subr.mxu0 0.0
        %5479 = vmatpush1.xpose.msra.mxu0 %v5220
        %5480 = vmatprep.subr.mxu0 0.0
        %5481 = vmatpush1.xpose.msra.mxu0 %v5223
        %5482 = vmatprep.subr.mxu0 0.0
        %5483 = vmatpush1.xpose.msra.mxu0 %v5226
        %5484 = vmatprep.subr.mxu0 0.0
        %5485 = vmatpush1.xpose.msra.mxu0 %v5229
        %5486 = vmatprep.subr.mxu0 0.0
        %5487 = vmatpush1.xpose.msra.mxu0 %v5232
        %5488 = vmatprep.subr.mxu0 0.0
        %5489 = vmatpush1.xpose.msra.mxu0 0.0
        %5490 = vmatprep.subr.mxu0 0.0
        %5491 = vmatpush1.xpose.msra.mxu0 0.0
        %5492 = vmatprep.subr.mxu0 0.0
        %5493 = vmatpush1.xpose.msra.mxu0 0.0
        %5494 = vmatprep.subr.mxu0 0.0
        %5495 = vmatpush1.xpose.msra.mxu0 0.0
        %5496 = vmatprep.subr.mxu0 0.0
        %5497 = vmatpush1.xpose.msra.mxu0 0.0
        %5498 = vmatprep.subr.mxu0 0.0
        %5499 = vmatpush1.xpose.msra.mxu0 0.0
        %5500 = vmatprep.subr.mxu0 0.0
        %5501 = vmatpush1.xpose.msra.mxu0 0.0
        %5502 = vmatprep.subr.mxu0 0.0
        %5503 = vmatpush1.xpose.msra.mxu0 0.0
        %5504 = vmatprep.subr.mxu0 0.0
        %5505 = vmatpush1.xpose.msra.mxu0 0.0
        %5506 = vmatprep.subr.mxu0 0.0
        %5507 = vmatpush1.xpose.msra.mxu0 0.0
        %5508 = vmatprep.subr.mxu0 0.0
        %5509 = vmatpush1.xpose.msra.mxu0 0.0
        %5510 = vmatprep.subr.mxu0 0.0
        %5511 = vmatpush1.xpose.msra.mxu0 0.0
        %5512 = vmatprep.subr.mxu0 0.0
        %5513 = vmatpush1.xpose.msra.mxu0 0.0
        %5514 = vmatprep.subr.mxu0 0.0
        %5515 = vmatpush1.xpose.msra.mxu0 0.0
        %5516 = vmatprep.subr.mxu0 0.0
        %5517 = vmatpush1.xpose.msra.mxu0 0.0
        %5518 = vmatprep.subr.mxu0 0.0
        %5519 = vmatpush1.xpose.msra.mxu0 0.0
        %5520 = vmatprep.subr.mxu0 0.0
        %5521 = vmatpush1.xpose.msra.mxu0 0.0
        %5522 = vmatprep.subr.mxu0 0.0
        %5523 = vmatpush1.xpose.msra.mxu0 0.0
        %5524 = vmatprep.subr.mxu0 0.0
        %5525 = vmatpush1.xpose.msra.mxu0 0.0
        %5526 = vmatprep.subr.mxu0 0.0
        %5527 = vmatpush1.xpose.msra.mxu0 0.0
        %5528 = vmatprep.subr.mxu0 0.0
        %5529 = vmatpush1.xpose.msra.mxu0 0.0
        %5530 = vmatprep.subr.mxu0 0.0
        %5531 = vmatpush1.xpose.msra.mxu0 0.0
        %5532 = vmatprep.subr.mxu0 0.0
        %5533 = vmatpush1.xpose.msra.mxu0 0.0
        %5534 = vmatprep.subr.mxu0 0.0
        %5535 = vmatpush1.xpose.msra.mxu0 0.0
        %5536 = vmatprep.mubr.f32.mxu0 0.0
        %5537 = vmatmul.mubr.f32.gmra.mrb[0].mxu0 %v5449
        %v5538 = vpop.f32.mrb[0].mxu0
        %v5539 = vadd.f32 0.0, %v5538
        %v5540 = vpop.f32.mrb[0].mxu0
        %5541 = vmatprep.mubr.f32.mxu0 0.0
        %5542 = vmatmul.mubr.f32.gmra.mrb[0].mxu0 %v5452
        %v5543 = vpop.f32.mrb[0].mxu0
        %v5544 = vadd.f32 0.0, %v5543
        %v5545 = vpop.f32.mrb[0].mxu0
        %5546 = vmatprep.mubr.f32.mxu0 0.0
        %5547 = vmatmul.mubr.f32.gmra.mrb[0].mxu0 %v5455
        %v5548 = vpop.f32.mrb[0].mxu0
        %v5549 = vadd.f32 0.0, %v5548
        %v5550 = vpop.f32.mrb[0].mxu0
        %5551 = vmatprep.mubr.f32.mxu0 0.0
        %5552 = vmatmul.mubr.f32.gmra.mrb[0].mxu0 %v5458
        %v5553 = vpop.f32.mrb[0].mxu0
        %v5554 = vadd.f32 0.0, %v5553
        %v5555 = vpop.f32.mrb[0].mxu0
        %5556 = vmatprep.mubr.f32.mxu0 0.0
        %5557 = vmatmul.mubr.f32.gmra.mrb[0].mxu0 %v5461
        %v5558 = vpop.f32.mrb[0].mxu0
        %v5559 = vadd.f32 0.0, %v5558
        %v5560 = vpop.f32.mrb[0].mxu0
        %5561 = vmatprep.mubr.f32.mxu0 0.0
        %5562 = vmatmul.mubr.f32.gmra.mrb[0].mxu0 %v5464
        %v5563 = vpop.f32.mrb[0].mxu0
        %v5564 = vadd.f32 0.0, %v5563
        %v5565 = vpop.f32.mrb[0].mxu0
        %5566 = vmatprep.mubr.f32.mxu0 0.0
        %5567 = vmatmul.mubr.f32.gmra.mrb[0].mxu0 %v5467
        %v5568 = vpop.f32.mrb[0].mxu0
        %v5569 = vadd.f32 0.0, %v5568
        %v5570 = vpop.f32.mrb[0].mxu0
        %5571 = vmatprep.mubr.f32.mxu0 0.0
        %5572 = vmatmul.mubr.f32.gmra.mrb[0].mxu0 %v5470
        %v5573 = vpop.f32.mrb[0].mxu0
        %v5574 = vadd.f32 0.0, %v5573
        %v5575 = vpop.f32.mrb[0].mxu0
        %5576 = vdwg.mxu0
        %v5577 = vsel %vm5339, %v5539, -inf
        %5578 = vmax.xlane.f32.xlu0 %v5577
        %v5579 = vpop.xlane.xlu0 %5578
        %v5580 = vsel %vm5339, %v5544, -inf
        %5581 = vmax.xlane.f32.xlu0 %v5580
        %v5582 = vpop.xlane.xlu0 %5581
        %v5583 = vsel %vm5339, %v5549, -inf
        %5584 = vmax.xlane.f32.xlu0 %v5583
        %v5585 = vpop.xlane.xlu0 %5584
        %v5586 = vsel %vm5339, %v5554, -inf
        %5587 = vmax.xlane.f32.xlu0 %v5586
        %v5588 = vpop.xlane.xlu0 %5587
        %v5589 = vsel %vm5339, %v5559, -inf
        %5590 = vmax.xlane.f32.xlu0 %v5589
        %v5591 = vpop.xlane.xlu0 %5590
        %v5592 = vsel %vm5339, %v5564, -inf
        %5593 = vmax.xlane.f32.xlu0 %v5592
        %v5594 = vpop.xlane.xlu0 %5593
        %v5595 = vsel %vm5339, %v5569, -inf
        %5596 = vmax.xlane.f32.xlu0 %v5595
        %v5597 = vpop.xlane.xlu0 %5596
        %v5598 = vsel %vm5339, %v5574, -inf
        %5599 = vmax.xlane.f32.xlu0 %v5598
        %v5600 = vpop.xlane.xlu0 %5599
        %v5601 = vsub.f32 %v5539, %v5579
        %v5602 = vsub.f32 %v5544, %v5582
        %v5603 = vsub.f32 %v5549, %v5585
        %v5604 = vsub.f32 %v5554, %v5588
        %v5605 = vsub.f32 %v5559, %v5591
        %v5606 = vsub.f32 %v5564, %v5594
        %v5607 = vsub.f32 %v5569, %v5597
        %v5608 = vsub.f32 %v5574, %v5600
        %v5609 = vmul.f32 %v5601, 1.442695
        %v5610 = vpow.pop %v5609
        %v5611 = vmul.f32 %v5602, 1.442695
        %v5612 = vpow.pop %v5611
        %v5613 = vmul.f32 %v5603, 1.442695
        %v5614 = vpow.pop %v5613
        %v5615 = vmul.f32 %v5604, 1.442695
        %v5616 = vpow.pop %v5615
        %v5617 = vmul.f32 %v5605, 1.442695
        %v5618 = vpow.pop %v5617
        %v5619 = vmul.f32 %v5606, 1.442695
        %v5620 = vpow.pop %v5619
        %v5621 = vmul.f32 %v5607, 1.442695
        %v5622 = vpow.pop %v5621
        %v5623 = vmul.f32 %v5608, 1.442695
        %v5624 = vpow.pop %v5623
        %v5625 = vsel %vm5339, %v5610, 0.0
        %5626 = vadd.xlane.f32.xlu0 %v5625
        %v5627 = vpop.xlane.xlu0 %5626
        %v5628 = vsel %vm5339, %v5612, 0.0
        %5629 = vadd.xlane.f32.xlu0 %v5628
        %v5630 = vpop.xlane.xlu0 %5629
        %v5631 = vsel %vm5339, %v5614, 0.0
        %5632 = vadd.xlane.f32.xlu0 %v5631
        %v5633 = vpop.xlane.xlu0 %5632
        %v5634 = vsel %vm5339, %v5616, 0.0
        %5635 = vadd.xlane.f32.xlu0 %v5634
        %v5636 = vpop.xlane.xlu0 %5635
        %v5637 = vsel %vm5339, %v5618, 0.0
        %5638 = vadd.xlane.f32.xlu0 %v5637
        %v5639 = vpop.xlane.xlu0 %5638
        %v5640 = vsel %vm5339, %v5620, 0.0
        %5641 = vadd.xlane.f32.xlu0 %v5640
        %v5642 = vpop.xlane.xlu0 %5641
        %v5643 = vsel %vm5339, %v5622, 0.0
        %5644 = vadd.xlane.f32.xlu0 %v5643
        %v5645 = vpop.xlane.xlu0 %5644
        %v5646 = vsel %vm5339, %v5624, 0.0
        %5647 = vadd.xlane.f32.xlu0 %v5646
        %v5648 = vpop.xlane.xlu0 %5647
        %v5649 = vrcp.pop %v5627
        %v5650 = vrcp.pop %v5630
        %v5651 = vrcp.pop %v5633
        %v5652 = vrcp.pop %v5636
        %v5653 = vrcp.pop %v5639
        %v5654 = vrcp.pop %v5642
        %v5655 = vrcp.pop %v5645
        %v5656 = vrcp.pop %v5648
        %v5657 = vmul.f32 %v5610, %v5649
        %v5658 = vmul.f32 %v5612, %v5650
        %v5659 = vmul.f32 %v5614, %v5651
        %v5660 = vmul.f32 %v5616, %v5652
        %v5661 = vmul.f32 %v5618, %v5653
        %v5662 = vmul.f32 %v5620, %v5654
        %v5663 = vmul.f32 %v5622, %v5655
        %v5664 = vmul.f32 %v5624, %v5656
        %v5665 = vmul.f32 %v5126, %v5439
        %v5666 = vmul.f32 %v5131, %v5439
        %v5667 = vmul.f32 %v5136, %v5439
        %v5668 = vmul.f32 %v5141, %v5439
        %v5669 = vmul.f32 %v5146, %v5439
        %v5670 = vmul.f32 %v5151, %v5439
        %v5671 = vmul.f32 %v5156, %v5439
        %v5672 = vmul.f32 %v5161, %v5439
        %v5674 = vsel %vm5339, %v5657, 0
        %v5677 = vsel %vm5339, %v5658, 0
        %v5680 = vsel %vm5339, %v5659, 0
        %v5683 = vsel %vm5339, %v5660, 0
        %v5686 = vsel %vm5339, %v5661, 0
        %v5689 = vsel %vm5339, %v5662, 0
        %v5692 = vsel %vm5339, %v5663, 0
        %v5695 = vsel %vm5339, %v5664, 0
        %5697 = vmatprep.subr.mxu0 0.0
        %5698 = vmatpush1.msra.mxu0 %v5665
        %5699 = vmatprep.subr.mxu0 0.0
        %5700 = vmatpush1.msra.mxu0 %v5666
        %5701 = vmatprep.subr.mxu0 0.0
        %5702 = vmatpush1.msra.mxu0 %v5667
        %5703 = vmatprep.subr.mxu0 0.0
        %5704 = vmatpush1.msra.mxu0 %v5668
        %5705 = vmatprep.subr.mxu0 0.0
        %5706 = vmatpush1.msra.mxu0 %v5669
        %5707 = vmatprep.subr.mxu0 0.0
        %5708 = vmatpush1.msra.mxu0 %v5670
        %5709 = vmatprep.subr.mxu0 0.0
        %5710 = vmatpush1.msra.mxu0 %v5671
        %5711 = vmatprep.subr.mxu0 0.0
        %5712 = vmatpush1.msra.mxu0 %v5672
        %5713 = vmatprep.subr.mxu0 0.0
        %5714 = vmatpush1.msra.mxu0 0.0
        %5715 = vmatprep.subr.mxu0 0.0
        %5716 = vmatpush1.msra.mxu0 0.0
        %5717 = vmatprep.subr.mxu0 0.0
        %5718 = vmatpush1.msra.mxu0 0.0
        %5719 = vmatprep.subr.mxu0 0.0
        %5720 = vmatpush1.msra.mxu0 0.0
        %5721 = vmatprep.subr.mxu0 0.0
        %5722 = vmatpush1.msra.mxu0 0.0
        %5723 = vmatprep.subr.mxu0 0.0
        %5724 = vmatpush1.msra.mxu0 0.0
        %5725 = vmatprep.subr.mxu0 0.0
        %5726 = vmatpush1.msra.mxu0 0.0
        %5727 = vmatprep.subr.mxu0 0.0
        %5728 = vmatpush1.msra.mxu0 0.0
        %5729 = vmatprep.subr.mxu0 0.0
        %5730 = vmatpush1.msra.mxu0 0.0
        %5731 = vmatprep.subr.mxu0 0.0
        %5732 = vmatpush1.msra.mxu0 0.0
        %5733 = vmatprep.subr.mxu0 0.0
        %5734 = vmatpush1.msra.mxu0 0.0
        %5735 = vmatprep.subr.mxu0 0.0
        %5736 = vmatpush1.msra.mxu0 0.0
        %5737 = vmatprep.subr.mxu0 0.0
        %5738 = vmatpush1.msra.mxu0 0.0
        %5739 = vmatprep.subr.mxu0 0.0
        %5740 = vmatpush1.msra.mxu0 0.0
        %5741 = vmatprep.subr.mxu0 0.0
        %5742 = vmatpush1.msra.mxu0 0.0
        %5743 = vmatprep.subr.mxu0 0.0
        %5744 = vmatpush1.msra.mxu0 0.0
        %5745 = vmatprep.subr.mxu0 0.0
        %5746 = vmatpush1.msra.mxu0 0.0
        %5747 = vmatprep.subr.mxu0 0.0
        %5748 = vmatpush1.msra.mxu0 0.0
        %5749 = vmatprep.subr.mxu0 0.0
        %5750 = vmatpush1.msra.mxu0 0.0
        %5751 = vmatprep.subr.mxu0 0.0
        %5752 = vmatpush1.msra.mxu0 0.0
        %5753 = vmatprep.subr.mxu0 0.0
        %5754 = vmatpush1.msra.mxu0 0.0
        %5755 = vmatprep.subr.mxu0 0.0
        %5756 = vmatpush1.msra.mxu0 0.0
        %5757 = vmatprep.subr.mxu0 0.0
        %5758 = vmatpush1.msra.mxu0 0.0
        %5759 = vmatprep.subr.mxu0 0.0
        %5760 = vmatpush1.msra.mxu0 0.0
        %5761 = vmatprep.mubr.f32.mxu0 0.0
        %5762 = vmatmul.mubr.f32.gmra.mrb[0].mxu0 %v5674
        %v5763 = vpop.f32.mrb[0].mxu0
        %v5764 = vadd.f32 0.0, %v5763
        %v5765 = vpop.f32.mrb[0].mxu0
        %5766 = vmatprep.mubr.f32.mxu0 0.0
        %5767 = vmatmul.mubr.f32.gmra.mrb[0].mxu0 %v5677
        %v5768 = vpop.f32.mrb[0].mxu0
        %v5769 = vadd.f32 0.0, %v5768
        %v5770 = vpop.f32.mrb[0].mxu0
        %5771 = vmatprep.mubr.f32.mxu0 0.0
        %5772 = vmatmul.mubr.f32.gmra.mrb[0].mxu0 %v5680
        %v5773 = vpop.f32.mrb[0].mxu0
        %v5774 = vadd.f32 0.0, %v5773
        %v5775 = vpop.f32.mrb[0].mxu0
        %5776 = vmatprep.mubr.f32.mxu0 0.0
        %5777 = vmatmul.mubr.f32.gmra.mrb[0].mxu0 %v5683
        %v5778 = vpop.f32.mrb[0].mxu0
        %v5779 = vadd.f32 0.0, %v5778
        %v5780 = vpop.f32.mrb[0].mxu0
        %5781 = vmatprep.mubr.f32.mxu0 0.0
        %5782 = vmatmul.mubr.f32.gmra.mrb[0].mxu0 %v5686
        %v5783 = vpop.f32.mrb[0].mxu0
        %v5784 = vadd.f32 0.0, %v5783
        %v5785 = vpop.f32.mrb[0].mxu0
        %5786 = vmatprep.mubr.f32.mxu0 0.0
        %5787 = vmatmul.mubr.f32.gmra.mrb[0].mxu0 %v5689
        %v5788 = vpop.f32.mrb[0].mxu0
        %v5789 = vadd.f32 0.0, %v5788
        %v5790 = vpop.f32.mrb[0].mxu0
        %5791 = vmatprep.mubr.f32.mxu0 0.0
        %5792 = vmatmul.mubr.f32.gmra.mrb[0].mxu0 %v5692
        %v5793 = vpop.f32.mrb[0].mxu0
        %v5794 = vadd.f32 0.0, %v5793
        %v5795 = vpop.f32.mrb[0].mxu0
        %5796 = vmatprep.mubr.f32.mxu0 0.0
        %5797 = vmatmul.mubr.f32.gmra.mrb[0].mxu0 %v5695
        %v5798 = vpop.f32.mrb[0].mxu0
        %v5799 = vadd.f32 0.0, %v5798
        %v5800 = vpop.f32.mrb[0].mxu0
        %5801 = vdwg.mxu0
        %v5803 = vsel %vm5339, %v5420, 0
        %v5806 = vsel %vm5339, %v5421, 0
        %v5809 = vsel %vm5339, %v5422, 0
        %v5812 = vsel %vm5339, %v5423, 0
        %v5815 = vsel %vm5339, %v5424, 0
        %v5818 = vsel %vm5339, %v5425, 0
        %v5821 = vsel %vm5339, %v5426, 0
        %v5824 = vsel %vm5339, %v5427, 0
        %5826 = vmatprep.subr.mxu0 0.0
        %5827 = vmatpush1.msra.mxu0 %v5428
        %5828 = vmatprep.subr.mxu0 0.0
        %5829 = vmatpush1.msra.mxu0 %v5429
        %5830 = vmatprep.subr.mxu0 0.0
        %5831 = vmatpush1.msra.mxu0 %v5430
        %5832 = vmatprep.subr.mxu0 0.0
        %5833 = vmatpush1.msra.mxu0 %v5431
        %5834 = vmatprep.subr.mxu0 0.0
        %5835 = vmatpush1.msra.mxu0 %v5432
        %5836 = vmatprep.subr.mxu0 0.0
        %5837 = vmatpush1.msra.mxu0 %v5433
        %5838 = vmatprep.subr.mxu0 0.0
        %5839 = vmatpush1.msra.mxu0 %v5434
        %5840 = vmatprep.subr.mxu0 0.0
        %5841 = vmatpush1.msra.mxu0 %v5435
        %5842 = vmatprep.subr.mxu0 0.0
        %5843 = vmatpush1.msra.mxu0 0.0
        %5844 = vmatprep.subr.mxu0 0.0
        %5845 = vmatpush1.msra.mxu0 0.0
        %5846 = vmatprep.subr.mxu0 0.0
        %5847 = vmatpush1.msra.mxu0 0.0
        %5848 = vmatprep.subr.mxu0 0.0
        %5849 = vmatpush1.msra.mxu0 0.0
        %5850 = vmatprep.subr.mxu0 0.0
        %5851 = vmatpush1.msra.mxu0 0.0
        %5852 = vmatprep.subr.mxu0 0.0
        %5853 = vmatpush1.msra.mxu0 0.0
        %5854 = vmatprep.subr.mxu0 0.0
        %5855 = vmatpush1.msra.mxu0 0.0
        %5856 = vmatprep.subr.mxu0 0.0
        %5857 = vmatpush1.msra.mxu0 0.0
        %5858 = vmatprep.subr.mxu0 0.0
        %5859 = vmatpush1.msra.mxu0 0.0
        %5860 = vmatprep.subr.mxu0 0.0
        %5861 = vmatpush1.msra.mxu0 0.0
        %5862 = vmatprep.subr.mxu0 0.0
        %5863 = vmatpush1.msra.mxu0 0.0
        %5864 = vmatprep.subr.mxu0 0.0
        %5865 = vmatpush1.msra.mxu0 0.0
        %5866 = vmatprep.subr.mxu0 0.0
        %5867 = vmatpush1.msra.mxu0 0.0
        %5868 = vmatprep.subr.mxu0 0.0
        %5869 = vmatpush1.msra.mxu0 0.0
        %5870 = vmatprep.subr.mxu0 0.0
        %5871 = vmatpush1.msra.mxu0 0.0
        %5872 = vmatprep.subr.mxu0 0.0
        %5873 = vmatpush1.msra.mxu0 0.0
        %5874 = vmatprep.subr.mxu0 0.0
        %5875 = vmatpush1.msra.mxu0 0.0
        %5876 = vmatprep.subr.mxu0 0.0
        %5877 = vmatpush1.msra.mxu0 0.0
        %5878 = vmatprep.subr.mxu0 0.0
        %5879 = vmatpush1.msra.mxu0 0.0
        %5880 = vmatprep.subr.mxu0 0.0
        %5881 = vmatpush1.msra.mxu0 0.0
        %5882 = vmatprep.subr.mxu0 0.0
        %5883 = vmatpush1.msra.mxu0 0.0
        %5884 = vmatprep.subr.mxu0 0.0
        %5885 = vmatpush1.msra.mxu0 0.0
        %5886 = vmatprep.subr.mxu0 0.0
        %5887 = vmatpush1.msra.mxu0 0.0
        %5888 = vmatprep.subr.mxu0 0.0
        %5889 = vmatpush1.msra.mxu0 0.0
        %5890 = vmatprep.mubr.f32.mxu0 0.0
        %5891 = vmatmul.mubr.f32.gmra.mrb[0].mxu0 %v5803
        %v5892 = vpop.f32.mrb[0].mxu0
        %v5893 = vadd.f32 %v5764, %v5892
        %v5894 = vpop.f32.mrb[0].mxu0
        %5895 = vmatprep.mubr.f32.mxu0 0.0
        %5896 = vmatmul.mubr.f32.gmra.mrb[0].mxu0 %v5806
        %v5897 = vpop.f32.mrb[0].mxu0
        %v5898 = vadd.f32 %v5769, %v5897
        %v5899 = vpop.f32.mrb[0].mxu0
        %5900 = vmatprep.mubr.f32.mxu0 0.0
        %5901 = vmatmul.mubr.f32.gmra.mrb[0].mxu0 %v5809
        %v5902 = vpop.f32.mrb[0].mxu0
        %v5903 = vadd.f32 %v5774, %v5902
        %v5904 = vpop.f32.mrb[0].mxu0
        %5905 = vmatprep.mubr.f32.mxu0 0.0
        %5906 = vmatmul.mubr.f32.gmra.mrb[0].mxu0 %v5812
        %v5907 = vpop.f32.mrb[0].mxu0
        %v5908 = vadd.f32 %v5779, %v5907
        %v5909 = vpop.f32.mrb[0].mxu0
        %5910 = vmatprep.mubr.f32.mxu0 0.0
        %5911 = vmatmul.mubr.f32.gmra.mrb[0].mxu0 %v5815
        %v5912 = vpop.f32.mrb[0].mxu0
        %v5913 = vadd.f32 %v5784, %v5912
        %v5914 = vpop.f32.mrb[0].mxu0
        %5915 = vmatprep.mubr.f32.mxu0 0.0
        %5916 = vmatmul.mubr.f32.gmra.mrb[0].mxu0 %v5818
        %v5917 = vpop.f32.mrb[0].mxu0
        %v5918 = vadd.f32 %v5789, %v5917
        %v5919 = vpop.f32.mrb[0].mxu0
        %5920 = vmatprep.mubr.f32.mxu0 0.0
        %5921 = vmatmul.mubr.f32.gmra.mrb[0].mxu0 %v5821
        %v5922 = vpop.f32.mrb[0].mxu0
        %v5923 = vadd.f32 %v5794, %v5922
        %v5924 = vpop.f32.mrb[0].mxu0
        %5925 = vmatprep.mubr.f32.mxu0 0.0
        %5926 = vmatmul.mubr.f32.gmra.mrb[0].mxu0 %v5824
        %v5927 = vpop.f32.mrb[0].mxu0
        %v5928 = vadd.f32 %v5799, %v5927
        %v5929 = vpop.f32.mrb[0].mxu0
        %5930 = vdwg.mxu0
        %vm5931 = vcmp.ge.s32.totalorder %v5173, 4
        %vm5932 = vcmp.lt.s32.totalorder %v5173, 6
        %vm5933 = vmand %vm5931, %vm5932
        %v5934 = vsel %vm5933, 1.0, 0.0
        %v5935 = vmul.f32 %v5164, %v5934
        %v5936 = vmul.f32 %v5165, %v5934
        %v5937 = vmul.f32 %v5166, %v5934
        %v5938 = vmul.f32 %v5167, %v5934
        %v5939 = vmul.f32 %v5168, %v5934
        %v5940 = vmul.f32 %v5169, %v5934
        %v5941 = vmul.f32 %v5170, %v5934
        %v5942 = vmul.f32 %v5171, %v5934
        %v5944 = vsel %vm3576, %v5935, 0
        %v5947 = vsel %vm3576, %v5936, 0
        %v5950 = vsel %vm3576, %v5937, 0
        %v5953 = vsel %vm3576, %v5938, 0
        %v5956 = vsel %vm3576, %v5939, 0
        %v5959 = vsel %vm3576, %v5940, 0
        %v5962 = vsel %vm3576, %v5941, 0
        %v5965 = vsel %vm3576, %v5942, 0
        %5967 = vmatprep.subr.mxu0 0.0
        %5968 = vmatpush1.xpose.msra.mxu0 %v5211
        %5969 = vmatprep.subr.mxu0 0.0
        %5970 = vmatpush1.xpose.msra.mxu0 %v5214
        %5971 = vmatprep.subr.mxu0 0.0
        %5972 = vmatpush1.xpose.msra.mxu0 %v5217
        %5973 = vmatprep.subr.mxu0 0.0
        %5974 = vmatpush1.xpose.msra.mxu0 %v5220
        %5975 = vmatprep.subr.mxu0 0.0
        %5976 = vmatpush1.xpose.msra.mxu0 %v5223
        %5977 = vmatprep.subr.mxu0 0.0
        %5978 = vmatpush1.xpose.msra.mxu0 %v5226
        %5979 = vmatprep.subr.mxu0 0.0
        %5980 = vmatpush1.xpose.msra.mxu0 %v5229
        %5981 = vmatprep.subr.mxu0 0.0
        %5982 = vmatpush1.xpose.msra.mxu0 %v5232
        %5983 = vmatprep.subr.mxu0 0.0
        %5984 = vmatpush1.xpose.msra.mxu0 0.0
        %5985 = vmatprep.subr.mxu0 0.0
        %5986 = vmatpush1.xpose.msra.mxu0 0.0
        %5987 = vmatprep.subr.mxu0 0.0
        %5988 = vmatpush1.xpose.msra.mxu0 0.0
        %5989 = vmatprep.subr.mxu0 0.0
        %5990 = vmatpush1.xpose.msra.mxu0 0.0
        %5991 = vmatprep.subr.mxu0 0.0
        %5992 = vmatpush1.xpose.msra.mxu0 0.0
        %5993 = vmatprep.subr.mxu0 0.0
        %5994 = vmatpush1.xpose.msra.mxu0 0.0
        %5995 = vmatprep.subr.mxu0 0.0
        %5996 = vmatpush1.xpose.msra.mxu0 0.0
        %5997 = vmatprep.subr.mxu0 0.0
        %5998 = vmatpush1.xpose.msra.mxu0 0.0
        %5999 = vmatprep.subr.mxu0 0.0
        %6000 = vmatpush1.xpose.msra.mxu0 0.0
        %6001 = vmatprep.subr.mxu0 0.0
        %6002 = vmatpush1.xpose.msra.mxu0 0.0
        %6003 = vmatprep.subr.mxu0 0.0
        %6004 = vmatpush1.xpose.msra.mxu0 0.0
        %6005 = vmatprep.subr.mxu0 0.0
        %6006 = vmatpush1.xpose.msra.mxu0 0.0
        %6007 = vmatprep.subr.mxu0 0.0
        %6008 = vmatpush1.xpose.msra.mxu0 0.0
        %6009 = vmatprep.subr.mxu0 0.0
        %6010 = vmatpush1.xpose.msra.mxu0 0.0
        %6011 = vmatprep.subr.mxu0 0.0
        %6012 = vmatpush1.xpose.msra.mxu0 0.0
        %6013 = vmatprep.subr.mxu0 0.0
        %6014 = vmatpush1.xpose.msra.mxu0 0.0
        %6015 = vmatprep.subr.mxu0 0.0
        %6016 = vmatpush1.xpose.msra.mxu0 0.0
        %6017 = vmatprep.subr.mxu0 0.0
        %6018 = vmatpush1.xpose.msra.mxu0 0.0
        %6019 = vmatprep.subr.mxu0 0.0
        %6020 = vmatpush1.xpose.msra.mxu0 0.0
        %6021 = vmatprep.subr.mxu0 0.0
        %6022 = vmatpush1.xpose.msra.mxu0 0.0
        %6023 = vmatprep.subr.mxu0 0.0
        %6024 = vmatpush1.xpose.msra.mxu0 0.0
        %6025 = vmatprep.subr.mxu0 0.0
        %6026 = vmatpush1.xpose.msra.mxu0 0.0
        %6027 = vmatprep.subr.mxu0 0.0
        %6028 = vmatpush1.xpose.msra.mxu0 0.0
        %6029 = vmatprep.subr.mxu0 0.0
        %6030 = vmatpush1.xpose.msra.mxu0 0.0
        %6031 = vmatprep.mubr.f32.mxu0 0.0
        %6032 = vmatmul.mubr.f32.gmra.mrb[0].mxu0 %v5944
        %v6033 = vpop.f32.mrb[0].mxu0
        %v6034 = vadd.f32 0.0, %v6033
        %v6035 = vpop.f32.mrb[0].mxu0
        %6036 = vmatprep.mubr.f32.mxu0 0.0
        %6037 = vmatmul.mubr.f32.gmra.mrb[0].mxu0 %v5947
        %v6038 = vpop.f32.mrb[0].mxu0
        %v6039 = vadd.f32 0.0, %v6038
        %v6040 = vpop.f32.mrb[0].mxu0
        %6041 = vmatprep.mubr.f32.mxu0 0.0
        %6042 = vmatmul.mubr.f32.gmra.mrb[0].mxu0 %v5950
        %v6043 = vpop.f32.mrb[0].mxu0
        %v6044 = vadd.f32 0.0, %v6043
        %v6045 = vpop.f32.mrb[0].mxu0
        %6046 = vmatprep.mubr.f32.mxu0 0.0
        %6047 = vmatmul.mubr.f32.gmra.mrb[0].mxu0 %v5953
        %v6048 = vpop.f32.mrb[0].mxu0
        %v6049 = vadd.f32 0.0, %v6048
        %v6050 = vpop.f32.mrb[0].mxu0
        %6051 = vmatprep.mubr.f32.mxu0 0.0
        %6052 = vmatmul.mubr.f32.gmra.mrb[0].mxu0 %v5956
        %v6053 = vpop.f32.mrb[0].mxu0
        %v6054 = vadd.f32 0.0, %v6053
        %v6055 = vpop.f32.mrb[0].mxu0
        %6056 = vmatprep.mubr.f32.mxu0 0.0
        %6057 = vmatmul.mubr.f32.gmra.mrb[0].mxu0 %v5959
        %v6058 = vpop.f32.mrb[0].mxu0
        %v6059 = vadd.f32 0.0, %v6058
        %v6060 = vpop.f32.mrb[0].mxu0
        %6061 = vmatprep.mubr.f32.mxu0 0.0
        %6062 = vmatmul.mubr.f32.gmra.mrb[0].mxu0 %v5962
        %v6063 = vpop.f32.mrb[0].mxu0
        %v6064 = vadd.f32 0.0, %v6063
        %v6065 = vpop.f32.mrb[0].mxu0
        %6066 = vmatprep.mubr.f32.mxu0 0.0
        %6067 = vmatmul.mubr.f32.gmra.mrb[0].mxu0 %v5965
        %v6068 = vpop.f32.mrb[0].mxu0
        %v6069 = vadd.f32 0.0, %v6068
        %v6070 = vpop.f32.mrb[0].mxu0
        %6071 = vdwg.mxu0
        %v6072 = vsel %vm5339, %v6034, -inf
        %6073 = vmax.xlane.f32.xlu0 %v6072
        %v6074 = vpop.xlane.xlu0 %6073
        %v6075 = vsel %vm5339, %v6039, -inf
        %6076 = vmax.xlane.f32.xlu0 %v6075
        %v6077 = vpop.xlane.xlu0 %6076
        %v6078 = vsel %vm5339, %v6044, -inf
        %6079 = vmax.xlane.f32.xlu0 %v6078
        %v6080 = vpop.xlane.xlu0 %6079
        %v6081 = vsel %vm5339, %v6049, -inf
        %6082 = vmax.xlane.f32.xlu0 %v6081
        %v6083 = vpop.xlane.xlu0 %6082
        %v6084 = vsel %vm5339, %v6054, -inf
        %6085 = vmax.xlane.f32.xlu0 %v6084
        %v6086 = vpop.xlane.xlu0 %6085
        %v6087 = vsel %vm5339, %v6059, -inf
        %6088 = vmax.xlane.f32.xlu0 %v6087
        %v6089 = vpop.xlane.xlu0 %6088
        %v6090 = vsel %vm5339, %v6064, -inf
        %6091 = vmax.xlane.f32.xlu0 %v6090
        %v6092 = vpop.xlane.xlu0 %6091
        %v6093 = vsel %vm5339, %v6069, -inf
        %6094 = vmax.xlane.f32.xlu0 %v6093
        %v6095 = vpop.xlane.xlu0 %6094
        %v6096 = vsub.f32 %v6034, %v6074
        %v6097 = vsub.f32 %v6039, %v6077
        %v6098 = vsub.f32 %v6044, %v6080
        %v6099 = vsub.f32 %v6049, %v6083
        %v6100 = vsub.f32 %v6054, %v6086
        %v6101 = vsub.f32 %v6059, %v6089
        %v6102 = vsub.f32 %v6064, %v6092
        %v6103 = vsub.f32 %v6069, %v6095
        %v6104 = vmul.f32 %v6096, 1.442695
        %v6105 = vpow.pop %v6104
        %v6106 = vmul.f32 %v6097, 1.442695
        %v6107 = vpow.pop %v6106
        %v6108 = vmul.f32 %v6098, 1.442695
        %v6109 = vpow.pop %v6108
        %v6110 = vmul.f32 %v6099, 1.442695
        %v6111 = vpow.pop %v6110
        %v6112 = vmul.f32 %v6100, 1.442695
        %v6113 = vpow.pop %v6112
        %v6114 = vmul.f32 %v6101, 1.442695
        %v6115 = vpow.pop %v6114
        %v6116 = vmul.f32 %v6102, 1.442695
        %v6117 = vpow.pop %v6116
        %v6118 = vmul.f32 %v6103, 1.442695
        %v6119 = vpow.pop %v6118
        %v6120 = vsel %vm5339, %v6105, 0.0
        %6121 = vadd.xlane.f32.xlu0 %v6120
        %v6122 = vpop.xlane.xlu0 %6121
        %v6123 = vsel %vm5339, %v6107, 0.0
        %6124 = vadd.xlane.f32.xlu0 %v6123
        %v6125 = vpop.xlane.xlu0 %6124
        %v6126 = vsel %vm5339, %v6109, 0.0
        %6127 = vadd.xlane.f32.xlu0 %v6126
        %v6128 = vpop.xlane.xlu0 %6127
        %v6129 = vsel %vm5339, %v6111, 0.0
        %6130 = vadd.xlane.f32.xlu0 %v6129
        %v6131 = vpop.xlane.xlu0 %6130
        %v6132 = vsel %vm5339, %v6113, 0.0
        %6133 = vadd.xlane.f32.xlu0 %v6132
        %v6134 = vpop.xlane.xlu0 %6133
        %v6135 = vsel %vm5339, %v6115, 0.0
        %6136 = vadd.xlane.f32.xlu0 %v6135
        %v6137 = vpop.xlane.xlu0 %6136
        %v6138 = vsel %vm5339, %v6117, 0.0
        %6139 = vadd.xlane.f32.xlu0 %v6138
        %v6140 = vpop.xlane.xlu0 %6139
        %v6141 = vsel %vm5339, %v6119, 0.0
        %6142 = vadd.xlane.f32.xlu0 %v6141
        %v6143 = vpop.xlane.xlu0 %6142
        %v6144 = vrcp.pop %v6122
        %v6145 = vrcp.pop %v6125
        %v6146 = vrcp.pop %v6128
        %v6147 = vrcp.pop %v6131
        %v6148 = vrcp.pop %v6134
        %v6149 = vrcp.pop %v6137
        %v6150 = vrcp.pop %v6140
        %v6151 = vrcp.pop %v6143
        %v6152 = vmul.f32 %v6105, %v6144
        %v6153 = vmul.f32 %v6107, %v6145
        %v6154 = vmul.f32 %v6109, %v6146
        %v6155 = vmul.f32 %v6111, %v6147
        %v6156 = vmul.f32 %v6113, %v6148
        %v6157 = vmul.f32 %v6115, %v6149
        %v6158 = vmul.f32 %v6117, %v6150
        %v6159 = vmul.f32 %v6119, %v6151
        %v6160 = vmul.f32 %v5126, %v5934
        %v6161 = vmul.f32 %v5131, %v5934
        %v6162 = vmul.f32 %v5136, %v5934
        %v6163 = vmul.f32 %v5141, %v5934
        %v6164 = vmul.f32 %v5146, %v5934
        %v6165 = vmul.f32 %v5151, %v5934
        %v6166 = vmul.f32 %v5156, %v5934
        %v6167 = vmul.f32 %v5161, %v5934
        %v6169 = vsel %vm5339, %v6152, 0
        %v6172 = vsel %vm5339, %v6153, 0
        %v6175 = vsel %vm5339, %v6154, 0
        %v6178 = vsel %vm5339, %v6155, 0
        %v6181 = vsel %vm5339, %v6156, 0
        %v6184 = vsel %vm5339, %v6157, 0
        %v6187 = vsel %vm5339, %v6158, 0
        %v6190 = vsel %vm5339, %v6159, 0
        %6192 = vmatprep.subr.mxu0 0.0
        %6193 = vmatpush1.msra.mxu0 %v6160
        %6194 = vmatprep.subr.mxu0 0.0
        %6195 = vmatpush1.msra.mxu0 %v6161
        %6196 = vmatprep.subr.mxu0 0.0
        %6197 = vmatpush1.msra.mxu0 %v6162
        %6198 = vmatprep.subr.mxu0 0.0
        %6199 = vmatpush1.msra.mxu0 %v6163
        %6200 = vmatprep.subr.mxu0 0.0
        %6201 = vmatpush1.msra.mxu0 %v6164
        %6202 = vmatprep.subr.mxu0 0.0
        %6203 = vmatpush1.msra.mxu0 %v6165
        %6204 = vmatprep.subr.mxu0 0.0
        %6205 = vmatpush1.msra.mxu0 %v6166
        %6206 = vmatprep.subr.mxu0 0.0
        %6207 = vmatpush1.msra.mxu0 %v6167
        %6208 = vmatprep.subr.mxu0 0.0
        %6209 = vmatpush1.msra.mxu0 0.0
        %6210 = vmatprep.subr.mxu0 0.0
        %6211 = vmatpush1.msra.mxu0 0.0
        %6212 = vmatprep.subr.mxu0 0.0
        %6213 = vmatpush1.msra.mxu0 0.0
        %6214 = vmatprep.subr.mxu0 0.0
        %6215 = vmatpush1.msra.mxu0 0.0
        %6216 = vmatprep.subr.mxu0 0.0
        %6217 = vmatpush1.msra.mxu0 0.0
        %6218 = vmatprep.subr.mxu0 0.0
        %6219 = vmatpush1.msra.mxu0 0.0
        %6220 = vmatprep.subr.mxu0 0.0
        %6221 = vmatpush1.msra.mxu0 0.0
        %6222 = vmatprep.subr.mxu0 0.0
        %6223 = vmatpush1.msra.mxu0 0.0
        %6224 = vmatprep.subr.mxu0 0.0
        %6225 = vmatpush1.msra.mxu0 0.0
        %6226 = vmatprep.subr.mxu0 0.0
        %6227 = vmatpush1.msra.mxu0 0.0
        %6228 = vmatprep.subr.mxu0 0.0
        %6229 = vmatpush1.msra.mxu0 0.0
        %6230 = vmatprep.subr.mxu0 0.0
        %6231 = vmatpush1.msra.mxu0 0.0
        %6232 = vmatprep.subr.mxu0 0.0
        %6233 = vmatpush1.msra.mxu0 0.0
        %6234 = vmatprep.subr.mxu0 0.0
        %6235 = vmatpush1.msra.mxu0 0.0
        %6236 = vmatprep.subr.mxu0 0.0
        %6237 = vmatpush1.msra.mxu0 0.0
        %6238 = vmatprep.subr.mxu0 0.0
        %6239 = vmatpush1.msra.mxu0 0.0
        %6240 = vmatprep.subr.mxu0 0.0
        %6241 = vmatpush1.msra.mxu0 0.0
        %6242 = vmatprep.subr.mxu0 0.0
        %6243 = vmatpush1.msra.mxu0 0.0
        %6244 = vmatprep.subr.mxu0 0.0
        %6245 = vmatpush1.msra.mxu0 0.0
        %6246 = vmatprep.subr.mxu0 0.0
        %6247 = vmatpush1.msra.mxu0 0.0
        %6248 = vmatprep.subr.mxu0 0.0
        %6249 = vmatpush1.msra.mxu0 0.0
        %6250 = vmatprep.subr.mxu0 0.0
        %6251 = vmatpush1.msra.mxu0 0.0
        %6252 = vmatprep.subr.mxu0 0.0
        %6253 = vmatpush1.msra.mxu0 0.0
        %6254 = vmatprep.subr.mxu0 0.0
        %6255 = vmatpush1.msra.mxu0 0.0
        %6256 = vmatprep.mubr.f32.mxu0 0.0
        %6257 = vmatmul.mubr.f32.gmra.mrb[0].mxu0 %v6169
        %v6258 = vpop.f32.mrb[0].mxu0
        %v6259 = vadd.f32 0.0, %v6258
        %v6260 = vpop.f32.mrb[0].mxu0
        %6261 = vmatprep.mubr.f32.mxu0 0.0
        %6262 = vmatmul.mubr.f32.gmra.mrb[0].mxu0 %v6172
        %v6263 = vpop.f32.mrb[0].mxu0
        %v6264 = vadd.f32 0.0, %v6263
        %v6265 = vpop.f32.mrb[0].mxu0
        %6266 = vmatprep.mubr.f32.mxu0 0.0
        %6267 = vmatmul.mubr.f32.gmra.mrb[0].mxu0 %v6175
        %v6268 = vpop.f32.mrb[0].mxu0
        %v6269 = vadd.f32 0.0, %v6268
        %v6270 = vpop.f32.mrb[0].mxu0
        %6271 = vmatprep.mubr.f32.mxu0 0.0
        %6272 = vmatmul.mubr.f32.gmra.mrb[0].mxu0 %v6178
        %v6273 = vpop.f32.mrb[0].mxu0
        %v6274 = vadd.f32 0.0, %v6273
        %v6275 = vpop.f32.mrb[0].mxu0
        %6276 = vmatprep.mubr.f32.mxu0 0.0
        %6277 = vmatmul.mubr.f32.gmra.mrb[0].mxu0 %v6181
        %v6278 = vpop.f32.mrb[0].mxu0
        %v6279 = vadd.f32 0.0, %v6278
        %v6280 = vpop.f32.mrb[0].mxu0
        %6281 = vmatprep.mubr.f32.mxu0 0.0
        %6282 = vmatmul.mubr.f32.gmra.mrb[0].mxu0 %v6184
        %v6283 = vpop.f32.mrb[0].mxu0
        %v6284 = vadd.f32 0.0, %v6283
        %v6285 = vpop.f32.mrb[0].mxu0
        %6286 = vmatprep.mubr.f32.mxu0 0.0
        %6287 = vmatmul.mubr.f32.gmra.mrb[0].mxu0 %v6187
        %v6288 = vpop.f32.mrb[0].mxu0
        %v6289 = vadd.f32 0.0, %v6288
        %v6290 = vpop.f32.mrb[0].mxu0
        %6291 = vmatprep.mubr.f32.mxu0 0.0
        %6292 = vmatmul.mubr.f32.gmra.mrb[0].mxu0 %v6190
        %v6293 = vpop.f32.mrb[0].mxu0
        %v6294 = vadd.f32 0.0, %v6293
        %v6295 = vpop.f32.mrb[0].mxu0
        %6296 = vdwg.mxu0
        %v6297 = vadd.f32 %v5893, %v6259
        %v6298 = vadd.f32 %v5898, %v6264
        %v6299 = vadd.f32 %v5903, %v6269
        %v6300 = vadd.f32 %v5908, %v6274
        %v6301 = vadd.f32 %v5913, %v6279
        %v6302 = vadd.f32 %v5918, %v6284
        %v6303 = vadd.f32 %v5923, %v6289
        %v6304 = vadd.f32 %v5928, %v6294
        %vm6305 = vcmp.ge.s32.totalorder %v5173, 6
        %vm6306 = vcmp.lt.s32.totalorder %v5173, 8
        %vm6307 = vmand %vm6305, %vm6306
        %v6308 = vsel %vm6307, 1.0, 0.0
        %v6309 = vmul.f32 %v5164, %v6308
        %v6310 = vmul.f32 %v5165, %v6308
        %v6311 = vmul.f32 %v5166, %v6308
        %v6312 = vmul.f32 %v5167, %v6308
        %v6313 = vmul.f32 %v5168, %v6308
        %v6314 = vmul.f32 %v5169, %v6308
        %v6315 = vmul.f32 %v5170, %v6308
        %v6316 = vmul.f32 %v5171, %v6308
        %v6318 = vsel %vm3576, %v6309, 0
        %v6321 = vsel %vm3576, %v6310, 0
        %v6324 = vsel %vm3576, %v6311, 0
        %v6327 = vsel %vm3576, %v6312, 0
        %v6330 = vsel %vm3576, %v6313, 0
        %v6333 = vsel %vm3576, %v6314, 0
        %v6336 = vsel %vm3576, %v6315, 0
        %v6339 = vsel %vm3576, %v6316, 0
        %6341 = vmatprep.subr.mxu0 0.0
        %6342 = vmatpush1.xpose.msra.mxu0 %v5211
        %6343 = vmatprep.subr.mxu0 0.0
        %6344 = vmatpush1.xpose.msra.mxu0 %v5214
        %6345 = vmatprep.subr.mxu0 0.0
        %6346 = vmatpush1.xpose.msra.mxu0 %v5217
        %6347 = vmatprep.subr.mxu0 0.0
        %6348 = vmatpush1.xpose.msra.mxu0 %v5220
        %6349 = vmatprep.subr.mxu0 0.0
        %6350 = vmatpush1.xpose.msra.mxu0 %v5223
        %6351 = vmatprep.subr.mxu0 0.0
        %6352 = vmatpush1.xpose.msra.mxu0 %v5226
        %6353 = vmatprep.subr.mxu0 0.0
        %6354 = vmatpush1.xpose.msra.mxu0 %v5229
        %6355 = vmatprep.subr.mxu0 0.0
        %6356 = vmatpush1.xpose.msra.mxu0 %v5232
        %6357 = vmatprep.subr.mxu0 0.0
        %6358 = vmatpush1.xpose.msra.mxu0 0.0
        %6359 = vmatprep.subr.mxu0 0.0
        %6360 = vmatpush1.xpose.msra.mxu0 0.0
        %6361 = vmatprep.subr.mxu0 0.0
        %6362 = vmatpush1.xpose.msra.mxu0 0.0
        %6363 = vmatprep.subr.mxu0 0.0
        %6364 = vmatpush1.xpose.msra.mxu0 0.0
        %6365 = vmatprep.subr.mxu0 0.0
        %6366 = vmatpush1.xpose.msra.mxu0 0.0
        %6367 = vmatprep.subr.mxu0 0.0
        %6368 = vmatpush1.xpose.msra.mxu0 0.0
        %6369 = vmatprep.subr.mxu0 0.0
        %6370 = vmatpush1.xpose.msra.mxu0 0.0
        %6371 = vmatprep.subr.mxu0 0.0
        %6372 = vmatpush1.xpose.msra.mxu0 0.0
        %6373 = vmatprep.subr.mxu0 0.0
        %6374 = vmatpush1.xpose.msra.mxu0 0.0
        %6375 = vmatprep.subr.mxu0 0.0
        %6376 = vmatpush1.xpose.msra.mxu0 0.0
        %6377 = vmatprep.subr.mxu0 0.0
        %6378 = vmatpush1.xpose.msra.mxu0 0.0
        %6379 = vmatprep.subr.mxu0 0.0
        %6380 = vmatpush1.xpose.msra.mxu0 0.0
        %6381 = vmatprep.subr.mxu0 0.0
        %6382 = vmatpush1.xpose.msra.mxu0 0.0
        %6383 = vmatprep.subr.mxu0 0.0
        %6384 = vmatpush1.xpose.msra.mxu0 0.0
        %6385 = vmatprep.subr.mxu0 0.0
        %6386 = vmatpush1.xpose.msra.mxu0 0.0
        %6387 = vmatprep.subr.mxu0 0.0
        %6388 = vmatpush1.xpose.msra.mxu0 0.0
        %6389 = vmatprep.subr.mxu0 0.0
        %6390 = vmatpush1.xpose.msra.mxu0 0.0
        %6391 = vmatprep.subr.mxu0 0.0
        %6392 = vmatpush1.xpose.msra.mxu0 0.0
        %6393 = vmatprep.subr.mxu0 0.0
        %6394 = vmatpush1.xpose.msra.mxu0 0.0
        %6395 = vmatprep.subr.mxu0 0.0
        %6396 = vmatpush1.xpose.msra.mxu0 0.0
        %6397 = vmatprep.subr.mxu0 0.0
        %6398 = vmatpush1.xpose.msra.mxu0 0.0
        %6399 = vmatprep.subr.mxu0 0.0
        %6400 = vmatpush1.xpose.msra.mxu0 0.0
        %6401 = vmatprep.subr.mxu0 0.0
        %6402 = vmatpush1.xpose.msra.mxu0 0.0
        %6403 = vmatprep.subr.mxu0 0.0
        %6404 = vmatpush1.xpose.msra.mxu0 0.0
        %6405 = vmatprep.mubr.f32.mxu0 0.0
        %6406 = vmatmul.mubr.f32.gmra.mrb[0].mxu0 %v6318
        %v6407 = vpop.f32.mrb[0].mxu0
        %v6408 = vadd.f32 0.0, %v6407
        %v6409 = vpop.f32.mrb[0].mxu0
        %6410 = vmatprep.mubr.f32.mxu0 0.0
        %6411 = vmatmul.mubr.f32.gmra.mrb[0].mxu0 %v6321
        %v6412 = vpop.f32.mrb[0].mxu0
        %v6413 = vadd.f32 0.0, %v6412
        %v6414 = vpop.f32.mrb[0].mxu0
        %6415 = vmatprep.mubr.f32.mxu0 0.0
        %6416 = vmatmul.mubr.f32.gmra.mrb[0].mxu0 %v6324
        %v6417 = vpop.f32.mrb[0].mxu0
        %v6418 = vadd.f32 0.0, %v6417
        %v6419 = vpop.f32.mrb[0].mxu0
        %6420 = vmatprep.mubr.f32.mxu0 0.0
        %6421 = vmatmul.mubr.f32.gmra.mrb[0].mxu0 %v6327
        %v6422 = vpop.f32.mrb[0].mxu0
        %v6423 = vadd.f32 0.0, %v6422
        %v6424 = vpop.f32.mrb[0].mxu0
        %6425 = vmatprep.mubr.f32.mxu0 0.0
        %6426 = vmatmul.mubr.f32.gmra.mrb[0].mxu0 %v6330
        %v6427 = vpop.f32.mrb[0].mxu0
        %v6428 = vadd.f32 0.0, %v6427
        %v6429 = vpop.f32.mrb[0].mxu0
        %6430 = vmatprep.mubr.f32.mxu0 0.0
        %6431 = vmatmul.mubr.f32.gmra.mrb[0].mxu0 %v6333
        %v6432 = vpop.f32.mrb[0].mxu0
        %v6433 = vadd.f32 0.0, %v6432
        %v6434 = vpop.f32.mrb[0].mxu0
        %6435 = vmatprep.mubr.f32.mxu0 0.0
        %6436 = vmatmul.mubr.f32.gmra.mrb[0].mxu0 %v6336
        %v6437 = vpop.f32.mrb[0].mxu0
        %v6438 = vadd.f32 0.0, %v6437
        %v6439 = vpop.f32.mrb[0].mxu0
        %6440 = vmatprep.mubr.f32.mxu0 0.0
        %6441 = vmatmul.mubr.f32.gmra.mrb[0].mxu0 %v6339
        %v6442 = vpop.f32.mrb[0].mxu0
        %v6443 = vadd.f32 0.0, %v6442
        %v6444 = vpop.f32.mrb[0].mxu0
        %6445 = vdwg.mxu0
        %v6446 = vsel %vm5339, %v6408, -inf
        %6447 = vmax.xlane.f32.xlu0 %v6446
        %v6448 = vpop.xlane.xlu0 %6447
        %v6449 = vsel %vm5339, %v6413, -inf
        %6450 = vmax.xlane.f32.xlu0 %v6449
        %v6451 = vpop.xlane.xlu0 %6450
        %v6452 = vsel %vm5339, %v6418, -inf
        %6453 = vmax.xlane.f32.xlu0 %v6452
        %v6454 = vpop.xlane.xlu0 %6453
        %v6455 = vsel %vm5339, %v6423, -inf
        %6456 = vmax.xlane.f32.xlu0 %v6455
        %v6457 = vpop.xlane.xlu0 %6456
        %v6458 = vsel %vm5339, %v6428, -inf
        %6459 = vmax.xlane.f32.xlu0 %v6458
        %v6460 = vpop.xlane.xlu0 %6459
        %v6461 = vsel %vm5339, %v6433, -inf
        %6462 = vmax.xlane.f32.xlu0 %v6461
        %v6463 = vpop.xlane.xlu0 %6462
        %v6464 = vsel %vm5339, %v6438, -inf
        %6465 = vmax.xlane.f32.xlu0 %v6464
        %v6466 = vpop.xlane.xlu0 %6465
        %v6467 = vsel %vm5339, %v6443, -inf
        %6468 = vmax.xlane.f32.xlu0 %v6467
        %v6469 = vpop.xlane.xlu0 %6468
        %v6470 = vsub.f32 %v6408, %v6448
        %v6471 = vsub.f32 %v6413, %v6451
        %v6472 = vsub.f32 %v6418, %v6454
        %v6473 = vsub.f32 %v6423, %v6457
        %v6474 = vsub.f32 %v6428, %v6460
        %v6475 = vsub.f32 %v6433, %v6463
        %v6476 = vsub.f32 %v6438, %v6466
        %v6477 = vsub.f32 %v6443, %v6469
        %v6478 = vmul.f32 %v6470, 1.442695
        %v6479 = vpow.pop %v6478
        %v6480 = vmul.f32 %v6471, 1.442695
        %v6481 = vpow.pop %v6480
        %v6482 = vmul.f32 %v6472, 1.442695
        %v6483 = vpow.pop %v6482
        %v6484 = vmul.f32 %v6473, 1.442695
        %v6485 = vpow.pop %v6484
        %v6486 = vmul.f32 %v6474, 1.442695
        %v6487 = vpow.pop %v6486
        %v6488 = vmul.f32 %v6475, 1.442695
        %v6489 = vpow.pop %v6488
        %v6490 = vmul.f32 %v6476, 1.442695
        %v6491 = vpow.pop %v6490
        %v6492 = vmul.f32 %v6477, 1.442695
        %v6493 = vpow.pop %v6492
        %v6494 = vsel %vm5339, %v6479, 0.0
        %6495 = vadd.xlane.f32.xlu0 %v6494
        %v6496 = vpop.xlane.xlu0 %6495
        %v6497 = vsel %vm5339, %v6481, 0.0
        %6498 = vadd.xlane.f32.xlu0 %v6497
        %v6499 = vpop.xlane.xlu0 %6498
        %v6500 = vsel %vm5339, %v6483, 0.0
        %6501 = vadd.xlane.f32.xlu0 %v6500
        %v6502 = vpop.xlane.xlu0 %6501
        %v6503 = vsel %vm5339, %v6485, 0.0
        %6504 = vadd.xlane.f32.xlu0 %v6503
        %v6505 = vpop.xlane.xlu0 %6504
        %v6506 = vsel %vm5339, %v6487, 0.0
        %6507 = vadd.xlane.f32.xlu0 %v6506
        %v6508 = vpop.xlane.xlu0 %6507
        %v6509 = vsel %vm5339, %v6489, 0.0
        %6510 = vadd.xlane.f32.xlu0 %v6509
        %v6511 = vpop.xlane.xlu0 %6510
        %v6512 = vsel %vm5339, %v6491, 0.0
        %6513 = vadd.xlane.f32.xlu0 %v6512
        %v6514 = vpop.xlane.xlu0 %6513
        %v6515 = vsel %vm5339, %v6493, 0.0
        %6516 = vadd.xlane.f32.xlu0 %v6515
        %v6517 = vpop.xlane.xlu0 %6516
        %v6518 = vrcp.pop %v6496
        %v6519 = vrcp.pop %v6499
        %v6520 = vrcp.pop %v6502
        %v6521 = vrcp.pop %v6505
        %v6522 = vrcp.pop %v6508
        %v6523 = vrcp.pop %v6511
        %v6524 = vrcp.pop %v6514
        %v6525 = vrcp.pop %v6517
        %v6526 = vmul.f32 %v6479, %v6518
        %v6527 = vmul.f32 %v6481, %v6519
        %v6528 = vmul.f32 %v6483, %v6520
        %v6529 = vmul.f32 %v6485, %v6521
        %v6530 = vmul.f32 %v6487, %v6522
        %v6531 = vmul.f32 %v6489, %v6523
        %v6532 = vmul.f32 %v6491, %v6524
        %v6533 = vmul.f32 %v6493, %v6525
        %v6534 = vmul.f32 %v5126, %v6308
        %v6535 = vmul.f32 %v5131, %v6308
        %v6536 = vmul.f32 %v5136, %v6308
        %v6537 = vmul.f32 %v5141, %v6308
        %v6538 = vmul.f32 %v5146, %v6308
        %v6539 = vmul.f32 %v5151, %v6308
        %v6540 = vmul.f32 %v5156, %v6308
        %v6541 = vmul.f32 %v5161, %v6308
        %v6543 = vsel %vm5339, %v6526, 0
        %v6546 = vsel %vm5339, %v6527, 0
        %v6549 = vsel %vm5339, %v6528, 0
        %v6552 = vsel %vm5339, %v6529, 0
        %v6555 = vsel %vm5339, %v6530, 0
        %v6558 = vsel %vm5339, %v6531, 0
        %v6561 = vsel %vm5339, %v6532, 0
        %v6564 = vsel %vm5339, %v6533, 0
        %6566 = vmatprep.subr.mxu0 0.0
        %6567 = vmatpush1.msra.mxu0 %v6534
        %6568 = vmatprep.subr.mxu0 0.0
        %6569 = vmatpush1.msra.mxu0 %v6535
        %6570 = vmatprep.subr.mxu0 0.0
        %6571 = vmatpush1.msra.mxu0 %v6536
        %6572 = vmatprep.subr.mxu0 0.0
        %6573 = vmatpush1.msra.mxu0 %v6537
        %6574 = vmatprep.subr.mxu0 0.0
        %6575 = vmatpush1.msra.mxu0 %v6538
        %6576 = vmatprep.subr.mxu0 0.0
        %6577 = vmatpush1.msra.mxu0 %v6539
        %6578 = vmatprep.subr.mxu0 0.0
        %6579 = vmatpush1.msra.mxu0 %v6540
        %6580 = vmatprep.subr.mxu0 0.0
        %6581 = vmatpush1.msra.mxu0 %v6541
        %6582 = vmatprep.subr.mxu0 0.0
        %6583 = vmatpush1.msra.mxu0 0.0
        %6584 = vmatprep.subr.mxu0 0.0
        %6585 = vmatpush1.msra.mxu0 0.0
        %6586 = vmatprep.subr.mxu0 0.0
        %6587 = vmatpush1.msra.mxu0 0.0
        %6588 = vmatprep.subr.mxu0 0.0
        %6589 = vmatpush1.msra.mxu0 0.0
        %6590 = vmatprep.subr.mxu0 0.0
        %6591 = vmatpush1.msra.mxu0 0.0
        %6592 = vmatprep.subr.mxu0 0.0
        %6593 = vmatpush1.msra.mxu0 0.0
        %6594 = vmatprep.subr.mxu0 0.0
        %6595 = vmatpush1.msra.mxu0 0.0
        %6596 = vmatprep.subr.mxu0 0.0
        %6597 = vmatpush1.msra.mxu0 0.0
        %6598 = vmatprep.subr.mxu0 0.0
        %6599 = vmatpush1.msra.mxu0 0.0
        %6600 = vmatprep.subr.mxu0 0.0
        %6601 = vmatpush1.msra.mxu0 0.0
        %6602 = vmatprep.subr.mxu0 0.0
        %6603 = vmatpush1.msra.mxu0 0.0
        %6604 = vmatprep.subr.mxu0 0.0
        %6605 = vmatpush1.msra.mxu0 0.0
        %6606 = vmatprep.subr.mxu0 0.0
        %6607 = vmatpush1.msra.mxu0 0.0
        %6608 = vmatprep.subr.mxu0 0.0
        %6609 = vmatpush1.msra.mxu0 0.0
        %6610 = vmatprep.subr.mxu0 0.0
        %6611 = vmatpush1.msra.mxu0 0.0
        %6612 = vmatprep.subr.mxu0 0.0
        %6613 = vmatpush1.msra.mxu0 0.0
        %6614 = vmatprep.subr.mxu0 0.0
        %6615 = vmatpush1.msra.mxu0 0.0
        %6616 = vmatprep.subr.mxu0 0.0
        %6617 = vmatpush1.msra.mxu0 0.0
        %6618 = vmatprep.subr.mxu0 0.0
        %6619 = vmatpush1.msra.mxu0 0.0
        %6620 = vmatprep.subr.mxu0 0.0
        %6621 = vmatpush1.msra.mxu0 0.0
        %6622 = vmatprep.subr.mxu0 0.0
        %6623 = vmatpush1.msra.mxu0 0.0
        %6624 = vmatprep.subr.mxu0 0.0
        %6625 = vmatpush1.msra.mxu0 0.0
        %6626 = vmatprep.subr.mxu0 0.0
        %6627 = vmatpush1.msra.mxu0 0.0
        %6628 = vmatprep.subr.mxu0 0.0
        %6629 = vmatpush1.msra.mxu0 0.0
        %6630 = vmatprep.mubr.f32.mxu0 0.0
        %6631 = vmatmul.mubr.f32.gmra.mrb[0].mxu0 %v6543
        %v6632 = vpop.f32.mrb[0].mxu0
        %v6633 = vadd.f32 0.0, %v6632
        %v6634 = vpop.f32.mrb[0].mxu0
        %6635 = vmatprep.mubr.f32.mxu0 0.0
        %6636 = vmatmul.mubr.f32.gmra.mrb[0].mxu0 %v6546
        %v6637 = vpop.f32.mrb[0].mxu0
        %v6638 = vadd.f32 0.0, %v6637
        %v6639 = vpop.f32.mrb[0].mxu0
        %6640 = vmatprep.mubr.f32.mxu0 0.0
        %6641 = vmatmul.mubr.f32.gmra.mrb[0].mxu0 %v6549
        %v6642 = vpop.f32.mrb[0].mxu0
        %v6643 = vadd.f32 0.0, %v6642
        %v6644 = vpop.f32.mrb[0].mxu0
        %6645 = vmatprep.mubr.f32.mxu0 0.0
        %6646 = vmatmul.mubr.f32.gmra.mrb[0].mxu0 %v6552
        %v6647 = vpop.f32.mrb[0].mxu0
        %v6648 = vadd.f32 0.0, %v6647
        %v6649 = vpop.f32.mrb[0].mxu0
        %6650 = vmatprep.mubr.f32.mxu0 0.0
        %6651 = vmatmul.mubr.f32.gmra.mrb[0].mxu0 %v6555
        %v6652 = vpop.f32.mrb[0].mxu0
        %v6653 = vadd.f32 0.0, %v6652
        %v6654 = vpop.f32.mrb[0].mxu0
        %6655 = vmatprep.mubr.f32.mxu0 0.0
        %6656 = vmatmul.mubr.f32.gmra.mrb[0].mxu0 %v6558
        %v6657 = vpop.f32.mrb[0].mxu0
        %v6658 = vadd.f32 0.0, %v6657
        %v6659 = vpop.f32.mrb[0].mxu0
        %6660 = vmatprep.mubr.f32.mxu0 0.0
        %6661 = vmatmul.mubr.f32.gmra.mrb[0].mxu0 %v6561
        %v6662 = vpop.f32.mrb[0].mxu0
        %v6663 = vadd.f32 0.0, %v6662
        %v6664 = vpop.f32.mrb[0].mxu0
        %6665 = vmatprep.mubr.f32.mxu0 0.0
        %6666 = vmatmul.mubr.f32.gmra.mrb[0].mxu0 %v6564
        %v6667 = vpop.f32.mrb[0].mxu0
        %v6668 = vadd.f32 0.0, %v6667
        %v6669 = vpop.f32.mrb[0].mxu0
        %6670 = vdwg.mxu0
        %v6671 = vadd.f32 %v6297, %v6633
        %v6672 = vadd.f32 %v6298, %v6638
        %v6673 = vadd.f32 %v6299, %v6643
        %v6674 = vadd.f32 %v6300, %v6648
        %v6675 = vadd.f32 %v6301, %v6653
        %v6676 = vadd.f32 %v6302, %v6658
        %v6677 = vadd.f32 %v6303, %v6663
        %v6678 = vadd.f32 %v6304, %v6668
        %v6679 = vld [vmem:[%s17] sm:$0xff]
        %v6680 = vld [vmem:[%s18] sm:$0x1]
        %v6682 = vlaneseq
        %v6683 = vshrl.u32 %v6682, 7
        %v6684 = vsub.s32 0, %v6683
        %v6685 = vrot.slane %v6680, %v6684
        %v6688 = vsel %vm3576, %v6671, 0
        %v6691 = vsel %vm3576, %v6672, 0
        %v6694 = vsel %vm3576, %v6673, 0
        %v6697 = vsel %vm3576, %v6674, 0
        %v6700 = vsel %vm3576, %v6675, 0
        %v6703 = vsel %vm3576, %v6676, 0
        %v6706 = vsel %vm3576, %v6677, 0
        %v6709 = vsel %vm3576, %v6678, 0
        %6711 = vmatprep.subr.mxu0 0.0
        %6712 = vmatpush1.msra.mxu0 %v6679
        %6713 = vmatprep.subr.mxu0 0.0
        %6714 = vmatpush1.msra.mxu0 0.0
        %6715 = vmatprep.subr.mxu0 0.0
        %6716 = vmatpush1.msra.mxu0 0.0
        %6717 = vmatprep.subr.mxu0 0.0
        %6718 = vmatpush1.msra.mxu0 0.0
        %6719 = vmatprep.subr.mxu0 0.0
        %6720 = vmatpush1.msra.mxu0 0.0
        %6721 = vmatprep.subr.mxu0 0.0
        %6722 = vmatpush1.msra.mxu0 0.0
        %6723 = vmatprep.subr.mxu0 0.0
        %6724 = vmatpush1.msra.mxu0 0.0
        %6725 = vmatprep.subr.mxu0 0.0
        %6726 = vmatpush1.msra.mxu0 0.0
        %6727 = vmatprep.subr.mxu0 0.0
        %6728 = vmatpush1.msra.mxu0 0.0
        %6729 = vmatprep.subr.mxu0 0.0
        %6730 = vmatpush1.msra.mxu0 0.0
        %6731 = vmatprep.subr.mxu0 0.0
        %6732 = vmatpush1.msra.mxu0 0.0
        %6733 = vmatprep.subr.mxu0 0.0
        %6734 = vmatpush1.msra.mxu0 0.0
        %6735 = vmatprep.subr.mxu0 0.0
        %6736 = vmatpush1.msra.mxu0 0.0
        %6737 = vmatprep.subr.mxu0 0.0
        %6738 = vmatpush1.msra.mxu0 0.0
        %6739 = vmatprep.subr.mxu0 0.0
        %6740 = vmatpush1.msra.mxu0 0.0
        %6741 = vmatprep.subr.mxu0 0.0
        %6742 = vmatpush1.msra.mxu0 0.0
        %6743 = vmatprep.subr.mxu0 0.0
        %6744 = vmatpush1.msra.mxu0 0.0
        %6745 = vmatprep.subr.mxu0 0.0
        %6746 = vmatpush1.msra.mxu0 0.0
        %6747 = vmatprep.subr.mxu0 0.0
        %6748 = vmatpush1.msra.mxu0 0.0
        %6749 = vmatprep.subr.mxu0 0.0
        %6750 = vmatpush1.msra.mxu0 0.0
        %6751 = vmatprep.subr.mxu0 0.0
        %6752 = vmatpush1.msra.mxu0 0.0
        %6753 = vmatprep.subr.mxu0 0.0
        %6754 = vmatpush1.msra.mxu0 0.0
        %6755 = vmatprep.subr.mxu0 0.0
        %6756 = vmatpush1.msra.mxu0 0.0
        %6757 = vmatprep.subr.mxu0 0.0
        %6758 = vmatpush1.msra.mxu0 0.0
        %6759 = vmatprep.subr.mxu0 0.0
        %6760 = vmatpush1.msra.mxu0 0.0
        %6761 = vmatprep.subr.mxu0 0.0
        %6762 = vmatpush1.msra.mxu0 0.0
        %6763 = vmatprep.subr.mxu0 0.0
        %6764 = vmatpush1.msra.mxu0 0.0
        %6765 = vmatprep.subr.mxu0 0.0
        %6766 = vmatpush1.msra.mxu0 0.0
        %6767 = vmatprep.subr.mxu0 0.0
        %6768 = vmatpush1.msra.mxu0 0.0
        %6769 = vmatprep.subr.mxu0 0.0
        %6770 = vmatpush1.msra.mxu0 0.0
        %6771 = vmatprep.subr.mxu0 0.0
        %6772 = vmatpush1.msra.mxu0 0.0
        %6773 = vmatprep.subr.mxu0 0.0
        %6774 = vmatpush1.msra.mxu0 0.0
        %6775 = vmatprep.mubr.f32.mxu0 0.0
        %6776 = vmatmul.mubr.f32.gmra.mrb[0].mxu0 %v6688
        %v6777 = vpop.f32.mrb[0].mxu0
        %v6778 = vadd.f32 %v6685, %v6777
        %v6779 = vpop.f32.mrb[0].mxu0
        %6780 = vmatprep.mubr.f32.mxu0 0.0
        %6781 = vmatmul.mubr.f32.gmra.mrb[0].mxu0 %v6691
        %v6782 = vpop.f32.mrb[0].mxu0
        %v6783 = vadd.f32 %v6685, %v6782
        %v6784 = vpop.f32.mrb[0].mxu0
        %6785 = vmatprep.mubr.f32.mxu0 0.0
        %6786 = vmatmul.mubr.f32.gmra.mrb[0].mxu0 %v6694
        %v6787 = vpop.f32.mrb[0].mxu0
        %v6788 = vadd.f32 %v6685, %v6787
        %v6789 = vpop.f32.mrb[0].mxu0
        %6790 = vmatprep.mubr.f32.mxu0 0.0
        %6791 = vmatmul.mubr.f32.gmra.mrb[0].mxu0 %v6697
        %v6792 = vpop.f32.mrb[0].mxu0
        %v6793 = vadd.f32 %v6685, %v6792
        %v6794 = vpop.f32.mrb[0].mxu0
        %6795 = vmatprep.mubr.f32.mxu0 0.0
        %6796 = vmatmul.mubr.f32.gmra.mrb[0].mxu0 %v6700
        %v6797 = vpop.f32.mrb[0].mxu0
        %v6798 = vadd.f32 %v6685, %v6797
        %v6799 = vpop.f32.mrb[0].mxu0
        %6800 = vmatprep.mubr.f32.mxu0 0.0
        %6801 = vmatmul.mubr.f32.gmra.mrb[0].mxu0 %v6703
        %v6802 = vpop.f32.mrb[0].mxu0
        %v6803 = vadd.f32 %v6685, %v6802
        %v6804 = vpop.f32.mrb[0].mxu0
        %6805 = vmatprep.mubr.f32.mxu0 0.0
        %6806 = vmatmul.mubr.f32.gmra.mrb[0].mxu0 %v6706
        %v6807 = vpop.f32.mrb[0].mxu0
        %v6808 = vadd.f32 %v6685, %v6807
        %v6809 = vpop.f32.mrb[0].mxu0
        %6810 = vmatprep.mubr.f32.mxu0 0.0
        %6811 = vmatmul.mubr.f32.gmra.mrb[0].mxu0 %v6709
        %v6812 = vpop.f32.mrb[0].mxu0
        %v6813 = vadd.f32 %v6685, %v6812
        %v6814 = vpop.f32.mrb[0].mxu0
        %6815 = vdwg.mxu0
        %v6816 = vadd.f32 %v6778, %v4623
        %v6817 = vadd.f32 %v6783, %v4628
        %v6818 = vadd.f32 %v6788, %v4633
        %v6819 = vadd.f32 %v6793, %v4638
        %v6820 = vadd.f32 %v6798, %v4643
        %v6821 = vadd.f32 %v6803, %v4648
        %v6822 = vadd.f32 %v6808, %v4653
        %v6823 = vadd.f32 %v6813, %v4658
        %v6824 = vld [vmem:[%s19] sm:$0x1]
        %s6825 = scalar_lea.vmem %s19, 1
        %v6826 = vld [vmem:[%s6825] sm:$0x1]
        %v6827 = vsel %vm3576, %v6816, 0.0
        %6828 = vadd.xlane.f32.xlu0 %v6827
        %v6829 = vpop.xlane.xlu0 %6828
        %v6830 = vsel %vm3576, %v6817, 0.0
        %6831 = vadd.xlane.f32.xlu0 %v6830
        %v6832 = vpop.xlane.xlu0 %6831
        %v6833 = vsel %vm3576, %v6818, 0.0
        %6834 = vadd.xlane.f32.xlu0 %v6833
        %v6835 = vpop.xlane.xlu0 %6834
        %v6836 = vsel %vm3576, %v6819, 0.0
        %6837 = vadd.xlane.f32.xlu0 %v6836
        %v6838 = vpop.xlane.xlu0 %6837
        %v6839 = vsel %vm3576, %v6820, 0.0
        %6840 = vadd.xlane.f32.xlu0 %v6839
        %v6841 = vpop.xlane.xlu0 %6840
        %v6842 = vsel %vm3576, %v6821, 0.0
        %6843 = vadd.xlane.f32.xlu0 %v6842
        %v6844 = vpop.xlane.xlu0 %6843
        %v6845 = vsel %vm3576, %v6822, 0.0
        %6846 = vadd.xlane.f32.xlu0 %v6845
        %v6847 = vpop.xlane.xlu0 %6846
        %v6848 = vsel %vm3576, %v6823, 0.0
        %6849 = vadd.xlane.f32.xlu0 %v6848
        %v6850 = vpop.xlane.xlu0 %6849
        %v6851 = vmul.f32 %v6829, %v4688
        %v6852 = vmul.f32 %v6832, %v4688
        %v6853 = vmul.f32 %v6835, %v4688
        %v6854 = vmul.f32 %v6838, %v4688
        %v6855 = vmul.f32 %v6841, %v4688
        %v6856 = vmul.f32 %v6844, %v4688
        %v6857 = vmul.f32 %v6847, %v4688
        %v6858 = vmul.f32 %v6850, %v4688
        %v6859 = vsub.f32 %v6816, %v6851
        %v6860 = vsub.f32 %v6817, %v6852
        %v6861 = vsub.f32 %v6818, %v6853
        %v6862 = vsub.f32 %v6819, %v6854
        %v6863 = vsub.f32 %v6820, %v6855
        %v6864 = vsub.f32 %v6821, %v6856
        %v6865 = vsub.f32 %v6822, %v6857
        %v6866 = vsub.f32 %v6823, %v6858
        %v6867 = vmul.f32 %v6859, %v6859
        %v6868 = vmul.f32 %v6860, %v6860
        %v6869 = vmul.f32 %v6861, %v6861
        %v6870 = vmul.f32 %v6862, %v6862
        %v6871 = vmul.f32 %v6863, %v6863
        %v6872 = vmul.f32 %v6864, %v6864
        %v6873 = vmul.f32 %v6865, %v6865
        %v6874 = vmul.f32 %v6866, %v6866
        %v6875 = vsel %vm3576, %v6867, 0.0
        %6876 = vadd.xlane.f32.xlu0 %v6875
        %v6877 = vpop.xlane.xlu0 %6876
        %v6878 = vsel %vm3576, %v6868, 0.0
        %6879 = vadd.xlane.f32.xlu0 %v6878
        %v6880 = vpop.xlane.xlu0 %6879
        %v6881 = vsel %vm3576, %v6869, 0.0
        %6882 = vadd.xlane.f32.xlu0 %v6881
        %v6883 = vpop.xlane.xlu0 %6882
        %v6884 = vsel %vm3576, %v6870, 0.0
        %6885 = vadd.xlane.f32.xlu0 %v6884
        %v6886 = vpop.xlane.xlu0 %6885
        %v6887 = vsel %vm3576, %v6871, 0.0
        %6888 = vadd.xlane.f32.xlu0 %v6887
        %v6889 = vpop.xlane.xlu0 %6888
        %v6890 = vsel %vm3576, %v6872, 0.0
        %6891 = vadd.xlane.f32.xlu0 %v6890
        %v6892 = vpop.xlane.xlu0 %6891
        %v6893 = vsel %vm3576, %v6873, 0.0
        %6894 = vadd.xlane.f32.xlu0 %v6893
        %v6895 = vpop.xlane.xlu0 %6894
        %v6896 = vsel %vm3576, %v6874, 0.0
        %6897 = vadd.xlane.f32.xlu0 %v6896
        %v6898 = vpop.xlane.xlu0 %6897
        %v6899 = vmul.f32 %v6877, %v4688
        %v6900 = vmul.f32 %v6880, %v4688
        %v6901 = vmul.f32 %v6883, %v4688
        %v6902 = vmul.f32 %v6886, %v4688
        %v6903 = vmul.f32 %v6889, %v4688
        %v6904 = vmul.f32 %v6892, %v4688
        %v6905 = vmul.f32 %v6895, %v4688
        %v6906 = vmul.f32 %v6898, %v4688
        %v6907 = vadd.f32 %v6899, 1e-05
        %v6908 = vadd.f32 %v6900, 1e-05
        %v6909 = vadd.f32 %v6901, 1e-05
        %v6910 = vadd.f32 %v6902, 1e-05
        %v6911 = vadd.f32 %v6903, 1e-05
        %v6912 = vadd.f32 %v6904, 1e-05
        %v6913 = vadd.f32 %v6905, 1e-05
        %v6914 = vadd.f32 %v6906, 1e-05
        %v6915 = vrsqrt.pop %v6907
        %v6916 = vrsqrt.pop %v6908
        %v6917 = vrsqrt.pop %v6909
        %v6918 = vrsqrt.pop %v6910
        %v6919 = vrsqrt.pop %v6911
        %v6920 = vrsqrt.pop %v6912
        %v6921 = vrsqrt.pop %v6913
        %v6922 = vrsqrt.pop %v6914
        %v6923 = vmul.f32 %v6859, %v6915
        %v6924 = vmul.f32 %v6860, %v6916
        %v6925 = vmul.f32 %v6861, %v6917
        %v6926 = vmul.f32 %v6862, %v6918
        %v6927 = vmul.f32 %v6863, %v6919
        %v6928 = vmul.f32 %v6864, %v6920
        %v6929 = vmul.f32 %v6865, %v6921
        %v6930 = vmul.f32 %v6866, %v6922
        %v6932 = vlaneseq
        %v6933 = vshrl.u32 %v6932, 7
        %v6934 = vsub.s32 0, %v6933
        %v6935 = vrot.slane %v6824, %v6934
        %v6937 = vmul.f32 %v6923, %v6935
        %v6938 = vmul.f32 %v6924, %v6935
        %v6939 = vmul.f32 %v6925, %v6935
        %v6940 = vmul.f32 %v6926, %v6935
        %v6941 = vmul.f32 %v6927, %v6935
        %v6942 = vmul.f32 %v6928, %v6935
        %v6943 = vmul.f32 %v6929, %v6935
        %v6944 = vmul.f32 %v6930, %v6935
        %v6946 = vlaneseq
        %v6947 = vshrl.u32 %v6946, 7
        %v6948 = vsub.s32 0, %v6947
        %v6949 = vrot.slane %v6826, %v6948
        %v6951 = vadd.f32 %v6937, %v6949
        %v6952 = vadd.f32 %v6938, %v6949
        %v6953 = vadd.f32 %v6939, %v6949
        %v6954 = vadd.f32 %v6940, %v6949
        %v6955 = vadd.f32 %v6941, %v6949
        %v6956 = vadd.f32 %v6942, %v6949
        %v6957 = vadd.f32 %v6943, %v6949
        %v6958 = vadd.f32 %v6944, %v6949
        %v6959 = vld [vmem:[%s20] sm:$0xff]
        %v6960 = vld [vmem:[%s21] sm:$0x1]
        %v6962 = vlaneseq
        %v6963 = vshrl.u32 %v6962, 7
        %v6964 = vsub.s32 0, %v6963
        %v6965 = vrot.slane %v6960, %v6964
        %v6968 = vsel %vm3576, %v6951, 0
        %v6971 = vsel %vm3576, %v6952, 0
        %v6974 = vsel %vm3576, %v6953, 0
        %v6977 = vsel %vm3576, %v6954, 0
        %v6980 = vsel %vm3576, %v6955, 0
        %v6983 = vsel %vm3576, %v6956, 0
        %v6986 = vsel %vm3576, %v6957, 0
        %v6989 = vsel %vm3576, %v6958, 0
        %6991 = vmatprep.subr.mxu0 0.0
        %6992 = vmatpush1.msra.mxu0 %v6959
        %6993 = vmatprep.subr.mxu0 0.0
        %6994 = vmatpush1.msra.mxu0 0.0
        %6995 = vmatprep.subr.mxu0 0.0
        %6996 = vmatpush1.msra.mxu0 0.0
        %6997 = vmatprep.subr.mxu0 0.0
        %6998 = vmatpush1.msra.mxu0 0.0
        %6999 = vmatprep.subr.mxu0 0.0
        %7000 = vmatpush1.msra.mxu0 0.0
        %7001 = vmatprep.subr.mxu0 0.0
        %7002 = vmatpush1.msra.mxu0 0.0
        %7003 = vmatprep.subr.mxu0 0.0
        %7004 = vmatpush1.msra.mxu0 0.0
        %7005 = vmatprep.subr.mxu0 0.0
        %7006 = vmatpush1.msra.mxu0 0.0
        %7007 = vmatprep.subr.mxu0 0.0
        %7008 = vmatpush1.msra.mxu0 0.0
        %7009 = vmatprep.subr.mxu0 0.0
        %7010 = vmatpush1.msra.mxu0 0.0
        %7011 = vmatprep.subr.mxu0 0.0
        %7012 = vmatpush1.msra.mxu0 0.0
        %7013 = vmatprep.subr.mxu0 0.0
        %7014 = vmatpush1.msra.mxu0 0.0
        %7015 = vmatprep.subr.mxu0 0.0
        %7016 = vmatpush1.msra.mxu0 0.0
        %7017 = vmatprep.subr.mxu0 0.0
        %7018 = vmatpush1.msra.mxu0 0.0
        %7019 = vmatprep.subr.mxu0 0.0
        %7020 = vmatpush1.msra.mxu0 0.0
        %7021 = vmatprep.subr.mxu0 0.0
        %7022 = vmatpush1.msra.mxu0 0.0
        %7023 = vmatprep.subr.mxu0 0.0
        %7024 = vmatpush1.msra.mxu0 0.0
        %7025 = vmatprep.subr.mxu0 0.0
        %7026 = vmatpush1.msra.mxu0 0.0
        %7027 = vmatprep.subr.mxu0 0.0
        %7028 = vmatpush1.msra.mxu0 0.0
        %7029 = vmatprep.subr.mxu0 0.0
        %7030 = vmatpush1.msra.mxu0 0.0
        %7031 = vmatprep.subr.mxu0 0.0
        %7032 = vmatpush1.msra.mxu0 0.0
        %7033 = vmatprep.subr.mxu0 0.0
        %7034 = vmatpush1.msra.mxu0 0.0
        %7035 = vmatprep.subr.mxu0 0.0
        %7036 = vmatpush1.msra.mxu0 0.0
        %7037 = vmatprep.subr.mxu0 0.0
        %7038 = vmatpush1.msra.mxu0 0.0
        %7039 = vmatprep.subr.mxu0 0.0
        %7040 = vmatpush1.msra.mxu0 0.0
        %7041 = vmatprep.subr.mxu0 0.0
        %7042 = vmatpush1.msra.mxu0 0.0
        %7043 = vmatprep.subr.mxu0 0.0
        %7044 = vmatpush1.msra.mxu0 0.0
        %7045 = vmatprep.subr.mxu0 0.0
        %7046 = vmatpush1.msra.mxu0 0.0
        %7047 = vmatprep.subr.mxu0 0.0
        %7048 = vmatpush1.msra.mxu0 0.0
        %7049 = vmatprep.subr.mxu0 0.0
        %7050 = vmatpush1.msra.mxu0 0.0
        %7051 = vmatprep.subr.mxu0 0.0
        %7052 = vmatpush1.msra.mxu0 0.0
        %7053 = vmatprep.subr.mxu0 0.0
        %7054 = vmatpush1.msra.mxu0 0.0
        %7055 = vmatprep.mubr.f32.mxu0 0.0
        %7056 = vmatmul.mubr.f32.gmra.mrb[0].mxu0 %v6968
        %v7057 = vpop.f32.mrb[0].mxu0
        %v7058 = vadd.f32 %v6965, %v7057
        %v7059 = vpop.f32.mrb[0].mxu0
        %7060 = vmatprep.mubr.f32.mxu0 0.0
        %7061 = vmatmul.mubr.f32.gmra.mrb[0].mxu0 %v6971
        %v7062 = vpop.f32.mrb[0].mxu0
        %v7063 = vadd.f32 %v6965, %v7062
        %v7064 = vpop.f32.mrb[0].mxu0
        %7065 = vmatprep.mubr.f32.mxu0 0.0
        %7066 = vmatmul.mubr.f32.gmra.mrb[0].mxu0 %v6974
        %v7067 = vpop.f32.mrb[0].mxu0
        %v7068 = vadd.f32 %v6965, %v7067
        %v7069 = vpop.f32.mrb[0].mxu0
        %7070 = vmatprep.mubr.f32.mxu0 0.0
        %7071 = vmatmul.mubr.f32.gmra.mrb[0].mxu0 %v6977
        %v7072 = vpop.f32.mrb[0].mxu0
        %v7073 = vadd.f32 %v6965, %v7072
        %v7074 = vpop.f32.mrb[0].mxu0
        %7075 = vmatprep.mubr.f32.mxu0 0.0
        %7076 = vmatmul.mubr.f32.gmra.mrb[0].mxu0 %v6980
        %v7077 = vpop.f32.mrb[0].mxu0
        %v7078 = vadd.f32 %v6965, %v7077
        %v7079 = vpop.f32.mrb[0].mxu0
        %7080 = vmatprep.mubr.f32.mxu0 0.0
        %7081 = vmatmul.mubr.f32.gmra.mrb[0].mxu0 %v6983
        %v7082 = vpop.f32.mrb[0].mxu0
        %v7083 = vadd.f32 %v6965, %v7082
        %v7084 = vpop.f32.mrb[0].mxu0
        %7085 = vmatprep.mubr.f32.mxu0 0.0
        %7086 = vmatmul.mubr.f32.gmra.mrb[0].mxu0 %v6986
        %v7087 = vpop.f32.mrb[0].mxu0
        %v7088 = vadd.f32 %v6965, %v7087
        %v7089 = vpop.f32.mrb[0].mxu0
        %7090 = vmatprep.mubr.f32.mxu0 0.0
        %7091 = vmatmul.mubr.f32.gmra.mrb[0].mxu0 %v6989
        %v7092 = vpop.f32.mrb[0].mxu0
        %v7093 = vadd.f32 %v6965, %v7092
        %v7094 = vpop.f32.mrb[0].mxu0
        %7095 = vdwg.mxu0
        %v7096 = vmul.f32 %v7058, 0.5
        %v7097 = vmul.f32 %v7063, 0.5
        %v7098 = vmul.f32 %v7068, 0.5
        %v7099 = vmul.f32 %v7073, 0.5
        %v7100 = vmul.f32 %v7078, 0.5
        %v7101 = vmul.f32 %v7083, 0.5
        %v7102 = vmul.f32 %v7088, 0.5
        %v7103 = vmul.f32 %v7093, 0.5
        %v7104 = vmul.f32 %v7058, 0.044715
        %v7105 = vmul.f32 %v7063, 0.044715
        %v7106 = vmul.f32 %v7068, 0.044715
        %v7107 = vmul.f32 %v7073, 0.044715
        %v7108 = vmul.f32 %v7078, 0.044715
        %v7109 = vmul.f32 %v7083, 0.044715
        %v7110 = vmul.f32 %v7088, 0.044715
        %v7111 = vmul.f32 %v7093, 0.044715
        %v7112 = vmul.f32 %v7104, %v7058
        %v7113 = vmul.f32 %v7105, %v7063
        %v7114 = vmul.f32 %v7106, %v7068
        %v7115 = vmul.f32 %v7107, %v7073
        %v7116 = vmul.f32 %v7108, %v7078
        %v7117 = vmul.f32 %v7109, %v7083
        %v7118 = vmul.f32 %v7110, %v7088
        %v7119 = vmul.f32 %v7111, %v7093
        %v7120 = vmul.f32 %v7112, %v7058
        %v7121 = vmul.f32 %v7113, %v7063
        %v7122 = vmul.f32 %v7114, %v7068
        %v7123 = vmul.f32 %v7115, %v7073
        %v7124 = vmul.f32 %v7116, %v7078
        %v7125 = vmul.f32 %v7117, %v7083
        %v7126 = vmul.f32 %v7118, %v7088
        %v7127 = vmul.f32 %v7119, %v7093
        %v7128 = vadd.f32 %v7058, %v7120
        %v7129 = vadd.f32 %v7063, %v7121
        %v7130 = vadd.f32 %v7068, %v7122
        %v7131 = vadd.f32 %v7073, %v7123
        %v7132 = vadd.f32 %v7078, %v7124
        %v7133 = vadd.f32 %v7083, %v7125
        %v7134 = vadd.f32 %v7088, %v7126
        %v7135 = vadd.f32 %v7093, %v7127
        %v7136 = vmul.f32 %v7128, 0.7978846
        %v7137 = vmul.f32 %v7129, 0.7978846
        %v7138 = vmul.f32 %v7130, 0.7978846
        %v7139 = vmul.f32 %v7131, 0.7978846
        %v7140 = vmul.f32 %v7132, 0.7978846
        %v7141 = vmul.f32 %v7133, 0.7978846
        %v7142 = vmul.f32 %v7134, 0.7978846
        %v7143 = vmul.f32 %v7135, 0.7978846
        %v7144 = vtanh.pop %v7136
        %v7145 = vtanh.pop %v7137
        %v7146 = vtanh.pop %v7138
        %v7147 = vtanh.pop %v7139
        %v7148 = vtanh.pop %v7140
        %v7149 = vtanh.pop %v7141
        %v7150 = vtanh.pop %v7142
        %v7151 = vtanh.pop %v7143
        %v7152 = vadd.f32 %v7144, 1.0
        %v7153 = vadd.f32 %v7145, 1.0
        %v7154 = vadd.f32 %v7146, 1.0
        %v7155 = vadd.f32 %v7147, 1.0
        %v7156 = vadd.f32 %v7148, 1.0
        %v7157 = vadd.f32 %v7149, 1.0
        %v7158 = vadd.f32 %v7150, 1.0
        %v7159 = vadd.f32 %v7151, 1.0
        %v7160 = vmul.f32 %v7096, %v7152
        %v7161 = vmul.f32 %v7097, %v7153
        %v7162 = vmul.f32 %v7098, %v7154
        %v7163 = vmul.f32 %v7099, %v7155
        %v7164 = vmul.f32 %v7100, %v7156
        %v7165 = vmul.f32 %v7101, %v7157
        %v7166 = vmul.f32 %v7102, %v7158
        %v7167 = vmul.f32 %v7103, %v7159
        %s7168 = scalar_lea.vmem %s20, 8
        %v7169 = vld [vmem:[%s7168] sm:$0xff]
        %s7170 = scalar_lea.vmem %s21, 1
        %v7171 = vld [vmem:[%s7170] sm:$0x1]
        %v7173 = vlaneseq
        %v7174 = vshrl.u32 %v7173, 7
        %v7175 = vsub.s32 0, %v7174
        %v7176 = vrot.slane %v7171, %v7175
        %v7179 = vsel %vm3576, %v7160, 0
        %v7182 = vsel %vm3576, %v7161, 0
        %v7185 = vsel %vm3576, %v7162, 0
        %v7188 = vsel %vm3576, %v7163, 0
        %v7191 = vsel %vm3576, %v7164, 0
        %v7194 = vsel %vm3576, %v7165, 0
        %v7197 = vsel %vm3576, %v7166, 0
        %v7200 = vsel %vm3576, %v7167, 0
        %7202 = vmatprep.subr.mxu0 0.0
        %7203 = vmatpush1.msra.mxu0 %v7169
        %7204 = vmatprep.subr.mxu0 0.0
        %7205 = vmatpush1.msra.mxu0 0.0
        %7206 = vmatprep.subr.mxu0 0.0
        %7207 = vmatpush1.msra.mxu0 0.0
        %7208 = vmatprep.subr.mxu0 0.0
        %7209 = vmatpush1.msra.mxu0 0.0
        %7210 = vmatprep.subr.mxu0 0.0
        %7211 = vmatpush1.msra.mxu0 0.0
        %7212 = vmatprep.subr.mxu0 0.0
        %7213 = vmatpush1.msra.mxu0 0.0
        %7214 = vmatprep.subr.mxu0 0.0
        %7215 = vmatpush1.msra.mxu0 0.0
        %7216 = vmatprep.subr.mxu0 0.0
        %7217 = vmatpush1.msra.mxu0 0.0
        %7218 = vmatprep.subr.mxu0 0.0
        %7219 = vmatpush1.msra.mxu0 0.0
        %7220 = vmatprep.subr.mxu0 0.0
        %7221 = vmatpush1.msra.mxu0 0.0
        %7222 = vmatprep.subr.mxu0 0.0
        %7223 = vmatpush1.msra.mxu0 0.0
        %7224 = vmatprep.subr.mxu0 0.0
        %7225 = vmatpush1.msra.mxu0 0.0
        %7226 = vmatprep.subr.mxu0 0.0
        %7227 = vmatpush1.msra.mxu0 0.0
        %7228 = vmatprep.subr.mxu0 0.0
        %7229 = vmatpush1.msra.mxu0 0.0
        %7230 = vmatprep.subr.mxu0 0.0
        %7231 = vmatpush1.msra.mxu0 0.0
        %7232 = vmatprep.subr.mxu0 0.0
        %7233 = vmatpush1.msra.mxu0 0.0
        %7234 = vmatprep.subr.mxu0 0.0
        %7235 = vmatpush1.msra.mxu0 0.0
        %7236 = vmatprep.subr.mxu0 0.0
        %7237 = vmatpush1.msra.mxu0 0.0
        %7238 = vmatprep.subr.mxu0 0.0
        %7239 = vmatpush1.msra.mxu0 0.0
        %7240 = vmatprep.subr.mxu0 0.0
        %7241 = vmatpush1.msra.mxu0 0.0
        %7242 = vmatprep.subr.mxu0 0.0
        %7243 = vmatpush1.msra.mxu0 0.0
        %7244 = vmatprep.subr.mxu0 0.0
        %7245 = vmatpush1.msra.mxu0 0.0
        %7246 = vmatprep.subr.mxu0 0.0
        %7247 = vmatpush1.msra.mxu0 0.0
        %7248 = vmatprep.subr.mxu0 0.0
        %7249 = vmatpush1.msra.mxu0 0.0
        %7250 = vmatprep.subr.mxu0 0.0
        %7251 = vmatpush1.msra.mxu0 0.0
        %7252 = vmatprep.subr.mxu0 0.0
        %7253 = vmatpush1.msra.mxu0 0.0
        %7254 = vmatprep.subr.mxu0 0.0
        %7255 = vmatpush1.msra.mxu0 0.0
        %7256 = vmatprep.subr.mxu0 0.0
        %7257 = vmatpush1.msra.mxu0 0.0
        %7258 = vmatprep.subr.mxu0 0.0
        %7259 = vmatpush1.msra.mxu0 0.0
        %7260 = vmatprep.subr.mxu0 0.0
        %7261 = vmatpush1.msra.mxu0 0.0
        %7262 = vmatprep.subr.mxu0 0.0
        %7263 = vmatpush1.msra.mxu0 0.0
        %7264 = vmatprep.subr.mxu0 0.0
        %7265 = vmatpush1.msra.mxu0 0.0
        %7266 = vmatprep.mubr.f32.mxu0 0.0
        %7267 = vmatmul.mubr.f32.gmra.mrb[0].mxu0 %v7179
        %v7268 = vpop.f32.mrb[0].mxu0
        %v7269 = vadd.f32 %v7176, %v7268
        %v7270 = vpop.f32.mrb[0].mxu0
        %7271 = vmatprep.mubr.f32.mxu0 0.0
        %7272 = vmatmul.mubr.f32.gmra.mrb[0].mxu0 %v7182
        %v7273 = vpop.f32.mrb[0].mxu0
        %v7274 = vadd.f32 %v7176, %v7273
        %v7275 = vpop.f32.mrb[0].mxu0
        %7276 = vmatprep.mubr.f32.mxu0 0.0
        %7277 = vmatmul.mubr.f32.gmra.mrb[0].mxu0 %v7185
        %v7278 = vpop.f32.mrb[0].mxu0
        %v7279 = vadd.f32 %v7176, %v7278
        %v7280 = vpop.f32.mrb[0].mxu0
        %7281 = vmatprep.mubr.f32.mxu0 0.0
        %7282 = vmatmul.mubr.f32.gmra.mrb[0].mxu0 %v7188
        %v7283 = vpop.f32.mrb[0].mxu0
        %v7284 = vadd.f32 %v7176, %v7283
        %v7285 = vpop.f32.mrb[0].mxu0
        %7286 = vmatprep.mubr.f32.mxu0 0.0
        %7287 = vmatmul.mubr.f32.gmra.mrb[0].mxu0 %v7191
        %v7288 = vpop.f32.mrb[0].mxu0
        %v7289 = vadd.f32 %v7176, %v7288
        %v7290 = vpop.f32.mrb[0].mxu0
        %7291 = vmatprep.mubr.f32.mxu0 0.0
        %7292 = vmatmul.mubr.f32.gmra.mrb[0].mxu0 %v7194
        %v7293 = vpop.f32.mrb[0].mxu0
        %v7294 = vadd.f32 %v7176, %v7293
        %v7295 = vpop.f32.mrb[0].mxu0
        %7296 = vmatprep.mubr.f32.mxu0 0.0
        %7297 = vmatmul.mubr.f32.gmra.mrb[0].mxu0 %v7197
        %v7298 = vpop.f32.mrb[0].mxu0
        %v7299 = vadd.f32 %v7176, %v7298
        %v7300 = vpop.f32.mrb[0].mxu0
        %7301 = vmatprep.mubr.f32.mxu0 0.0
        %7302 = vmatmul.mubr.f32.gmra.mrb[0].mxu0 %v7200
        %v7303 = vpop.f32.mrb[0].mxu0
        %v7304 = vadd.f32 %v7176, %v7303
        %v7305 = vpop.f32.mrb[0].mxu0
        %7306 = vdwg.mxu0
        %v7307 = vadd.f32 %v7269, %v6816
        %v7308 = vadd.f32 %v7274, %v6817
        %v7309 = vadd.f32 %v7279, %v6818
        %v7310 = vadd.f32 %v7284, %v6819
        %v7311 = vadd.f32 %v7289, %v6820
        %v7312 = vadd.f32 %v7294, %v6821
        %v7313 = vadd.f32 %v7299, %v6822
        %v7314 = vadd.f32 %v7304, %v6823
        %7315 = vxpose.xlu0.b32.start [1/16] %v7307, 128
        %7316 = vxpose.xlu0.b32.cont [2/16] %v7308, 128
        %7317 = vxpose.xlu0.b32.cont [3/16] %v7309, 128
        %7318 = vxpose.xlu0.b32.cont [4/16] %v7310, 128
        %7319 = vxpose.xlu0.b32.cont [5/16] %v7311, 128
        %7320 = vxpose.xlu0.b32.cont [6/16] %v7312, 128
        %7321 = vxpose.xlu0.b32.cont [7/16] %v7313, 128
        %7322 = vxpose.xlu0.b32.cont [8/16] %v7314, 128
        %7323 = vxpose.xlu0.b32.cont [9/16] 0.0, 128
        %7324 = vxpose.xlu0.b32.cont [10/16] 0.0, 128
        %7325 = vxpose.xlu0.b32.cont [11/16] 0.0, 128
        %7326 = vxpose.xlu0.b32.cont [12/16] 0.0, 128
        %7327 = vxpose.xlu0.b32.cont [13/16] 0.0, 128
        %7328 = vxpose.xlu0.b32.cont [14/16] 0.0, 128
        %7329 = vxpose.xlu0.b32.cont [15/16] 0.0, 128
        %7330 = vxpose.xlu0.b32.end [16/16] 0.0, 128
        %v7331 = vpop.trf.xlu0
        %v7332 = vpop.trf.xlu0
        %v7333 = vpop.trf.xlu0
        %v7334 = vpop.trf.xlu0
        %v7335 = vpop.trf.xlu0
        %v7336 = vpop.trf.xlu0
        %v7337 = vpop.trf.xlu0
        %v7338 = vpop.trf.xlu0
        %v7339 = vpop.trf.xlu0
        %v7340 = vpop.trf.xlu0
        %v7341 = vpop.trf.xlu0
        %v7342 = vpop.trf.xlu0
        %v7343 = vpop.trf.xlu0
        %v7344 = vpop.trf.xlu0
        %v7345 = vpop.trf.xlu0
        %v7346 = vpop.trf.xlu0
        %7347 = vst.msk [vmem:[%s718] sm:$0xff] %vm5339, %v7331
        %s7348 = sand.u32 %s521, 1
        %s7349 = scalar_lea.sflag [#allocation3], %s7348
        %s7350 = sand.u32 %s521, 1
        %s7351 = smul.addr %s7350, 8
        %s7352 = scalar_lea.vmem [#allocation2], %s7351
        %s7353 = sand.u32 %s547, 1
        %s7354 = scalar_lea.sflag [#allocation5], %s7353
        %s7355 = sand.u32 %s547, 1
        %s7356 = smul.addr %s7355, 16
        %s7357 = scalar_lea.vmem [#allocation4], %s7356
        // Predicated region
        $region109: #{tpu_custom_call.1} parent=107 // pred_check
          %p7358 = pneg %p531
        $region110: #{tpu_custom_call.1} parent=107 // pred_check_branch
          %7360 = sbr.rel (%p7358) target = $region112
        $region111: #{tpu_custom_call.1} parent=107 // pred_region
          %s7362 = ssub.s32 128, 128
          %7363 = vsyncadd %s7349, %s7362
          %s7364 = smul.addr %s41, 128
          %s7365 = scalar_lea.hbm %s22, %s7364
          %s7367 = sshll.u32 %s7352, 4
          %s7368 = int_to_ptr.vmem [resolvable:$true] %s7367
          %7370 = dma.vmem_to_hbm [thread:$0]  %s7368, 128, %s7365, %s7349
        $region112: #{tpu_custom_call.1} parent=107 // pred_fallthru
          _
        // Predicated region
        $region113: #{tpu_custom_call.1} parent=107 // pred_check
          %p7371 = pneg %p557
        $region114: #{tpu_custom_call.1} parent=107 // pred_check_branch
          %7373 = sbr.rel (%p7371) target = $region116
        $region115: #{tpu_custom_call.1} parent=107 // pred_region
          %s7375 = ssub.s32 256, 256
          %7376 = vsyncadd %s7354, %s7375
          %s7377 = smul.addr %s41, 2
          %s7378 = smul.addr %s7377, 128
          %s7379 = scalar_lea.hbm %s23, %s7378
          %s7381 = sshll.u32 %s7357, 4
          %s7382 = int_to_ptr.vmem [resolvable:$true] %s7381
          %7384 = dma.vmem_to_hbm [thread:$0]  %s7382, 256, %s7379, %s7354
        $region116: #{tpu_custom_call.1} parent=107 // pred_fallthru
          _
      $region108: #{tpu_custom_call.1} parent=5 // pred_fallthru
        _
      %p7385 = scmp.le.s32.totalorder 2, %s36
      // Predicated region
      $region117: #{tpu_custom_call.1} parent=5 // pred_check
        %p7386 = pneg %p7385
      $region118: #{tpu_custom_call.1} parent=5 // pred_check_branch
        %7388 = sbr.rel (%p7386) target = $region120
      $region119: #{tpu_custom_call.1} parent=5 // pred_region
        %s7389 = ssub.s32 %s36, 2
        // Predicated region
        $region121: #{tpu_custom_call.1} parent=119 // pred_check
          %p7390 = pneg %p537
        $region122: #{tpu_custom_call.1} parent=119 // pred_check_branch
          %7392 = sbr.rel (%p7390) target = $region124
        $region123: #{tpu_custom_call.1} parent=119 // pred_region
          %s7393 = sand.u32 %s522, 1
          %s7394 = scalar_lea.sflag [#allocation3], %s7393
          %s7395 = sand.u32 %s522, 1
          %s7396 = smul.addr %s7395, 8
          %s7397 = scalar_lea.vmem [#allocation2], %s7396
          %7398 = dma.done %s7394, 128
        $region124: #{tpu_custom_call.1} parent=119 // pred_fallthru
          _
        // Predicated region
        $region125: #{tpu_custom_call.1} parent=119 // pred_check
          %p7399 = pneg %p563
        $region126: #{tpu_custom_call.1} parent=119 // pred_check_branch
          %7401 = sbr.rel (%p7399) target = $region128
        $region127: #{tpu_custom_call.1} parent=119 // pred_region
          %s7402 = sand.u32 %s548, 1
          %s7403 = scalar_lea.sflag [#allocation5], %s7402
          %s7404 = sand.u32 %s548, 1
          %s7405 = smul.addr %s7404, 16
          %s7406 = scalar_lea.vmem [#allocation4], %s7405
          %7407 = dma.done %s7403, 256
        $region128: #{tpu_custom_call.1} parent=119 // pred_fallthru
          _
      $region120: #{tpu_custom_call.1} parent=5 // pred_fallthru
        _
    $region6: #{tpu_custom_call.1} parent=1 // loop_footer
      %s40 = sadd.s32 1, %s36
    $region7: #{tpu_custom_call.1} parent=1 // loop_footer_branch
      %35 = sbr.rel target = $region3
    $region8: #{tpu_custom_call.1} parent=1 // loop_exit
      _
    %7408 = vsyncpa [#allocation3], 1
    %s7409 = scalar_lea.sflag [#allocation3], 1
    %7410 = vsyncpa %s7409, 1
    %7411 = vsyncpa [#allocation5], 1
    %s7412 = scalar_lea.sflag [#allocation5], 1
    %7413 = vsyncpa %s7412, 1

</llo_original>
